<compile_context>
chip_gen: v7x
topology: tpu7x:2x2x1
jax: 0.10.0
libtpu: 0.0.40
codegen_flags: <defaults>
</compile_context>

<pallas_src>
import jax
import jax.numpy as jnp
import numpy as np
from jax import lax
from jax.experimental import pallas as pl
from jax.experimental.pallas import tpu as pltpu


# ----------------------------- Pallas kernel ------------------------------- #

def double_conv_kernel(x_ref, w1_ref, s1_ref, b1_ref, w2_ref, s2_ref, b2_ref,
                       o_ref):
    """Fused (conv3x3 valid -> BN -> ReLU) x 2 for one image.

    x_ref : (1, H, W, Cin)            f32
    w1_ref: (9*Cin, Cout)             bf16  (HWIO reshaped: tap-major, cin-minor)
    s1/b1 : (1, Cout)                 f32   folded BN scale / bias
    w2_ref: (9*Cout, CoutP)           bf16  (output channels zero-padded to 128)
    s2/b2 : (1, CoutP)                f32
    o_ref : (1, (H-4)*(W-4), CoutP)   f32   lane-dense output slab
    """
    _, h, w, cin = x_ref.shape
    cout = w1_ref.shape[1]
    ho1, wo1 = h - 2, w - 2
    ho2, wo2 = h - 4, w - 4

    # ---- conv1: im2col -> one bf16 matmul (K = 9*Cin), fused BN + ReLU ----
    p1 = jnp.concatenate(
        [x_ref[0, dy:dy + ho1, dx:dx + wo1, :].reshape(ho1 * wo1, cin)
         for dy in range(3) for dx in range(3)],
        axis=1)                                              # (ho1*wo1, 9*cin)
    y1 = jnp.dot(p1.astype(jnp.bfloat16), w1_ref[...],
                 preferred_element_type=jnp.float32)          # (ho1*wo1, cout)
    y1 = jnp.maximum(y1 * s1_ref[...] + b1_ref[...], 0.0)     # folded BN + ReLU
    y1 = y1.reshape(ho1, wo1, cout)      # stays in VMEM, never written to HBM

    # ---- conv2: im2col -> one bf16 matmul (K = 9*Cout), fused BN + ReLU ----
    p2 = jnp.concatenate(
        [y1[dy:dy + ho2, dx:dx + wo2, :].reshape(ho2 * wo2, cout)
         for dy in range(3) for dx in range(3)],
        axis=1)                                              # (ho2*wo2, 9*cout)
    y2 = jnp.dot(p2.astype(jnp.bfloat16), w2_ref[...],
                 preferred_element_type=jnp.float32)          # (ho2*wo2, coutp)
    y2 = jnp.maximum(y2 * s2_ref[...] + b2_ref[...], 0.0)

    o_ref[0] = y2.astype(o_ref.dtype)


# ------------------------------ JAX wrapper --------------------------------- #

def fold_bn(conv_bias, gamma, beta, running_mean, running_var, eps=1e-5):
    """Fold conv bias + eval-mode BatchNorm into per-channel (scale, bias)."""
    scale = gamma / jnp.sqrt(running_var + eps)
    bias = (conv_bias - running_mean) * scale + beta
    return scale, bias


@jax.jit
def inconv_forward(x_nchw, params):
    """inconv_orig forward: (Conv3x3 valid -> BN(eval) -> ReLU) x 2."""
    # TODO(synk): BatchNorm is applied in eval mode (running statistics folded
    # into scale/bias); training-mode batch-statistics update is not implemented.
    x = jnp.transpose(x_nchw, (0, 2, 3, 1))                   # NCHW -> NHWC
    n, h, w, cin = x.shape
    cout = params["w1"].shape[-1]
    ho2, wo2 = h - 4, w - 4
    coutp = max(128, -(-cout // 128) * 128)   # pad channels to full 128 lanes

    s1, b1 = fold_bn(params["b1"], params["gamma1"], params["beta1"],
                     params["mean1"], params["var1"])
    s2, b2 = fold_bn(params["b2"], params["gamma2"], params["beta2"],
                     params["mean2"], params["var2"])

    # Weights in im2col layout (tap-major, input-channel-minor on the K axis),
    # cast to bf16 for the MXU; conv2 output channels zero-padded for lane-dense
    # stores.
    w1_r = params["w1"].reshape(9 * cin, cout).astype(jnp.bfloat16)
    w2_r = params["w2"].reshape(9 * cout, cout)
    w2_p = jnp.zeros((9 * cout, coutp), jnp.float32).at[:, :cout].set(w2_r)
    w2_p = w2_p.astype(jnp.bfloat16)
    s2_p = jnp.zeros((coutp,), jnp.float32).at[:cout].set(s2)
    b2_p = jnp.zeros((coutp,), jnp.float32).at[:cout].set(b2)

    out = pl.pallas_call(
        double_conv_kernel,
        out_shape=jax.ShapeDtypeStruct((n, ho2 * wo2, coutp), jnp.float32),
        grid=(n,),
        in_specs=[
            pl.BlockSpec((1, h, w, cin), lambda i: (i, 0, 0, 0)),
            pl.BlockSpec((9 * cin, cout), lambda i: (0, 0)),
            pl.BlockSpec((1, cout), lambda i: (0, 0)),
            pl.BlockSpec((1, cout), lambda i: (0, 0)),
            pl.BlockSpec((9 * cout, coutp), lambda i: (0, 0)),
            pl.BlockSpec((1, coutp), lambda i: (0, 0)),
            pl.BlockSpec((1, coutp), lambda i: (0, 0)),
        ],
        out_specs=pl.BlockSpec((1, ho2 * wo2, coutp), lambda i: (i, 0, 0)),
        compiler_params=pltpu.CompilerParams(
            dimension_semantics=("parallel",),        # N=2 -> both v7x TCs busy
            vmem_limit_bytes=32 * 1024 * 1024,        # explicit budget, safe on v5e/v6e/v7x
        ),
    )(x, w1_r, s1.reshape(1, -1), b1.reshape(1, -1),
      w2_p, s2_p.reshape(1, -1), b2_p.reshape(1, -1))

    # TODO(synk): for large H*W, add a second grid axis over output-row tiles
    # with a 4-row input halo (manual DMA / pl.ANY) so the per-step footprint
    # stays under v7x's ~32 MiB scoped VMEM and the pipeline gets >2 steps.

    out = out[:, :, :cout].reshape(n, ho2, wo2, cout)
    return jnp.transpose(out, (0, 3, 1, 2))                   # NHWC -> NCHW


# ---------------------------- pure-JAX reference ---------------------------- #

def reference_forward(x_nchw, params, *, matmul_dtype=jnp.bfloat16):
    """Reference. Conv operands cast to `matmul_dtype` to mirror the kernel's
    bf16 MXU matmul (f32 accumulation); BN + ReLU in f32."""
    x = jnp.transpose(x_nchw, (0, 2, 3, 1))

    def conv_bn_relu(x, w, cb, g, bt, m, v):
        y = lax.conv_general_dilated(
            x.astype(matmul_dtype), w.astype(matmul_dtype), (1, 1), "VALID",
            dimension_numbers=("NHWC", "HWIO", "NHWC"),
            preferred_element_type=jnp.float32) + cb
        y = (y - m) / jnp.sqrt(v + 1e-5) * g + bt
        return jnp.maximum(y, 0.0)

    x = conv_bn_relu(x, params["w1"], params["b1"], params["gamma1"],
                     params["beta1"], params["mean1"], params["var1"])
    x = conv_bn_relu(x, params["w2"], params["b2"], params["gamma2"],
                     params["beta2"], params["mean2"], params["var2"])
    return jnp.transpose(x, (0, 3, 1, 2))


def init_params(key, in_ch, out_ch):
    ks = jax.random.split(key, 12)

    def conv_w(k, cin, cout):
        bound = 1.0 / np.sqrt(cin * 9)
        return jax.random.uniform(k, (3, 3, cin, cout), jnp.float32, -bound, bound)

    def conv_b(k, cin, cout):
        bound = 1.0 / np.sqrt(cin * 9)
        return jax.random.uniform(k, (cout,), jnp.float32, -bound, bound)

    return {
        "w1": conv_w(ks[0], in_ch, out_ch),
        "b1": conv_b(ks[1], in_ch, out_ch),
        "gamma1": jax.random.uniform(ks[2], (out_ch,), jnp.float32, 0.5, 1.5),
        "beta1": jax.random.normal(ks[3], (out_ch,)) * 0.1,
        "mean1": jax.random.normal(ks[4], (out_ch,)) * 0.1,
        "var1": jax.random.uniform(ks[5], (out_ch,), jnp.float32, 0.5, 1.5),
        "w2": conv_w(ks[6], out_ch, out_ch),
        "b2": conv_b(ks[7], out_ch, out_ch),
        "gamma2": jax.random.uniform(ks[8], (out_ch,), jnp.float32, 0.5, 1.5),
        "beta2": jax.random.normal(ks[9], (out_ch,)) * 0.1,
        "mean2": jax.random.normal(ks[10], (out_ch,)) * 0.1,
        "var2": jax.random.uniform(ks[11], (out_ch,), jnp.float32, 0.5, 1.5),
    }


if __name__ == "__main__":
    key = jax.random.PRNGKey(0)
    k_x, k_p = jax.random.split(key)

    N, IN_CH, OUT_CH, H, W = 2, 4, 8, 16, 16
    x = jax.random.normal(k_x, (N, IN_CH, H, W), jnp.float32)   # NCHW like PyTorch
    params = init_params(k_p, IN_CH, OUT_CH)

    out = jax.block_until_ready(inconv_forward(x, params))
    assert out.shape == (N, OUT_CH, H - 4, W - 4), out.shape

    ref = reference_forward(x, params)
    np.testing.assert_allclose(np.asarray(out), np.asarray(ref),
                               rtol=1e-2, atol=1e-2)
    print("KERNEL_OK")
</pallas_src>

<mosaic_0001>
module attributes {stable_mosaic.version = 11 : i64} {
  func.func @double_conv_kernel(%arg0: i32, %arg1: memref<1x16x16x4xf32, #tpu.memory_space<vmem>>, %arg2: memref<36x8xbf16, #tpu.memory_space<vmem>>, %arg3: memref<1x8xf32, #tpu.memory_space<vmem>>, %arg4: memref<1x8xf32, #tpu.memory_space<vmem>>, %arg5: memref<72x128xbf16, #tpu.memory_space<vmem>>, %arg6: memref<1x128xf32, #tpu.memory_space<vmem>>, %arg7: memref<1x128xf32, #tpu.memory_space<vmem>>, %arg8: memref<1x144x128xf32, #tpu.memory_space<vmem>>) attributes {dimension_semantics = [#tpu.dimension_semantics<parallel>], iteration_bounds = array<i64: 2>, scalar_prefetch = 0 : i64, scratch_operands = 0 : i64, tpu.core_type = #tpu.core_type<tc>, window_params = [{transform_indices = @transform_0, window_bounds = array<i64: 1, 16, 16, 4>}, {pipeline_mode = #tpu.pipeline_mode<synchronous>, transform_indices = @transform_1, window_bounds = array<i64: 36, 8>}, {pipeline_mode = #tpu.pipeline_mode<synchronous>, transform_indices = @transform_2, window_bounds = array<i64: 1, 8>}, {pipeline_mode = #tpu.pipeline_mode<synchronous>, transform_indices = @transform_3, window_bounds = array<i64: 1, 8>}, {pipeline_mode = #tpu.pipeline_mode<synchronous>, transform_indices = @transform_4, window_bounds = array<i64: 72, 128>}, {pipeline_mode = #tpu.pipeline_mode<synchronous>, transform_indices = @transform_5, window_bounds = array<i64: 1, 128>}, {pipeline_mode = #tpu.pipeline_mode<synchronous>, transform_indices = @transform_6, window_bounds = array<i64: 1, 128>}, {transform_indices = @transform_7, window_bounds = array<i64: 1, 144, 128>}]} {
    %c0 = arith.constant 0 : index
    %c0_0 = arith.constant 0 : index
    %c0_1 = arith.constant 0 : index
    %c0_2 = arith.constant 0 : index
    %0 = vector.load %arg1[%c0, %c0_0, %c0_1, %c0_2] : memref<1x16x16x4xf32, #tpu.memory_space<vmem>>, vector<1x14x14x4xf32>
    %1 = vector.shape_cast %0 : vector<1x14x14x4xf32> to vector<14x14x4xf32>
    %2 = vector.shape_cast %1 : vector<14x14x4xf32> to vector<196x4xf32>
    %c0_3 = arith.constant 0 : index
    %c0_4 = arith.constant 0 : index
    %c1 = arith.constant 1 : index
    %c0_5 = arith.constant 0 : index
    %3 = vector.load %arg1[%c0_3, %c0_4, %c1, %c0_5] : memref<1x16x16x4xf32, #tpu.memory_space<vmem>>, vector<1x14x14x4xf32>
    %4 = vector.shape_cast %3 : vector<1x14x14x4xf32> to vector<14x14x4xf32>
    %5 = vector.shape_cast %4 : vector<14x14x4xf32> to vector<196x4xf32>
    %c0_6 = arith.constant 0 : index
    %c0_7 = arith.constant 0 : index
    %c2 = arith.constant 2 : index
    %c0_8 = arith.constant 0 : index
    %6 = vector.load %arg1[%c0_6, %c0_7, %c2, %c0_8] : memref<1x16x16x4xf32, #tpu.memory_space<vmem>>, vector<1x14x14x4xf32>
    %7 = vector.shape_cast %6 : vector<1x14x14x4xf32> to vector<14x14x4xf32>
    %8 = vector.shape_cast %7 : vector<14x14x4xf32> to vector<196x4xf32>
    %c0_9 = arith.constant 0 : index
    %c1_10 = arith.constant 1 : index
    %c0_11 = arith.constant 0 : index
    %c0_12 = arith.constant 0 : index
    %9 = vector.load %arg1[%c0_9, %c1_10, %c0_11, %c0_12] : memref<1x16x16x4xf32, #tpu.memory_space<vmem>>, vector<1x14x14x4xf32>
    %10 = vector.shape_cast %9 : vector<1x14x14x4xf32> to vector<14x14x4xf32>
    %11 = vector.shape_cast %10 : vector<14x14x4xf32> to vector<196x4xf32>
    %c0_13 = arith.constant 0 : index
    %c1_14 = arith.constant 1 : index
    %c1_15 = arith.constant 1 : index
    %c0_16 = arith.constant 0 : index
    %12 = vector.load %arg1[%c0_13, %c1_14, %c1_15, %c0_16] : memref<1x16x16x4xf32, #tpu.memory_space<vmem>>, vector<1x14x14x4xf32>
    %13 = vector.shape_cast %12 : vector<1x14x14x4xf32> to vector<14x14x4xf32>
    %14 = vector.shape_cast %13 : vector<14x14x4xf32> to vector<196x4xf32>
    %c0_17 = arith.constant 0 : index
    %c1_18 = arith.constant 1 : index
    %c2_19 = arith.constant 2 : index
    %c0_20 = arith.constant 0 : index
    %15 = vector.load %arg1[%c0_17, %c1_18, %c2_19, %c0_20] : memref<1x16x16x4xf32, #tpu.memory_space<vmem>>, vector<1x14x14x4xf32>
    %16 = vector.shape_cast %15 : vector<1x14x14x4xf32> to vector<14x14x4xf32>
    %17 = vector.shape_cast %16 : vector<14x14x4xf32> to vector<196x4xf32>
    %c0_21 = arith.constant 0 : index
    %c2_22 = arith.constant 2 : index
    %c0_23 = arith.constant 0 : index
    %c0_24 = arith.constant 0 : index
    %18 = vector.load %arg1[%c0_21, %c2_22, %c0_23, %c0_24] : memref<1x16x16x4xf32, #tpu.memory_space<vmem>>, vector<1x14x14x4xf32>
    %19 = vector.shape_cast %18 : vector<1x14x14x4xf32> to vector<14x14x4xf32>
    %20 = vector.shape_cast %19 : vector<14x14x4xf32> to vector<196x4xf32>
    %c0_25 = arith.constant 0 : index
    %c2_26 = arith.constant 2 : index
    %c1_27 = arith.constant 1 : index
    %c0_28 = arith.constant 0 : index
    %21 = vector.load %arg1[%c0_25, %c2_26, %c1_27, %c0_28] : memref<1x16x16x4xf32, #tpu.memory_space<vmem>>, vector<1x14x14x4xf32>
    %22 = vector.shape_cast %21 : vector<1x14x14x4xf32> to vector<14x14x4xf32>
    %23 = vector.shape_cast %22 : vector<14x14x4xf32> to vector<196x4xf32>
    %c0_29 = arith.constant 0 : index
    %c2_30 = arith.constant 2 : index
    %c2_31 = arith.constant 2 : index
    %c0_32 = arith.constant 0 : index
    %24 = vector.load %arg1[%c0_29, %c2_30, %c2_31, %c0_32] : memref<1x16x16x4xf32, #tpu.memory_space<vmem>>, vector<1x14x14x4xf32>
    %25 = vector.shape_cast %24 : vector<1x14x14x4xf32> to vector<14x14x4xf32>
    %26 = vector.shape_cast %25 : vector<14x14x4xf32> to vector<196x4xf32>
    %27 = tpu.concatenate %2, %5, %8, %11, %14, %17, %20, %23, %26 in 1 : vector<196x4xf32>, vector<196x4xf32>, vector<196x4xf32>, vector<196x4xf32>, vector<196x4xf32>, vector<196x4xf32>, vector<196x4xf32>, vector<196x4xf32>, vector<196x4xf32> -> vector<196x36xf32>
    %28 = arith.truncf %27 : vector<196x36xf32> to vector<196x36xbf16>
    %c0_33 = arith.constant 0 : index
    %c0_34 = arith.constant 0 : index
    %29 = vector.load %arg2[%c0_33, %c0_34] : memref<36x8xbf16, #tpu.memory_space<vmem>>, vector<36x8xbf16>
    %cst = arith.constant dense<0.000000e+00> : vector<196x8xf32>
    %30 = tpu.matmul %28, %29, %cst {dimension_numbers = #tpu.dot_dimension_numbers<[1], [0], [0], [1], [0, 0, 1, 1], [], []>} : vector<196x36xbf16>, vector<36x8xbf16>, vector<196x8xf32> -> vector<196x8xf32>
    %c0_35 = arith.constant 0 : index
    %c0_36 = arith.constant 0 : index
    %31 = vector.load %arg3[%c0_35, %c0_36] : memref<1x8xf32, #tpu.memory_space<vmem>>, vector<1x8xf32>
    %32 = vector.broadcast %31 : vector<1x8xf32> to vector<196x8xf32>
    %33 = arith.mulf %30, %32 : vector<196x8xf32>
    %c0_37 = arith.constant 0 : index
    %c0_38 = arith.constant 0 : index
    %34 = vector.load %arg4[%c0_37, %c0_38] : memref<1x8xf32, #tpu.memory_space<vmem>>, vector<1x8xf32>
    %35 = vector.broadcast %34 : vector<1x8xf32> to vector<196x8xf32>
    %36 = arith.addf %33, %35 : vector<196x8xf32>
    %cst_39 = arith.constant 0.000000e+00 : f32
    %37 = vector.broadcast %cst_39 : f32 to vector<196x8xf32>
    %38 = arith.maximumf %36, %37 : vector<196x8xf32>
    %39 = vector.shape_cast %38 : vector<196x8xf32> to vector<14x14x8xf32>
    %40 = vector.extract_strided_slice %39 {offsets = [0, 0, 0], sizes = [12, 12, 8], strides = [1, 1, 1]} : vector<14x14x8xf32> to vector<12x12x8xf32>
    %41 = vector.shape_cast %40 : vector<12x12x8xf32> to vector<144x8xf32>
    %42 = vector.extract_strided_slice %39 {offsets = [0, 1, 0], sizes = [12, 12, 8], strides = [1, 1, 1]} : vector<14x14x8xf32> to vector<12x12x8xf32>
    %43 = vector.shape_cast %42 : vector<12x12x8xf32> to vector<144x8xf32>
    %44 = vector.extract_strided_slice %39 {offsets = [0, 2, 0], sizes = [12, 12, 8], strides = [1, 1, 1]} : vector<14x14x8xf32> to vector<12x12x8xf32>
    %45 = vector.shape_cast %44 : vector<12x12x8xf32> to vector<144x8xf32>
    %46 = vector.extract_strided_slice %39 {offsets = [1, 0, 0], sizes = [12, 12, 8], strides = [1, 1, 1]} : vector<14x14x8xf32> to vector<12x12x8xf32>
    %47 = vector.shape_cast %46 : vector<12x12x8xf32> to vector<144x8xf32>
    %48 = vector.extract_strided_slice %39 {offsets = [1, 1, 0], sizes = [12, 12, 8], strides = [1, 1, 1]} : vector<14x14x8xf32> to vector<12x12x8xf32>
    %49 = vector.shape_cast %48 : vector<12x12x8xf32> to vector<144x8xf32>
    %50 = vector.extract_strided_slice %39 {offsets = [1, 2, 0], sizes = [12, 12, 8], strides = [1, 1, 1]} : vector<14x14x8xf32> to vector<12x12x8xf32>
    %51 = vector.shape_cast %50 : vector<12x12x8xf32> to vector<144x8xf32>
    %52 = vector.extract_strided_slice %39 {offsets = [2, 0, 0], sizes = [12, 12, 8], strides = [1, 1, 1]} : vector<14x14x8xf32> to vector<12x12x8xf32>
    %53 = vector.shape_cast %52 : vector<12x12x8xf32> to vector<144x8xf32>
    %54 = vector.extract_strided_slice %39 {offsets = [2, 1, 0], sizes = [12, 12, 8], strides = [1, 1, 1]} : vector<14x14x8xf32> to vector<12x12x8xf32>
    %55 = vector.shape_cast %54 : vector<12x12x8xf32> to vector<144x8xf32>
    %56 = vector.extract_strided_slice %39 {offsets = [2, 2, 0], sizes = [12, 12, 8], strides = [1, 1, 1]} : vector<14x14x8xf32> to vector<12x12x8xf32>
    %57 = vector.shape_cast %56 : vector<12x12x8xf32> to vector<144x8xf32>
    %58 = tpu.concatenate %41, %43, %45, %47, %49, %51, %53, %55, %57 in 1 : vector<144x8xf32>, vector<144x8xf32>, vector<144x8xf32>, vector<144x8xf32>, vector<144x8xf32>, vector<144x8xf32>, vector<144x8xf32>, vector<144x8xf32>, vector<144x8xf32> -> vector<144x72xf32>
    %59 = arith.truncf %58 : vector<144x72xf32> to vector<144x72xbf16>
    %c0_40 = arith.constant 0 : index
    %c0_41 = arith.constant 0 : index
    %60 = vector.load %arg5[%c0_40, %c0_41] : memref<72x128xbf16, #tpu.memory_space<vmem>>, vector<72x128xbf16>
    %cst_42 = arith.constant dense<0.000000e+00> : vector<144x128xf32>
    %61 = tpu.matmul %59, %60, %cst_42 {dimension_numbers = #tpu.dot_dimension_numbers<[1], [0], [0], [1], [0, 0, 1, 1], [], []>} : vector<144x72xbf16>, vector<72x128xbf16>, vector<144x128xf32> -> vector<144x128xf32>
    %c0_43 = arith.constant 0 : index
    %c0_44 = arith.constant 0 : index
    %62 = vector.load %arg6[%c0_43, %c0_44] : memref<1x128xf32, #tpu.memory_space<vmem>>, vector<1x128xf32>
    %63 = vector.broadcast %62 : vector<1x128xf32> to vector<144x128xf32>
    %64 = arith.mulf %61, %63 : vector<144x128xf32>
    %c0_45 = arith.constant 0 : index
    %c0_46 = arith.constant 0 : index
    %65 = vector.load %arg7[%c0_45, %c0_46] : memref<1x128xf32, #tpu.memory_space<vmem>>, vector<1x128xf32>
    %66 = vector.broadcast %65 : vector<1x128xf32> to vector<144x128xf32>
    %67 = arith.addf %64, %66 : vector<144x128xf32>
    %cst_47 = arith.constant 0.000000e+00 : f32
    %68 = vector.broadcast %cst_47 : f32 to vector<144x128xf32>
    %69 = arith.maximumf %67, %68 : vector<144x128xf32>
    %c0_48 = arith.constant 0 : index
    %c0_49 = arith.constant 0 : index
    %c0_50 = arith.constant 0 : index
    %70 = vector.load %arg8[%c0_48, %c0_49, %c0_50] : memref<1x144x128xf32, #tpu.memory_space<vmem>>, vector<1x144x128xf32>
    %71 = vector.shape_cast %70 : vector<1x144x128xf32> to vector<144x128xf32>
    %72 = vector.shape_cast %69 : vector<144x128xf32> to vector<1x144x128xf32>
    tpu.vector_store %arg8[%c0_48, %c0_49, %c0_50], %72 {strides = array<i32>} : memref<1x144x128xf32, #tpu.memory_space<vmem>>, vector<1x144x128xf32>,
    return
  }
  func.func @transform_0(%arg0: i32) -> (i32, i32, i32, i32) {
    %c0_i32 = arith.constant 0 : i32
    %c0_i32_0 = arith.constant 0 : i32
    %c0_i32_1 = arith.constant 0 : i32
    %c0_i32_2 = arith.constant 0 : i32
    return %arg0, %c0_i32, %c0_i32_0, %c0_i32_1 : i32, i32, i32, i32
  }
  func.func @transform_1(%arg0: i32) -> (i32, i32) {
    %c0_i32 = arith.constant 0 : i32
    %c0_i32_0 = arith.constant 0 : i32
    %c0_i32_1 = arith.constant 0 : i32
    return %c0_i32, %c0_i32_0 : i32, i32
  }
  func.func @transform_2(%arg0: i32) -> (i32, i32) {
    %c0_i32 = arith.constant 0 : i32
    %c0_i32_0 = arith.constant 0 : i32
    %c0_i32_1 = arith.constant 0 : i32
    return %c0_i32, %c0_i32_0 : i32, i32
  }
  func.func @transform_3(%arg0: i32) -> (i32, i32) {
    %c0_i32 = arith.constant 0 : i32
    %c0_i32_0 = arith.constant 0 : i32
    %c0_i32_1 = arith.constant 0 : i32
    return %c0_i32, %c0_i32_0 : i32, i32
  }
  func.func @transform_4(%arg0: i32) -> (i32, i32) {
    %c0_i32 = arith.constant 0 : i32
    %c0_i32_0 = arith.constant 0 : i32
    %c0_i32_1 = arith.constant 0 : i32
    return %c0_i32, %c0_i32_0 : i32, i32
  }
  func.func @transform_5(%arg0: i32) -> (i32, i32) {
    %c0_i32 = arith.constant 0 : i32
    %c0_i32_0 = arith.constant 0 : i32
    %c0_i32_1 = arith.constant 0 : i32
    return %c0_i32, %c0_i32_0 : i32, i32
  }
  func.func @transform_6(%arg0: i32) -> (i32, i32) {
    %c0_i32 = arith.constant 0 : i32
    %c0_i32_0 = arith.constant 0 : i32
    %c0_i32_1 = arith.constant 0 : i32
    return %c0_i32, %c0_i32_0 : i32, i32
  }
  func.func @transform_7(%arg0: i32) -> (i32, i32, i32) {
    %c0_i32 = arith.constant 0 : i32
    %c0_i32_0 = arith.constant 0 : i32
    %c0_i32_1 = arith.constant 0 : i32
    return %arg0, %c0_i32, %c0_i32_0 : i32, i32, i32
  }
}

</mosaic_0001>

<llo_original>
// kernel: inconv_forward.1
$region0: #{inconv_forward.1}
  #allocation0 [shape = 'u32[]', space=smem, size = 0x4, offset = 0x4, fixed_abs, tag = 'smem constant byte address 0x4 - core index']
  #allocation1 [shape = 'u32[144,128]{1,0:T(1,128)}', space=vmem, size = 0x12000, scoped, tag = 'internal scratch']
  %s0 = inlined_call_operand.vmem [shape: f32[2,16,16,4], index: 0, kind: input, shape index: {}]
  %s1 = inlined_call_operand.vmem [shape: bf16[36,8], index: 1, kind: input, shape index: {}]
  %s2 = inlined_call_operand.vmem [shape: f32[1,8], index: 2, kind: input, shape index: {}]
  %s3 = inlined_call_operand.vmem [shape: f32[1,8], index: 3, kind: input, shape index: {}]
  %s4 = inlined_call_operand.vmem [shape: bf16[72,128], index: 4, kind: input, shape index: {}]
  %s5 = inlined_call_operand.vmem [shape: f32[1,128], index: 5, kind: input, shape index: {}]
  %s6 = inlined_call_operand.vmem [shape: f32[1,128], index: 6, kind: input, shape index: {}]
  %s7 = inlined_call_operand.vmem [shape: f32[2,144,128], index: 7, kind: output, shape index: {}]
  %s8 = sld [smem:[#allocation0]]
  $region61: #{inconv_forward.1} parent=0
    _
  %s10 = ssub.s32 1, %s8
  %s11 = scalar_select 0, %s10, %s8
  loop: start=0, step=1, limit=4
  $region2: #{inconv_forward.1} parent=0 // loop_pre_header
    _
  $region3: #{inconv_forward.1} parent=0 // loop_header
    %s13 = sphi 0, %s17
    %p14 = scmp.ge.s32.totalorder %s13, 4
    %s23 = sphi 0, %s25
    %s26 = sphi 0, %s23
    %s27 = sphi 0, %s26
    %s43 = sphi 0, %s27
    %s47 = sphi 0, %s47
    %s49 = sphi 0, %s47
    %s50 = sphi 0, %s49
    %s64 = sphi 0, %s50
    %s68 = sphi 0, %s68
    %s70 = sphi 0, %s68
    %s71 = sphi 0, %s70
    %s85 = sphi 0, %s71
    %s89 = sphi 0, %s89
    %s91 = sphi 0, %s89
    %s92 = sphi 0, %s91
    %s106 = sphi 0, %s92
    %s110 = sphi 0, %s110
    %s112 = sphi 0, %s110
    %s113 = sphi 0, %s112
    %s127 = sphi 0, %s113
    %s131 = sphi 0, %s131
    %s133 = sphi 0, %s131
    %s134 = sphi 0, %s133
    %s148 = sphi 0, %s134
    %s152 = sphi 0, %s152
    %s154 = sphi 0, %s152
    %s155 = sphi 0, %s154
    %s169 = sphi 0, %s155
    %s175 = sphi 0, %s177
    %s178 = sphi 0, %s175
    %s179 = sphi 0, %s178
    %s195 = sphi 0, %s179
  $region4: #{inconv_forward.1} parent=0 // loop_header_branch
    %16 = sbr.rel (%p14) target = $region8
  $region5: #{inconv_forward.1} parent=0 // loop_body
    %s18 = ssub.s32 %s13, 1
    %s19 = ssub.s32 %s13, 2
    %s20 = sadd.s32 %s13, 1
    %s21 = ssub.s32 %s13, %s20
    %p22 = scmp.eq.s32.totalorder %s21, 0
    %s24 = sadd.s32 %s23, 1
    %s25 = scalar_select %p22, %s23, %s24
    %p28 = pneg %p22
    %p29 = scmp.eq.s32.totalorder %s13, 1
    %p30 = por %p28, %p29
    %p31 = scmp.ne.s32.totalorder %s23, %s26
    %p32 = scmp.eq.s32.totalorder %s13, 0
    %p33 = por %p31, %p32
    %p34 = scmp.ne.s32.totalorder %s23, %s26
    %p35 = scmp.eq.s32.totalorder %s18, 1
    %p36 = por %p34, %p35
    %p37 = scmp.ne.s32.totalorder %s26, %s27
    %p38 = scmp.eq.s32.totalorder %s18, 0
    %p39 = por %p37, %p38
    %p40 = scmp.ne.s32.totalorder %s26, %s27
    %p41 = scmp.eq.s32.totalorder %s19, 1
    %p42 = por %p40, %p41
    %p44 = scmp.ne.s32.totalorder %s27, %s43
    %p45 = scmp.eq.s32.totalorder %s19, 0
    %p46 = por %p44, %p45
    %s48 = sadd.s32 %s47, 1
    %p51 = scmp.eq.s32.totalorder %s13, 1
    %p52 = scmp.ne.s32.totalorder %s47, %s49
    %p53 = scmp.eq.s32.totalorder %s13, 0
    %p54 = por %p52, %p53
    %p55 = scmp.ne.s32.totalorder %s47, %s49
    %p56 = scmp.eq.s32.totalorder %s18, 1
    %p57 = por %p55, %p56
    %p58 = scmp.ne.s32.totalorder %s49, %s50
    %p59 = scmp.eq.s32.totalorder %s18, 0
    %p60 = por %p58, %p59
    %p61 = scmp.ne.s32.totalorder %s49, %s50
    %p62 = scmp.eq.s32.totalorder %s19, 1
    %p63 = por %p61, %p62
    %p65 = scmp.ne.s32.totalorder %s50, %s64
    %p66 = scmp.eq.s32.totalorder %s19, 0
    %p67 = por %p65, %p66
    %s69 = sadd.s32 %s68, 1
    %p72 = scmp.eq.s32.totalorder %s13, 1
    %p73 = scmp.ne.s32.totalorder %s68, %s70
    %p74 = scmp.eq.s32.totalorder %s13, 0
    %p75 = por %p73, %p74
    %p76 = scmp.ne.s32.totalorder %s68, %s70
    %p77 = scmp.eq.s32.totalorder %s18, 1
    %p78 = por %p76, %p77
    %p79 = scmp.ne.s32.totalorder %s70, %s71
    %p80 = scmp.eq.s32.totalorder %s18, 0
    %p81 = por %p79, %p80
    %p82 = scmp.ne.s32.totalorder %s70, %s71
    %p83 = scmp.eq.s32.totalorder %s19, 1
    %p84 = por %p82, %p83
    %p86 = scmp.ne.s32.totalorder %s71, %s85
    %p87 = scmp.eq.s32.totalorder %s19, 0
    %p88 = por %p86, %p87
    %s90 = sadd.s32 %s89, 1
    %p93 = scmp.eq.s32.totalorder %s13, 1
    %p94 = scmp.ne.s32.totalorder %s89, %s91
    %p95 = scmp.eq.s32.totalorder %s13, 0
    %p96 = por %p94, %p95
    %p97 = scmp.ne.s32.totalorder %s89, %s91
    %p98 = scmp.eq.s32.totalorder %s18, 1
    %p99 = por %p97, %p98
    %p100 = scmp.ne.s32.totalorder %s91, %s92
    %p101 = scmp.eq.s32.totalorder %s18, 0
    %p102 = por %p100, %p101
    %p103 = scmp.ne.s32.totalorder %s91, %s92
    %p104 = scmp.eq.s32.totalorder %s19, 1
    %p105 = por %p103, %p104
    %p107 = scmp.ne.s32.totalorder %s92, %s106
    %p108 = scmp.eq.s32.totalorder %s19, 0
    %p109 = por %p107, %p108
    %s111 = sadd.s32 %s110, 1
    %p114 = scmp.eq.s32.totalorder %s13, 1
    %p115 = scmp.ne.s32.totalorder %s110, %s112
    %p116 = scmp.eq.s32.totalorder %s13, 0
    %p117 = por %p115, %p116
    %p118 = scmp.ne.s32.totalorder %s110, %s112
    %p119 = scmp.eq.s32.totalorder %s18, 1
    %p120 = por %p118, %p119
    %p121 = scmp.ne.s32.totalorder %s112, %s113
    %p122 = scmp.eq.s32.totalorder %s18, 0
    %p123 = por %p121, %p122
    %p124 = scmp.ne.s32.totalorder %s112, %s113
    %p125 = scmp.eq.s32.totalorder %s19, 1
    %p126 = por %p124, %p125
    %p128 = scmp.ne.s32.totalorder %s113, %s127
    %p129 = scmp.eq.s32.totalorder %s19, 0
    %p130 = por %p128, %p129
    %s132 = sadd.s32 %s131, 1
    %p135 = scmp.eq.s32.totalorder %s13, 1
    %p136 = scmp.ne.s32.totalorder %s131, %s133
    %p137 = scmp.eq.s32.totalorder %s13, 0
    %p138 = por %p136, %p137
    %p139 = scmp.ne.s32.totalorder %s131, %s133
    %p140 = scmp.eq.s32.totalorder %s18, 1
    %p141 = por %p139, %p140
    %p142 = scmp.ne.s32.totalorder %s133, %s134
    %p143 = scmp.eq.s32.totalorder %s18, 0
    %p144 = por %p142, %p143
    %p145 = scmp.ne.s32.totalorder %s133, %s134
    %p146 = scmp.eq.s32.totalorder %s19, 1
    %p147 = por %p145, %p146
    %p149 = scmp.ne.s32.totalorder %s134, %s148
    %p150 = scmp.eq.s32.totalorder %s19, 0
    %p151 = por %p149, %p150
    %s153 = sadd.s32 %s152, 1
    %p156 = scmp.eq.s32.totalorder %s13, 1
    %p157 = scmp.ne.s32.totalorder %s152, %s154
    %p158 = scmp.eq.s32.totalorder %s13, 0
    %p159 = por %p157, %p158
    %p160 = scmp.ne.s32.totalorder %s152, %s154
    %p161 = scmp.eq.s32.totalorder %s18, 1
    %p162 = por %p160, %p161
    %p163 = scmp.ne.s32.totalorder %s154, %s155
    %p164 = scmp.eq.s32.totalorder %s18, 0
    %p165 = por %p163, %p164
    %p166 = scmp.ne.s32.totalorder %s154, %s155
    %p167 = scmp.eq.s32.totalorder %s19, 1
    %p168 = por %p166, %p167
    %p170 = scmp.ne.s32.totalorder %s155, %s169
    %p171 = scmp.eq.s32.totalorder %s19, 0
    %p172 = por %p170, %p171
    %s173 = ssub.s32 %s13, %s20
    %p174 = scmp.eq.s32.totalorder %s173, 0
    %s176 = sadd.s32 %s175, 1
    %s177 = scalar_select %p174, %s175, %s176
    %p180 = pneg %p174
    %p181 = scmp.eq.s32.totalorder %s13, 1
    %p182 = por %p180, %p181
    %p183 = scmp.ne.s32.totalorder %s175, %s178
    %p184 = scmp.eq.s32.totalorder %s13, 0
    %p185 = por %p183, %p184
    %p186 = scmp.ne.s32.totalorder %s175, %s178
    %p187 = scmp.eq.s32.totalorder %s18, 1
    %p188 = por %p186, %p187
    %p189 = scmp.ne.s32.totalorder %s178, %s179
    %p190 = scmp.eq.s32.totalorder %s18, 0
    %p191 = por %p189, %p190
    %p192 = scmp.ne.s32.totalorder %s178, %s179
    %p193 = scmp.eq.s32.totalorder %s19, 1
    %p194 = por %p192, %p193
    %p196 = scmp.ne.s32.totalorder %s179, %s195
    %p197 = scmp.eq.s32.totalorder %s19, 0
    %p198 = por %p196, %p197
    %p199 = scmp.le.s32.totalorder 1, %s13
    %p200 = scmp.lt.s32.totalorder %s13, 3
    %p201 = pnand %p199, %p200
    %p202 = pneg %p201
    // Predicated region
    $region9: #{inconv_forward.1} parent=5 // pred_check
      _
    $region10: #{inconv_forward.1} parent=5 // pred_check_branch
      %204 = sbr.rel (%p201) target = $region12
    $region11: #{inconv_forward.1} parent=5 // pred_region
      %s205 = ssub.s32 %s13, 1
      // Predicated region
      $region13: #{inconv_forward.1} parent=11 // pred_check
        %p206 = pneg %p60
      $region14: #{inconv_forward.1} parent=11 // pred_check_branch
        %208 = sbr.rel (%p206) target = $region16
      $region15: #{inconv_forward.1} parent=11 // pred_region
        _
      $region16: #{inconv_forward.1} parent=11 // pred_fallthru
        _
      // Predicated region
      $region17: #{inconv_forward.1} parent=11 // pred_check
        %p209 = pneg %p81
      $region18: #{inconv_forward.1} parent=11 // pred_check_branch
        %211 = sbr.rel (%p209) target = $region20
      $region19: #{inconv_forward.1} parent=11 // pred_region
        _
      $region20: #{inconv_forward.1} parent=11 // pred_fallthru
        _
      // Predicated region
      $region21: #{inconv_forward.1} parent=11 // pred_check
        %p212 = pneg %p102
      $region22: #{inconv_forward.1} parent=11 // pred_check_branch
        %214 = sbr.rel (%p212) target = $region24
      $region23: #{inconv_forward.1} parent=11 // pred_region
        _
      $region24: #{inconv_forward.1} parent=11 // pred_fallthru
        _
      // Predicated region
      $region25: #{inconv_forward.1} parent=11 // pred_check
        %p215 = pneg %p123
      $region26: #{inconv_forward.1} parent=11 // pred_check_branch
        %217 = sbr.rel (%p215) target = $region28
      $region27: #{inconv_forward.1} parent=11 // pred_region
        _
      $region28: #{inconv_forward.1} parent=11 // pred_fallthru
        _
      // Predicated region
      $region29: #{inconv_forward.1} parent=11 // pred_check
        %p218 = pneg %p144
      $region30: #{inconv_forward.1} parent=11 // pred_check_branch
        %220 = sbr.rel (%p218) target = $region32
      $region31: #{inconv_forward.1} parent=11 // pred_region
        _
      $region32: #{inconv_forward.1} parent=11 // pred_fallthru
        _
      // Predicated region
      $region33: #{inconv_forward.1} parent=11 // pred_check
        %p221 = pneg %p165
      $region34: #{inconv_forward.1} parent=11 // pred_check_branch
        %223 = sbr.rel (%p221) target = $region36
      $region35: #{inconv_forward.1} parent=11 // pred_region
        _
      $region36: #{inconv_forward.1} parent=11 // pred_fallthru
        _
    $region12: #{inconv_forward.1} parent=5 // pred_fallthru
      _
    %p224 = scmp.lt.s32.totalorder %s13, 2
    // Predicated region
    $region37: #{inconv_forward.1} parent=5 // pred_check
      %p225 = pneg %p224
    $region38: #{inconv_forward.1} parent=5 // pred_check_branch
      %227 = sbr.rel (%p225) target = $region40
    $region39: #{inconv_forward.1} parent=5 // pred_region
      // Predicated region
      $region41: #{inconv_forward.1} parent=39 // pred_check
        %p228 = pneg %p33
      $region42: #{inconv_forward.1} parent=39 // pred_check_branch
        %230 = sbr.rel (%p228) target = $region44
      $region43: #{inconv_forward.1} parent=39 // pred_region
        %p231 = scmp.lt.s32.totalorder %s13, 1
        %s232 = scalar_select %p231, %s13, 1
        %s233 = smul.addr %s232, 32
        %s234 = smul.addr %s233, 8
        %s235 = scalar_lea.vmem %s0, %s234
      $region44: #{inconv_forward.1} parent=39 // pred_fallthru
        _
    $region40: #{inconv_forward.1} parent=5 // pred_fallthru
      _
    %p236 = scmp.le.s32.totalorder 1, %s13
    %p237 = scmp.lt.s32.totalorder %s13, 3
    %p238 = pnand %p236, %p237
    %p239 = pneg %p238
    // Predicated region
    $region45: #{inconv_forward.1} parent=5 // pred_check
      _
    $region46: #{inconv_forward.1} parent=5 // pred_check_branch
      %241 = sbr.rel (%p238) target = $region48
    $region47: #{inconv_forward.1} parent=5 // pred_region
      %s242 = ssub.s32 %s13, 1
      %p243 = scmp.lt.s32.totalorder %s18, 1
      %s244 = scalar_select %p243, %s18, 1
      %s245 = smul.addr %s244, 32
      %s246 = smul.addr %s245, 8
      %s247 = scalar_lea.vmem %s0, %s246
      %p248 = pneg %p39
      %p249 = pneg %p36
      %p250 = pneg %p60
      %p251 = pneg %p57
      %p252 = pneg %p81
      %p253 = pneg %p78
      %p254 = pneg %p102
      %p255 = pneg %p99
      %p256 = pneg %p123
      %p257 = pneg %p120
      %p258 = pneg %p144
      %p259 = pneg %p141
      %p260 = pneg %p165
      %p261 = pneg %p162
      %p262 = pneg %p191
      %p263 = pneg %p188
      %p264 = scmp.lt.s32.totalorder %s18, 1
      %s265 = scalar_select %p264, %s18, 1
      %s266 = smul.addr %s265, 18
      %s267 = smul.addr %s266, 8
      %s268 = scalar_lea.vmem %s7, %s267
      %p269 = scmp.lt.s32.totalorder %s18, 1
      %s270 = scalar_select %p269, %s18, 1
      %s271 = smul.addr %s270, 32
      %s272 = smul.addr %s271, 8
      %s273 = scalar_lea.vmem %s0, %s272
      %p274 = scmp.lt.s32.totalorder %s18, 1
      %s275 = scalar_select %p274, %s18, 1
      %s276 = smul.addr %s275, 18
      %s277 = smul.addr %s276, 8
      %s278 = scalar_lea.vmem %s7, %s277
      %v280 = vld [vmem:[%s273] sm:$0xff]
      %v281 = vld [vmem:[%s273 + $0x8] sm:$0x3f]
      %v282 = vld [vmem:[%s273 + $0x10] sm:$0xff]
      %v283 = vld [vmem:[%s273 + $0x18] sm:$0x3f]
      %v284 = vld [vmem:[%s273 + $0x20] sm:$0xff]
      %v285 = vld [vmem:[%s273 + $0x28] sm:$0x3f]
      %v286 = vld [vmem:[%s273 + $0x30] sm:$0xff]
      %v287 = vld [vmem:[%s273 + $0x38] sm:$0x3f]
      %v288 = vld [vmem:[%s273 + $0x40] sm:$0xff]
      %v289 = vld [vmem:[%s273 + $0x48] sm:$0x3f]
      %v290 = vld [vmem:[%s273 + $0x50] sm:$0xff]
      %v291 = vld [vmem:[%s273 + $0x58] sm:$0x3f]
      %v292 = vld [vmem:[%s273 + $0x60] sm:$0xff]
      %v293 = vld [vmem:[%s273 + $0x68] sm:$0x3f]
      %v294 = vld [vmem:[%s273 + $0x70] sm:$0xff]
      %v295 = vld [vmem:[%s273 + $0x78] sm:$0x3f]
      %v296 = vld [vmem:[%s273 + $0x80] sm:$0xff]
      %v297 = vld [vmem:[%s273 + $0x88] sm:$0x3f]
      %v298 = vld [vmem:[%s273 + $0x90] sm:$0xff]
      %v299 = vld [vmem:[%s273 + $0x98] sm:$0x3f]
      %v300 = vld [vmem:[%s273 + $0xa0] sm:$0xff]
      %v301 = vld [vmem:[%s273 + $0xa8] sm:$0x3f]
      %v302 = vld [vmem:[%s273 + $0xb0] sm:$0xff]
      %v303 = vld [vmem:[%s273 + $0xb8] sm:$0x3f]
      %v304 = vld [vmem:[%s273 + $0xc0] sm:$0xff]
      %v305 = vld [vmem:[%s273 + $0xc8] sm:$0x3f]
      %v306 = vld [vmem:[%s273 + $0xd0] sm:$0xff]
      %v307 = vld [vmem:[%s273 + $0xd8] sm:$0x3f]
      %v336 = vcombine.high %v280, %v280
      %v338 = vunpack.c.l.s4 1983009808
      %v339 = vunpack.c.0.s8 %v338
      %v340 = vlaneseq
      %v341 = vshrl.u32 %v340, 7
      %v342 = vsub.s32 %v339, %v341
      %v343 = vrot.slane %v280, %v342
      %v345 = vunpack.c.l.s4 1983009808
      %v346 = vunpack.c.0.s8 %v345
      %v347 = vlaneseq
      %v348 = vshrl.u32 %v347, 7
      %v349 = vsub.s32 %v346, %v348
      %v350 = vrot.slane %v336, %v349
      %v351 = vcombine.high %v343, %v343
      %v352 = vcombine.high %v350, %v350
      %v353 = vcombine.high %v281, %v281
      %v355 = vunpack.c.l.s4 1983009808
      %v356 = vunpack.c.0.s8 %v355
      %v357 = vlaneseq
      %v358 = vshrl.u32 %v357, 7
      %v359 = vsub.s32 %v356, %v358
      %v360 = vrot.slane %v281, %v359
      %v362 = vunpack.c.l.s4 1983009808
      %v363 = vunpack.c.0.s8 %v362
      %v364 = vlaneseq
      %v365 = vshrl.u32 %v364, 7
      %v366 = vsub.s32 %v363, %v365
      %v367 = vrot.slane %v353, %v366
      %v368 = vcombine.high %v360, %v360
      %v369 = vcombine.high %v282, %v282
      %v371 = vunpack.c.l.s4 1983009808
      %v372 = vunpack.c.0.s8 %v371
      %v373 = vlaneseq
      %v374 = vshrl.u32 %v373, 7
      %v375 = vsub.s32 %v372, %v374
      %v376 = vrot.slane %v282, %v375
      %v378 = vunpack.c.l.s4 1983009808
      %v379 = vunpack.c.0.s8 %v378
      %v380 = vlaneseq
      %v381 = vshrl.u32 %v380, 7
      %v382 = vsub.s32 %v379, %v381
      %v383 = vrot.slane %v369, %v382
      %v384 = vcombine.high %v376, %v376
      %v385 = vcombine.high %v383, %v383
      %v386 = vcombine.high %v283, %v283
      %v388 = vunpack.c.l.s4 1983009808
      %v389 = vunpack.c.0.s8 %v388
      %v390 = vlaneseq
      %v391 = vshrl.u32 %v390, 7
      %v392 = vsub.s32 %v389, %v391
      %v393 = vrot.slane %v283, %v392
      %v395 = vunpack.c.l.s4 1983009808
      %v396 = vunpack.c.0.s8 %v395
      %v397 = vlaneseq
      %v398 = vshrl.u32 %v397, 7
      %v399 = vsub.s32 %v396, %v398
      %v400 = vrot.slane %v386, %v399
      %v401 = vcombine.high %v393, %v393
      %v402 = vcombine.high %v284, %v284
      %v404 = vunpack.c.l.s4 1983009808
      %v405 = vunpack.c.0.s8 %v404
      %v406 = vlaneseq
      %v407 = vshrl.u32 %v406, 7
      %v408 = vsub.s32 %v405, %v407
      %v409 = vrot.slane %v284, %v408
      %v411 = vunpack.c.l.s4 1983009808
      %v412 = vunpack.c.0.s8 %v411
      %v413 = vlaneseq
      %v414 = vshrl.u32 %v413, 7
      %v415 = vsub.s32 %v412, %v414
      %v416 = vrot.slane %v402, %v415
      %v417 = vcombine.high %v409, %v409
      %v418 = vcombine.high %v416, %v416
      %v419 = vcombine.high %v285, %v285
      %v421 = vunpack.c.l.s4 1983009808
      %v422 = vunpack.c.0.s8 %v421
      %v423 = vlaneseq
      %v424 = vshrl.u32 %v423, 7
      %v425 = vsub.s32 %v422, %v424
      %v426 = vrot.slane %v285, %v425
      %v428 = vunpack.c.l.s4 1983009808
      %v429 = vunpack.c.0.s8 %v428
      %v430 = vlaneseq
      %v431 = vshrl.u32 %v430, 7
      %v432 = vsub.s32 %v429, %v431
      %v433 = vrot.slane %v419, %v432
      %v434 = vcombine.high %v426, %v426
      %v435 = vcombine.high %v286, %v286
      %v437 = vunpack.c.l.s4 1983009808
      %v438 = vunpack.c.0.s8 %v437
      %v439 = vlaneseq
      %v440 = vshrl.u32 %v439, 7
      %v441 = vsub.s32 %v438, %v440
      %v442 = vrot.slane %v286, %v441
      %v444 = vunpack.c.l.s4 1983009808
      %v445 = vunpack.c.0.s8 %v444
      %v446 = vlaneseq
      %v447 = vshrl.u32 %v446, 7
      %v448 = vsub.s32 %v445, %v447
      %v449 = vrot.slane %v435, %v448
      %v450 = vcombine.high %v442, %v442
      %v451 = vcombine.high %v449, %v449
      %v452 = vcombine.high %v287, %v287
      %v454 = vunpack.c.l.s4 1983009808
      %v455 = vunpack.c.0.s8 %v454
      %v456 = vlaneseq
      %v457 = vshrl.u32 %v456, 7
      %v458 = vsub.s32 %v455, %v457
      %v459 = vrot.slane %v287, %v458
      %v461 = vunpack.c.l.s4 1983009808
      %v462 = vunpack.c.0.s8 %v461
      %v463 = vlaneseq
      %v464 = vshrl.u32 %v463, 7
      %v465 = vsub.s32 %v462, %v464
      %v466 = vrot.slane %v452, %v465
      %v467 = vcombine.high %v459, %v459
      %v468 = vcombine.high %v288, %v288
      %v470 = vunpack.c.l.s4 1983009808
      %v471 = vunpack.c.0.s8 %v470
      %v472 = vlaneseq
      %v473 = vshrl.u32 %v472, 7
      %v474 = vsub.s32 %v471, %v473
      %v475 = vrot.slane %v288, %v474
      %v477 = vunpack.c.l.s4 1983009808
      %v478 = vunpack.c.0.s8 %v477
      %v479 = vlaneseq
      %v480 = vshrl.u32 %v479, 7
      %v481 = vsub.s32 %v478, %v480
      %v482 = vrot.slane %v468, %v481
      %v483 = vcombine.high %v475, %v475
      %v484 = vcombine.high %v482, %v482
      %v485 = vcombine.high %v289, %v289
      %v487 = vunpack.c.l.s4 1983009808
      %v488 = vunpack.c.0.s8 %v487
      %v489 = vlaneseq
      %v490 = vshrl.u32 %v489, 7
      %v491 = vsub.s32 %v488, %v490
      %v492 = vrot.slane %v289, %v491
      %v494 = vunpack.c.l.s4 1983009808
      %v495 = vunpack.c.0.s8 %v494
      %v496 = vlaneseq
      %v497 = vshrl.u32 %v496, 7
      %v498 = vsub.s32 %v495, %v497
      %v499 = vrot.slane %v485, %v498
      %v500 = vcombine.high %v492, %v492
      %v501 = vcombine.high %v290, %v290
      %v503 = vunpack.c.l.s4 1983009808
      %v504 = vunpack.c.0.s8 %v503
      %v505 = vlaneseq
      %v506 = vshrl.u32 %v505, 7
      %v507 = vsub.s32 %v504, %v506
      %v508 = vrot.slane %v290, %v507
      %v510 = vunpack.c.l.s4 1983009808
      %v511 = vunpack.c.0.s8 %v510
      %v512 = vlaneseq
      %v513 = vshrl.u32 %v512, 7
      %v514 = vsub.s32 %v511, %v513
      %v515 = vrot.slane %v501, %v514
      %v516 = vcombine.high %v508, %v508
      %v517 = vcombine.high %v515, %v515
      %v518 = vcombine.high %v291, %v291
      %v520 = vunpack.c.l.s4 1983009808
      %v521 = vunpack.c.0.s8 %v520
      %v522 = vlaneseq
      %v523 = vshrl.u32 %v522, 7
      %v524 = vsub.s32 %v521, %v523
      %v525 = vrot.slane %v291, %v524
      %v527 = vunpack.c.l.s4 1983009808
      %v528 = vunpack.c.0.s8 %v527
      %v529 = vlaneseq
      %v530 = vshrl.u32 %v529, 7
      %v531 = vsub.s32 %v528, %v530
      %v532 = vrot.slane %v518, %v531
      %v533 = vcombine.high %v525, %v525
      %v534 = vcombine.high %v292, %v292
      %v536 = vunpack.c.l.s4 1983009808
      %v537 = vunpack.c.0.s8 %v536
      %v538 = vlaneseq
      %v539 = vshrl.u32 %v538, 7
      %v540 = vsub.s32 %v537, %v539
      %v541 = vrot.slane %v292, %v540
      %v543 = vunpack.c.l.s4 1983009808
      %v544 = vunpack.c.0.s8 %v543
      %v545 = vlaneseq
      %v546 = vshrl.u32 %v545, 7
      %v547 = vsub.s32 %v544, %v546
      %v548 = vrot.slane %v534, %v547
      %v549 = vcombine.high %v541, %v541
      %v550 = vcombine.high %v548, %v548
      %v551 = vcombine.high %v293, %v293
      %v553 = vunpack.c.l.s4 1983009808
      %v554 = vunpack.c.0.s8 %v553
      %v555 = vlaneseq
      %v556 = vshrl.u32 %v555, 7
      %v557 = vsub.s32 %v554, %v556
      %v558 = vrot.slane %v293, %v557
      %v560 = vunpack.c.l.s4 1983009808
      %v561 = vunpack.c.0.s8 %v560
      %v562 = vlaneseq
      %v563 = vshrl.u32 %v562, 7
      %v564 = vsub.s32 %v561, %v563
      %v565 = vrot.slane %v551, %v564
      %v566 = vcombine.high %v558, %v558
      %v567 = vcombine.high %v294, %v294
      %v569 = vunpack.c.l.s4 1983009808
      %v570 = vunpack.c.0.s8 %v569
      %v571 = vlaneseq
      %v572 = vshrl.u32 %v571, 7
      %v573 = vsub.s32 %v570, %v572
      %v574 = vrot.slane %v294, %v573
      %v576 = vunpack.c.l.s4 1983009808
      %v577 = vunpack.c.0.s8 %v576
      %v578 = vlaneseq
      %v579 = vshrl.u32 %v578, 7
      %v580 = vsub.s32 %v577, %v579
      %v581 = vrot.slane %v567, %v580
      %v582 = vcombine.high %v574, %v574
      %v583 = vcombine.high %v581, %v581
      %v584 = vcombine.high %v295, %v295
      %v586 = vunpack.c.l.s4 1983009808
      %v587 = vunpack.c.0.s8 %v586
      %v588 = vlaneseq
      %v589 = vshrl.u32 %v588, 7
      %v590 = vsub.s32 %v587, %v589
      %v591 = vrot.slane %v295, %v590
      %v593 = vunpack.c.l.s4 1983009808
      %v594 = vunpack.c.0.s8 %v593
      %v595 = vlaneseq
      %v596 = vshrl.u32 %v595, 7
      %v597 = vsub.s32 %v594, %v596
      %v598 = vrot.slane %v584, %v597
      %v599 = vcombine.high %v591, %v591
      %v600 = vcombine.high %v296, %v296
      %v602 = vunpack.c.l.s4 1983009808
      %v603 = vunpack.c.0.s8 %v602
      %v604 = vlaneseq
      %v605 = vshrl.u32 %v604, 7
      %v606 = vsub.s32 %v603, %v605
      %v607 = vrot.slane %v296, %v606
      %v609 = vunpack.c.l.s4 1983009808
      %v610 = vunpack.c.0.s8 %v609
      %v611 = vlaneseq
      %v612 = vshrl.u32 %v611, 7
      %v613 = vsub.s32 %v610, %v612
      %v614 = vrot.slane %v600, %v613
      %v615 = vcombine.high %v607, %v607
      %v616 = vcombine.high %v614, %v614
      %v617 = vcombine.high %v297, %v297
      %v619 = vunpack.c.l.s4 1983009808
      %v620 = vunpack.c.0.s8 %v619
      %v621 = vlaneseq
      %v622 = vshrl.u32 %v621, 7
      %v623 = vsub.s32 %v620, %v622
      %v624 = vrot.slane %v297, %v623
      %v626 = vunpack.c.l.s4 1983009808
      %v627 = vunpack.c.0.s8 %v626
      %v628 = vlaneseq
      %v629 = vshrl.u32 %v628, 7
      %v630 = vsub.s32 %v627, %v629
      %v631 = vrot.slane %v617, %v630
      %v632 = vcombine.high %v624, %v624
      %v633 = vcombine.high %v298, %v298
      %v635 = vunpack.c.l.s4 1983009808
      %v636 = vunpack.c.0.s8 %v635
      %v637 = vlaneseq
      %v638 = vshrl.u32 %v637, 7
      %v639 = vsub.s32 %v636, %v638
      %v640 = vrot.slane %v298, %v639
      %v642 = vunpack.c.l.s4 1983009808
      %v643 = vunpack.c.0.s8 %v642
      %v644 = vlaneseq
      %v645 = vshrl.u32 %v644, 7
      %v646 = vsub.s32 %v643, %v645
      %v647 = vrot.slane %v633, %v646
      %v648 = vcombine.high %v640, %v640
      %v649 = vcombine.high %v647, %v647
      %v650 = vcombine.high %v299, %v299
      %v652 = vunpack.c.l.s4 1983009808
      %v653 = vunpack.c.0.s8 %v652
      %v654 = vlaneseq
      %v655 = vshrl.u32 %v654, 7
      %v656 = vsub.s32 %v653, %v655
      %v657 = vrot.slane %v299, %v656
      %v659 = vunpack.c.l.s4 1983009808
      %v660 = vunpack.c.0.s8 %v659
      %v661 = vlaneseq
      %v662 = vshrl.u32 %v661, 7
      %v663 = vsub.s32 %v660, %v662
      %v664 = vrot.slane %v650, %v663
      %v665 = vcombine.high %v657, %v657
      %v666 = vcombine.high %v300, %v300
      %v668 = vunpack.c.l.s4 1983009808
      %v669 = vunpack.c.0.s8 %v668
      %v670 = vlaneseq
      %v671 = vshrl.u32 %v670, 7
      %v672 = vsub.s32 %v669, %v671
      %v673 = vrot.slane %v300, %v672
      %v675 = vunpack.c.l.s4 1983009808
      %v676 = vunpack.c.0.s8 %v675
      %v677 = vlaneseq
      %v678 = vshrl.u32 %v677, 7
      %v679 = vsub.s32 %v676, %v678
      %v680 = vrot.slane %v666, %v679
      %v681 = vcombine.high %v673, %v673
      %v682 = vcombine.high %v680, %v680
      %v683 = vcombine.high %v301, %v301
      %v685 = vunpack.c.l.s4 1983009808
      %v686 = vunpack.c.0.s8 %v685
      %v687 = vlaneseq
      %v688 = vshrl.u32 %v687, 7
      %v689 = vsub.s32 %v686, %v688
      %v690 = vrot.slane %v301, %v689
      %v692 = vunpack.c.l.s4 1983009808
      %v693 = vunpack.c.0.s8 %v692
      %v694 = vlaneseq
      %v695 = vshrl.u32 %v694, 7
      %v696 = vsub.s32 %v693, %v695
      %v697 = vrot.slane %v683, %v696
      %v698 = vcombine.high %v690, %v690
      %v699 = vcombine.high %v302, %v302
      %v701 = vunpack.c.l.s4 1983009808
      %v702 = vunpack.c.0.s8 %v701
      %v703 = vlaneseq
      %v704 = vshrl.u32 %v703, 7
      %v705 = vsub.s32 %v702, %v704
      %v706 = vrot.slane %v302, %v705
      %v708 = vunpack.c.l.s4 1983009808
      %v709 = vunpack.c.0.s8 %v708
      %v710 = vlaneseq
      %v711 = vshrl.u32 %v710, 7
      %v712 = vsub.s32 %v709, %v711
      %v713 = vrot.slane %v699, %v712
      %v714 = vcombine.high %v706, %v706
      %v715 = vcombine.high %v713, %v713
      %v716 = vcombine.high %v303, %v303
      %v718 = vunpack.c.l.s4 1983009808
      %v719 = vunpack.c.0.s8 %v718
      %v720 = vlaneseq
      %v721 = vshrl.u32 %v720, 7
      %v722 = vsub.s32 %v719, %v721
      %v723 = vrot.slane %v303, %v722
      %v725 = vunpack.c.l.s4 1983009808
      %v726 = vunpack.c.0.s8 %v725
      %v727 = vlaneseq
      %v728 = vshrl.u32 %v727, 7
      %v729 = vsub.s32 %v726, %v728
      %v730 = vrot.slane %v716, %v729
      %v731 = vcombine.high %v723, %v723
      %v732 = vcombine.high %v304, %v304
      %v734 = vunpack.c.l.s4 1983009808
      %v735 = vunpack.c.0.s8 %v734
      %v736 = vlaneseq
      %v737 = vshrl.u32 %v736, 7
      %v738 = vsub.s32 %v735, %v737
      %v739 = vrot.slane %v304, %v738
      %v741 = vunpack.c.l.s4 1983009808
      %v742 = vunpack.c.0.s8 %v741
      %v743 = vlaneseq
      %v744 = vshrl.u32 %v743, 7
      %v745 = vsub.s32 %v742, %v744
      %v746 = vrot.slane %v732, %v745
      %v747 = vcombine.high %v739, %v739
      %v748 = vcombine.high %v746, %v746
      %v749 = vcombine.high %v305, %v305
      %v751 = vunpack.c.l.s4 1983009808
      %v752 = vunpack.c.0.s8 %v751
      %v753 = vlaneseq
      %v754 = vshrl.u32 %v753, 7
      %v755 = vsub.s32 %v752, %v754
      %v756 = vrot.slane %v305, %v755
      %v758 = vunpack.c.l.s4 1983009808
      %v759 = vunpack.c.0.s8 %v758
      %v760 = vlaneseq
      %v761 = vshrl.u32 %v760, 7
      %v762 = vsub.s32 %v759, %v761
      %v763 = vrot.slane %v749, %v762
      %v764 = vcombine.high %v756, %v756
      %v765 = vcombine.high %v306, %v306
      %v767 = vunpack.c.l.s4 1983009808
      %v768 = vunpack.c.0.s8 %v767
      %v769 = vlaneseq
      %v770 = vshrl.u32 %v769, 7
      %v771 = vsub.s32 %v768, %v770
      %v772 = vrot.slane %v306, %v771
      %v774 = vunpack.c.l.s4 1983009808
      %v775 = vunpack.c.0.s8 %v774
      %v776 = vlaneseq
      %v777 = vshrl.u32 %v776, 7
      %v778 = vsub.s32 %v775, %v777
      %v779 = vrot.slane %v765, %v778
      %v780 = vcombine.high %v772, %v772
      %v781 = vcombine.high %v779, %v779
      %v782 = vcombine.high %v307, %v307
      %v784 = vunpack.c.l.s4 1983009808
      %v785 = vunpack.c.0.s8 %v784
      %v786 = vlaneseq
      %v787 = vshrl.u32 %v786, 7
      %v788 = vsub.s32 %v785, %v787
      %v789 = vrot.slane %v307, %v788
      %v791 = vunpack.c.l.s4 1983009808
      %v792 = vunpack.c.0.s8 %v791
      %v793 = vlaneseq
      %v794 = vshrl.u32 %v793, 7
      %v795 = vsub.s32 %v792, %v794
      %v796 = vrot.slane %v782, %v795
      %v797 = vcombine.high %v789, %v789
      %v798 = vld [vmem:[%s273 + $0x1] sm:$0xff]
      %v799 = vld [vmem:[%s273 + $0x9] sm:$0x3f]
      %v800 = vld [vmem:[%s273 + $0x11] sm:$0xff]
      %v801 = vld [vmem:[%s273 + $0x19] sm:$0x3f]
      %v802 = vld [vmem:[%s273 + $0x21] sm:$0xff]
      %v803 = vld [vmem:[%s273 + $0x29] sm:$0x3f]
      %v804 = vld [vmem:[%s273 + $0x31] sm:$0xff]
      %v805 = vld [vmem:[%s273 + $0x39] sm:$0x3f]
      %v806 = vld [vmem:[%s273 + $0x41] sm:$0xff]
      %v807 = vld [vmem:[%s273 + $0x49] sm:$0x3f]
      %v808 = vld [vmem:[%s273 + $0x51] sm:$0xff]
      %v809 = vld [vmem:[%s273 + $0x59] sm:$0x3f]
      %v810 = vld [vmem:[%s273 + $0x61] sm:$0xff]
      %v811 = vld [vmem:[%s273 + $0x69] sm:$0x3f]
      %v812 = vld [vmem:[%s273 + $0x71] sm:$0xff]
      %v813 = vld [vmem:[%s273 + $0x79] sm:$0x3f]
      %v814 = vld [vmem:[%s273 + $0x81] sm:$0xff]
      %v815 = vld [vmem:[%s273 + $0x89] sm:$0x3f]
      %v816 = vld [vmem:[%s273 + $0x91] sm:$0xff]
      %v817 = vld [vmem:[%s273 + $0x99] sm:$0x3f]
      %v818 = vld [vmem:[%s273 + $0xa1] sm:$0xff]
      %v819 = vld [vmem:[%s273 + $0xa9] sm:$0x3f]
      %v820 = vld [vmem:[%s273 + $0xb1] sm:$0xff]
      %v821 = vld [vmem:[%s273 + $0xb9] sm:$0x3f]
      %v822 = vld [vmem:[%s273 + $0xc1] sm:$0xff]
      %v823 = vld [vmem:[%s273 + $0xc9] sm:$0x3f]
      %v824 = vld [vmem:[%s273 + $0xd1] sm:$0xff]
      %v825 = vld [vmem:[%s273 + $0xd9] sm:$0x3f]
      %v854 = vcombine.high %v798, %v798
      %v856 = vunpack.c.l.s4 1983009808
      %v857 = vunpack.c.0.s8 %v856
      %v858 = vlaneseq
      %v859 = vshrl.u32 %v858, 7
      %v860 = vsub.s32 %v857, %v859
      %v861 = vrot.slane %v798, %v860
      %v863 = vunpack.c.l.s4 1983009808
      %v864 = vunpack.c.0.s8 %v863
      %v865 = vlaneseq
      %v866 = vshrl.u32 %v865, 7
      %v867 = vsub.s32 %v864, %v866
      %v868 = vrot.slane %v854, %v867
      %v869 = vcombine.high %v861, %v861
      %v870 = vcombine.high %v868, %v868
      %v871 = vcombine.high %v799, %v799
      %v873 = vunpack.c.l.s4 1983009808
      %v874 = vunpack.c.0.s8 %v873
      %v875 = vlaneseq
      %v876 = vshrl.u32 %v875, 7
      %v877 = vsub.s32 %v874, %v876
      %v878 = vrot.slane %v799, %v877
      %v880 = vunpack.c.l.s4 1983009808
      %v881 = vunpack.c.0.s8 %v880
      %v882 = vlaneseq
      %v883 = vshrl.u32 %v882, 7
      %v884 = vsub.s32 %v881, %v883
      %v885 = vrot.slane %v871, %v884
      %v886 = vcombine.high %v878, %v878
      %v887 = vcombine.high %v800, %v800
      %v889 = vunpack.c.l.s4 1983009808
      %v890 = vunpack.c.0.s8 %v889
      %v891 = vlaneseq
      %v892 = vshrl.u32 %v891, 7
      %v893 = vsub.s32 %v890, %v892
      %v894 = vrot.slane %v800, %v893
      %v896 = vunpack.c.l.s4 1983009808
      %v897 = vunpack.c.0.s8 %v896
      %v898 = vlaneseq
      %v899 = vshrl.u32 %v898, 7
      %v900 = vsub.s32 %v897, %v899
      %v901 = vrot.slane %v887, %v900
      %v902 = vcombine.high %v894, %v894
      %v903 = vcombine.high %v901, %v901
      %v904 = vcombine.high %v801, %v801
      %v906 = vunpack.c.l.s4 1983009808
      %v907 = vunpack.c.0.s8 %v906
      %v908 = vlaneseq
      %v909 = vshrl.u32 %v908, 7
      %v910 = vsub.s32 %v907, %v909
      %v911 = vrot.slane %v801, %v910
      %v913 = vunpack.c.l.s4 1983009808
      %v914 = vunpack.c.0.s8 %v913
      %v915 = vlaneseq
      %v916 = vshrl.u32 %v915, 7
      %v917 = vsub.s32 %v914, %v916
      %v918 = vrot.slane %v904, %v917
      %v919 = vcombine.high %v911, %v911
      %v920 = vcombine.high %v802, %v802
      %v922 = vunpack.c.l.s4 1983009808
      %v923 = vunpack.c.0.s8 %v922
      %v924 = vlaneseq
      %v925 = vshrl.u32 %v924, 7
      %v926 = vsub.s32 %v923, %v925
      %v927 = vrot.slane %v802, %v926
      %v929 = vunpack.c.l.s4 1983009808
      %v930 = vunpack.c.0.s8 %v929
      %v931 = vlaneseq
      %v932 = vshrl.u32 %v931, 7
      %v933 = vsub.s32 %v930, %v932
      %v934 = vrot.slane %v920, %v933
      %v935 = vcombine.high %v927, %v927
      %v936 = vcombine.high %v934, %v934
      %v937 = vcombine.high %v803, %v803
      %v939 = vunpack.c.l.s4 1983009808
      %v940 = vunpack.c.0.s8 %v939
      %v941 = vlaneseq
      %v942 = vshrl.u32 %v941, 7
      %v943 = vsub.s32 %v940, %v942
      %v944 = vrot.slane %v803, %v943
      %v946 = vunpack.c.l.s4 1983009808
      %v947 = vunpack.c.0.s8 %v946
      %v948 = vlaneseq
      %v949 = vshrl.u32 %v948, 7
      %v950 = vsub.s32 %v947, %v949
      %v951 = vrot.slane %v937, %v950
      %v952 = vcombine.high %v944, %v944
      %v953 = vcombine.high %v804, %v804
      %v955 = vunpack.c.l.s4 1983009808
      %v956 = vunpack.c.0.s8 %v955
      %v957 = vlaneseq
      %v958 = vshrl.u32 %v957, 7
      %v959 = vsub.s32 %v956, %v958
      %v960 = vrot.slane %v804, %v959
      %v962 = vunpack.c.l.s4 1983009808
      %v963 = vunpack.c.0.s8 %v962
      %v964 = vlaneseq
      %v965 = vshrl.u32 %v964, 7
      %v966 = vsub.s32 %v963, %v965
      %v967 = vrot.slane %v953, %v966
      %v968 = vcombine.high %v960, %v960
      %v969 = vcombine.high %v967, %v967
      %v970 = vcombine.high %v805, %v805
      %v972 = vunpack.c.l.s4 1983009808
      %v973 = vunpack.c.0.s8 %v972
      %v974 = vlaneseq
      %v975 = vshrl.u32 %v974, 7
      %v976 = vsub.s32 %v973, %v975
      %v977 = vrot.slane %v805, %v976
      %v979 = vunpack.c.l.s4 1983009808
      %v980 = vunpack.c.0.s8 %v979
      %v981 = vlaneseq
      %v982 = vshrl.u32 %v981, 7
      %v983 = vsub.s32 %v980, %v982
      %v984 = vrot.slane %v970, %v983
      %v985 = vcombine.high %v977, %v977
      %v986 = vcombine.high %v806, %v806
      %v988 = vunpack.c.l.s4 1983009808
      %v989 = vunpack.c.0.s8 %v988
      %v990 = vlaneseq
      %v991 = vshrl.u32 %v990, 7
      %v992 = vsub.s32 %v989, %v991
      %v993 = vrot.slane %v806, %v992
      %v995 = vunpack.c.l.s4 1983009808
      %v996 = vunpack.c.0.s8 %v995
      %v997 = vlaneseq
      %v998 = vshrl.u32 %v997, 7
      %v999 = vsub.s32 %v996, %v998
      %v1000 = vrot.slane %v986, %v999
      %v1001 = vcombine.high %v993, %v993
      %v1002 = vcombine.high %v1000, %v1000
      %v1003 = vcombine.high %v807, %v807
      %v1005 = vunpack.c.l.s4 1983009808
      %v1006 = vunpack.c.0.s8 %v1005
      %v1007 = vlaneseq
      %v1008 = vshrl.u32 %v1007, 7
      %v1009 = vsub.s32 %v1006, %v1008
      %v1010 = vrot.slane %v807, %v1009
      %v1012 = vunpack.c.l.s4 1983009808
      %v1013 = vunpack.c.0.s8 %v1012
      %v1014 = vlaneseq
      %v1015 = vshrl.u32 %v1014, 7
      %v1016 = vsub.s32 %v1013, %v1015
      %v1017 = vrot.slane %v1003, %v1016
      %v1018 = vcombine.high %v1010, %v1010
      %v1019 = vcombine.high %v808, %v808
      %v1021 = vunpack.c.l.s4 1983009808
      %v1022 = vunpack.c.0.s8 %v1021
      %v1023 = vlaneseq
      %v1024 = vshrl.u32 %v1023, 7
      %v1025 = vsub.s32 %v1022, %v1024
      %v1026 = vrot.slane %v808, %v1025
      %v1028 = vunpack.c.l.s4 1983009808
      %v1029 = vunpack.c.0.s8 %v1028
      %v1030 = vlaneseq
      %v1031 = vshrl.u32 %v1030, 7
      %v1032 = vsub.s32 %v1029, %v1031
      %v1033 = vrot.slane %v1019, %v1032
      %v1034 = vcombine.high %v1026, %v1026
      %v1035 = vcombine.high %v1033, %v1033
      %v1036 = vcombine.high %v809, %v809
      %v1038 = vunpack.c.l.s4 1983009808
      %v1039 = vunpack.c.0.s8 %v1038
      %v1040 = vlaneseq
      %v1041 = vshrl.u32 %v1040, 7
      %v1042 = vsub.s32 %v1039, %v1041
      %v1043 = vrot.slane %v809, %v1042
      %v1045 = vunpack.c.l.s4 1983009808
      %v1046 = vunpack.c.0.s8 %v1045
      %v1047 = vlaneseq
      %v1048 = vshrl.u32 %v1047, 7
      %v1049 = vsub.s32 %v1046, %v1048
      %v1050 = vrot.slane %v1036, %v1049
      %v1051 = vcombine.high %v1043, %v1043
      %v1052 = vcombine.high %v810, %v810
      %v1054 = vunpack.c.l.s4 1983009808
      %v1055 = vunpack.c.0.s8 %v1054
      %v1056 = vlaneseq
      %v1057 = vshrl.u32 %v1056, 7
      %v1058 = vsub.s32 %v1055, %v1057
      %v1059 = vrot.slane %v810, %v1058
      %v1061 = vunpack.c.l.s4 1983009808
      %v1062 = vunpack.c.0.s8 %v1061
      %v1063 = vlaneseq
      %v1064 = vshrl.u32 %v1063, 7
      %v1065 = vsub.s32 %v1062, %v1064
      %v1066 = vrot.slane %v1052, %v1065
      %v1067 = vcombine.high %v1059, %v1059
      %v1068 = vcombine.high %v1066, %v1066
      %v1069 = vcombine.high %v811, %v811
      %v1071 = vunpack.c.l.s4 1983009808
      %v1072 = vunpack.c.0.s8 %v1071
      %v1073 = vlaneseq
      %v1074 = vshrl.u32 %v1073, 7
      %v1075 = vsub.s32 %v1072, %v1074
      %v1076 = vrot.slane %v811, %v1075
      %v1078 = vunpack.c.l.s4 1983009808
      %v1079 = vunpack.c.0.s8 %v1078
      %v1080 = vlaneseq
      %v1081 = vshrl.u32 %v1080, 7
      %v1082 = vsub.s32 %v1079, %v1081
      %v1083 = vrot.slane %v1069, %v1082
      %v1084 = vcombine.high %v1076, %v1076
      %v1085 = vcombine.high %v812, %v812
      %v1087 = vunpack.c.l.s4 1983009808
      %v1088 = vunpack.c.0.s8 %v1087
      %v1089 = vlaneseq
      %v1090 = vshrl.u32 %v1089, 7
      %v1091 = vsub.s32 %v1088, %v1090
      %v1092 = vrot.slane %v812, %v1091
      %v1094 = vunpack.c.l.s4 1983009808
      %v1095 = vunpack.c.0.s8 %v1094
      %v1096 = vlaneseq
      %v1097 = vshrl.u32 %v1096, 7
      %v1098 = vsub.s32 %v1095, %v1097
      %v1099 = vrot.slane %v1085, %v1098
      %v1100 = vcombine.high %v1092, %v1092
      %v1101 = vcombine.high %v1099, %v1099
      %v1102 = vcombine.high %v813, %v813
      %v1104 = vunpack.c.l.s4 1983009808
      %v1105 = vunpack.c.0.s8 %v1104
      %v1106 = vlaneseq
      %v1107 = vshrl.u32 %v1106, 7
      %v1108 = vsub.s32 %v1105, %v1107
      %v1109 = vrot.slane %v813, %v1108
      %v1111 = vunpack.c.l.s4 1983009808
      %v1112 = vunpack.c.0.s8 %v1111
      %v1113 = vlaneseq
      %v1114 = vshrl.u32 %v1113, 7
      %v1115 = vsub.s32 %v1112, %v1114
      %v1116 = vrot.slane %v1102, %v1115
      %v1117 = vcombine.high %v1109, %v1109
      %v1118 = vcombine.high %v814, %v814
      %v1120 = vunpack.c.l.s4 1983009808
      %v1121 = vunpack.c.0.s8 %v1120
      %v1122 = vlaneseq
      %v1123 = vshrl.u32 %v1122, 7
      %v1124 = vsub.s32 %v1121, %v1123
      %v1125 = vrot.slane %v814, %v1124
      %v1127 = vunpack.c.l.s4 1983009808
      %v1128 = vunpack.c.0.s8 %v1127
      %v1129 = vlaneseq
      %v1130 = vshrl.u32 %v1129, 7
      %v1131 = vsub.s32 %v1128, %v1130
      %v1132 = vrot.slane %v1118, %v1131
      %v1133 = vcombine.high %v1125, %v1125
      %v1134 = vcombine.high %v1132, %v1132
      %v1135 = vcombine.high %v815, %v815
      %v1137 = vunpack.c.l.s4 1983009808
      %v1138 = vunpack.c.0.s8 %v1137
      %v1139 = vlaneseq
      %v1140 = vshrl.u32 %v1139, 7
      %v1141 = vsub.s32 %v1138, %v1140
      %v1142 = vrot.slane %v815, %v1141
      %v1144 = vunpack.c.l.s4 1983009808
      %v1145 = vunpack.c.0.s8 %v1144
      %v1146 = vlaneseq
      %v1147 = vshrl.u32 %v1146, 7
      %v1148 = vsub.s32 %v1145, %v1147
      %v1149 = vrot.slane %v1135, %v1148
      %v1150 = vcombine.high %v1142, %v1142
      %v1151 = vcombine.high %v816, %v816
      %v1153 = vunpack.c.l.s4 1983009808
      %v1154 = vunpack.c.0.s8 %v1153
      %v1155 = vlaneseq
      %v1156 = vshrl.u32 %v1155, 7
      %v1157 = vsub.s32 %v1154, %v1156
      %v1158 = vrot.slane %v816, %v1157
      %v1160 = vunpack.c.l.s4 1983009808
      %v1161 = vunpack.c.0.s8 %v1160
      %v1162 = vlaneseq
      %v1163 = vshrl.u32 %v1162, 7
      %v1164 = vsub.s32 %v1161, %v1163
      %v1165 = vrot.slane %v1151, %v1164
      %v1166 = vcombine.high %v1158, %v1158
      %v1167 = vcombine.high %v1165, %v1165
      %v1168 = vcombine.high %v817, %v817
      %v1170 = vunpack.c.l.s4 1983009808
      %v1171 = vunpack.c.0.s8 %v1170
      %v1172 = vlaneseq
      %v1173 = vshrl.u32 %v1172, 7
      %v1174 = vsub.s32 %v1171, %v1173
      %v1175 = vrot.slane %v817, %v1174
      %v1177 = vunpack.c.l.s4 1983009808
      %v1178 = vunpack.c.0.s8 %v1177
      %v1179 = vlaneseq
      %v1180 = vshrl.u32 %v1179, 7
      %v1181 = vsub.s32 %v1178, %v1180
      %v1182 = vrot.slane %v1168, %v1181
      %v1183 = vcombine.high %v1175, %v1175
      %v1184 = vcombine.high %v818, %v818
      %v1186 = vunpack.c.l.s4 1983009808
      %v1187 = vunpack.c.0.s8 %v1186
      %v1188 = vlaneseq
      %v1189 = vshrl.u32 %v1188, 7
      %v1190 = vsub.s32 %v1187, %v1189
      %v1191 = vrot.slane %v818, %v1190
      %v1193 = vunpack.c.l.s4 1983009808
      %v1194 = vunpack.c.0.s8 %v1193
      %v1195 = vlaneseq
      %v1196 = vshrl.u32 %v1195, 7
      %v1197 = vsub.s32 %v1194, %v1196
      %v1198 = vrot.slane %v1184, %v1197
      %v1199 = vcombine.high %v1191, %v1191
      %v1200 = vcombine.high %v1198, %v1198
      %v1201 = vcombine.high %v819, %v819
      %v1203 = vunpack.c.l.s4 1983009808
      %v1204 = vunpack.c.0.s8 %v1203
      %v1205 = vlaneseq
      %v1206 = vshrl.u32 %v1205, 7
      %v1207 = vsub.s32 %v1204, %v1206
      %v1208 = vrot.slane %v819, %v1207
      %v1210 = vunpack.c.l.s4 1983009808
      %v1211 = vunpack.c.0.s8 %v1210
      %v1212 = vlaneseq
      %v1213 = vshrl.u32 %v1212, 7
      %v1214 = vsub.s32 %v1211, %v1213
      %v1215 = vrot.slane %v1201, %v1214
      %v1216 = vcombine.high %v1208, %v1208
      %v1217 = vcombine.high %v820, %v820
      %v1219 = vunpack.c.l.s4 1983009808
      %v1220 = vunpack.c.0.s8 %v1219
      %v1221 = vlaneseq
      %v1222 = vshrl.u32 %v1221, 7
      %v1223 = vsub.s32 %v1220, %v1222
      %v1224 = vrot.slane %v820, %v1223
      %v1226 = vunpack.c.l.s4 1983009808
      %v1227 = vunpack.c.0.s8 %v1226
      %v1228 = vlaneseq
      %v1229 = vshrl.u32 %v1228, 7
      %v1230 = vsub.s32 %v1227, %v1229
      %v1231 = vrot.slane %v1217, %v1230
      %v1232 = vcombine.high %v1224, %v1224
      %v1233 = vcombine.high %v1231, %v1231
      %v1234 = vcombine.high %v821, %v821
      %v1236 = vunpack.c.l.s4 1983009808
      %v1237 = vunpack.c.0.s8 %v1236
      %v1238 = vlaneseq
      %v1239 = vshrl.u32 %v1238, 7
      %v1240 = vsub.s32 %v1237, %v1239
      %v1241 = vrot.slane %v821, %v1240
      %v1243 = vunpack.c.l.s4 1983009808
      %v1244 = vunpack.c.0.s8 %v1243
      %v1245 = vlaneseq
      %v1246 = vshrl.u32 %v1245, 7
      %v1247 = vsub.s32 %v1244, %v1246
      %v1248 = vrot.slane %v1234, %v1247
      %v1249 = vcombine.high %v1241, %v1241
      %v1250 = vcombine.high %v822, %v822
      %v1252 = vunpack.c.l.s4 1983009808
      %v1253 = vunpack.c.0.s8 %v1252
      %v1254 = vlaneseq
      %v1255 = vshrl.u32 %v1254, 7
      %v1256 = vsub.s32 %v1253, %v1255
      %v1257 = vrot.slane %v822, %v1256
      %v1259 = vunpack.c.l.s4 1983009808
      %v1260 = vunpack.c.0.s8 %v1259
      %v1261 = vlaneseq
      %v1262 = vshrl.u32 %v1261, 7
      %v1263 = vsub.s32 %v1260, %v1262
      %v1264 = vrot.slane %v1250, %v1263
      %v1265 = vcombine.high %v1257, %v1257
      %v1266 = vcombine.high %v1264, %v1264
      %v1267 = vcombine.high %v823, %v823
      %v1269 = vunpack.c.l.s4 1983009808
      %v1270 = vunpack.c.0.s8 %v1269
      %v1271 = vlaneseq
      %v1272 = vshrl.u32 %v1271, 7
      %v1273 = vsub.s32 %v1270, %v1272
      %v1274 = vrot.slane %v823, %v1273
      %v1276 = vunpack.c.l.s4 1983009808
      %v1277 = vunpack.c.0.s8 %v1276
      %v1278 = vlaneseq
      %v1279 = vshrl.u32 %v1278, 7
      %v1280 = vsub.s32 %v1277, %v1279
      %v1281 = vrot.slane %v1267, %v1280
      %v1282 = vcombine.high %v1274, %v1274
      %v1283 = vcombine.high %v824, %v824
      %v1285 = vunpack.c.l.s4 1983009808
      %v1286 = vunpack.c.0.s8 %v1285
      %v1287 = vlaneseq
      %v1288 = vshrl.u32 %v1287, 7
      %v1289 = vsub.s32 %v1286, %v1288
      %v1290 = vrot.slane %v824, %v1289
      %v1292 = vunpack.c.l.s4 1983009808
      %v1293 = vunpack.c.0.s8 %v1292
      %v1294 = vlaneseq
      %v1295 = vshrl.u32 %v1294, 7
      %v1296 = vsub.s32 %v1293, %v1295
      %v1297 = vrot.slane %v1283, %v1296
      %v1298 = vcombine.high %v1290, %v1290
      %v1299 = vcombine.high %v1297, %v1297
      %v1300 = vcombine.high %v825, %v825
      %v1302 = vunpack.c.l.s4 1983009808
      %v1303 = vunpack.c.0.s8 %v1302
      %v1304 = vlaneseq
      %v1305 = vshrl.u32 %v1304, 7
      %v1306 = vsub.s32 %v1303, %v1305
      %v1307 = vrot.slane %v825, %v1306
      %v1309 = vunpack.c.l.s4 1983009808
      %v1310 = vunpack.c.0.s8 %v1309
      %v1311 = vlaneseq
      %v1312 = vshrl.u32 %v1311, 7
      %v1313 = vsub.s32 %v1310, %v1312
      %v1314 = vrot.slane %v1300, %v1313
      %v1315 = vcombine.high %v1307, %v1307
      %v1316 = vld [vmem:[%s273 + $0x2] sm:$0xff]
      %v1317 = vld [vmem:[%s273 + $0xa] sm:$0x3f]
      %v1318 = vld [vmem:[%s273 + $0x12] sm:$0xff]
      %v1319 = vld [vmem:[%s273 + $0x1a] sm:$0x3f]
      %v1320 = vld [vmem:[%s273 + $0x22] sm:$0xff]
      %v1321 = vld [vmem:[%s273 + $0x2a] sm:$0x3f]
      %v1322 = vld [vmem:[%s273 + $0x32] sm:$0xff]
      %v1323 = vld [vmem:[%s273 + $0x3a] sm:$0x3f]
      %v1324 = vld [vmem:[%s273 + $0x42] sm:$0xff]
      %v1325 = vld [vmem:[%s273 + $0x4a] sm:$0x3f]
      %v1326 = vld [vmem:[%s273 + $0x52] sm:$0xff]
      %v1327 = vld [vmem:[%s273 + $0x5a] sm:$0x3f]
      %v1328 = vld [vmem:[%s273 + $0x62] sm:$0xff]
      %v1329 = vld [vmem:[%s273 + $0x6a] sm:$0x3f]
      %v1330 = vld [vmem:[%s273 + $0x72] sm:$0xff]
      %v1331 = vld [vmem:[%s273 + $0x7a] sm:$0x3f]
      %v1332 = vld [vmem:[%s273 + $0x82] sm:$0xff]
      %v1333 = vld [vmem:[%s273 + $0x8a] sm:$0x3f]
      %v1334 = vld [vmem:[%s273 + $0x92] sm:$0xff]
      %v1335 = vld [vmem:[%s273 + $0x9a] sm:$0x3f]
      %v1336 = vld [vmem:[%s273 + $0xa2] sm:$0xff]
      %v1337 = vld [vmem:[%s273 + $0xaa] sm:$0x3f]
      %v1338 = vld [vmem:[%s273 + $0xb2] sm:$0xff]
      %v1339 = vld [vmem:[%s273 + $0xba] sm:$0x3f]
      %v1340 = vld [vmem:[%s273 + $0xc2] sm:$0xff]
      %v1341 = vld [vmem:[%s273 + $0xca] sm:$0x3f]
      %v1342 = vld [vmem:[%s273 + $0xd2] sm:$0xff]
      %v1343 = vld [vmem:[%s273 + $0xda] sm:$0x3f]
      %v1372 = vcombine.high %v1316, %v1316
      %v1374 = vunpack.c.l.s4 1983009808
      %v1375 = vunpack.c.0.s8 %v1374
      %v1376 = vlaneseq
      %v1377 = vshrl.u32 %v1376, 7
      %v1378 = vsub.s32 %v1375, %v1377
      %v1379 = vrot.slane %v1316, %v1378
      %v1381 = vunpack.c.l.s4 1983009808
      %v1382 = vunpack.c.0.s8 %v1381
      %v1383 = vlaneseq
      %v1384 = vshrl.u32 %v1383, 7
      %v1385 = vsub.s32 %v1382, %v1384
      %v1386 = vrot.slane %v1372, %v1385
      %v1387 = vcombine.high %v1379, %v1379
      %v1388 = vcombine.high %v1386, %v1386
      %v1389 = vcombine.high %v1317, %v1317
      %v1391 = vunpack.c.l.s4 1983009808
      %v1392 = vunpack.c.0.s8 %v1391
      %v1393 = vlaneseq
      %v1394 = vshrl.u32 %v1393, 7
      %v1395 = vsub.s32 %v1392, %v1394
      %v1396 = vrot.slane %v1317, %v1395
      %v1398 = vunpack.c.l.s4 1983009808
      %v1399 = vunpack.c.0.s8 %v1398
      %v1400 = vlaneseq
      %v1401 = vshrl.u32 %v1400, 7
      %v1402 = vsub.s32 %v1399, %v1401
      %v1403 = vrot.slane %v1389, %v1402
      %v1404 = vcombine.high %v1396, %v1396
      %v1405 = vcombine.high %v1318, %v1318
      %v1407 = vunpack.c.l.s4 1983009808
      %v1408 = vunpack.c.0.s8 %v1407
      %v1409 = vlaneseq
      %v1410 = vshrl.u32 %v1409, 7
      %v1411 = vsub.s32 %v1408, %v1410
      %v1412 = vrot.slane %v1318, %v1411
      %v1414 = vunpack.c.l.s4 1983009808
      %v1415 = vunpack.c.0.s8 %v1414
      %v1416 = vlaneseq
      %v1417 = vshrl.u32 %v1416, 7
      %v1418 = vsub.s32 %v1415, %v1417
      %v1419 = vrot.slane %v1405, %v1418
      %v1420 = vcombine.high %v1412, %v1412
      %v1421 = vcombine.high %v1419, %v1419
      %v1422 = vcombine.high %v1319, %v1319
      %v1424 = vunpack.c.l.s4 1983009808
      %v1425 = vunpack.c.0.s8 %v1424
      %v1426 = vlaneseq
      %v1427 = vshrl.u32 %v1426, 7
      %v1428 = vsub.s32 %v1425, %v1427
      %v1429 = vrot.slane %v1319, %v1428
      %v1431 = vunpack.c.l.s4 1983009808
      %v1432 = vunpack.c.0.s8 %v1431
      %v1433 = vlaneseq
      %v1434 = vshrl.u32 %v1433, 7
      %v1435 = vsub.s32 %v1432, %v1434
      %v1436 = vrot.slane %v1422, %v1435
      %v1437 = vcombine.high %v1429, %v1429
      %v1438 = vcombine.high %v1320, %v1320
      %v1440 = vunpack.c.l.s4 1983009808
      %v1441 = vunpack.c.0.s8 %v1440
      %v1442 = vlaneseq
      %v1443 = vshrl.u32 %v1442, 7
      %v1444 = vsub.s32 %v1441, %v1443
      %v1445 = vrot.slane %v1320, %v1444
      %v1447 = vunpack.c.l.s4 1983009808
      %v1448 = vunpack.c.0.s8 %v1447
      %v1449 = vlaneseq
      %v1450 = vshrl.u32 %v1449, 7
      %v1451 = vsub.s32 %v1448, %v1450
      %v1452 = vrot.slane %v1438, %v1451
      %v1453 = vcombine.high %v1445, %v1445
      %v1454 = vcombine.high %v1452, %v1452
      %v1455 = vcombine.high %v1321, %v1321
      %v1457 = vunpack.c.l.s4 1983009808
      %v1458 = vunpack.c.0.s8 %v1457
      %v1459 = vlaneseq
      %v1460 = vshrl.u32 %v1459, 7
      %v1461 = vsub.s32 %v1458, %v1460
      %v1462 = vrot.slane %v1321, %v1461
      %v1464 = vunpack.c.l.s4 1983009808
      %v1465 = vunpack.c.0.s8 %v1464
      %v1466 = vlaneseq
      %v1467 = vshrl.u32 %v1466, 7
      %v1468 = vsub.s32 %v1465, %v1467
      %v1469 = vrot.slane %v1455, %v1468
      %v1470 = vcombine.high %v1462, %v1462
      %v1471 = vcombine.high %v1322, %v1322
      %v1473 = vunpack.c.l.s4 1983009808
      %v1474 = vunpack.c.0.s8 %v1473
      %v1475 = vlaneseq
      %v1476 = vshrl.u32 %v1475, 7
      %v1477 = vsub.s32 %v1474, %v1476
      %v1478 = vrot.slane %v1322, %v1477
      %v1480 = vunpack.c.l.s4 1983009808
      %v1481 = vunpack.c.0.s8 %v1480
      %v1482 = vlaneseq
      %v1483 = vshrl.u32 %v1482, 7
      %v1484 = vsub.s32 %v1481, %v1483
      %v1485 = vrot.slane %v1471, %v1484
      %v1486 = vcombine.high %v1478, %v1478
      %v1487 = vcombine.high %v1485, %v1485
      %v1488 = vcombine.high %v1323, %v1323
      %v1490 = vunpack.c.l.s4 1983009808
      %v1491 = vunpack.c.0.s8 %v1490
      %v1492 = vlaneseq
      %v1493 = vshrl.u32 %v1492, 7
      %v1494 = vsub.s32 %v1491, %v1493
      %v1495 = vrot.slane %v1323, %v1494
      %v1497 = vunpack.c.l.s4 1983009808
      %v1498 = vunpack.c.0.s8 %v1497
      %v1499 = vlaneseq
      %v1500 = vshrl.u32 %v1499, 7
      %v1501 = vsub.s32 %v1498, %v1500
      %v1502 = vrot.slane %v1488, %v1501
      %v1503 = vcombine.high %v1495, %v1495
      %v1504 = vcombine.high %v1324, %v1324
      %v1506 = vunpack.c.l.s4 1983009808
      %v1507 = vunpack.c.0.s8 %v1506
      %v1508 = vlaneseq
      %v1509 = vshrl.u32 %v1508, 7
      %v1510 = vsub.s32 %v1507, %v1509
      %v1511 = vrot.slane %v1324, %v1510
      %v1513 = vunpack.c.l.s4 1983009808
      %v1514 = vunpack.c.0.s8 %v1513
      %v1515 = vlaneseq
      %v1516 = vshrl.u32 %v1515, 7
      %v1517 = vsub.s32 %v1514, %v1516
      %v1518 = vrot.slane %v1504, %v1517
      %v1519 = vcombine.high %v1511, %v1511
      %v1520 = vcombine.high %v1518, %v1518
      %v1521 = vcombine.high %v1325, %v1325
      %v1523 = vunpack.c.l.s4 1983009808
      %v1524 = vunpack.c.0.s8 %v1523
      %v1525 = vlaneseq
      %v1526 = vshrl.u32 %v1525, 7
      %v1527 = vsub.s32 %v1524, %v1526
      %v1528 = vrot.slane %v1325, %v1527
      %v1530 = vunpack.c.l.s4 1983009808
      %v1531 = vunpack.c.0.s8 %v1530
      %v1532 = vlaneseq
      %v1533 = vshrl.u32 %v1532, 7
      %v1534 = vsub.s32 %v1531, %v1533
      %v1535 = vrot.slane %v1521, %v1534
      %v1536 = vcombine.high %v1528, %v1528
      %v1537 = vcombine.high %v1326, %v1326
      %v1539 = vunpack.c.l.s4 1983009808
      %v1540 = vunpack.c.0.s8 %v1539
      %v1541 = vlaneseq
      %v1542 = vshrl.u32 %v1541, 7
      %v1543 = vsub.s32 %v1540, %v1542
      %v1544 = vrot.slane %v1326, %v1543
      %v1546 = vunpack.c.l.s4 1983009808
      %v1547 = vunpack.c.0.s8 %v1546
      %v1548 = vlaneseq
      %v1549 = vshrl.u32 %v1548, 7
      %v1550 = vsub.s32 %v1547, %v1549
      %v1551 = vrot.slane %v1537, %v1550
      %v1552 = vcombine.high %v1544, %v1544
      %v1553 = vcombine.high %v1551, %v1551
      %v1554 = vcombine.high %v1327, %v1327
      %v1556 = vunpack.c.l.s4 1983009808
      %v1557 = vunpack.c.0.s8 %v1556
      %v1558 = vlaneseq
      %v1559 = vshrl.u32 %v1558, 7
      %v1560 = vsub.s32 %v1557, %v1559
      %v1561 = vrot.slane %v1327, %v1560
      %v1563 = vunpack.c.l.s4 1983009808
      %v1564 = vunpack.c.0.s8 %v1563
      %v1565 = vlaneseq
      %v1566 = vshrl.u32 %v1565, 7
      %v1567 = vsub.s32 %v1564, %v1566
      %v1568 = vrot.slane %v1554, %v1567
      %v1569 = vcombine.high %v1561, %v1561
      %v1570 = vcombine.high %v1328, %v1328
      %v1572 = vunpack.c.l.s4 1983009808
      %v1573 = vunpack.c.0.s8 %v1572
      %v1574 = vlaneseq
      %v1575 = vshrl.u32 %v1574, 7
      %v1576 = vsub.s32 %v1573, %v1575
      %v1577 = vrot.slane %v1328, %v1576
      %v1579 = vunpack.c.l.s4 1983009808
      %v1580 = vunpack.c.0.s8 %v1579
      %v1581 = vlaneseq
      %v1582 = vshrl.u32 %v1581, 7
      %v1583 = vsub.s32 %v1580, %v1582
      %v1584 = vrot.slane %v1570, %v1583
      %v1585 = vcombine.high %v1577, %v1577
      %v1586 = vcombine.high %v1584, %v1584
      %v1587 = vcombine.high %v1329, %v1329
      %v1589 = vunpack.c.l.s4 1983009808
      %v1590 = vunpack.c.0.s8 %v1589
      %v1591 = vlaneseq
      %v1592 = vshrl.u32 %v1591, 7
      %v1593 = vsub.s32 %v1590, %v1592
      %v1594 = vrot.slane %v1329, %v1593
      %v1596 = vunpack.c.l.s4 1983009808
      %v1597 = vunpack.c.0.s8 %v1596
      %v1598 = vlaneseq
      %v1599 = vshrl.u32 %v1598, 7
      %v1600 = vsub.s32 %v1597, %v1599
      %v1601 = vrot.slane %v1587, %v1600
      %v1602 = vcombine.high %v1594, %v1594
      %v1603 = vcombine.high %v1330, %v1330
      %v1605 = vunpack.c.l.s4 1983009808
      %v1606 = vunpack.c.0.s8 %v1605
      %v1607 = vlaneseq
      %v1608 = vshrl.u32 %v1607, 7
      %v1609 = vsub.s32 %v1606, %v1608
      %v1610 = vrot.slane %v1330, %v1609
      %v1612 = vunpack.c.l.s4 1983009808
      %v1613 = vunpack.c.0.s8 %v1612
      %v1614 = vlaneseq
      %v1615 = vshrl.u32 %v1614, 7
      %v1616 = vsub.s32 %v1613, %v1615
      %v1617 = vrot.slane %v1603, %v1616
      %v1618 = vcombine.high %v1610, %v1610
      %v1619 = vcombine.high %v1617, %v1617
      %v1620 = vcombine.high %v1331, %v1331
      %v1622 = vunpack.c.l.s4 1983009808
      %v1623 = vunpack.c.0.s8 %v1622
      %v1624 = vlaneseq
      %v1625 = vshrl.u32 %v1624, 7
      %v1626 = vsub.s32 %v1623, %v1625
      %v1627 = vrot.slane %v1331, %v1626
      %v1629 = vunpack.c.l.s4 1983009808
      %v1630 = vunpack.c.0.s8 %v1629
      %v1631 = vlaneseq
      %v1632 = vshrl.u32 %v1631, 7
      %v1633 = vsub.s32 %v1630, %v1632
      %v1634 = vrot.slane %v1620, %v1633
      %v1635 = vcombine.high %v1627, %v1627
      %v1636 = vcombine.high %v1332, %v1332
      %v1638 = vunpack.c.l.s4 1983009808
      %v1639 = vunpack.c.0.s8 %v1638
      %v1640 = vlaneseq
      %v1641 = vshrl.u32 %v1640, 7
      %v1642 = vsub.s32 %v1639, %v1641
      %v1643 = vrot.slane %v1332, %v1642
      %v1645 = vunpack.c.l.s4 1983009808
      %v1646 = vunpack.c.0.s8 %v1645
      %v1647 = vlaneseq
      %v1648 = vshrl.u32 %v1647, 7
      %v1649 = vsub.s32 %v1646, %v1648
      %v1650 = vrot.slane %v1636, %v1649
      %v1651 = vcombine.high %v1643, %v1643
      %v1652 = vcombine.high %v1650, %v1650
      %v1653 = vcombine.high %v1333, %v1333
      %v1655 = vunpack.c.l.s4 1983009808
      %v1656 = vunpack.c.0.s8 %v1655
      %v1657 = vlaneseq
      %v1658 = vshrl.u32 %v1657, 7
      %v1659 = vsub.s32 %v1656, %v1658
      %v1660 = vrot.slane %v1333, %v1659
      %v1662 = vunpack.c.l.s4 1983009808
      %v1663 = vunpack.c.0.s8 %v1662
      %v1664 = vlaneseq
      %v1665 = vshrl.u32 %v1664, 7
      %v1666 = vsub.s32 %v1663, %v1665
      %v1667 = vrot.slane %v1653, %v1666
      %v1668 = vcombine.high %v1660, %v1660
      %v1669 = vcombine.high %v1334, %v1334
      %v1671 = vunpack.c.l.s4 1983009808
      %v1672 = vunpack.c.0.s8 %v1671
      %v1673 = vlaneseq
      %v1674 = vshrl.u32 %v1673, 7
      %v1675 = vsub.s32 %v1672, %v1674
      %v1676 = vrot.slane %v1334, %v1675
      %v1678 = vunpack.c.l.s4 1983009808
      %v1679 = vunpack.c.0.s8 %v1678
      %v1680 = vlaneseq
      %v1681 = vshrl.u32 %v1680, 7
      %v1682 = vsub.s32 %v1679, %v1681
      %v1683 = vrot.slane %v1669, %v1682
      %v1684 = vcombine.high %v1676, %v1676
      %v1685 = vcombine.high %v1683, %v1683
      %v1686 = vcombine.high %v1335, %v1335
      %v1688 = vunpack.c.l.s4 1983009808
      %v1689 = vunpack.c.0.s8 %v1688
      %v1690 = vlaneseq
      %v1691 = vshrl.u32 %v1690, 7
      %v1692 = vsub.s32 %v1689, %v1691
      %v1693 = vrot.slane %v1335, %v1692
      %v1695 = vunpack.c.l.s4 1983009808
      %v1696 = vunpack.c.0.s8 %v1695
      %v1697 = vlaneseq
      %v1698 = vshrl.u32 %v1697, 7
      %v1699 = vsub.s32 %v1696, %v1698
      %v1700 = vrot.slane %v1686, %v1699
      %v1701 = vcombine.high %v1693, %v1693
      %v1702 = vcombine.high %v1336, %v1336
      %v1704 = vunpack.c.l.s4 1983009808
      %v1705 = vunpack.c.0.s8 %v1704
      %v1706 = vlaneseq
      %v1707 = vshrl.u32 %v1706, 7
      %v1708 = vsub.s32 %v1705, %v1707
      %v1709 = vrot.slane %v1336, %v1708
      %v1711 = vunpack.c.l.s4 1983009808
      %v1712 = vunpack.c.0.s8 %v1711
      %v1713 = vlaneseq
      %v1714 = vshrl.u32 %v1713, 7
      %v1715 = vsub.s32 %v1712, %v1714
      %v1716 = vrot.slane %v1702, %v1715
      %v1717 = vcombine.high %v1709, %v1709
      %v1718 = vcombine.high %v1716, %v1716
      %v1719 = vcombine.high %v1337, %v1337
      %v1721 = vunpack.c.l.s4 1983009808
      %v1722 = vunpack.c.0.s8 %v1721
      %v1723 = vlaneseq
      %v1724 = vshrl.u32 %v1723, 7
      %v1725 = vsub.s32 %v1722, %v1724
      %v1726 = vrot.slane %v1337, %v1725
      %v1728 = vunpack.c.l.s4 1983009808
      %v1729 = vunpack.c.0.s8 %v1728
      %v1730 = vlaneseq
      %v1731 = vshrl.u32 %v1730, 7
      %v1732 = vsub.s32 %v1729, %v1731
      %v1733 = vrot.slane %v1719, %v1732
      %v1734 = vcombine.high %v1726, %v1726
      %v1735 = vcombine.high %v1338, %v1338
      %v1737 = vunpack.c.l.s4 1983009808
      %v1738 = vunpack.c.0.s8 %v1737
      %v1739 = vlaneseq
      %v1740 = vshrl.u32 %v1739, 7
      %v1741 = vsub.s32 %v1738, %v1740
      %v1742 = vrot.slane %v1338, %v1741
      %v1744 = vunpack.c.l.s4 1983009808
      %v1745 = vunpack.c.0.s8 %v1744
      %v1746 = vlaneseq
      %v1747 = vshrl.u32 %v1746, 7
      %v1748 = vsub.s32 %v1745, %v1747
      %v1749 = vrot.slane %v1735, %v1748
      %v1750 = vcombine.high %v1742, %v1742
      %v1751 = vcombine.high %v1749, %v1749
      %v1752 = vcombine.high %v1339, %v1339
      %v1754 = vunpack.c.l.s4 1983009808
      %v1755 = vunpack.c.0.s8 %v1754
      %v1756 = vlaneseq
      %v1757 = vshrl.u32 %v1756, 7
      %v1758 = vsub.s32 %v1755, %v1757
      %v1759 = vrot.slane %v1339, %v1758
      %v1761 = vunpack.c.l.s4 1983009808
      %v1762 = vunpack.c.0.s8 %v1761
      %v1763 = vlaneseq
      %v1764 = vshrl.u32 %v1763, 7
      %v1765 = vsub.s32 %v1762, %v1764
      %v1766 = vrot.slane %v1752, %v1765
      %v1767 = vcombine.high %v1759, %v1759
      %v1768 = vcombine.high %v1340, %v1340
      %v1770 = vunpack.c.l.s4 1983009808
      %v1771 = vunpack.c.0.s8 %v1770
      %v1772 = vlaneseq
      %v1773 = vshrl.u32 %v1772, 7
      %v1774 = vsub.s32 %v1771, %v1773
      %v1775 = vrot.slane %v1340, %v1774
      %v1777 = vunpack.c.l.s4 1983009808
      %v1778 = vunpack.c.0.s8 %v1777
      %v1779 = vlaneseq
      %v1780 = vshrl.u32 %v1779, 7
      %v1781 = vsub.s32 %v1778, %v1780
      %v1782 = vrot.slane %v1768, %v1781
      %v1783 = vcombine.high %v1775, %v1775
      %v1784 = vcombine.high %v1782, %v1782
      %v1785 = vcombine.high %v1341, %v1341
      %v1787 = vunpack.c.l.s4 1983009808
      %v1788 = vunpack.c.0.s8 %v1787
      %v1789 = vlaneseq
      %v1790 = vshrl.u32 %v1789, 7
      %v1791 = vsub.s32 %v1788, %v1790
      %v1792 = vrot.slane %v1341, %v1791
      %v1794 = vunpack.c.l.s4 1983009808
      %v1795 = vunpack.c.0.s8 %v1794
      %v1796 = vlaneseq
      %v1797 = vshrl.u32 %v1796, 7
      %v1798 = vsub.s32 %v1795, %v1797
      %v1799 = vrot.slane %v1785, %v1798
      %v1800 = vcombine.high %v1792, %v1792
      %v1801 = vcombine.high %v1342, %v1342
      %v1803 = vunpack.c.l.s4 1983009808
      %v1804 = vunpack.c.0.s8 %v1803
      %v1805 = vlaneseq
      %v1806 = vshrl.u32 %v1805, 7
      %v1807 = vsub.s32 %v1804, %v1806
      %v1808 = vrot.slane %v1342, %v1807
      %v1810 = vunpack.c.l.s4 1983009808
      %v1811 = vunpack.c.0.s8 %v1810
      %v1812 = vlaneseq
      %v1813 = vshrl.u32 %v1812, 7
      %v1814 = vsub.s32 %v1811, %v1813
      %v1815 = vrot.slane %v1801, %v1814
      %v1816 = vcombine.high %v1808, %v1808
      %v1817 = vcombine.high %v1815, %v1815
      %v1818 = vcombine.high %v1343, %v1343
      %v1820 = vunpack.c.l.s4 1983009808
      %v1821 = vunpack.c.0.s8 %v1820
      %v1822 = vlaneseq
      %v1823 = vshrl.u32 %v1822, 7
      %v1824 = vsub.s32 %v1821, %v1823
      %v1825 = vrot.slane %v1343, %v1824
      %v1827 = vunpack.c.l.s4 1983009808
      %v1828 = vunpack.c.0.s8 %v1827
      %v1829 = vlaneseq
      %v1830 = vshrl.u32 %v1829, 7
      %v1831 = vsub.s32 %v1828, %v1830
      %v1832 = vrot.slane %v1818, %v1831
      %v1833 = vcombine.high %v1825, %v1825
      %s1834 = scalar_lea.vmem %s273, 16
      %v1835 = vld [vmem:[%s1834] sm:$0xff]
      %v1836 = vld [vmem:[%s1834 + $0x8] sm:$0x3f]
      %v1837 = vld [vmem:[%s1834 + $0x10] sm:$0xff]
      %v1838 = vld [vmem:[%s1834 + $0x18] sm:$0x3f]
      %v1839 = vld [vmem:[%s1834 + $0x20] sm:$0xff]
      %v1840 = vld [vmem:[%s1834 + $0x28] sm:$0x3f]
      %v1841 = vld [vmem:[%s1834 + $0x30] sm:$0xff]
      %v1842 = vld [vmem:[%s1834 + $0x38] sm:$0x3f]
      %v1843 = vld [vmem:[%s1834 + $0x40] sm:$0xff]
      %v1844 = vld [vmem:[%s1834 + $0x48] sm:$0x3f]
      %v1845 = vld [vmem:[%s1834 + $0x50] sm:$0xff]
      %v1846 = vld [vmem:[%s1834 + $0x58] sm:$0x3f]
      %v1847 = vld [vmem:[%s1834 + $0x60] sm:$0xff]
      %v1848 = vld [vmem:[%s1834 + $0x68] sm:$0x3f]
      %v1849 = vld [vmem:[%s1834 + $0x70] sm:$0xff]
      %v1850 = vld [vmem:[%s1834 + $0x78] sm:$0x3f]
      %v1851 = vld [vmem:[%s1834 + $0x80] sm:$0xff]
      %v1852 = vld [vmem:[%s1834 + $0x88] sm:$0x3f]
      %v1853 = vld [vmem:[%s1834 + $0x90] sm:$0xff]
      %v1854 = vld [vmem:[%s1834 + $0x98] sm:$0x3f]
      %v1855 = vld [vmem:[%s1834 + $0xa0] sm:$0xff]
      %v1856 = vld [vmem:[%s1834 + $0xa8] sm:$0x3f]
      %v1857 = vld [vmem:[%s1834 + $0xb0] sm:$0xff]
      %v1858 = vld [vmem:[%s1834 + $0xb8] sm:$0x3f]
      %v1859 = vld [vmem:[%s1834 + $0xc0] sm:$0xff]
      %v1860 = vld [vmem:[%s1834 + $0xc8] sm:$0x3f]
      %v1861 = vld [vmem:[%s1834 + $0xd0] sm:$0xff]
      %v1862 = vld [vmem:[%s1834 + $0xd8] sm:$0x3f]
      %v1891 = vcombine.high %v1835, %v1835
      %v1893 = vunpack.c.l.s4 1983009808
      %v1894 = vunpack.c.0.s8 %v1893
      %v1895 = vlaneseq
      %v1896 = vshrl.u32 %v1895, 7
      %v1897 = vsub.s32 %v1894, %v1896
      %v1898 = vrot.slane %v1835, %v1897
      %v1900 = vunpack.c.l.s4 1983009808
      %v1901 = vunpack.c.0.s8 %v1900
      %v1902 = vlaneseq
      %v1903 = vshrl.u32 %v1902, 7
      %v1904 = vsub.s32 %v1901, %v1903
      %v1905 = vrot.slane %v1891, %v1904
      %v1906 = vcombine.high %v1898, %v1898
      %v1907 = vcombine.high %v1905, %v1905
      %v1908 = vcombine.high %v1836, %v1836
      %v1910 = vunpack.c.l.s4 1983009808
      %v1911 = vunpack.c.0.s8 %v1910
      %v1912 = vlaneseq
      %v1913 = vshrl.u32 %v1912, 7
      %v1914 = vsub.s32 %v1911, %v1913
      %v1915 = vrot.slane %v1836, %v1914
      %v1917 = vunpack.c.l.s4 1983009808
      %v1918 = vunpack.c.0.s8 %v1917
      %v1919 = vlaneseq
      %v1920 = vshrl.u32 %v1919, 7
      %v1921 = vsub.s32 %v1918, %v1920
      %v1922 = vrot.slane %v1908, %v1921
      %v1923 = vcombine.high %v1915, %v1915
      %v1924 = vcombine.high %v1837, %v1837
      %v1926 = vunpack.c.l.s4 1983009808
      %v1927 = vunpack.c.0.s8 %v1926
      %v1928 = vlaneseq
      %v1929 = vshrl.u32 %v1928, 7
      %v1930 = vsub.s32 %v1927, %v1929
      %v1931 = vrot.slane %v1837, %v1930
      %v1933 = vunpack.c.l.s4 1983009808
      %v1934 = vunpack.c.0.s8 %v1933
      %v1935 = vlaneseq
      %v1936 = vshrl.u32 %v1935, 7
      %v1937 = vsub.s32 %v1934, %v1936
      %v1938 = vrot.slane %v1924, %v1937
      %v1939 = vcombine.high %v1931, %v1931
      %v1940 = vcombine.high %v1938, %v1938
      %v1941 = vcombine.high %v1838, %v1838
      %v1943 = vunpack.c.l.s4 1983009808
      %v1944 = vunpack.c.0.s8 %v1943
      %v1945 = vlaneseq
      %v1946 = vshrl.u32 %v1945, 7
      %v1947 = vsub.s32 %v1944, %v1946
      %v1948 = vrot.slane %v1838, %v1947
      %v1950 = vunpack.c.l.s4 1983009808
      %v1951 = vunpack.c.0.s8 %v1950
      %v1952 = vlaneseq
      %v1953 = vshrl.u32 %v1952, 7
      %v1954 = vsub.s32 %v1951, %v1953
      %v1955 = vrot.slane %v1941, %v1954
      %v1956 = vcombine.high %v1948, %v1948
      %v1957 = vcombine.high %v1839, %v1839
      %v1959 = vunpack.c.l.s4 1983009808
      %v1960 = vunpack.c.0.s8 %v1959
      %v1961 = vlaneseq
      %v1962 = vshrl.u32 %v1961, 7
      %v1963 = vsub.s32 %v1960, %v1962
      %v1964 = vrot.slane %v1839, %v1963
      %v1966 = vunpack.c.l.s4 1983009808
      %v1967 = vunpack.c.0.s8 %v1966
      %v1968 = vlaneseq
      %v1969 = vshrl.u32 %v1968, 7
      %v1970 = vsub.s32 %v1967, %v1969
      %v1971 = vrot.slane %v1957, %v1970
      %v1972 = vcombine.high %v1964, %v1964
      %v1973 = vcombine.high %v1971, %v1971
      %v1974 = vcombine.high %v1840, %v1840
      %v1976 = vunpack.c.l.s4 1983009808
      %v1977 = vunpack.c.0.s8 %v1976
      %v1978 = vlaneseq
      %v1979 = vshrl.u32 %v1978, 7
      %v1980 = vsub.s32 %v1977, %v1979
      %v1981 = vrot.slane %v1840, %v1980
      %v1983 = vunpack.c.l.s4 1983009808
      %v1984 = vunpack.c.0.s8 %v1983
      %v1985 = vlaneseq
      %v1986 = vshrl.u32 %v1985, 7
      %v1987 = vsub.s32 %v1984, %v1986
      %v1988 = vrot.slane %v1974, %v1987
      %v1989 = vcombine.high %v1981, %v1981
      %v1990 = vcombine.high %v1841, %v1841
      %v1992 = vunpack.c.l.s4 1983009808
      %v1993 = vunpack.c.0.s8 %v1992
      %v1994 = vlaneseq
      %v1995 = vshrl.u32 %v1994, 7
      %v1996 = vsub.s32 %v1993, %v1995
      %v1997 = vrot.slane %v1841, %v1996
      %v1999 = vunpack.c.l.s4 1983009808
      %v2000 = vunpack.c.0.s8 %v1999
      %v2001 = vlaneseq
      %v2002 = vshrl.u32 %v2001, 7
      %v2003 = vsub.s32 %v2000, %v2002
      %v2004 = vrot.slane %v1990, %v2003
      %v2005 = vcombine.high %v1997, %v1997
      %v2006 = vcombine.high %v2004, %v2004
      %v2007 = vcombine.high %v1842, %v1842
      %v2009 = vunpack.c.l.s4 1983009808
      %v2010 = vunpack.c.0.s8 %v2009
      %v2011 = vlaneseq
      %v2012 = vshrl.u32 %v2011, 7
      %v2013 = vsub.s32 %v2010, %v2012
      %v2014 = vrot.slane %v1842, %v2013
      %v2016 = vunpack.c.l.s4 1983009808
      %v2017 = vunpack.c.0.s8 %v2016
      %v2018 = vlaneseq
      %v2019 = vshrl.u32 %v2018, 7
      %v2020 = vsub.s32 %v2017, %v2019
      %v2021 = vrot.slane %v2007, %v2020
      %v2022 = vcombine.high %v2014, %v2014
      %v2023 = vcombine.high %v1843, %v1843
      %v2025 = vunpack.c.l.s4 1983009808
      %v2026 = vunpack.c.0.s8 %v2025
      %v2027 = vlaneseq
      %v2028 = vshrl.u32 %v2027, 7
      %v2029 = vsub.s32 %v2026, %v2028
      %v2030 = vrot.slane %v1843, %v2029
      %v2032 = vunpack.c.l.s4 1983009808
      %v2033 = vunpack.c.0.s8 %v2032
      %v2034 = vlaneseq
      %v2035 = vshrl.u32 %v2034, 7
      %v2036 = vsub.s32 %v2033, %v2035
      %v2037 = vrot.slane %v2023, %v2036
      %v2038 = vcombine.high %v2030, %v2030
      %v2039 = vcombine.high %v2037, %v2037
      %v2040 = vcombine.high %v1844, %v1844
      %v2042 = vunpack.c.l.s4 1983009808
      %v2043 = vunpack.c.0.s8 %v2042
      %v2044 = vlaneseq
      %v2045 = vshrl.u32 %v2044, 7
      %v2046 = vsub.s32 %v2043, %v2045
      %v2047 = vrot.slane %v1844, %v2046
      %v2049 = vunpack.c.l.s4 1983009808
      %v2050 = vunpack.c.0.s8 %v2049
      %v2051 = vlaneseq
      %v2052 = vshrl.u32 %v2051, 7
      %v2053 = vsub.s32 %v2050, %v2052
      %v2054 = vrot.slane %v2040, %v2053
      %v2055 = vcombine.high %v2047, %v2047
      %v2056 = vcombine.high %v1845, %v1845
      %v2058 = vunpack.c.l.s4 1983009808
      %v2059 = vunpack.c.0.s8 %v2058
      %v2060 = vlaneseq
      %v2061 = vshrl.u32 %v2060, 7
      %v2062 = vsub.s32 %v2059, %v2061
      %v2063 = vrot.slane %v1845, %v2062
      %v2065 = vunpack.c.l.s4 1983009808
      %v2066 = vunpack.c.0.s8 %v2065
      %v2067 = vlaneseq
      %v2068 = vshrl.u32 %v2067, 7
      %v2069 = vsub.s32 %v2066, %v2068
      %v2070 = vrot.slane %v2056, %v2069
      %v2071 = vcombine.high %v2063, %v2063
      %v2072 = vcombine.high %v2070, %v2070
      %v2073 = vcombine.high %v1846, %v1846
      %v2075 = vunpack.c.l.s4 1983009808
      %v2076 = vunpack.c.0.s8 %v2075
      %v2077 = vlaneseq
      %v2078 = vshrl.u32 %v2077, 7
      %v2079 = vsub.s32 %v2076, %v2078
      %v2080 = vrot.slane %v1846, %v2079
      %v2082 = vunpack.c.l.s4 1983009808
      %v2083 = vunpack.c.0.s8 %v2082
      %v2084 = vlaneseq
      %v2085 = vshrl.u32 %v2084, 7
      %v2086 = vsub.s32 %v2083, %v2085
      %v2087 = vrot.slane %v2073, %v2086
      %v2088 = vcombine.high %v2080, %v2080
      %v2089 = vcombine.high %v1847, %v1847
      %v2091 = vunpack.c.l.s4 1983009808
      %v2092 = vunpack.c.0.s8 %v2091
      %v2093 = vlaneseq
      %v2094 = vshrl.u32 %v2093, 7
      %v2095 = vsub.s32 %v2092, %v2094
      %v2096 = vrot.slane %v1847, %v2095
      %v2098 = vunpack.c.l.s4 1983009808
      %v2099 = vunpack.c.0.s8 %v2098
      %v2100 = vlaneseq
      %v2101 = vshrl.u32 %v2100, 7
      %v2102 = vsub.s32 %v2099, %v2101
      %v2103 = vrot.slane %v2089, %v2102
      %v2104 = vcombine.high %v2096, %v2096
      %v2105 = vcombine.high %v2103, %v2103
      %v2106 = vcombine.high %v1848, %v1848
      %v2108 = vunpack.c.l.s4 1983009808
      %v2109 = vunpack.c.0.s8 %v2108
      %v2110 = vlaneseq
      %v2111 = vshrl.u32 %v2110, 7
      %v2112 = vsub.s32 %v2109, %v2111
      %v2113 = vrot.slane %v1848, %v2112
      %v2115 = vunpack.c.l.s4 1983009808
      %v2116 = vunpack.c.0.s8 %v2115
      %v2117 = vlaneseq
      %v2118 = vshrl.u32 %v2117, 7
      %v2119 = vsub.s32 %v2116, %v2118
      %v2120 = vrot.slane %v2106, %v2119
      %v2121 = vcombine.high %v2113, %v2113
      %v2122 = vcombine.high %v1849, %v1849
      %v2124 = vunpack.c.l.s4 1983009808
      %v2125 = vunpack.c.0.s8 %v2124
      %v2126 = vlaneseq
      %v2127 = vshrl.u32 %v2126, 7
      %v2128 = vsub.s32 %v2125, %v2127
      %v2129 = vrot.slane %v1849, %v2128
      %v2131 = vunpack.c.l.s4 1983009808
      %v2132 = vunpack.c.0.s8 %v2131
      %v2133 = vlaneseq
      %v2134 = vshrl.u32 %v2133, 7
      %v2135 = vsub.s32 %v2132, %v2134
      %v2136 = vrot.slane %v2122, %v2135
      %v2137 = vcombine.high %v2129, %v2129
      %v2138 = vcombine.high %v2136, %v2136
      %v2139 = vcombine.high %v1850, %v1850
      %v2141 = vunpack.c.l.s4 1983009808
      %v2142 = vunpack.c.0.s8 %v2141
      %v2143 = vlaneseq
      %v2144 = vshrl.u32 %v2143, 7
      %v2145 = vsub.s32 %v2142, %v2144
      %v2146 = vrot.slane %v1850, %v2145
      %v2148 = vunpack.c.l.s4 1983009808
      %v2149 = vunpack.c.0.s8 %v2148
      %v2150 = vlaneseq
      %v2151 = vshrl.u32 %v2150, 7
      %v2152 = vsub.s32 %v2149, %v2151
      %v2153 = vrot.slane %v2139, %v2152
      %v2154 = vcombine.high %v2146, %v2146
      %v2155 = vcombine.high %v1851, %v1851
      %v2157 = vunpack.c.l.s4 1983009808
      %v2158 = vunpack.c.0.s8 %v2157
      %v2159 = vlaneseq
      %v2160 = vshrl.u32 %v2159, 7
      %v2161 = vsub.s32 %v2158, %v2160
      %v2162 = vrot.slane %v1851, %v2161
      %v2164 = vunpack.c.l.s4 1983009808
      %v2165 = vunpack.c.0.s8 %v2164
      %v2166 = vlaneseq
      %v2167 = vshrl.u32 %v2166, 7
      %v2168 = vsub.s32 %v2165, %v2167
      %v2169 = vrot.slane %v2155, %v2168
      %v2170 = vcombine.high %v2162, %v2162
      %v2171 = vcombine.high %v2169, %v2169
      %v2172 = vcombine.high %v1852, %v1852
      %v2174 = vunpack.c.l.s4 1983009808
      %v2175 = vunpack.c.0.s8 %v2174
      %v2176 = vlaneseq
      %v2177 = vshrl.u32 %v2176, 7
      %v2178 = vsub.s32 %v2175, %v2177
      %v2179 = vrot.slane %v1852, %v2178
      %v2181 = vunpack.c.l.s4 1983009808
      %v2182 = vunpack.c.0.s8 %v2181
      %v2183 = vlaneseq
      %v2184 = vshrl.u32 %v2183, 7
      %v2185 = vsub.s32 %v2182, %v2184
      %v2186 = vrot.slane %v2172, %v2185
      %v2187 = vcombine.high %v2179, %v2179
      %v2188 = vcombine.high %v1853, %v1853
      %v2190 = vunpack.c.l.s4 1983009808
      %v2191 = vunpack.c.0.s8 %v2190
      %v2192 = vlaneseq
      %v2193 = vshrl.u32 %v2192, 7
      %v2194 = vsub.s32 %v2191, %v2193
      %v2195 = vrot.slane %v1853, %v2194
      %v2197 = vunpack.c.l.s4 1983009808
      %v2198 = vunpack.c.0.s8 %v2197
      %v2199 = vlaneseq
      %v2200 = vshrl.u32 %v2199, 7
      %v2201 = vsub.s32 %v2198, %v2200
      %v2202 = vrot.slane %v2188, %v2201
      %v2203 = vcombine.high %v2195, %v2195
      %v2204 = vcombine.high %v2202, %v2202
      %v2205 = vcombine.high %v1854, %v1854
      %v2207 = vunpack.c.l.s4 1983009808
      %v2208 = vunpack.c.0.s8 %v2207
      %v2209 = vlaneseq
      %v2210 = vshrl.u32 %v2209, 7
      %v2211 = vsub.s32 %v2208, %v2210
      %v2212 = vrot.slane %v1854, %v2211
      %v2214 = vunpack.c.l.s4 1983009808
      %v2215 = vunpack.c.0.s8 %v2214
      %v2216 = vlaneseq
      %v2217 = vshrl.u32 %v2216, 7
      %v2218 = vsub.s32 %v2215, %v2217
      %v2219 = vrot.slane %v2205, %v2218
      %v2220 = vcombine.high %v2212, %v2212
      %v2221 = vcombine.high %v1855, %v1855
      %v2223 = vunpack.c.l.s4 1983009808
      %v2224 = vunpack.c.0.s8 %v2223
      %v2225 = vlaneseq
      %v2226 = vshrl.u32 %v2225, 7
      %v2227 = vsub.s32 %v2224, %v2226
      %v2228 = vrot.slane %v1855, %v2227
      %v2230 = vunpack.c.l.s4 1983009808
      %v2231 = vunpack.c.0.s8 %v2230
      %v2232 = vlaneseq
      %v2233 = vshrl.u32 %v2232, 7
      %v2234 = vsub.s32 %v2231, %v2233
      %v2235 = vrot.slane %v2221, %v2234
      %v2236 = vcombine.high %v2228, %v2228
      %v2237 = vcombine.high %v2235, %v2235
      %v2238 = vcombine.high %v1856, %v1856
      %v2240 = vunpack.c.l.s4 1983009808
      %v2241 = vunpack.c.0.s8 %v2240
      %v2242 = vlaneseq
      %v2243 = vshrl.u32 %v2242, 7
      %v2244 = vsub.s32 %v2241, %v2243
      %v2245 = vrot.slane %v1856, %v2244
      %v2247 = vunpack.c.l.s4 1983009808
      %v2248 = vunpack.c.0.s8 %v2247
      %v2249 = vlaneseq
      %v2250 = vshrl.u32 %v2249, 7
      %v2251 = vsub.s32 %v2248, %v2250
      %v2252 = vrot.slane %v2238, %v2251
      %v2253 = vcombine.high %v2245, %v2245
      %v2254 = vcombine.high %v1857, %v1857
      %v2256 = vunpack.c.l.s4 1983009808
      %v2257 = vunpack.c.0.s8 %v2256
      %v2258 = vlaneseq
      %v2259 = vshrl.u32 %v2258, 7
      %v2260 = vsub.s32 %v2257, %v2259
      %v2261 = vrot.slane %v1857, %v2260
      %v2263 = vunpack.c.l.s4 1983009808
      %v2264 = vunpack.c.0.s8 %v2263
      %v2265 = vlaneseq
      %v2266 = vshrl.u32 %v2265, 7
      %v2267 = vsub.s32 %v2264, %v2266
      %v2268 = vrot.slane %v2254, %v2267
      %v2269 = vcombine.high %v2261, %v2261
      %v2270 = vcombine.high %v2268, %v2268
      %v2271 = vcombine.high %v1858, %v1858
      %v2273 = vunpack.c.l.s4 1983009808
      %v2274 = vunpack.c.0.s8 %v2273
      %v2275 = vlaneseq
      %v2276 = vshrl.u32 %v2275, 7
      %v2277 = vsub.s32 %v2274, %v2276
      %v2278 = vrot.slane %v1858, %v2277
      %v2280 = vunpack.c.l.s4 1983009808
      %v2281 = vunpack.c.0.s8 %v2280
      %v2282 = vlaneseq
      %v2283 = vshrl.u32 %v2282, 7
      %v2284 = vsub.s32 %v2281, %v2283
      %v2285 = vrot.slane %v2271, %v2284
      %v2286 = vcombine.high %v2278, %v2278
      %v2287 = vcombine.high %v1859, %v1859
      %v2289 = vunpack.c.l.s4 1983009808
      %v2290 = vunpack.c.0.s8 %v2289
      %v2291 = vlaneseq
      %v2292 = vshrl.u32 %v2291, 7
      %v2293 = vsub.s32 %v2290, %v2292
      %v2294 = vrot.slane %v1859, %v2293
      %v2296 = vunpack.c.l.s4 1983009808
      %v2297 = vunpack.c.0.s8 %v2296
      %v2298 = vlaneseq
      %v2299 = vshrl.u32 %v2298, 7
      %v2300 = vsub.s32 %v2297, %v2299
      %v2301 = vrot.slane %v2287, %v2300
      %v2302 = vcombine.high %v2294, %v2294
      %v2303 = vcombine.high %v2301, %v2301
      %v2304 = vcombine.high %v1860, %v1860
      %v2306 = vunpack.c.l.s4 1983009808
      %v2307 = vunpack.c.0.s8 %v2306
      %v2308 = vlaneseq
      %v2309 = vshrl.u32 %v2308, 7
      %v2310 = vsub.s32 %v2307, %v2309
      %v2311 = vrot.slane %v1860, %v2310
      %v2313 = vunpack.c.l.s4 1983009808
      %v2314 = vunpack.c.0.s8 %v2313
      %v2315 = vlaneseq
      %v2316 = vshrl.u32 %v2315, 7
      %v2317 = vsub.s32 %v2314, %v2316
      %v2318 = vrot.slane %v2304, %v2317
      %v2319 = vcombine.high %v2311, %v2311
      %v2320 = vcombine.high %v1861, %v1861
      %v2322 = vunpack.c.l.s4 1983009808
      %v2323 = vunpack.c.0.s8 %v2322
      %v2324 = vlaneseq
      %v2325 = vshrl.u32 %v2324, 7
      %v2326 = vsub.s32 %v2323, %v2325
      %v2327 = vrot.slane %v1861, %v2326
      %v2329 = vunpack.c.l.s4 1983009808
      %v2330 = vunpack.c.0.s8 %v2329
      %v2331 = vlaneseq
      %v2332 = vshrl.u32 %v2331, 7
      %v2333 = vsub.s32 %v2330, %v2332
      %v2334 = vrot.slane %v2320, %v2333
      %v2335 = vcombine.high %v2327, %v2327
      %v2336 = vcombine.high %v2334, %v2334
      %v2337 = vcombine.high %v1862, %v1862
      %v2339 = vunpack.c.l.s4 1983009808
      %v2340 = vunpack.c.0.s8 %v2339
      %v2341 = vlaneseq
      %v2342 = vshrl.u32 %v2341, 7
      %v2343 = vsub.s32 %v2340, %v2342
      %v2344 = vrot.slane %v1862, %v2343
      %v2346 = vunpack.c.l.s4 1983009808
      %v2347 = vunpack.c.0.s8 %v2346
      %v2348 = vlaneseq
      %v2349 = vshrl.u32 %v2348, 7
      %v2350 = vsub.s32 %v2347, %v2349
      %v2351 = vrot.slane %v2337, %v2350
      %v2352 = vcombine.high %v2344, %v2344
      %v2353 = vld [vmem:[%s1834 + $0x1] sm:$0xff]
      %v2354 = vld [vmem:[%s1834 + $0x9] sm:$0x3f]
      %v2355 = vld [vmem:[%s1834 + $0x11] sm:$0xff]
      %v2356 = vld [vmem:[%s1834 + $0x19] sm:$0x3f]
      %v2357 = vld [vmem:[%s1834 + $0x21] sm:$0xff]
      %v2358 = vld [vmem:[%s1834 + $0x29] sm:$0x3f]
      %v2359 = vld [vmem:[%s1834 + $0x31] sm:$0xff]
      %v2360 = vld [vmem:[%s1834 + $0x39] sm:$0x3f]
      %v2361 = vld [vmem:[%s1834 + $0x41] sm:$0xff]
      %v2362 = vld [vmem:[%s1834 + $0x49] sm:$0x3f]
      %v2363 = vld [vmem:[%s1834 + $0x51] sm:$0xff]
      %v2364 = vld [vmem:[%s1834 + $0x59] sm:$0x3f]
      %v2365 = vld [vmem:[%s1834 + $0x61] sm:$0xff]
      %v2366 = vld [vmem:[%s1834 + $0x69] sm:$0x3f]
      %v2367 = vld [vmem:[%s1834 + $0x71] sm:$0xff]
      %v2368 = vld [vmem:[%s1834 + $0x79] sm:$0x3f]
      %v2369 = vld [vmem:[%s1834 + $0x81] sm:$0xff]
      %v2370 = vld [vmem:[%s1834 + $0x89] sm:$0x3f]
      %v2371 = vld [vmem:[%s1834 + $0x91] sm:$0xff]
      %v2372 = vld [vmem:[%s1834 + $0x99] sm:$0x3f]
      %v2373 = vld [vmem:[%s1834 + $0xa1] sm:$0xff]
      %v2374 = vld [vmem:[%s1834 + $0xa9] sm:$0x3f]
      %v2375 = vld [vmem:[%s1834 + $0xb1] sm:$0xff]
      %v2376 = vld [vmem:[%s1834 + $0xb9] sm:$0x3f]
      %v2377 = vld [vmem:[%s1834 + $0xc1] sm:$0xff]
      %v2378 = vld [vmem:[%s1834 + $0xc9] sm:$0x3f]
      %v2379 = vld [vmem:[%s1834 + $0xd1] sm:$0xff]
      %v2380 = vld [vmem:[%s1834 + $0xd9] sm:$0x3f]
      %v2409 = vcombine.high %v2353, %v2353
      %v2411 = vunpack.c.l.s4 1983009808
      %v2412 = vunpack.c.0.s8 %v2411
      %v2413 = vlaneseq
      %v2414 = vshrl.u32 %v2413, 7
      %v2415 = vsub.s32 %v2412, %v2414
      %v2416 = vrot.slane %v2353, %v2415
      %v2418 = vunpack.c.l.s4 1983009808
      %v2419 = vunpack.c.0.s8 %v2418
      %v2420 = vlaneseq
      %v2421 = vshrl.u32 %v2420, 7
      %v2422 = vsub.s32 %v2419, %v2421
      %v2423 = vrot.slane %v2409, %v2422
      %v2424 = vcombine.high %v2416, %v2416
      %v2425 = vcombine.high %v2423, %v2423
      %v2426 = vcombine.high %v2354, %v2354
      %v2428 = vunpack.c.l.s4 1983009808
      %v2429 = vunpack.c.0.s8 %v2428
      %v2430 = vlaneseq
      %v2431 = vshrl.u32 %v2430, 7
      %v2432 = vsub.s32 %v2429, %v2431
      %v2433 = vrot.slane %v2354, %v2432
      %v2435 = vunpack.c.l.s4 1983009808
      %v2436 = vunpack.c.0.s8 %v2435
      %v2437 = vlaneseq
      %v2438 = vshrl.u32 %v2437, 7
      %v2439 = vsub.s32 %v2436, %v2438
      %v2440 = vrot.slane %v2426, %v2439
      %v2441 = vcombine.high %v2433, %v2433
      %v2442 = vcombine.high %v2355, %v2355
      %v2444 = vunpack.c.l.s4 1983009808
      %v2445 = vunpack.c.0.s8 %v2444
      %v2446 = vlaneseq
      %v2447 = vshrl.u32 %v2446, 7
      %v2448 = vsub.s32 %v2445, %v2447
      %v2449 = vrot.slane %v2355, %v2448
      %v2451 = vunpack.c.l.s4 1983009808
      %v2452 = vunpack.c.0.s8 %v2451
      %v2453 = vlaneseq
      %v2454 = vshrl.u32 %v2453, 7
      %v2455 = vsub.s32 %v2452, %v2454
      %v2456 = vrot.slane %v2442, %v2455
      %v2457 = vcombine.high %v2449, %v2449
      %v2458 = vcombine.high %v2456, %v2456
      %v2459 = vcombine.high %v2356, %v2356
      %v2461 = vunpack.c.l.s4 1983009808
      %v2462 = vunpack.c.0.s8 %v2461
      %v2463 = vlaneseq
      %v2464 = vshrl.u32 %v2463, 7
      %v2465 = vsub.s32 %v2462, %v2464
      %v2466 = vrot.slane %v2356, %v2465
      %v2468 = vunpack.c.l.s4 1983009808
      %v2469 = vunpack.c.0.s8 %v2468
      %v2470 = vlaneseq
      %v2471 = vshrl.u32 %v2470, 7
      %v2472 = vsub.s32 %v2469, %v2471
      %v2473 = vrot.slane %v2459, %v2472
      %v2474 = vcombine.high %v2466, %v2466
      %v2475 = vcombine.high %v2357, %v2357
      %v2477 = vunpack.c.l.s4 1983009808
      %v2478 = vunpack.c.0.s8 %v2477
      %v2479 = vlaneseq
      %v2480 = vshrl.u32 %v2479, 7
      %v2481 = vsub.s32 %v2478, %v2480
      %v2482 = vrot.slane %v2357, %v2481
      %v2484 = vunpack.c.l.s4 1983009808
      %v2485 = vunpack.c.0.s8 %v2484
      %v2486 = vlaneseq
      %v2487 = vshrl.u32 %v2486, 7
      %v2488 = vsub.s32 %v2485, %v2487
      %v2489 = vrot.slane %v2475, %v2488
      %v2490 = vcombine.high %v2482, %v2482
      %v2491 = vcombine.high %v2489, %v2489
      %v2492 = vcombine.high %v2358, %v2358
      %v2494 = vunpack.c.l.s4 1983009808
      %v2495 = vunpack.c.0.s8 %v2494
      %v2496 = vlaneseq
      %v2497 = vshrl.u32 %v2496, 7
      %v2498 = vsub.s32 %v2495, %v2497
      %v2499 = vrot.slane %v2358, %v2498
      %v2501 = vunpack.c.l.s4 1983009808
      %v2502 = vunpack.c.0.s8 %v2501
      %v2503 = vlaneseq
      %v2504 = vshrl.u32 %v2503, 7
      %v2505 = vsub.s32 %v2502, %v2504
      %v2506 = vrot.slane %v2492, %v2505
      %v2507 = vcombine.high %v2499, %v2499
      %v2508 = vcombine.high %v2359, %v2359
      %v2510 = vunpack.c.l.s4 1983009808
      %v2511 = vunpack.c.0.s8 %v2510
      %v2512 = vlaneseq
      %v2513 = vshrl.u32 %v2512, 7
      %v2514 = vsub.s32 %v2511, %v2513
      %v2515 = vrot.slane %v2359, %v2514
      %v2517 = vunpack.c.l.s4 1983009808
      %v2518 = vunpack.c.0.s8 %v2517
      %v2519 = vlaneseq
      %v2520 = vshrl.u32 %v2519, 7
      %v2521 = vsub.s32 %v2518, %v2520
      %v2522 = vrot.slane %v2508, %v2521
      %v2523 = vcombine.high %v2515, %v2515
      %v2524 = vcombine.high %v2522, %v2522
      %v2525 = vcombine.high %v2360, %v2360
      %v2527 = vunpack.c.l.s4 1983009808
      %v2528 = vunpack.c.0.s8 %v2527
      %v2529 = vlaneseq
      %v2530 = vshrl.u32 %v2529, 7
      %v2531 = vsub.s32 %v2528, %v2530
      %v2532 = vrot.slane %v2360, %v2531
      %v2534 = vunpack.c.l.s4 1983009808
      %v2535 = vunpack.c.0.s8 %v2534
      %v2536 = vlaneseq
      %v2537 = vshrl.u32 %v2536, 7
      %v2538 = vsub.s32 %v2535, %v2537
      %v2539 = vrot.slane %v2525, %v2538
      %v2540 = vcombine.high %v2532, %v2532
      %v2541 = vcombine.high %v2361, %v2361
      %v2543 = vunpack.c.l.s4 1983009808
      %v2544 = vunpack.c.0.s8 %v2543
      %v2545 = vlaneseq
      %v2546 = vshrl.u32 %v2545, 7
      %v2547 = vsub.s32 %v2544, %v2546
      %v2548 = vrot.slane %v2361, %v2547
      %v2550 = vunpack.c.l.s4 1983009808
      %v2551 = vunpack.c.0.s8 %v2550
      %v2552 = vlaneseq
      %v2553 = vshrl.u32 %v2552, 7
      %v2554 = vsub.s32 %v2551, %v2553
      %v2555 = vrot.slane %v2541, %v2554
      %v2556 = vcombine.high %v2548, %v2548
      %v2557 = vcombine.high %v2555, %v2555
      %v2558 = vcombine.high %v2362, %v2362
      %v2560 = vunpack.c.l.s4 1983009808
      %v2561 = vunpack.c.0.s8 %v2560
      %v2562 = vlaneseq
      %v2563 = vshrl.u32 %v2562, 7
      %v2564 = vsub.s32 %v2561, %v2563
      %v2565 = vrot.slane %v2362, %v2564
      %v2567 = vunpack.c.l.s4 1983009808
      %v2568 = vunpack.c.0.s8 %v2567
      %v2569 = vlaneseq
      %v2570 = vshrl.u32 %v2569, 7
      %v2571 = vsub.s32 %v2568, %v2570
      %v2572 = vrot.slane %v2558, %v2571
      %v2573 = vcombine.high %v2565, %v2565
      %v2574 = vcombine.high %v2363, %v2363
      %v2576 = vunpack.c.l.s4 1983009808
      %v2577 = vunpack.c.0.s8 %v2576
      %v2578 = vlaneseq
      %v2579 = vshrl.u32 %v2578, 7
      %v2580 = vsub.s32 %v2577, %v2579
      %v2581 = vrot.slane %v2363, %v2580
      %v2583 = vunpack.c.l.s4 1983009808
      %v2584 = vunpack.c.0.s8 %v2583
      %v2585 = vlaneseq
      %v2586 = vshrl.u32 %v2585, 7
      %v2587 = vsub.s32 %v2584, %v2586
      %v2588 = vrot.slane %v2574, %v2587
      %v2589 = vcombine.high %v2581, %v2581
      %v2590 = vcombine.high %v2588, %v2588
      %v2591 = vcombine.high %v2364, %v2364
      %v2593 = vunpack.c.l.s4 1983009808
      %v2594 = vunpack.c.0.s8 %v2593
      %v2595 = vlaneseq
      %v2596 = vshrl.u32 %v2595, 7
      %v2597 = vsub.s32 %v2594, %v2596
      %v2598 = vrot.slane %v2364, %v2597
      %v2600 = vunpack.c.l.s4 1983009808
      %v2601 = vunpack.c.0.s8 %v2600
      %v2602 = vlaneseq
      %v2603 = vshrl.u32 %v2602, 7
      %v2604 = vsub.s32 %v2601, %v2603
      %v2605 = vrot.slane %v2591, %v2604
      %v2606 = vcombine.high %v2598, %v2598
      %v2607 = vcombine.high %v2365, %v2365
      %v2609 = vunpack.c.l.s4 1983009808
      %v2610 = vunpack.c.0.s8 %v2609
      %v2611 = vlaneseq
      %v2612 = vshrl.u32 %v2611, 7
      %v2613 = vsub.s32 %v2610, %v2612
      %v2614 = vrot.slane %v2365, %v2613
      %v2616 = vunpack.c.l.s4 1983009808
      %v2617 = vunpack.c.0.s8 %v2616
      %v2618 = vlaneseq
      %v2619 = vshrl.u32 %v2618, 7
      %v2620 = vsub.s32 %v2617, %v2619
      %v2621 = vrot.slane %v2607, %v2620
      %v2622 = vcombine.high %v2614, %v2614
      %v2623 = vcombine.high %v2621, %v2621
      %v2624 = vcombine.high %v2366, %v2366
      %v2626 = vunpack.c.l.s4 1983009808
      %v2627 = vunpack.c.0.s8 %v2626
      %v2628 = vlaneseq
      %v2629 = vshrl.u32 %v2628, 7
      %v2630 = vsub.s32 %v2627, %v2629
      %v2631 = vrot.slane %v2366, %v2630
      %v2633 = vunpack.c.l.s4 1983009808
      %v2634 = vunpack.c.0.s8 %v2633
      %v2635 = vlaneseq
      %v2636 = vshrl.u32 %v2635, 7
      %v2637 = vsub.s32 %v2634, %v2636
      %v2638 = vrot.slane %v2624, %v2637
      %v2639 = vcombine.high %v2631, %v2631
      %v2640 = vcombine.high %v2367, %v2367
      %v2642 = vunpack.c.l.s4 1983009808
      %v2643 = vunpack.c.0.s8 %v2642
      %v2644 = vlaneseq
      %v2645 = vshrl.u32 %v2644, 7
      %v2646 = vsub.s32 %v2643, %v2645
      %v2647 = vrot.slane %v2367, %v2646
      %v2649 = vunpack.c.l.s4 1983009808
      %v2650 = vunpack.c.0.s8 %v2649
      %v2651 = vlaneseq
      %v2652 = vshrl.u32 %v2651, 7
      %v2653 = vsub.s32 %v2650, %v2652
      %v2654 = vrot.slane %v2640, %v2653
      %v2655 = vcombine.high %v2647, %v2647
      %v2656 = vcombine.high %v2654, %v2654
      %v2657 = vcombine.high %v2368, %v2368
      %v2659 = vunpack.c.l.s4 1983009808
      %v2660 = vunpack.c.0.s8 %v2659
      %v2661 = vlaneseq
      %v2662 = vshrl.u32 %v2661, 7
      %v2663 = vsub.s32 %v2660, %v2662
      %v2664 = vrot.slane %v2368, %v2663
      %v2666 = vunpack.c.l.s4 1983009808
      %v2667 = vunpack.c.0.s8 %v2666
      %v2668 = vlaneseq
      %v2669 = vshrl.u32 %v2668, 7
      %v2670 = vsub.s32 %v2667, %v2669
      %v2671 = vrot.slane %v2657, %v2670
      %v2672 = vcombine.high %v2664, %v2664
      %v2673 = vcombine.high %v2369, %v2369
      %v2675 = vunpack.c.l.s4 1983009808
      %v2676 = vunpack.c.0.s8 %v2675
      %v2677 = vlaneseq
      %v2678 = vshrl.u32 %v2677, 7
      %v2679 = vsub.s32 %v2676, %v2678
      %v2680 = vrot.slane %v2369, %v2679
      %v2682 = vunpack.c.l.s4 1983009808
      %v2683 = vunpack.c.0.s8 %v2682
      %v2684 = vlaneseq
      %v2685 = vshrl.u32 %v2684, 7
      %v2686 = vsub.s32 %v2683, %v2685
      %v2687 = vrot.slane %v2673, %v2686
      %v2688 = vcombine.high %v2680, %v2680
      %v2689 = vcombine.high %v2687, %v2687
      %v2690 = vcombine.high %v2370, %v2370
      %v2692 = vunpack.c.l.s4 1983009808
      %v2693 = vunpack.c.0.s8 %v2692
      %v2694 = vlaneseq
      %v2695 = vshrl.u32 %v2694, 7
      %v2696 = vsub.s32 %v2693, %v2695
      %v2697 = vrot.slane %v2370, %v2696
      %v2699 = vunpack.c.l.s4 1983009808
      %v2700 = vunpack.c.0.s8 %v2699
      %v2701 = vlaneseq
      %v2702 = vshrl.u32 %v2701, 7
      %v2703 = vsub.s32 %v2700, %v2702
      %v2704 = vrot.slane %v2690, %v2703
      %v2705 = vcombine.high %v2697, %v2697
      %v2706 = vcombine.high %v2371, %v2371
      %v2708 = vunpack.c.l.s4 1983009808
      %v2709 = vunpack.c.0.s8 %v2708
      %v2710 = vlaneseq
      %v2711 = vshrl.u32 %v2710, 7
      %v2712 = vsub.s32 %v2709, %v2711
      %v2713 = vrot.slane %v2371, %v2712
      %v2715 = vunpack.c.l.s4 1983009808
      %v2716 = vunpack.c.0.s8 %v2715
      %v2717 = vlaneseq
      %v2718 = vshrl.u32 %v2717, 7
      %v2719 = vsub.s32 %v2716, %v2718
      %v2720 = vrot.slane %v2706, %v2719
      %v2721 = vcombine.high %v2713, %v2713
      %v2722 = vcombine.high %v2720, %v2720
      %v2723 = vcombine.high %v2372, %v2372
      %v2725 = vunpack.c.l.s4 1983009808
      %v2726 = vunpack.c.0.s8 %v2725
      %v2727 = vlaneseq
      %v2728 = vshrl.u32 %v2727, 7
      %v2729 = vsub.s32 %v2726, %v2728
      %v2730 = vrot.slane %v2372, %v2729
      %v2732 = vunpack.c.l.s4 1983009808
      %v2733 = vunpack.c.0.s8 %v2732
      %v2734 = vlaneseq
      %v2735 = vshrl.u32 %v2734, 7
      %v2736 = vsub.s32 %v2733, %v2735
      %v2737 = vrot.slane %v2723, %v2736
      %v2738 = vcombine.high %v2730, %v2730
      %v2739 = vcombine.high %v2373, %v2373
      %v2741 = vunpack.c.l.s4 1983009808
      %v2742 = vunpack.c.0.s8 %v2741
      %v2743 = vlaneseq
      %v2744 = vshrl.u32 %v2743, 7
      %v2745 = vsub.s32 %v2742, %v2744
      %v2746 = vrot.slane %v2373, %v2745
      %v2748 = vunpack.c.l.s4 1983009808
      %v2749 = vunpack.c.0.s8 %v2748
      %v2750 = vlaneseq
      %v2751 = vshrl.u32 %v2750, 7
      %v2752 = vsub.s32 %v2749, %v2751
      %v2753 = vrot.slane %v2739, %v2752
      %v2754 = vcombine.high %v2746, %v2746
      %v2755 = vcombine.high %v2753, %v2753
      %v2756 = vcombine.high %v2374, %v2374
      %v2758 = vunpack.c.l.s4 1983009808
      %v2759 = vunpack.c.0.s8 %v2758
      %v2760 = vlaneseq
      %v2761 = vshrl.u32 %v2760, 7
      %v2762 = vsub.s32 %v2759, %v2761
      %v2763 = vrot.slane %v2374, %v2762
      %v2765 = vunpack.c.l.s4 1983009808
      %v2766 = vunpack.c.0.s8 %v2765
      %v2767 = vlaneseq
      %v2768 = vshrl.u32 %v2767, 7
      %v2769 = vsub.s32 %v2766, %v2768
      %v2770 = vrot.slane %v2756, %v2769
      %v2771 = vcombine.high %v2763, %v2763
      %v2772 = vcombine.high %v2375, %v2375
      %v2774 = vunpack.c.l.s4 1983009808
      %v2775 = vunpack.c.0.s8 %v2774
      %v2776 = vlaneseq
      %v2777 = vshrl.u32 %v2776, 7
      %v2778 = vsub.s32 %v2775, %v2777
      %v2779 = vrot.slane %v2375, %v2778
      %v2781 = vunpack.c.l.s4 1983009808
      %v2782 = vunpack.c.0.s8 %v2781
      %v2783 = vlaneseq
      %v2784 = vshrl.u32 %v2783, 7
      %v2785 = vsub.s32 %v2782, %v2784
      %v2786 = vrot.slane %v2772, %v2785
      %v2787 = vcombine.high %v2779, %v2779
      %v2788 = vcombine.high %v2786, %v2786
      %v2789 = vcombine.high %v2376, %v2376
      %v2791 = vunpack.c.l.s4 1983009808
      %v2792 = vunpack.c.0.s8 %v2791
      %v2793 = vlaneseq
      %v2794 = vshrl.u32 %v2793, 7
      %v2795 = vsub.s32 %v2792, %v2794
      %v2796 = vrot.slane %v2376, %v2795
      %v2798 = vunpack.c.l.s4 1983009808
      %v2799 = vunpack.c.0.s8 %v2798
      %v2800 = vlaneseq
      %v2801 = vshrl.u32 %v2800, 7
      %v2802 = vsub.s32 %v2799, %v2801
      %v2803 = vrot.slane %v2789, %v2802
      %v2804 = vcombine.high %v2796, %v2796
      %v2805 = vcombine.high %v2377, %v2377
      %v2807 = vunpack.c.l.s4 1983009808
      %v2808 = vunpack.c.0.s8 %v2807
      %v2809 = vlaneseq
      %v2810 = vshrl.u32 %v2809, 7
      %v2811 = vsub.s32 %v2808, %v2810
      %v2812 = vrot.slane %v2377, %v2811
      %v2814 = vunpack.c.l.s4 1983009808
      %v2815 = vunpack.c.0.s8 %v2814
      %v2816 = vlaneseq
      %v2817 = vshrl.u32 %v2816, 7
      %v2818 = vsub.s32 %v2815, %v2817
      %v2819 = vrot.slane %v2805, %v2818
      %v2820 = vcombine.high %v2812, %v2812
      %v2821 = vcombine.high %v2819, %v2819
      %v2822 = vcombine.high %v2378, %v2378
      %v2824 = vunpack.c.l.s4 1983009808
      %v2825 = vunpack.c.0.s8 %v2824
      %v2826 = vlaneseq
      %v2827 = vshrl.u32 %v2826, 7
      %v2828 = vsub.s32 %v2825, %v2827
      %v2829 = vrot.slane %v2378, %v2828
      %v2831 = vunpack.c.l.s4 1983009808
      %v2832 = vunpack.c.0.s8 %v2831
      %v2833 = vlaneseq
      %v2834 = vshrl.u32 %v2833, 7
      %v2835 = vsub.s32 %v2832, %v2834
      %v2836 = vrot.slane %v2822, %v2835
      %v2837 = vcombine.high %v2829, %v2829
      %v2838 = vcombine.high %v2379, %v2379
      %v2840 = vunpack.c.l.s4 1983009808
      %v2841 = vunpack.c.0.s8 %v2840
      %v2842 = vlaneseq
      %v2843 = vshrl.u32 %v2842, 7
      %v2844 = vsub.s32 %v2841, %v2843
      %v2845 = vrot.slane %v2379, %v2844
      %v2847 = vunpack.c.l.s4 1983009808
      %v2848 = vunpack.c.0.s8 %v2847
      %v2849 = vlaneseq
      %v2850 = vshrl.u32 %v2849, 7
      %v2851 = vsub.s32 %v2848, %v2850
      %v2852 = vrot.slane %v2838, %v2851
      %v2853 = vcombine.high %v2845, %v2845
      %v2854 = vcombine.high %v2852, %v2852
      %v2855 = vcombine.high %v2380, %v2380
      %v2857 = vunpack.c.l.s4 1983009808
      %v2858 = vunpack.c.0.s8 %v2857
      %v2859 = vlaneseq
      %v2860 = vshrl.u32 %v2859, 7
      %v2861 = vsub.s32 %v2858, %v2860
      %v2862 = vrot.slane %v2380, %v2861
      %v2864 = vunpack.c.l.s4 1983009808
      %v2865 = vunpack.c.0.s8 %v2864
      %v2866 = vlaneseq
      %v2867 = vshrl.u32 %v2866, 7
      %v2868 = vsub.s32 %v2865, %v2867
      %v2869 = vrot.slane %v2855, %v2868
      %v2870 = vcombine.high %v2862, %v2862
      %v2871 = vld [vmem:[%s1834 + $0x2] sm:$0xff]
      %v2872 = vld [vmem:[%s1834 + $0xa] sm:$0x3f]
      %v2873 = vld [vmem:[%s1834 + $0x12] sm:$0xff]
      %v2874 = vld [vmem:[%s1834 + $0x1a] sm:$0x3f]
      %v2875 = vld [vmem:[%s1834 + $0x22] sm:$0xff]
      %v2876 = vld [vmem:[%s1834 + $0x2a] sm:$0x3f]
      %v2877 = vld [vmem:[%s1834 + $0x32] sm:$0xff]
      %v2878 = vld [vmem:[%s1834 + $0x3a] sm:$0x3f]
      %v2879 = vld [vmem:[%s1834 + $0x42] sm:$0xff]
      %v2880 = vld [vmem:[%s1834 + $0x4a] sm:$0x3f]
      %v2881 = vld [vmem:[%s1834 + $0x52] sm:$0xff]
      %v2882 = vld [vmem:[%s1834 + $0x5a] sm:$0x3f]
      %v2883 = vld [vmem:[%s1834 + $0x62] sm:$0xff]
      %v2884 = vld [vmem:[%s1834 + $0x6a] sm:$0x3f]
      %v2885 = vld [vmem:[%s1834 + $0x72] sm:$0xff]
      %v2886 = vld [vmem:[%s1834 + $0x7a] sm:$0x3f]
      %v2887 = vld [vmem:[%s1834 + $0x82] sm:$0xff]
      %v2888 = vld [vmem:[%s1834 + $0x8a] sm:$0x3f]
      %v2889 = vld [vmem:[%s1834 + $0x92] sm:$0xff]
      %v2890 = vld [vmem:[%s1834 + $0x9a] sm:$0x3f]
      %v2891 = vld [vmem:[%s1834 + $0xa2] sm:$0xff]
      %v2892 = vld [vmem:[%s1834 + $0xaa] sm:$0x3f]
      %v2893 = vld [vmem:[%s1834 + $0xb2] sm:$0xff]
      %v2894 = vld [vmem:[%s1834 + $0xba] sm:$0x3f]
      %v2895 = vld [vmem:[%s1834 + $0xc2] sm:$0xff]
      %v2896 = vld [vmem:[%s1834 + $0xca] sm:$0x3f]
      %v2897 = vld [vmem:[%s1834 + $0xd2] sm:$0xff]
      %v2898 = vld [vmem:[%s1834 + $0xda] sm:$0x3f]
      %v2927 = vcombine.high %v2871, %v2871
      %v2929 = vunpack.c.l.s4 1983009808
      %v2930 = vunpack.c.0.s8 %v2929
      %v2931 = vlaneseq
      %v2932 = vshrl.u32 %v2931, 7
      %v2933 = vsub.s32 %v2930, %v2932
      %v2934 = vrot.slane %v2871, %v2933
      %v2936 = vunpack.c.l.s4 1983009808
      %v2937 = vunpack.c.0.s8 %v2936
      %v2938 = vlaneseq
      %v2939 = vshrl.u32 %v2938, 7
      %v2940 = vsub.s32 %v2937, %v2939
      %v2941 = vrot.slane %v2927, %v2940
      %v2942 = vcombine.high %v2934, %v2934
      %v2943 = vcombine.high %v2941, %v2941
      %v2944 = vcombine.high %v2872, %v2872
      %v2946 = vunpack.c.l.s4 1983009808
      %v2947 = vunpack.c.0.s8 %v2946
      %v2948 = vlaneseq
      %v2949 = vshrl.u32 %v2948, 7
      %v2950 = vsub.s32 %v2947, %v2949
      %v2951 = vrot.slane %v2872, %v2950
      %v2953 = vunpack.c.l.s4 1983009808
      %v2954 = vunpack.c.0.s8 %v2953
      %v2955 = vlaneseq
      %v2956 = vshrl.u32 %v2955, 7
      %v2957 = vsub.s32 %v2954, %v2956
      %v2958 = vrot.slane %v2944, %v2957
      %v2959 = vcombine.high %v2951, %v2951
      %v2960 = vcombine.high %v2873, %v2873
      %v2962 = vunpack.c.l.s4 1983009808
      %v2963 = vunpack.c.0.s8 %v2962
      %v2964 = vlaneseq
      %v2965 = vshrl.u32 %v2964, 7
      %v2966 = vsub.s32 %v2963, %v2965
      %v2967 = vrot.slane %v2873, %v2966
      %v2969 = vunpack.c.l.s4 1983009808
      %v2970 = vunpack.c.0.s8 %v2969
      %v2971 = vlaneseq
      %v2972 = vshrl.u32 %v2971, 7
      %v2973 = vsub.s32 %v2970, %v2972
      %v2974 = vrot.slane %v2960, %v2973
      %v2975 = vcombine.high %v2967, %v2967
      %v2976 = vcombine.high %v2974, %v2974
      %v2977 = vcombine.high %v2874, %v2874
      %v2979 = vunpack.c.l.s4 1983009808
      %v2980 = vunpack.c.0.s8 %v2979
      %v2981 = vlaneseq
      %v2982 = vshrl.u32 %v2981, 7
      %v2983 = vsub.s32 %v2980, %v2982
      %v2984 = vrot.slane %v2874, %v2983
      %v2986 = vunpack.c.l.s4 1983009808
      %v2987 = vunpack.c.0.s8 %v2986
      %v2988 = vlaneseq
      %v2989 = vshrl.u32 %v2988, 7
      %v2990 = vsub.s32 %v2987, %v2989
      %v2991 = vrot.slane %v2977, %v2990
      %v2992 = vcombine.high %v2984, %v2984
      %v2993 = vcombine.high %v2875, %v2875
      %v2995 = vunpack.c.l.s4 1983009808
      %v2996 = vunpack.c.0.s8 %v2995
      %v2997 = vlaneseq
      %v2998 = vshrl.u32 %v2997, 7
      %v2999 = vsub.s32 %v2996, %v2998
      %v3000 = vrot.slane %v2875, %v2999
      %v3002 = vunpack.c.l.s4 1983009808
      %v3003 = vunpack.c.0.s8 %v3002
      %v3004 = vlaneseq
      %v3005 = vshrl.u32 %v3004, 7
      %v3006 = vsub.s32 %v3003, %v3005
      %v3007 = vrot.slane %v2993, %v3006
      %v3008 = vcombine.high %v3000, %v3000
      %v3009 = vcombine.high %v3007, %v3007
      %v3010 = vcombine.high %v2876, %v2876
      %v3012 = vunpack.c.l.s4 1983009808
      %v3013 = vunpack.c.0.s8 %v3012
      %v3014 = vlaneseq
      %v3015 = vshrl.u32 %v3014, 7
      %v3016 = vsub.s32 %v3013, %v3015
      %v3017 = vrot.slane %v2876, %v3016
      %v3019 = vunpack.c.l.s4 1983009808
      %v3020 = vunpack.c.0.s8 %v3019
      %v3021 = vlaneseq
      %v3022 = vshrl.u32 %v3021, 7
      %v3023 = vsub.s32 %v3020, %v3022
      %v3024 = vrot.slane %v3010, %v3023
      %v3025 = vcombine.high %v3017, %v3017
      %v3026 = vcombine.high %v2877, %v2877
      %v3028 = vunpack.c.l.s4 1983009808
      %v3029 = vunpack.c.0.s8 %v3028
      %v3030 = vlaneseq
      %v3031 = vshrl.u32 %v3030, 7
      %v3032 = vsub.s32 %v3029, %v3031
      %v3033 = vrot.slane %v2877, %v3032
      %v3035 = vunpack.c.l.s4 1983009808
      %v3036 = vunpack.c.0.s8 %v3035
      %v3037 = vlaneseq
      %v3038 = vshrl.u32 %v3037, 7
      %v3039 = vsub.s32 %v3036, %v3038
      %v3040 = vrot.slane %v3026, %v3039
      %v3041 = vcombine.high %v3033, %v3033
      %v3042 = vcombine.high %v3040, %v3040
      %v3043 = vcombine.high %v2878, %v2878
      %v3045 = vunpack.c.l.s4 1983009808
      %v3046 = vunpack.c.0.s8 %v3045
      %v3047 = vlaneseq
      %v3048 = vshrl.u32 %v3047, 7
      %v3049 = vsub.s32 %v3046, %v3048
      %v3050 = vrot.slane %v2878, %v3049
      %v3052 = vunpack.c.l.s4 1983009808
      %v3053 = vunpack.c.0.s8 %v3052
      %v3054 = vlaneseq
      %v3055 = vshrl.u32 %v3054, 7
      %v3056 = vsub.s32 %v3053, %v3055
      %v3057 = vrot.slane %v3043, %v3056
      %v3058 = vcombine.high %v3050, %v3050
      %v3059 = vcombine.high %v2879, %v2879
      %v3061 = vunpack.c.l.s4 1983009808
      %v3062 = vunpack.c.0.s8 %v3061
      %v3063 = vlaneseq
      %v3064 = vshrl.u32 %v3063, 7
      %v3065 = vsub.s32 %v3062, %v3064
      %v3066 = vrot.slane %v2879, %v3065
      %v3068 = vunpack.c.l.s4 1983009808
      %v3069 = vunpack.c.0.s8 %v3068
      %v3070 = vlaneseq
      %v3071 = vshrl.u32 %v3070, 7
      %v3072 = vsub.s32 %v3069, %v3071
      %v3073 = vrot.slane %v3059, %v3072
      %v3074 = vcombine.high %v3066, %v3066
      %v3075 = vcombine.high %v3073, %v3073
      %v3076 = vcombine.high %v2880, %v2880
      %v3078 = vunpack.c.l.s4 1983009808
      %v3079 = vunpack.c.0.s8 %v3078
      %v3080 = vlaneseq
      %v3081 = vshrl.u32 %v3080, 7
      %v3082 = vsub.s32 %v3079, %v3081
      %v3083 = vrot.slane %v2880, %v3082
      %v3085 = vunpack.c.l.s4 1983009808
      %v3086 = vunpack.c.0.s8 %v3085
      %v3087 = vlaneseq
      %v3088 = vshrl.u32 %v3087, 7
      %v3089 = vsub.s32 %v3086, %v3088
      %v3090 = vrot.slane %v3076, %v3089
      %v3091 = vcombine.high %v3083, %v3083
      %v3092 = vcombine.high %v2881, %v2881
      %v3094 = vunpack.c.l.s4 1983009808
      %v3095 = vunpack.c.0.s8 %v3094
      %v3096 = vlaneseq
      %v3097 = vshrl.u32 %v3096, 7
      %v3098 = vsub.s32 %v3095, %v3097
      %v3099 = vrot.slane %v2881, %v3098
      %v3101 = vunpack.c.l.s4 1983009808
      %v3102 = vunpack.c.0.s8 %v3101
      %v3103 = vlaneseq
      %v3104 = vshrl.u32 %v3103, 7
      %v3105 = vsub.s32 %v3102, %v3104
      %v3106 = vrot.slane %v3092, %v3105
      %v3107 = vcombine.high %v3099, %v3099
      %v3108 = vcombine.high %v3106, %v3106
      %v3109 = vcombine.high %v2882, %v2882
      %v3111 = vunpack.c.l.s4 1983009808
      %v3112 = vunpack.c.0.s8 %v3111
      %v3113 = vlaneseq
      %v3114 = vshrl.u32 %v3113, 7
      %v3115 = vsub.s32 %v3112, %v3114
      %v3116 = vrot.slane %v2882, %v3115
      %v3118 = vunpack.c.l.s4 1983009808
      %v3119 = vunpack.c.0.s8 %v3118
      %v3120 = vlaneseq
      %v3121 = vshrl.u32 %v3120, 7
      %v3122 = vsub.s32 %v3119, %v3121
      %v3123 = vrot.slane %v3109, %v3122
      %v3124 = vcombine.high %v3116, %v3116
      %v3125 = vcombine.high %v2883, %v2883
      %v3127 = vunpack.c.l.s4 1983009808
      %v3128 = vunpack.c.0.s8 %v3127
      %v3129 = vlaneseq
      %v3130 = vshrl.u32 %v3129, 7
      %v3131 = vsub.s32 %v3128, %v3130
      %v3132 = vrot.slane %v2883, %v3131
      %v3134 = vunpack.c.l.s4 1983009808
      %v3135 = vunpack.c.0.s8 %v3134
      %v3136 = vlaneseq
      %v3137 = vshrl.u32 %v3136, 7
      %v3138 = vsub.s32 %v3135, %v3137
      %v3139 = vrot.slane %v3125, %v3138
      %v3140 = vcombine.high %v3132, %v3132
      %v3141 = vcombine.high %v3139, %v3139
      %v3142 = vcombine.high %v2884, %v2884
      %v3144 = vunpack.c.l.s4 1983009808
      %v3145 = vunpack.c.0.s8 %v3144
      %v3146 = vlaneseq
      %v3147 = vshrl.u32 %v3146, 7
      %v3148 = vsub.s32 %v3145, %v3147
      %v3149 = vrot.slane %v2884, %v3148
      %v3151 = vunpack.c.l.s4 1983009808
      %v3152 = vunpack.c.0.s8 %v3151
      %v3153 = vlaneseq
      %v3154 = vshrl.u32 %v3153, 7
      %v3155 = vsub.s32 %v3152, %v3154
      %v3156 = vrot.slane %v3142, %v3155
      %v3157 = vcombine.high %v3149, %v3149
      %v3158 = vcombine.high %v2885, %v2885
      %v3160 = vunpack.c.l.s4 1983009808
      %v3161 = vunpack.c.0.s8 %v3160
      %v3162 = vlaneseq
      %v3163 = vshrl.u32 %v3162, 7
      %v3164 = vsub.s32 %v3161, %v3163
      %v3165 = vrot.slane %v2885, %v3164
      %v3167 = vunpack.c.l.s4 1983009808
      %v3168 = vunpack.c.0.s8 %v3167
      %v3169 = vlaneseq
      %v3170 = vshrl.u32 %v3169, 7
      %v3171 = vsub.s32 %v3168, %v3170
      %v3172 = vrot.slane %v3158, %v3171
      %v3173 = vcombine.high %v3165, %v3165
      %v3174 = vcombine.high %v3172, %v3172
      %v3175 = vcombine.high %v2886, %v2886
      %v3177 = vunpack.c.l.s4 1983009808
      %v3178 = vunpack.c.0.s8 %v3177
      %v3179 = vlaneseq
      %v3180 = vshrl.u32 %v3179, 7
      %v3181 = vsub.s32 %v3178, %v3180
      %v3182 = vrot.slane %v2886, %v3181
      %v3184 = vunpack.c.l.s4 1983009808
      %v3185 = vunpack.c.0.s8 %v3184
      %v3186 = vlaneseq
      %v3187 = vshrl.u32 %v3186, 7
      %v3188 = vsub.s32 %v3185, %v3187
      %v3189 = vrot.slane %v3175, %v3188
      %v3190 = vcombine.high %v3182, %v3182
      %v3191 = vcombine.high %v2887, %v2887
      %v3193 = vunpack.c.l.s4 1983009808
      %v3194 = vunpack.c.0.s8 %v3193
      %v3195 = vlaneseq
      %v3196 = vshrl.u32 %v3195, 7
      %v3197 = vsub.s32 %v3194, %v3196
      %v3198 = vrot.slane %v2887, %v3197
      %v3200 = vunpack.c.l.s4 1983009808
      %v3201 = vunpack.c.0.s8 %v3200
      %v3202 = vlaneseq
      %v3203 = vshrl.u32 %v3202, 7
      %v3204 = vsub.s32 %v3201, %v3203
      %v3205 = vrot.slane %v3191, %v3204
      %v3206 = vcombine.high %v3198, %v3198
      %v3207 = vcombine.high %v3205, %v3205
      %v3208 = vcombine.high %v2888, %v2888
      %v3210 = vunpack.c.l.s4 1983009808
      %v3211 = vunpack.c.0.s8 %v3210
      %v3212 = vlaneseq
      %v3213 = vshrl.u32 %v3212, 7
      %v3214 = vsub.s32 %v3211, %v3213
      %v3215 = vrot.slane %v2888, %v3214
      %v3217 = vunpack.c.l.s4 1983009808
      %v3218 = vunpack.c.0.s8 %v3217
      %v3219 = vlaneseq
      %v3220 = vshrl.u32 %v3219, 7
      %v3221 = vsub.s32 %v3218, %v3220
      %v3222 = vrot.slane %v3208, %v3221
      %v3223 = vcombine.high %v3215, %v3215
      %v3224 = vcombine.high %v2889, %v2889
      %v3226 = vunpack.c.l.s4 1983009808
      %v3227 = vunpack.c.0.s8 %v3226
      %v3228 = vlaneseq
      %v3229 = vshrl.u32 %v3228, 7
      %v3230 = vsub.s32 %v3227, %v3229
      %v3231 = vrot.slane %v2889, %v3230
      %v3233 = vunpack.c.l.s4 1983009808
      %v3234 = vunpack.c.0.s8 %v3233
      %v3235 = vlaneseq
      %v3236 = vshrl.u32 %v3235, 7
      %v3237 = vsub.s32 %v3234, %v3236
      %v3238 = vrot.slane %v3224, %v3237
      %v3239 = vcombine.high %v3231, %v3231
      %v3240 = vcombine.high %v3238, %v3238
      %v3241 = vcombine.high %v2890, %v2890
      %v3243 = vunpack.c.l.s4 1983009808
      %v3244 = vunpack.c.0.s8 %v3243
      %v3245 = vlaneseq
      %v3246 = vshrl.u32 %v3245, 7
      %v3247 = vsub.s32 %v3244, %v3246
      %v3248 = vrot.slane %v2890, %v3247
      %v3250 = vunpack.c.l.s4 1983009808
      %v3251 = vunpack.c.0.s8 %v3250
      %v3252 = vlaneseq
      %v3253 = vshrl.u32 %v3252, 7
      %v3254 = vsub.s32 %v3251, %v3253
      %v3255 = vrot.slane %v3241, %v3254
      %v3256 = vcombine.high %v3248, %v3248
      %v3257 = vcombine.high %v2891, %v2891
      %v3259 = vunpack.c.l.s4 1983009808
      %v3260 = vunpack.c.0.s8 %v3259
      %v3261 = vlaneseq
      %v3262 = vshrl.u32 %v3261, 7
      %v3263 = vsub.s32 %v3260, %v3262
      %v3264 = vrot.slane %v2891, %v3263
      %v3266 = vunpack.c.l.s4 1983009808
      %v3267 = vunpack.c.0.s8 %v3266
      %v3268 = vlaneseq
      %v3269 = vshrl.u32 %v3268, 7
      %v3270 = vsub.s32 %v3267, %v3269
      %v3271 = vrot.slane %v3257, %v3270
      %v3272 = vcombine.high %v3264, %v3264
      %v3273 = vcombine.high %v3271, %v3271
      %v3274 = vcombine.high %v2892, %v2892
      %v3276 = vunpack.c.l.s4 1983009808
      %v3277 = vunpack.c.0.s8 %v3276
      %v3278 = vlaneseq
      %v3279 = vshrl.u32 %v3278, 7
      %v3280 = vsub.s32 %v3277, %v3279
      %v3281 = vrot.slane %v2892, %v3280
      %v3283 = vunpack.c.l.s4 1983009808
      %v3284 = vunpack.c.0.s8 %v3283
      %v3285 = vlaneseq
      %v3286 = vshrl.u32 %v3285, 7
      %v3287 = vsub.s32 %v3284, %v3286
      %v3288 = vrot.slane %v3274, %v3287
      %v3289 = vcombine.high %v3281, %v3281
      %v3290 = vcombine.high %v2893, %v2893
      %v3292 = vunpack.c.l.s4 1983009808
      %v3293 = vunpack.c.0.s8 %v3292
      %v3294 = vlaneseq
      %v3295 = vshrl.u32 %v3294, 7
      %v3296 = vsub.s32 %v3293, %v3295
      %v3297 = vrot.slane %v2893, %v3296
      %v3299 = vunpack.c.l.s4 1983009808
      %v3300 = vunpack.c.0.s8 %v3299
      %v3301 = vlaneseq
      %v3302 = vshrl.u32 %v3301, 7
      %v3303 = vsub.s32 %v3300, %v3302
      %v3304 = vrot.slane %v3290, %v3303
      %v3305 = vcombine.high %v3297, %v3297
      %v3306 = vcombine.high %v3304, %v3304
      %v3307 = vcombine.high %v2894, %v2894
      %v3309 = vunpack.c.l.s4 1983009808
      %v3310 = vunpack.c.0.s8 %v3309
      %v3311 = vlaneseq
      %v3312 = vshrl.u32 %v3311, 7
      %v3313 = vsub.s32 %v3310, %v3312
      %v3314 = vrot.slane %v2894, %v3313
      %v3316 = vunpack.c.l.s4 1983009808
      %v3317 = vunpack.c.0.s8 %v3316
      %v3318 = vlaneseq
      %v3319 = vshrl.u32 %v3318, 7
      %v3320 = vsub.s32 %v3317, %v3319
      %v3321 = vrot.slane %v3307, %v3320
      %v3322 = vcombine.high %v3314, %v3314
      %v3323 = vcombine.high %v2895, %v2895
      %v3325 = vunpack.c.l.s4 1983009808
      %v3326 = vunpack.c.0.s8 %v3325
      %v3327 = vlaneseq
      %v3328 = vshrl.u32 %v3327, 7
      %v3329 = vsub.s32 %v3326, %v3328
      %v3330 = vrot.slane %v2895, %v3329
      %v3332 = vunpack.c.l.s4 1983009808
      %v3333 = vunpack.c.0.s8 %v3332
      %v3334 = vlaneseq
      %v3335 = vshrl.u32 %v3334, 7
      %v3336 = vsub.s32 %v3333, %v3335
      %v3337 = vrot.slane %v3323, %v3336
      %v3338 = vcombine.high %v3330, %v3330
      %v3339 = vcombine.high %v3337, %v3337
      %v3340 = vcombine.high %v2896, %v2896
      %v3342 = vunpack.c.l.s4 1983009808
      %v3343 = vunpack.c.0.s8 %v3342
      %v3344 = vlaneseq
      %v3345 = vshrl.u32 %v3344, 7
      %v3346 = vsub.s32 %v3343, %v3345
      %v3347 = vrot.slane %v2896, %v3346
      %v3349 = vunpack.c.l.s4 1983009808
      %v3350 = vunpack.c.0.s8 %v3349
      %v3351 = vlaneseq
      %v3352 = vshrl.u32 %v3351, 7
      %v3353 = vsub.s32 %v3350, %v3352
      %v3354 = vrot.slane %v3340, %v3353
      %v3355 = vcombine.high %v3347, %v3347
      %v3356 = vcombine.high %v2897, %v2897
      %v3358 = vunpack.c.l.s4 1983009808
      %v3359 = vunpack.c.0.s8 %v3358
      %v3360 = vlaneseq
      %v3361 = vshrl.u32 %v3360, 7
      %v3362 = vsub.s32 %v3359, %v3361
      %v3363 = vrot.slane %v2897, %v3362
      %v3365 = vunpack.c.l.s4 1983009808
      %v3366 = vunpack.c.0.s8 %v3365
      %v3367 = vlaneseq
      %v3368 = vshrl.u32 %v3367, 7
      %v3369 = vsub.s32 %v3366, %v3368
      %v3370 = vrot.slane %v3356, %v3369
      %v3371 = vcombine.high %v3363, %v3363
      %v3372 = vcombine.high %v3370, %v3370
      %v3373 = vcombine.high %v2898, %v2898
      %v3375 = vunpack.c.l.s4 1983009808
      %v3376 = vunpack.c.0.s8 %v3375
      %v3377 = vlaneseq
      %v3378 = vshrl.u32 %v3377, 7
      %v3379 = vsub.s32 %v3376, %v3378
      %v3380 = vrot.slane %v2898, %v3379
      %v3382 = vunpack.c.l.s4 1983009808
      %v3383 = vunpack.c.0.s8 %v3382
      %v3384 = vlaneseq
      %v3385 = vshrl.u32 %v3384, 7
      %v3386 = vsub.s32 %v3383, %v3385
      %v3387 = vrot.slane %v3373, %v3386
      %v3388 = vcombine.high %v3380, %v3380
      %s3389 = scalar_lea.vmem %s273, 32
      %v3390 = vld [vmem:[%s3389] sm:$0xff]
      %v3391 = vld [vmem:[%s3389 + $0x8] sm:$0x3f]
      %v3392 = vld [vmem:[%s3389 + $0x10] sm:$0xff]
      %v3393 = vld [vmem:[%s3389 + $0x18] sm:$0x3f]
      %v3394 = vld [vmem:[%s3389 + $0x20] sm:$0xff]
      %v3395 = vld [vmem:[%s3389 + $0x28] sm:$0x3f]
      %v3396 = vld [vmem:[%s3389 + $0x30] sm:$0xff]
      %v3397 = vld [vmem:[%s3389 + $0x38] sm:$0x3f]
      %v3398 = vld [vmem:[%s3389 + $0x40] sm:$0xff]
      %v3399 = vld [vmem:[%s3389 + $0x48] sm:$0x3f]
      %v3400 = vld [vmem:[%s3389 + $0x50] sm:$0xff]
      %v3401 = vld [vmem:[%s3389 + $0x58] sm:$0x3f]
      %v3402 = vld [vmem:[%s3389 + $0x60] sm:$0xff]
      %v3403 = vld [vmem:[%s3389 + $0x68] sm:$0x3f]
      %v3404 = vld [vmem:[%s3389 + $0x70] sm:$0xff]
      %v3405 = vld [vmem:[%s3389 + $0x78] sm:$0x3f]
      %v3406 = vld [vmem:[%s3389 + $0x80] sm:$0xff]
      %v3407 = vld [vmem:[%s3389 + $0x88] sm:$0x3f]
      %v3408 = vld [vmem:[%s3389 + $0x90] sm:$0xff]
      %v3409 = vld [vmem:[%s3389 + $0x98] sm:$0x3f]
      %v3410 = vld [vmem:[%s3389 + $0xa0] sm:$0xff]
      %v3411 = vld [vmem:[%s3389 + $0xa8] sm:$0x3f]
      %v3412 = vld [vmem:[%s3389 + $0xb0] sm:$0xff]
      %v3413 = vld [vmem:[%s3389 + $0xb8] sm:$0x3f]
      %v3414 = vld [vmem:[%s3389 + $0xc0] sm:$0xff]
      %v3415 = vld [vmem:[%s3389 + $0xc8] sm:$0x3f]
      %v3416 = vld [vmem:[%s3389 + $0xd0] sm:$0xff]
      %v3417 = vld [vmem:[%s3389 + $0xd8] sm:$0x3f]
      %v3446 = vcombine.high %v3390, %v3390
      %v3448 = vunpack.c.l.s4 1983009808
      %v3449 = vunpack.c.0.s8 %v3448
      %v3450 = vlaneseq
      %v3451 = vshrl.u32 %v3450, 7
      %v3452 = vsub.s32 %v3449, %v3451
      %v3453 = vrot.slane %v3390, %v3452
      %v3455 = vunpack.c.l.s4 1983009808
      %v3456 = vunpack.c.0.s8 %v3455
      %v3457 = vlaneseq
      %v3458 = vshrl.u32 %v3457, 7
      %v3459 = vsub.s32 %v3456, %v3458
      %v3460 = vrot.slane %v3446, %v3459
      %v3461 = vcombine.high %v3453, %v3453
      %v3462 = vcombine.high %v3460, %v3460
      %v3463 = vcombine.high %v3391, %v3391
      %v3465 = vunpack.c.l.s4 1983009808
      %v3466 = vunpack.c.0.s8 %v3465
      %v3467 = vlaneseq
      %v3468 = vshrl.u32 %v3467, 7
      %v3469 = vsub.s32 %v3466, %v3468
      %v3470 = vrot.slane %v3391, %v3469
      %v3472 = vunpack.c.l.s4 1983009808
      %v3473 = vunpack.c.0.s8 %v3472
      %v3474 = vlaneseq
      %v3475 = vshrl.u32 %v3474, 7
      %v3476 = vsub.s32 %v3473, %v3475
      %v3477 = vrot.slane %v3463, %v3476
      %v3478 = vcombine.high %v3470, %v3470
      %v3479 = vcombine.high %v3392, %v3392
      %v3481 = vunpack.c.l.s4 1983009808
      %v3482 = vunpack.c.0.s8 %v3481
      %v3483 = vlaneseq
      %v3484 = vshrl.u32 %v3483, 7
      %v3485 = vsub.s32 %v3482, %v3484
      %v3486 = vrot.slane %v3392, %v3485
      %v3488 = vunpack.c.l.s4 1983009808
      %v3489 = vunpack.c.0.s8 %v3488
      %v3490 = vlaneseq
      %v3491 = vshrl.u32 %v3490, 7
      %v3492 = vsub.s32 %v3489, %v3491
      %v3493 = vrot.slane %v3479, %v3492
      %v3494 = vcombine.high %v3486, %v3486
      %v3495 = vcombine.high %v3493, %v3493
      %v3496 = vcombine.high %v3393, %v3393
      %v3498 = vunpack.c.l.s4 1983009808
      %v3499 = vunpack.c.0.s8 %v3498
      %v3500 = vlaneseq
      %v3501 = vshrl.u32 %v3500, 7
      %v3502 = vsub.s32 %v3499, %v3501
      %v3503 = vrot.slane %v3393, %v3502
      %v3505 = vunpack.c.l.s4 1983009808
      %v3506 = vunpack.c.0.s8 %v3505
      %v3507 = vlaneseq
      %v3508 = vshrl.u32 %v3507, 7
      %v3509 = vsub.s32 %v3506, %v3508
      %v3510 = vrot.slane %v3496, %v3509
      %v3511 = vcombine.high %v3503, %v3503
      %v3512 = vcombine.high %v3394, %v3394
      %v3514 = vunpack.c.l.s4 1983009808
      %v3515 = vunpack.c.0.s8 %v3514
      %v3516 = vlaneseq
      %v3517 = vshrl.u32 %v3516, 7
      %v3518 = vsub.s32 %v3515, %v3517
      %v3519 = vrot.slane %v3394, %v3518
      %v3521 = vunpack.c.l.s4 1983009808
      %v3522 = vunpack.c.0.s8 %v3521
      %v3523 = vlaneseq
      %v3524 = vshrl.u32 %v3523, 7
      %v3525 = vsub.s32 %v3522, %v3524
      %v3526 = vrot.slane %v3512, %v3525
      %v3527 = vcombine.high %v3519, %v3519
      %v3528 = vcombine.high %v3526, %v3526
      %v3529 = vcombine.high %v3395, %v3395
      %v3531 = vunpack.c.l.s4 1983009808
      %v3532 = vunpack.c.0.s8 %v3531
      %v3533 = vlaneseq
      %v3534 = vshrl.u32 %v3533, 7
      %v3535 = vsub.s32 %v3532, %v3534
      %v3536 = vrot.slane %v3395, %v3535
      %v3538 = vunpack.c.l.s4 1983009808
      %v3539 = vunpack.c.0.s8 %v3538
      %v3540 = vlaneseq
      %v3541 = vshrl.u32 %v3540, 7
      %v3542 = vsub.s32 %v3539, %v3541
      %v3543 = vrot.slane %v3529, %v3542
      %v3544 = vcombine.high %v3536, %v3536
      %v3545 = vcombine.high %v3396, %v3396
      %v3547 = vunpack.c.l.s4 1983009808
      %v3548 = vunpack.c.0.s8 %v3547
      %v3549 = vlaneseq
      %v3550 = vshrl.u32 %v3549, 7
      %v3551 = vsub.s32 %v3548, %v3550
      %v3552 = vrot.slane %v3396, %v3551
      %v3554 = vunpack.c.l.s4 1983009808
      %v3555 = vunpack.c.0.s8 %v3554
      %v3556 = vlaneseq
      %v3557 = vshrl.u32 %v3556, 7
      %v3558 = vsub.s32 %v3555, %v3557
      %v3559 = vrot.slane %v3545, %v3558
      %v3560 = vcombine.high %v3552, %v3552
      %v3561 = vcombine.high %v3559, %v3559
      %v3562 = vcombine.high %v3397, %v3397
      %v3564 = vunpack.c.l.s4 1983009808
      %v3565 = vunpack.c.0.s8 %v3564
      %v3566 = vlaneseq
      %v3567 = vshrl.u32 %v3566, 7
      %v3568 = vsub.s32 %v3565, %v3567
      %v3569 = vrot.slane %v3397, %v3568
      %v3571 = vunpack.c.l.s4 1983009808
      %v3572 = vunpack.c.0.s8 %v3571
      %v3573 = vlaneseq
      %v3574 = vshrl.u32 %v3573, 7
      %v3575 = vsub.s32 %v3572, %v3574
      %v3576 = vrot.slane %v3562, %v3575
      %v3577 = vcombine.high %v3569, %v3569
      %v3578 = vcombine.high %v3398, %v3398
      %v3580 = vunpack.c.l.s4 1983009808
      %v3581 = vunpack.c.0.s8 %v3580
      %v3582 = vlaneseq
      %v3583 = vshrl.u32 %v3582, 7
      %v3584 = vsub.s32 %v3581, %v3583
      %v3585 = vrot.slane %v3398, %v3584
      %v3587 = vunpack.c.l.s4 1983009808
      %v3588 = vunpack.c.0.s8 %v3587
      %v3589 = vlaneseq
      %v3590 = vshrl.u32 %v3589, 7
      %v3591 = vsub.s32 %v3588, %v3590
      %v3592 = vrot.slane %v3578, %v3591
      %v3593 = vcombine.high %v3585, %v3585
      %v3594 = vcombine.high %v3592, %v3592
      %v3595 = vcombine.high %v3399, %v3399
      %v3597 = vunpack.c.l.s4 1983009808
      %v3598 = vunpack.c.0.s8 %v3597
      %v3599 = vlaneseq
      %v3600 = vshrl.u32 %v3599, 7
      %v3601 = vsub.s32 %v3598, %v3600
      %v3602 = vrot.slane %v3399, %v3601
      %v3604 = vunpack.c.l.s4 1983009808
      %v3605 = vunpack.c.0.s8 %v3604
      %v3606 = vlaneseq
      %v3607 = vshrl.u32 %v3606, 7
      %v3608 = vsub.s32 %v3605, %v3607
      %v3609 = vrot.slane %v3595, %v3608
      %v3610 = vcombine.high %v3602, %v3602
      %v3611 = vcombine.high %v3400, %v3400
      %v3613 = vunpack.c.l.s4 1983009808
      %v3614 = vunpack.c.0.s8 %v3613
      %v3615 = vlaneseq
      %v3616 = vshrl.u32 %v3615, 7
      %v3617 = vsub.s32 %v3614, %v3616
      %v3618 = vrot.slane %v3400, %v3617
      %v3620 = vunpack.c.l.s4 1983009808
      %v3621 = vunpack.c.0.s8 %v3620
      %v3622 = vlaneseq
      %v3623 = vshrl.u32 %v3622, 7
      %v3624 = vsub.s32 %v3621, %v3623
      %v3625 = vrot.slane %v3611, %v3624
      %v3626 = vcombine.high %v3618, %v3618
      %v3627 = vcombine.high %v3625, %v3625
      %v3628 = vcombine.high %v3401, %v3401
      %v3630 = vunpack.c.l.s4 1983009808
      %v3631 = vunpack.c.0.s8 %v3630
      %v3632 = vlaneseq
      %v3633 = vshrl.u32 %v3632, 7
      %v3634 = vsub.s32 %v3631, %v3633
      %v3635 = vrot.slane %v3401, %v3634
      %v3637 = vunpack.c.l.s4 1983009808
      %v3638 = vunpack.c.0.s8 %v3637
      %v3639 = vlaneseq
      %v3640 = vshrl.u32 %v3639, 7
      %v3641 = vsub.s32 %v3638, %v3640
      %v3642 = vrot.slane %v3628, %v3641
      %v3643 = vcombine.high %v3635, %v3635
      %v3644 = vcombine.high %v3402, %v3402
      %v3646 = vunpack.c.l.s4 1983009808
      %v3647 = vunpack.c.0.s8 %v3646
      %v3648 = vlaneseq
      %v3649 = vshrl.u32 %v3648, 7
      %v3650 = vsub.s32 %v3647, %v3649
      %v3651 = vrot.slane %v3402, %v3650
      %v3653 = vunpack.c.l.s4 1983009808
      %v3654 = vunpack.c.0.s8 %v3653
      %v3655 = vlaneseq
      %v3656 = vshrl.u32 %v3655, 7
      %v3657 = vsub.s32 %v3654, %v3656
      %v3658 = vrot.slane %v3644, %v3657
      %v3659 = vcombine.high %v3651, %v3651
      %v3660 = vcombine.high %v3658, %v3658
      %v3661 = vcombine.high %v3403, %v3403
      %v3663 = vunpack.c.l.s4 1983009808
      %v3664 = vunpack.c.0.s8 %v3663
      %v3665 = vlaneseq
      %v3666 = vshrl.u32 %v3665, 7
      %v3667 = vsub.s32 %v3664, %v3666
      %v3668 = vrot.slane %v3403, %v3667
      %v3670 = vunpack.c.l.s4 1983009808
      %v3671 = vunpack.c.0.s8 %v3670
      %v3672 = vlaneseq
      %v3673 = vshrl.u32 %v3672, 7
      %v3674 = vsub.s32 %v3671, %v3673
      %v3675 = vrot.slane %v3661, %v3674
      %v3676 = vcombine.high %v3668, %v3668
      %v3677 = vcombine.high %v3404, %v3404
      %v3679 = vunpack.c.l.s4 1983009808
      %v3680 = vunpack.c.0.s8 %v3679
      %v3681 = vlaneseq
      %v3682 = vshrl.u32 %v3681, 7
      %v3683 = vsub.s32 %v3680, %v3682
      %v3684 = vrot.slane %v3404, %v3683
      %v3686 = vunpack.c.l.s4 1983009808
      %v3687 = vunpack.c.0.s8 %v3686
      %v3688 = vlaneseq
      %v3689 = vshrl.u32 %v3688, 7
      %v3690 = vsub.s32 %v3687, %v3689
      %v3691 = vrot.slane %v3677, %v3690
      %v3692 = vcombine.high %v3684, %v3684
      %v3693 = vcombine.high %v3691, %v3691
      %v3694 = vcombine.high %v3405, %v3405
      %v3696 = vunpack.c.l.s4 1983009808
      %v3697 = vunpack.c.0.s8 %v3696
      %v3698 = vlaneseq
      %v3699 = vshrl.u32 %v3698, 7
      %v3700 = vsub.s32 %v3697, %v3699
      %v3701 = vrot.slane %v3405, %v3700
      %v3703 = vunpack.c.l.s4 1983009808
      %v3704 = vunpack.c.0.s8 %v3703
      %v3705 = vlaneseq
      %v3706 = vshrl.u32 %v3705, 7
      %v3707 = vsub.s32 %v3704, %v3706
      %v3708 = vrot.slane %v3694, %v3707
      %v3709 = vcombine.high %v3701, %v3701
      %v3710 = vcombine.high %v3406, %v3406
      %v3712 = vunpack.c.l.s4 1983009808
      %v3713 = vunpack.c.0.s8 %v3712
      %v3714 = vlaneseq
      %v3715 = vshrl.u32 %v3714, 7
      %v3716 = vsub.s32 %v3713, %v3715
      %v3717 = vrot.slane %v3406, %v3716
      %v3719 = vunpack.c.l.s4 1983009808
      %v3720 = vunpack.c.0.s8 %v3719
      %v3721 = vlaneseq
      %v3722 = vshrl.u32 %v3721, 7
      %v3723 = vsub.s32 %v3720, %v3722
      %v3724 = vrot.slane %v3710, %v3723
      %v3725 = vcombine.high %v3717, %v3717
      %v3726 = vcombine.high %v3724, %v3724
      %v3727 = vcombine.high %v3407, %v3407
      %v3729 = vunpack.c.l.s4 1983009808
      %v3730 = vunpack.c.0.s8 %v3729
      %v3731 = vlaneseq
      %v3732 = vshrl.u32 %v3731, 7
      %v3733 = vsub.s32 %v3730, %v3732
      %v3734 = vrot.slane %v3407, %v3733
      %v3736 = vunpack.c.l.s4 1983009808
      %v3737 = vunpack.c.0.s8 %v3736
      %v3738 = vlaneseq
      %v3739 = vshrl.u32 %v3738, 7
      %v3740 = vsub.s32 %v3737, %v3739
      %v3741 = vrot.slane %v3727, %v3740
      %v3742 = vcombine.high %v3734, %v3734
      %v3743 = vcombine.high %v3408, %v3408
      %v3745 = vunpack.c.l.s4 1983009808
      %v3746 = vunpack.c.0.s8 %v3745
      %v3747 = vlaneseq
      %v3748 = vshrl.u32 %v3747, 7
      %v3749 = vsub.s32 %v3746, %v3748
      %v3750 = vrot.slane %v3408, %v3749
      %v3752 = vunpack.c.l.s4 1983009808
      %v3753 = vunpack.c.0.s8 %v3752
      %v3754 = vlaneseq
      %v3755 = vshrl.u32 %v3754, 7
      %v3756 = vsub.s32 %v3753, %v3755
      %v3757 = vrot.slane %v3743, %v3756
      %v3758 = vcombine.high %v3750, %v3750
      %v3759 = vcombine.high %v3757, %v3757
      %v3760 = vcombine.high %v3409, %v3409
      %v3762 = vunpack.c.l.s4 1983009808
      %v3763 = vunpack.c.0.s8 %v3762
      %v3764 = vlaneseq
      %v3765 = vshrl.u32 %v3764, 7
      %v3766 = vsub.s32 %v3763, %v3765
      %v3767 = vrot.slane %v3409, %v3766
      %v3769 = vunpack.c.l.s4 1983009808
      %v3770 = vunpack.c.0.s8 %v3769
      %v3771 = vlaneseq
      %v3772 = vshrl.u32 %v3771, 7
      %v3773 = vsub.s32 %v3770, %v3772
      %v3774 = vrot.slane %v3760, %v3773
      %v3775 = vcombine.high %v3767, %v3767
      %v3776 = vcombine.high %v3410, %v3410
      %v3778 = vunpack.c.l.s4 1983009808
      %v3779 = vunpack.c.0.s8 %v3778
      %v3780 = vlaneseq
      %v3781 = vshrl.u32 %v3780, 7
      %v3782 = vsub.s32 %v3779, %v3781
      %v3783 = vrot.slane %v3410, %v3782
      %v3785 = vunpack.c.l.s4 1983009808
      %v3786 = vunpack.c.0.s8 %v3785
      %v3787 = vlaneseq
      %v3788 = vshrl.u32 %v3787, 7
      %v3789 = vsub.s32 %v3786, %v3788
      %v3790 = vrot.slane %v3776, %v3789
      %v3791 = vcombine.high %v3783, %v3783
      %v3792 = vcombine.high %v3790, %v3790
      %v3793 = vcombine.high %v3411, %v3411
      %v3795 = vunpack.c.l.s4 1983009808
      %v3796 = vunpack.c.0.s8 %v3795
      %v3797 = vlaneseq
      %v3798 = vshrl.u32 %v3797, 7
      %v3799 = vsub.s32 %v3796, %v3798
      %v3800 = vrot.slane %v3411, %v3799
      %v3802 = vunpack.c.l.s4 1983009808
      %v3803 = vunpack.c.0.s8 %v3802
      %v3804 = vlaneseq
      %v3805 = vshrl.u32 %v3804, 7
      %v3806 = vsub.s32 %v3803, %v3805
      %v3807 = vrot.slane %v3793, %v3806
      %v3808 = vcombine.high %v3800, %v3800
      %v3809 = vcombine.high %v3412, %v3412
      %v3811 = vunpack.c.l.s4 1983009808
      %v3812 = vunpack.c.0.s8 %v3811
      %v3813 = vlaneseq
      %v3814 = vshrl.u32 %v3813, 7
      %v3815 = vsub.s32 %v3812, %v3814
      %v3816 = vrot.slane %v3412, %v3815
      %v3818 = vunpack.c.l.s4 1983009808
      %v3819 = vunpack.c.0.s8 %v3818
      %v3820 = vlaneseq
      %v3821 = vshrl.u32 %v3820, 7
      %v3822 = vsub.s32 %v3819, %v3821
      %v3823 = vrot.slane %v3809, %v3822
      %v3824 = vcombine.high %v3816, %v3816
      %v3825 = vcombine.high %v3823, %v3823
      %v3826 = vcombine.high %v3413, %v3413
      %v3828 = vunpack.c.l.s4 1983009808
      %v3829 = vunpack.c.0.s8 %v3828
      %v3830 = vlaneseq
      %v3831 = vshrl.u32 %v3830, 7
      %v3832 = vsub.s32 %v3829, %v3831
      %v3833 = vrot.slane %v3413, %v3832
      %v3835 = vunpack.c.l.s4 1983009808
      %v3836 = vunpack.c.0.s8 %v3835
      %v3837 = vlaneseq
      %v3838 = vshrl.u32 %v3837, 7
      %v3839 = vsub.s32 %v3836, %v3838
      %v3840 = vrot.slane %v3826, %v3839
      %v3841 = vcombine.high %v3833, %v3833
      %v3842 = vcombine.high %v3414, %v3414
      %v3844 = vunpack.c.l.s4 1983009808
      %v3845 = vunpack.c.0.s8 %v3844
      %v3846 = vlaneseq
      %v3847 = vshrl.u32 %v3846, 7
      %v3848 = vsub.s32 %v3845, %v3847
      %v3849 = vrot.slane %v3414, %v3848
      %v3851 = vunpack.c.l.s4 1983009808
      %v3852 = vunpack.c.0.s8 %v3851
      %v3853 = vlaneseq
      %v3854 = vshrl.u32 %v3853, 7
      %v3855 = vsub.s32 %v3852, %v3854
      %v3856 = vrot.slane %v3842, %v3855
      %v3857 = vcombine.high %v3849, %v3849
      %v3858 = vcombine.high %v3856, %v3856
      %v3859 = vcombine.high %v3415, %v3415
      %v3861 = vunpack.c.l.s4 1983009808
      %v3862 = vunpack.c.0.s8 %v3861
      %v3863 = vlaneseq
      %v3864 = vshrl.u32 %v3863, 7
      %v3865 = vsub.s32 %v3862, %v3864
      %v3866 = vrot.slane %v3415, %v3865
      %v3868 = vunpack.c.l.s4 1983009808
      %v3869 = vunpack.c.0.s8 %v3868
      %v3870 = vlaneseq
      %v3871 = vshrl.u32 %v3870, 7
      %v3872 = vsub.s32 %v3869, %v3871
      %v3873 = vrot.slane %v3859, %v3872
      %v3874 = vcombine.high %v3866, %v3866
      %v3875 = vcombine.high %v3416, %v3416
      %v3877 = vunpack.c.l.s4 1983009808
      %v3878 = vunpack.c.0.s8 %v3877
      %v3879 = vlaneseq
      %v3880 = vshrl.u32 %v3879, 7
      %v3881 = vsub.s32 %v3878, %v3880
      %v3882 = vrot.slane %v3416, %v3881
      %v3884 = vunpack.c.l.s4 1983009808
      %v3885 = vunpack.c.0.s8 %v3884
      %v3886 = vlaneseq
      %v3887 = vshrl.u32 %v3886, 7
      %v3888 = vsub.s32 %v3885, %v3887
      %v3889 = vrot.slane %v3875, %v3888
      %v3890 = vcombine.high %v3882, %v3882
      %v3891 = vcombine.high %v3889, %v3889
      %v3892 = vcombine.high %v3417, %v3417
      %v3894 = vunpack.c.l.s4 1983009808
      %v3895 = vunpack.c.0.s8 %v3894
      %v3896 = vlaneseq
      %v3897 = vshrl.u32 %v3896, 7
      %v3898 = vsub.s32 %v3895, %v3897
      %v3899 = vrot.slane %v3417, %v3898
      %v3901 = vunpack.c.l.s4 1983009808
      %v3902 = vunpack.c.0.s8 %v3901
      %v3903 = vlaneseq
      %v3904 = vshrl.u32 %v3903, 7
      %v3905 = vsub.s32 %v3902, %v3904
      %v3906 = vrot.slane %v3892, %v3905
      %v3907 = vcombine.high %v3899, %v3899
      %v3908 = vld [vmem:[%s3389 + $0x1] sm:$0xff]
      %v3909 = vld [vmem:[%s3389 + $0x9] sm:$0x3f]
      %v3910 = vld [vmem:[%s3389 + $0x11] sm:$0xff]
      %v3911 = vld [vmem:[%s3389 + $0x19] sm:$0x3f]
      %v3912 = vld [vmem:[%s3389 + $0x21] sm:$0xff]
      %v3913 = vld [vmem:[%s3389 + $0x29] sm:$0x3f]
      %v3914 = vld [vmem:[%s3389 + $0x31] sm:$0xff]
      %v3915 = vld [vmem:[%s3389 + $0x39] sm:$0x3f]
      %v3916 = vld [vmem:[%s3389 + $0x41] sm:$0xff]
      %v3917 = vld [vmem:[%s3389 + $0x49] sm:$0x3f]
      %v3918 = vld [vmem:[%s3389 + $0x51] sm:$0xff]
      %v3919 = vld [vmem:[%s3389 + $0x59] sm:$0x3f]
      %v3920 = vld [vmem:[%s3389 + $0x61] sm:$0xff]
      %v3921 = vld [vmem:[%s3389 + $0x69] sm:$0x3f]
      %v3922 = vld [vmem:[%s3389 + $0x71] sm:$0xff]
      %v3923 = vld [vmem:[%s3389 + $0x79] sm:$0x3f]
      %v3924 = vld [vmem:[%s3389 + $0x81] sm:$0xff]
      %v3925 = vld [vmem:[%s3389 + $0x89] sm:$0x3f]
      %v3926 = vld [vmem:[%s3389 + $0x91] sm:$0xff]
      %v3927 = vld [vmem:[%s3389 + $0x99] sm:$0x3f]
      %v3928 = vld [vmem:[%s3389 + $0xa1] sm:$0xff]
      %v3929 = vld [vmem:[%s3389 + $0xa9] sm:$0x3f]
      %v3930 = vld [vmem:[%s3389 + $0xb1] sm:$0xff]
      %v3931 = vld [vmem:[%s3389 + $0xb9] sm:$0x3f]
      %v3932 = vld [vmem:[%s3389 + $0xc1] sm:$0xff]
      %v3933 = vld [vmem:[%s3389 + $0xc9] sm:$0x3f]
      %v3934 = vld [vmem:[%s3389 + $0xd1] sm:$0xff]
      %v3935 = vld [vmem:[%s3389 + $0xd9] sm:$0x3f]
      %v3964 = vcombine.high %v3908, %v3908
      %v3966 = vunpack.c.l.s4 1983009808
      %v3967 = vunpack.c.0.s8 %v3966
      %v3968 = vlaneseq
      %v3969 = vshrl.u32 %v3968, 7
      %v3970 = vsub.s32 %v3967, %v3969
      %v3971 = vrot.slane %v3908, %v3970
      %v3973 = vunpack.c.l.s4 1983009808
      %v3974 = vunpack.c.0.s8 %v3973
      %v3975 = vlaneseq
      %v3976 = vshrl.u32 %v3975, 7
      %v3977 = vsub.s32 %v3974, %v3976
      %v3978 = vrot.slane %v3964, %v3977
      %v3979 = vcombine.high %v3971, %v3971
      %v3980 = vcombine.high %v3978, %v3978
      %v3981 = vcombine.high %v3909, %v3909
      %v3983 = vunpack.c.l.s4 1983009808
      %v3984 = vunpack.c.0.s8 %v3983
      %v3985 = vlaneseq
      %v3986 = vshrl.u32 %v3985, 7
      %v3987 = vsub.s32 %v3984, %v3986
      %v3988 = vrot.slane %v3909, %v3987
      %v3990 = vunpack.c.l.s4 1983009808
      %v3991 = vunpack.c.0.s8 %v3990
      %v3992 = vlaneseq
      %v3993 = vshrl.u32 %v3992, 7
      %v3994 = vsub.s32 %v3991, %v3993
      %v3995 = vrot.slane %v3981, %v3994
      %v3996 = vcombine.high %v3988, %v3988
      %v3997 = vcombine.high %v3910, %v3910
      %v3999 = vunpack.c.l.s4 1983009808
      %v4000 = vunpack.c.0.s8 %v3999
      %v4001 = vlaneseq
      %v4002 = vshrl.u32 %v4001, 7
      %v4003 = vsub.s32 %v4000, %v4002
      %v4004 = vrot.slane %v3910, %v4003
      %v4006 = vunpack.c.l.s4 1983009808
      %v4007 = vunpack.c.0.s8 %v4006
      %v4008 = vlaneseq
      %v4009 = vshrl.u32 %v4008, 7
      %v4010 = vsub.s32 %v4007, %v4009
      %v4011 = vrot.slane %v3997, %v4010
      %v4012 = vcombine.high %v4004, %v4004
      %v4013 = vcombine.high %v4011, %v4011
      %v4014 = vcombine.high %v3911, %v3911
      %v4016 = vunpack.c.l.s4 1983009808
      %v4017 = vunpack.c.0.s8 %v4016
      %v4018 = vlaneseq
      %v4019 = vshrl.u32 %v4018, 7
      %v4020 = vsub.s32 %v4017, %v4019
      %v4021 = vrot.slane %v3911, %v4020
      %v4023 = vunpack.c.l.s4 1983009808
      %v4024 = vunpack.c.0.s8 %v4023
      %v4025 = vlaneseq
      %v4026 = vshrl.u32 %v4025, 7
      %v4027 = vsub.s32 %v4024, %v4026
      %v4028 = vrot.slane %v4014, %v4027
      %v4029 = vcombine.high %v4021, %v4021
      %v4030 = vcombine.high %v3912, %v3912
      %v4032 = vunpack.c.l.s4 1983009808
      %v4033 = vunpack.c.0.s8 %v4032
      %v4034 = vlaneseq
      %v4035 = vshrl.u32 %v4034, 7
      %v4036 = vsub.s32 %v4033, %v4035
      %v4037 = vrot.slane %v3912, %v4036
      %v4039 = vunpack.c.l.s4 1983009808
      %v4040 = vunpack.c.0.s8 %v4039
      %v4041 = vlaneseq
      %v4042 = vshrl.u32 %v4041, 7
      %v4043 = vsub.s32 %v4040, %v4042
      %v4044 = vrot.slane %v4030, %v4043
      %v4045 = vcombine.high %v4037, %v4037
      %v4046 = vcombine.high %v4044, %v4044
      %v4047 = vcombine.high %v3913, %v3913
      %v4049 = vunpack.c.l.s4 1983009808
      %v4050 = vunpack.c.0.s8 %v4049
      %v4051 = vlaneseq
      %v4052 = vshrl.u32 %v4051, 7
      %v4053 = vsub.s32 %v4050, %v4052
      %v4054 = vrot.slane %v3913, %v4053
      %v4056 = vunpack.c.l.s4 1983009808
      %v4057 = vunpack.c.0.s8 %v4056
      %v4058 = vlaneseq
      %v4059 = vshrl.u32 %v4058, 7
      %v4060 = vsub.s32 %v4057, %v4059
      %v4061 = vrot.slane %v4047, %v4060
      %v4062 = vcombine.high %v4054, %v4054
      %v4063 = vcombine.high %v3914, %v3914
      %v4065 = vunpack.c.l.s4 1983009808
      %v4066 = vunpack.c.0.s8 %v4065
      %v4067 = vlaneseq
      %v4068 = vshrl.u32 %v4067, 7
      %v4069 = vsub.s32 %v4066, %v4068
      %v4070 = vrot.slane %v3914, %v4069
      %v4072 = vunpack.c.l.s4 1983009808
      %v4073 = vunpack.c.0.s8 %v4072
      %v4074 = vlaneseq
      %v4075 = vshrl.u32 %v4074, 7
      %v4076 = vsub.s32 %v4073, %v4075
      %v4077 = vrot.slane %v4063, %v4076
      %v4078 = vcombine.high %v4070, %v4070
      %v4079 = vcombine.high %v4077, %v4077
      %v4080 = vcombine.high %v3915, %v3915
      %v4082 = vunpack.c.l.s4 1983009808
      %v4083 = vunpack.c.0.s8 %v4082
      %v4084 = vlaneseq
      %v4085 = vshrl.u32 %v4084, 7
      %v4086 = vsub.s32 %v4083, %v4085
      %v4087 = vrot.slane %v3915, %v4086
      %v4089 = vunpack.c.l.s4 1983009808
      %v4090 = vunpack.c.0.s8 %v4089
      %v4091 = vlaneseq
      %v4092 = vshrl.u32 %v4091, 7
      %v4093 = vsub.s32 %v4090, %v4092
      %v4094 = vrot.slane %v4080, %v4093
      %v4095 = vcombine.high %v4087, %v4087
      %v4096 = vcombine.high %v3916, %v3916
      %v4098 = vunpack.c.l.s4 1983009808
      %v4099 = vunpack.c.0.s8 %v4098
      %v4100 = vlaneseq
      %v4101 = vshrl.u32 %v4100, 7
      %v4102 = vsub.s32 %v4099, %v4101
      %v4103 = vrot.slane %v3916, %v4102
      %v4105 = vunpack.c.l.s4 1983009808
      %v4106 = vunpack.c.0.s8 %v4105
      %v4107 = vlaneseq
      %v4108 = vshrl.u32 %v4107, 7
      %v4109 = vsub.s32 %v4106, %v4108
      %v4110 = vrot.slane %v4096, %v4109
      %v4111 = vcombine.high %v4103, %v4103
      %v4112 = vcombine.high %v4110, %v4110
      %v4113 = vcombine.high %v3917, %v3917
      %v4115 = vunpack.c.l.s4 1983009808
      %v4116 = vunpack.c.0.s8 %v4115
      %v4117 = vlaneseq
      %v4118 = vshrl.u32 %v4117, 7
      %v4119 = vsub.s32 %v4116, %v4118
      %v4120 = vrot.slane %v3917, %v4119
      %v4122 = vunpack.c.l.s4 1983009808
      %v4123 = vunpack.c.0.s8 %v4122
      %v4124 = vlaneseq
      %v4125 = vshrl.u32 %v4124, 7
      %v4126 = vsub.s32 %v4123, %v4125
      %v4127 = vrot.slane %v4113, %v4126
      %v4128 = vcombine.high %v4120, %v4120
      %v4129 = vcombine.high %v3918, %v3918
      %v4131 = vunpack.c.l.s4 1983009808
      %v4132 = vunpack.c.0.s8 %v4131
      %v4133 = vlaneseq
      %v4134 = vshrl.u32 %v4133, 7
      %v4135 = vsub.s32 %v4132, %v4134
      %v4136 = vrot.slane %v3918, %v4135
      %v4138 = vunpack.c.l.s4 1983009808
      %v4139 = vunpack.c.0.s8 %v4138
      %v4140 = vlaneseq
      %v4141 = vshrl.u32 %v4140, 7
      %v4142 = vsub.s32 %v4139, %v4141
      %v4143 = vrot.slane %v4129, %v4142
      %v4144 = vcombine.high %v4136, %v4136
      %v4145 = vcombine.high %v4143, %v4143
      %v4146 = vcombine.high %v3919, %v3919
      %v4148 = vunpack.c.l.s4 1983009808
      %v4149 = vunpack.c.0.s8 %v4148
      %v4150 = vlaneseq
      %v4151 = vshrl.u32 %v4150, 7
      %v4152 = vsub.s32 %v4149, %v4151
      %v4153 = vrot.slane %v3919, %v4152
      %v4155 = vunpack.c.l.s4 1983009808
      %v4156 = vunpack.c.0.s8 %v4155
      %v4157 = vlaneseq
      %v4158 = vshrl.u32 %v4157, 7
      %v4159 = vsub.s32 %v4156, %v4158
      %v4160 = vrot.slane %v4146, %v4159
      %v4161 = vcombine.high %v4153, %v4153
      %v4162 = vcombine.high %v3920, %v3920
      %v4164 = vunpack.c.l.s4 1983009808
      %v4165 = vunpack.c.0.s8 %v4164
      %v4166 = vlaneseq
      %v4167 = vshrl.u32 %v4166, 7
      %v4168 = vsub.s32 %v4165, %v4167
      %v4169 = vrot.slane %v3920, %v4168
      %v4171 = vunpack.c.l.s4 1983009808
      %v4172 = vunpack.c.0.s8 %v4171
      %v4173 = vlaneseq
      %v4174 = vshrl.u32 %v4173, 7
      %v4175 = vsub.s32 %v4172, %v4174
      %v4176 = vrot.slane %v4162, %v4175
      %v4177 = vcombine.high %v4169, %v4169
      %v4178 = vcombine.high %v4176, %v4176
      %v4179 = vcombine.high %v3921, %v3921
      %v4181 = vunpack.c.l.s4 1983009808
      %v4182 = vunpack.c.0.s8 %v4181
      %v4183 = vlaneseq
      %v4184 = vshrl.u32 %v4183, 7
      %v4185 = vsub.s32 %v4182, %v4184
      %v4186 = vrot.slane %v3921, %v4185
      %v4188 = vunpack.c.l.s4 1983009808
      %v4189 = vunpack.c.0.s8 %v4188
      %v4190 = vlaneseq
      %v4191 = vshrl.u32 %v4190, 7
      %v4192 = vsub.s32 %v4189, %v4191
      %v4193 = vrot.slane %v4179, %v4192
      %v4194 = vcombine.high %v4186, %v4186
      %v4195 = vcombine.high %v3922, %v3922
      %v4197 = vunpack.c.l.s4 1983009808
      %v4198 = vunpack.c.0.s8 %v4197
      %v4199 = vlaneseq
      %v4200 = vshrl.u32 %v4199, 7
      %v4201 = vsub.s32 %v4198, %v4200
      %v4202 = vrot.slane %v3922, %v4201
      %v4204 = vunpack.c.l.s4 1983009808
      %v4205 = vunpack.c.0.s8 %v4204
      %v4206 = vlaneseq
      %v4207 = vshrl.u32 %v4206, 7
      %v4208 = vsub.s32 %v4205, %v4207
      %v4209 = vrot.slane %v4195, %v4208
      %v4210 = vcombine.high %v4202, %v4202
      %v4211 = vcombine.high %v4209, %v4209
      %v4212 = vcombine.high %v3923, %v3923
      %v4214 = vunpack.c.l.s4 1983009808
      %v4215 = vunpack.c.0.s8 %v4214
      %v4216 = vlaneseq
      %v4217 = vshrl.u32 %v4216, 7
      %v4218 = vsub.s32 %v4215, %v4217
      %v4219 = vrot.slane %v3923, %v4218
      %v4221 = vunpack.c.l.s4 1983009808
      %v4222 = vunpack.c.0.s8 %v4221
      %v4223 = vlaneseq
      %v4224 = vshrl.u32 %v4223, 7
      %v4225 = vsub.s32 %v4222, %v4224
      %v4226 = vrot.slane %v4212, %v4225
      %v4227 = vcombine.high %v4219, %v4219
      %v4228 = vcombine.high %v3924, %v3924
      %v4230 = vunpack.c.l.s4 1983009808
      %v4231 = vunpack.c.0.s8 %v4230
      %v4232 = vlaneseq
      %v4233 = vshrl.u32 %v4232, 7
      %v4234 = vsub.s32 %v4231, %v4233
      %v4235 = vrot.slane %v3924, %v4234
      %v4237 = vunpack.c.l.s4 1983009808
      %v4238 = vunpack.c.0.s8 %v4237
      %v4239 = vlaneseq
      %v4240 = vshrl.u32 %v4239, 7
      %v4241 = vsub.s32 %v4238, %v4240
      %v4242 = vrot.slane %v4228, %v4241
      %v4243 = vcombine.high %v4235, %v4235
      %v4244 = vcombine.high %v4242, %v4242
      %v4245 = vcombine.high %v3925, %v3925
      %v4247 = vunpack.c.l.s4 1983009808
      %v4248 = vunpack.c.0.s8 %v4247
      %v4249 = vlaneseq
      %v4250 = vshrl.u32 %v4249, 7
      %v4251 = vsub.s32 %v4248, %v4250
      %v4252 = vrot.slane %v3925, %v4251
      %v4254 = vunpack.c.l.s4 1983009808
      %v4255 = vunpack.c.0.s8 %v4254
      %v4256 = vlaneseq
      %v4257 = vshrl.u32 %v4256, 7
      %v4258 = vsub.s32 %v4255, %v4257
      %v4259 = vrot.slane %v4245, %v4258
      %v4260 = vcombine.high %v4252, %v4252
      %v4261 = vcombine.high %v3926, %v3926
      %v4263 = vunpack.c.l.s4 1983009808
      %v4264 = vunpack.c.0.s8 %v4263
      %v4265 = vlaneseq
      %v4266 = vshrl.u32 %v4265, 7
      %v4267 = vsub.s32 %v4264, %v4266
      %v4268 = vrot.slane %v3926, %v4267
      %v4270 = vunpack.c.l.s4 1983009808
      %v4271 = vunpack.c.0.s8 %v4270
      %v4272 = vlaneseq
      %v4273 = vshrl.u32 %v4272, 7
      %v4274 = vsub.s32 %v4271, %v4273
      %v4275 = vrot.slane %v4261, %v4274
      %v4276 = vcombine.high %v4268, %v4268
      %v4277 = vcombine.high %v4275, %v4275
      %v4278 = vcombine.high %v3927, %v3927
      %v4280 = vunpack.c.l.s4 1983009808
      %v4281 = vunpack.c.0.s8 %v4280
      %v4282 = vlaneseq
      %v4283 = vshrl.u32 %v4282, 7
      %v4284 = vsub.s32 %v4281, %v4283
      %v4285 = vrot.slane %v3927, %v4284
      %v4287 = vunpack.c.l.s4 1983009808
      %v4288 = vunpack.c.0.s8 %v4287
      %v4289 = vlaneseq
      %v4290 = vshrl.u32 %v4289, 7
      %v4291 = vsub.s32 %v4288, %v4290
      %v4292 = vrot.slane %v4278, %v4291
      %v4293 = vcombine.high %v4285, %v4285
      %v4294 = vcombine.high %v3928, %v3928
      %v4296 = vunpack.c.l.s4 1983009808
      %v4297 = vunpack.c.0.s8 %v4296
      %v4298 = vlaneseq
      %v4299 = vshrl.u32 %v4298, 7
      %v4300 = vsub.s32 %v4297, %v4299
      %v4301 = vrot.slane %v3928, %v4300
      %v4303 = vunpack.c.l.s4 1983009808
      %v4304 = vunpack.c.0.s8 %v4303
      %v4305 = vlaneseq
      %v4306 = vshrl.u32 %v4305, 7
      %v4307 = vsub.s32 %v4304, %v4306
      %v4308 = vrot.slane %v4294, %v4307
      %v4309 = vcombine.high %v4301, %v4301
      %v4310 = vcombine.high %v4308, %v4308
      %v4311 = vcombine.high %v3929, %v3929
      %v4313 = vunpack.c.l.s4 1983009808
      %v4314 = vunpack.c.0.s8 %v4313
      %v4315 = vlaneseq
      %v4316 = vshrl.u32 %v4315, 7
      %v4317 = vsub.s32 %v4314, %v4316
      %v4318 = vrot.slane %v3929, %v4317
      %v4320 = vunpack.c.l.s4 1983009808
      %v4321 = vunpack.c.0.s8 %v4320
      %v4322 = vlaneseq
      %v4323 = vshrl.u32 %v4322, 7
      %v4324 = vsub.s32 %v4321, %v4323
      %v4325 = vrot.slane %v4311, %v4324
      %v4326 = vcombine.high %v4318, %v4318
      %v4327 = vcombine.high %v3930, %v3930
      %v4329 = vunpack.c.l.s4 1983009808
      %v4330 = vunpack.c.0.s8 %v4329
      %v4331 = vlaneseq
      %v4332 = vshrl.u32 %v4331, 7
      %v4333 = vsub.s32 %v4330, %v4332
      %v4334 = vrot.slane %v3930, %v4333
      %v4336 = vunpack.c.l.s4 1983009808
      %v4337 = vunpack.c.0.s8 %v4336
      %v4338 = vlaneseq
      %v4339 = vshrl.u32 %v4338, 7
      %v4340 = vsub.s32 %v4337, %v4339
      %v4341 = vrot.slane %v4327, %v4340
      %v4342 = vcombine.high %v4334, %v4334
      %v4343 = vcombine.high %v4341, %v4341
      %v4344 = vcombine.high %v3931, %v3931
      %v4346 = vunpack.c.l.s4 1983009808
      %v4347 = vunpack.c.0.s8 %v4346
      %v4348 = vlaneseq
      %v4349 = vshrl.u32 %v4348, 7
      %v4350 = vsub.s32 %v4347, %v4349
      %v4351 = vrot.slane %v3931, %v4350
      %v4353 = vunpack.c.l.s4 1983009808
      %v4354 = vunpack.c.0.s8 %v4353
      %v4355 = vlaneseq
      %v4356 = vshrl.u32 %v4355, 7
      %v4357 = vsub.s32 %v4354, %v4356
      %v4358 = vrot.slane %v4344, %v4357
      %v4359 = vcombine.high %v4351, %v4351
      %v4360 = vcombine.high %v3932, %v3932
      %v4362 = vunpack.c.l.s4 1983009808
      %v4363 = vunpack.c.0.s8 %v4362
      %v4364 = vlaneseq
      %v4365 = vshrl.u32 %v4364, 7
      %v4366 = vsub.s32 %v4363, %v4365
      %v4367 = vrot.slane %v3932, %v4366
      %v4369 = vunpack.c.l.s4 1983009808
      %v4370 = vunpack.c.0.s8 %v4369
      %v4371 = vlaneseq
      %v4372 = vshrl.u32 %v4371, 7
      %v4373 = vsub.s32 %v4370, %v4372
      %v4374 = vrot.slane %v4360, %v4373
      %v4375 = vcombine.high %v4367, %v4367
      %v4376 = vcombine.high %v4374, %v4374
      %v4377 = vcombine.high %v3933, %v3933
      %v4379 = vunpack.c.l.s4 1983009808
      %v4380 = vunpack.c.0.s8 %v4379
      %v4381 = vlaneseq
      %v4382 = vshrl.u32 %v4381, 7
      %v4383 = vsub.s32 %v4380, %v4382
      %v4384 = vrot.slane %v3933, %v4383
      %v4386 = vunpack.c.l.s4 1983009808
      %v4387 = vunpack.c.0.s8 %v4386
      %v4388 = vlaneseq
      %v4389 = vshrl.u32 %v4388, 7
      %v4390 = vsub.s32 %v4387, %v4389
      %v4391 = vrot.slane %v4377, %v4390
      %v4392 = vcombine.high %v4384, %v4384
      %v4393 = vcombine.high %v3934, %v3934
      %v4395 = vunpack.c.l.s4 1983009808
      %v4396 = vunpack.c.0.s8 %v4395
      %v4397 = vlaneseq
      %v4398 = vshrl.u32 %v4397, 7
      %v4399 = vsub.s32 %v4396, %v4398
      %v4400 = vrot.slane %v3934, %v4399
      %v4402 = vunpack.c.l.s4 1983009808
      %v4403 = vunpack.c.0.s8 %v4402
      %v4404 = vlaneseq
      %v4405 = vshrl.u32 %v4404, 7
      %v4406 = vsub.s32 %v4403, %v4405
      %v4407 = vrot.slane %v4393, %v4406
      %v4408 = vcombine.high %v4400, %v4400
      %v4409 = vcombine.high %v4407, %v4407
      %v4410 = vcombine.high %v3935, %v3935
      %v4412 = vunpack.c.l.s4 1983009808
      %v4413 = vunpack.c.0.s8 %v4412
      %v4414 = vlaneseq
      %v4415 = vshrl.u32 %v4414, 7
      %v4416 = vsub.s32 %v4413, %v4415
      %v4417 = vrot.slane %v3935, %v4416
      %v4419 = vunpack.c.l.s4 1983009808
      %v4420 = vunpack.c.0.s8 %v4419
      %v4421 = vlaneseq
      %v4422 = vshrl.u32 %v4421, 7
      %v4423 = vsub.s32 %v4420, %v4422
      %v4424 = vrot.slane %v4410, %v4423
      %v4425 = vcombine.high %v4417, %v4417
      %v4426 = vld [vmem:[%s3389 + $0x2] sm:$0xff]
      %v4427 = vld [vmem:[%s3389 + $0xa] sm:$0x3f]
      %v4428 = vld [vmem:[%s3389 + $0x12] sm:$0xff]
      %v4429 = vld [vmem:[%s3389 + $0x1a] sm:$0x3f]
      %v4430 = vld [vmem:[%s3389 + $0x22] sm:$0xff]
      %v4431 = vld [vmem:[%s3389 + $0x2a] sm:$0x3f]
      %v4432 = vld [vmem:[%s3389 + $0x32] sm:$0xff]
      %v4433 = vld [vmem:[%s3389 + $0x3a] sm:$0x3f]
      %v4434 = vld [vmem:[%s3389 + $0x42] sm:$0xff]
      %v4435 = vld [vmem:[%s3389 + $0x4a] sm:$0x3f]
      %v4436 = vld [vmem:[%s3389 + $0x52] sm:$0xff]
      %v4437 = vld [vmem:[%s3389 + $0x5a] sm:$0x3f]
      %v4438 = vld [vmem:[%s3389 + $0x62] sm:$0xff]
      %v4439 = vld [vmem:[%s3389 + $0x6a] sm:$0x3f]
      %v4440 = vld [vmem:[%s3389 + $0x72] sm:$0xff]
      %v4441 = vld [vmem:[%s3389 + $0x7a] sm:$0x3f]
      %v4442 = vld [vmem:[%s3389 + $0x82] sm:$0xff]
      %v4443 = vld [vmem:[%s3389 + $0x8a] sm:$0x3f]
      %v4444 = vld [vmem:[%s3389 + $0x92] sm:$0xff]
      %v4445 = vld [vmem:[%s3389 + $0x9a] sm:$0x3f]
      %v4446 = vld [vmem:[%s3389 + $0xa2] sm:$0xff]
      %v4447 = vld [vmem:[%s3389 + $0xaa] sm:$0x3f]
      %v4448 = vld [vmem:[%s3389 + $0xb2] sm:$0xff]
      %v4449 = vld [vmem:[%s3389 + $0xba] sm:$0x3f]
      %v4450 = vld [vmem:[%s3389 + $0xc2] sm:$0xff]
      %v4451 = vld [vmem:[%s3389 + $0xca] sm:$0x3f]
      %v4452 = vld [vmem:[%s3389 + $0xd2] sm:$0xff]
      %v4453 = vld [vmem:[%s3389 + $0xda] sm:$0x3f]
      %v4482 = vcombine.high %v4426, %v4426
      %v4484 = vunpack.c.l.s4 1983009808
      %v4485 = vunpack.c.0.s8 %v4484
      %v4486 = vlaneseq
      %v4487 = vshrl.u32 %v4486, 7
      %v4488 = vsub.s32 %v4485, %v4487
      %v4489 = vrot.slane %v4426, %v4488
      %v4491 = vunpack.c.l.s4 1983009808
      %v4492 = vunpack.c.0.s8 %v4491
      %v4493 = vlaneseq
      %v4494 = vshrl.u32 %v4493, 7
      %v4495 = vsub.s32 %v4492, %v4494
      %v4496 = vrot.slane %v4482, %v4495
      %v4497 = vcombine.high %v4489, %v4489
      %v4498 = vcombine.high %v4496, %v4496
      %v4499 = vcombine.high %v4427, %v4427
      %v4501 = vunpack.c.l.s4 1983009808
      %v4502 = vunpack.c.0.s8 %v4501
      %v4503 = vlaneseq
      %v4504 = vshrl.u32 %v4503, 7
      %v4505 = vsub.s32 %v4502, %v4504
      %v4506 = vrot.slane %v4427, %v4505
      %v4508 = vunpack.c.l.s4 1983009808
      %v4509 = vunpack.c.0.s8 %v4508
      %v4510 = vlaneseq
      %v4511 = vshrl.u32 %v4510, 7
      %v4512 = vsub.s32 %v4509, %v4511
      %v4513 = vrot.slane %v4499, %v4512
      %v4514 = vcombine.high %v4506, %v4506
      %v4515 = vcombine.high %v4428, %v4428
      %v4517 = vunpack.c.l.s4 1983009808
      %v4518 = vunpack.c.0.s8 %v4517
      %v4519 = vlaneseq
      %v4520 = vshrl.u32 %v4519, 7
      %v4521 = vsub.s32 %v4518, %v4520
      %v4522 = vrot.slane %v4428, %v4521
      %v4524 = vunpack.c.l.s4 1983009808
      %v4525 = vunpack.c.0.s8 %v4524
      %v4526 = vlaneseq
      %v4527 = vshrl.u32 %v4526, 7
      %v4528 = vsub.s32 %v4525, %v4527
      %v4529 = vrot.slane %v4515, %v4528
      %v4530 = vcombine.high %v4522, %v4522
      %v4531 = vcombine.high %v4529, %v4529
      %v4532 = vcombine.high %v4429, %v4429
      %v4534 = vunpack.c.l.s4 1983009808
      %v4535 = vunpack.c.0.s8 %v4534
      %v4536 = vlaneseq
      %v4537 = vshrl.u32 %v4536, 7
      %v4538 = vsub.s32 %v4535, %v4537
      %v4539 = vrot.slane %v4429, %v4538
      %v4541 = vunpack.c.l.s4 1983009808
      %v4542 = vunpack.c.0.s8 %v4541
      %v4543 = vlaneseq
      %v4544 = vshrl.u32 %v4543, 7
      %v4545 = vsub.s32 %v4542, %v4544
      %v4546 = vrot.slane %v4532, %v4545
      %v4547 = vcombine.high %v4539, %v4539
      %v4548 = vcombine.high %v4430, %v4430
      %v4550 = vunpack.c.l.s4 1983009808
      %v4551 = vunpack.c.0.s8 %v4550
      %v4552 = vlaneseq
      %v4553 = vshrl.u32 %v4552, 7
      %v4554 = vsub.s32 %v4551, %v4553
      %v4555 = vrot.slane %v4430, %v4554
      %v4557 = vunpack.c.l.s4 1983009808
      %v4558 = vunpack.c.0.s8 %v4557
      %v4559 = vlaneseq
      %v4560 = vshrl.u32 %v4559, 7
      %v4561 = vsub.s32 %v4558, %v4560
      %v4562 = vrot.slane %v4548, %v4561
      %v4563 = vcombine.high %v4555, %v4555
      %v4564 = vcombine.high %v4562, %v4562
      %v4565 = vcombine.high %v4431, %v4431
      %v4567 = vunpack.c.l.s4 1983009808
      %v4568 = vunpack.c.0.s8 %v4567
      %v4569 = vlaneseq
      %v4570 = vshrl.u32 %v4569, 7
      %v4571 = vsub.s32 %v4568, %v4570
      %v4572 = vrot.slane %v4431, %v4571
      %v4574 = vunpack.c.l.s4 1983009808
      %v4575 = vunpack.c.0.s8 %v4574
      %v4576 = vlaneseq
      %v4577 = vshrl.u32 %v4576, 7
      %v4578 = vsub.s32 %v4575, %v4577
      %v4579 = vrot.slane %v4565, %v4578
      %v4580 = vcombine.high %v4572, %v4572
      %v4581 = vcombine.high %v4432, %v4432
      %v4583 = vunpack.c.l.s4 1983009808
      %v4584 = vunpack.c.0.s8 %v4583
      %v4585 = vlaneseq
      %v4586 = vshrl.u32 %v4585, 7
      %v4587 = vsub.s32 %v4584, %v4586
      %v4588 = vrot.slane %v4432, %v4587
      %v4590 = vunpack.c.l.s4 1983009808
      %v4591 = vunpack.c.0.s8 %v4590
      %v4592 = vlaneseq
      %v4593 = vshrl.u32 %v4592, 7
      %v4594 = vsub.s32 %v4591, %v4593
      %v4595 = vrot.slane %v4581, %v4594
      %v4596 = vcombine.high %v4588, %v4588
      %v4597 = vcombine.high %v4595, %v4595
      %v4598 = vcombine.high %v4433, %v4433
      %v4600 = vunpack.c.l.s4 1983009808
      %v4601 = vunpack.c.0.s8 %v4600
      %v4602 = vlaneseq
      %v4603 = vshrl.u32 %v4602, 7
      %v4604 = vsub.s32 %v4601, %v4603
      %v4605 = vrot.slane %v4433, %v4604
      %v4607 = vunpack.c.l.s4 1983009808
      %v4608 = vunpack.c.0.s8 %v4607
      %v4609 = vlaneseq
      %v4610 = vshrl.u32 %v4609, 7
      %v4611 = vsub.s32 %v4608, %v4610
      %v4612 = vrot.slane %v4598, %v4611
      %v4613 = vcombine.high %v4605, %v4605
      %v4614 = vcombine.high %v4434, %v4434
      %v4616 = vunpack.c.l.s4 1983009808
      %v4617 = vunpack.c.0.s8 %v4616
      %v4618 = vlaneseq
      %v4619 = vshrl.u32 %v4618, 7
      %v4620 = vsub.s32 %v4617, %v4619
      %v4621 = vrot.slane %v4434, %v4620
      %v4623 = vunpack.c.l.s4 1983009808
      %v4624 = vunpack.c.0.s8 %v4623
      %v4625 = vlaneseq
      %v4626 = vshrl.u32 %v4625, 7
      %v4627 = vsub.s32 %v4624, %v4626
      %v4628 = vrot.slane %v4614, %v4627
      %v4629 = vcombine.high %v4621, %v4621
      %v4630 = vcombine.high %v4628, %v4628
      %v4631 = vcombine.high %v4435, %v4435
      %v4633 = vunpack.c.l.s4 1983009808
      %v4634 = vunpack.c.0.s8 %v4633
      %v4635 = vlaneseq
      %v4636 = vshrl.u32 %v4635, 7
      %v4637 = vsub.s32 %v4634, %v4636
      %v4638 = vrot.slane %v4435, %v4637
      %v4640 = vunpack.c.l.s4 1983009808
      %v4641 = vunpack.c.0.s8 %v4640
      %v4642 = vlaneseq
      %v4643 = vshrl.u32 %v4642, 7
      %v4644 = vsub.s32 %v4641, %v4643
      %v4645 = vrot.slane %v4631, %v4644
      %v4646 = vcombine.high %v4638, %v4638
      %v4647 = vcombine.high %v4436, %v4436
      %v4649 = vunpack.c.l.s4 1983009808
      %v4650 = vunpack.c.0.s8 %v4649
      %v4651 = vlaneseq
      %v4652 = vshrl.u32 %v4651, 7
      %v4653 = vsub.s32 %v4650, %v4652
      %v4654 = vrot.slane %v4436, %v4653
      %v4656 = vunpack.c.l.s4 1983009808
      %v4657 = vunpack.c.0.s8 %v4656
      %v4658 = vlaneseq
      %v4659 = vshrl.u32 %v4658, 7
      %v4660 = vsub.s32 %v4657, %v4659
      %v4661 = vrot.slane %v4647, %v4660
      %v4662 = vcombine.high %v4654, %v4654
      %v4663 = vcombine.high %v4661, %v4661
      %v4664 = vcombine.high %v4437, %v4437
      %v4666 = vunpack.c.l.s4 1983009808
      %v4667 = vunpack.c.0.s8 %v4666
      %v4668 = vlaneseq
      %v4669 = vshrl.u32 %v4668, 7
      %v4670 = vsub.s32 %v4667, %v4669
      %v4671 = vrot.slane %v4437, %v4670
      %v4673 = vunpack.c.l.s4 1983009808
      %v4674 = vunpack.c.0.s8 %v4673
      %v4675 = vlaneseq
      %v4676 = vshrl.u32 %v4675, 7
      %v4677 = vsub.s32 %v4674, %v4676
      %v4678 = vrot.slane %v4664, %v4677
      %v4679 = vcombine.high %v4671, %v4671
      %v4680 = vcombine.high %v4438, %v4438
      %v4682 = vunpack.c.l.s4 1983009808
      %v4683 = vunpack.c.0.s8 %v4682
      %v4684 = vlaneseq
      %v4685 = vshrl.u32 %v4684, 7
      %v4686 = vsub.s32 %v4683, %v4685
      %v4687 = vrot.slane %v4438, %v4686
      %v4689 = vunpack.c.l.s4 1983009808
      %v4690 = vunpack.c.0.s8 %v4689
      %v4691 = vlaneseq
      %v4692 = vshrl.u32 %v4691, 7
      %v4693 = vsub.s32 %v4690, %v4692
      %v4694 = vrot.slane %v4680, %v4693
      %v4695 = vcombine.high %v4687, %v4687
      %v4696 = vcombine.high %v4694, %v4694
      %v4697 = vcombine.high %v4439, %v4439
      %v4699 = vunpack.c.l.s4 1983009808
      %v4700 = vunpack.c.0.s8 %v4699
      %v4701 = vlaneseq
      %v4702 = vshrl.u32 %v4701, 7
      %v4703 = vsub.s32 %v4700, %v4702
      %v4704 = vrot.slane %v4439, %v4703
      %v4706 = vunpack.c.l.s4 1983009808
      %v4707 = vunpack.c.0.s8 %v4706
      %v4708 = vlaneseq
      %v4709 = vshrl.u32 %v4708, 7
      %v4710 = vsub.s32 %v4707, %v4709
      %v4711 = vrot.slane %v4697, %v4710
      %v4712 = vcombine.high %v4704, %v4704
      %v4713 = vcombine.high %v4440, %v4440
      %v4715 = vunpack.c.l.s4 1983009808
      %v4716 = vunpack.c.0.s8 %v4715
      %v4717 = vlaneseq
      %v4718 = vshrl.u32 %v4717, 7
      %v4719 = vsub.s32 %v4716, %v4718
      %v4720 = vrot.slane %v4440, %v4719
      %v4722 = vunpack.c.l.s4 1983009808
      %v4723 = vunpack.c.0.s8 %v4722
      %v4724 = vlaneseq
      %v4725 = vshrl.u32 %v4724, 7
      %v4726 = vsub.s32 %v4723, %v4725
      %v4727 = vrot.slane %v4713, %v4726
      %v4728 = vcombine.high %v4720, %v4720
      %v4729 = vcombine.high %v4727, %v4727
      %v4730 = vcombine.high %v4441, %v4441
      %v4732 = vunpack.c.l.s4 1983009808
      %v4733 = vunpack.c.0.s8 %v4732
      %v4734 = vlaneseq
      %v4735 = vshrl.u32 %v4734, 7
      %v4736 = vsub.s32 %v4733, %v4735
      %v4737 = vrot.slane %v4441, %v4736
      %v4739 = vunpack.c.l.s4 1983009808
      %v4740 = vunpack.c.0.s8 %v4739
      %v4741 = vlaneseq
      %v4742 = vshrl.u32 %v4741, 7
      %v4743 = vsub.s32 %v4740, %v4742
      %v4744 = vrot.slane %v4730, %v4743
      %v4745 = vcombine.high %v4737, %v4737
      %v4746 = vcombine.high %v4442, %v4442
      %v4748 = vunpack.c.l.s4 1983009808
      %v4749 = vunpack.c.0.s8 %v4748
      %v4750 = vlaneseq
      %v4751 = vshrl.u32 %v4750, 7
      %v4752 = vsub.s32 %v4749, %v4751
      %v4753 = vrot.slane %v4442, %v4752
      %v4755 = vunpack.c.l.s4 1983009808
      %v4756 = vunpack.c.0.s8 %v4755
      %v4757 = vlaneseq
      %v4758 = vshrl.u32 %v4757, 7
      %v4759 = vsub.s32 %v4756, %v4758
      %v4760 = vrot.slane %v4746, %v4759
      %v4761 = vcombine.high %v4753, %v4753
      %v4762 = vcombine.high %v4760, %v4760
      %v4763 = vcombine.high %v4443, %v4443
      %v4765 = vunpack.c.l.s4 1983009808
      %v4766 = vunpack.c.0.s8 %v4765
      %v4767 = vlaneseq
      %v4768 = vshrl.u32 %v4767, 7
      %v4769 = vsub.s32 %v4766, %v4768
      %v4770 = vrot.slane %v4443, %v4769
      %v4772 = vunpack.c.l.s4 1983009808
      %v4773 = vunpack.c.0.s8 %v4772
      %v4774 = vlaneseq
      %v4775 = vshrl.u32 %v4774, 7
      %v4776 = vsub.s32 %v4773, %v4775
      %v4777 = vrot.slane %v4763, %v4776
      %v4778 = vcombine.high %v4770, %v4770
      %v4779 = vcombine.high %v4444, %v4444
      %v4781 = vunpack.c.l.s4 1983009808
      %v4782 = vunpack.c.0.s8 %v4781
      %v4783 = vlaneseq
      %v4784 = vshrl.u32 %v4783, 7
      %v4785 = vsub.s32 %v4782, %v4784
      %v4786 = vrot.slane %v4444, %v4785
      %v4788 = vunpack.c.l.s4 1983009808
      %v4789 = vunpack.c.0.s8 %v4788
      %v4790 = vlaneseq
      %v4791 = vshrl.u32 %v4790, 7
      %v4792 = vsub.s32 %v4789, %v4791
      %v4793 = vrot.slane %v4779, %v4792
      %v4794 = vcombine.high %v4786, %v4786
      %v4795 = vcombine.high %v4793, %v4793
      %v4796 = vcombine.high %v4445, %v4445
      %v4798 = vunpack.c.l.s4 1983009808
      %v4799 = vunpack.c.0.s8 %v4798
      %v4800 = vlaneseq
      %v4801 = vshrl.u32 %v4800, 7
      %v4802 = vsub.s32 %v4799, %v4801
      %v4803 = vrot.slane %v4445, %v4802
      %v4805 = vunpack.c.l.s4 1983009808
      %v4806 = vunpack.c.0.s8 %v4805
      %v4807 = vlaneseq
      %v4808 = vshrl.u32 %v4807, 7
      %v4809 = vsub.s32 %v4806, %v4808
      %v4810 = vrot.slane %v4796, %v4809
      %v4811 = vcombine.high %v4803, %v4803
      %v4812 = vcombine.high %v4446, %v4446
      %v4814 = vunpack.c.l.s4 1983009808
      %v4815 = vunpack.c.0.s8 %v4814
      %v4816 = vlaneseq
      %v4817 = vshrl.u32 %v4816, 7
      %v4818 = vsub.s32 %v4815, %v4817
      %v4819 = vrot.slane %v4446, %v4818
      %v4821 = vunpack.c.l.s4 1983009808
      %v4822 = vunpack.c.0.s8 %v4821
      %v4823 = vlaneseq
      %v4824 = vshrl.u32 %v4823, 7
      %v4825 = vsub.s32 %v4822, %v4824
      %v4826 = vrot.slane %v4812, %v4825
      %v4827 = vcombine.high %v4819, %v4819
      %v4828 = vcombine.high %v4826, %v4826
      %v4829 = vcombine.high %v4447, %v4447
      %v4831 = vunpack.c.l.s4 1983009808
      %v4832 = vunpack.c.0.s8 %v4831
      %v4833 = vlaneseq
      %v4834 = vshrl.u32 %v4833, 7
      %v4835 = vsub.s32 %v4832, %v4834
      %v4836 = vrot.slane %v4447, %v4835
      %v4838 = vunpack.c.l.s4 1983009808
      %v4839 = vunpack.c.0.s8 %v4838
      %v4840 = vlaneseq
      %v4841 = vshrl.u32 %v4840, 7
      %v4842 = vsub.s32 %v4839, %v4841
      %v4843 = vrot.slane %v4829, %v4842
      %v4844 = vcombine.high %v4836, %v4836
      %v4845 = vcombine.high %v4448, %v4448
      %v4847 = vunpack.c.l.s4 1983009808
      %v4848 = vunpack.c.0.s8 %v4847
      %v4849 = vlaneseq
      %v4850 = vshrl.u32 %v4849, 7
      %v4851 = vsub.s32 %v4848, %v4850
      %v4852 = vrot.slane %v4448, %v4851
      %v4854 = vunpack.c.l.s4 1983009808
      %v4855 = vunpack.c.0.s8 %v4854
      %v4856 = vlaneseq
      %v4857 = vshrl.u32 %v4856, 7
      %v4858 = vsub.s32 %v4855, %v4857
      %v4859 = vrot.slane %v4845, %v4858
      %v4860 = vcombine.high %v4852, %v4852
      %v4861 = vcombine.high %v4859, %v4859
      %v4862 = vcombine.high %v4449, %v4449
      %v4864 = vunpack.c.l.s4 1983009808
      %v4865 = vunpack.c.0.s8 %v4864
      %v4866 = vlaneseq
      %v4867 = vshrl.u32 %v4866, 7
      %v4868 = vsub.s32 %v4865, %v4867
      %v4869 = vrot.slane %v4449, %v4868
      %v4871 = vunpack.c.l.s4 1983009808
      %v4872 = vunpack.c.0.s8 %v4871
      %v4873 = vlaneseq
      %v4874 = vshrl.u32 %v4873, 7
      %v4875 = vsub.s32 %v4872, %v4874
      %v4876 = vrot.slane %v4862, %v4875
      %v4877 = vcombine.high %v4869, %v4869
      %v4878 = vcombine.high %v4450, %v4450
      %v4880 = vunpack.c.l.s4 1983009808
      %v4881 = vunpack.c.0.s8 %v4880
      %v4882 = vlaneseq
      %v4883 = vshrl.u32 %v4882, 7
      %v4884 = vsub.s32 %v4881, %v4883
      %v4885 = vrot.slane %v4450, %v4884
      %v4887 = vunpack.c.l.s4 1983009808
      %v4888 = vunpack.c.0.s8 %v4887
      %v4889 = vlaneseq
      %v4890 = vshrl.u32 %v4889, 7
      %v4891 = vsub.s32 %v4888, %v4890
      %v4892 = vrot.slane %v4878, %v4891
      %v4893 = vcombine.high %v4885, %v4885
      %v4894 = vcombine.high %v4892, %v4892
      %v4895 = vcombine.high %v4451, %v4451
      %v4897 = vunpack.c.l.s4 1983009808
      %v4898 = vunpack.c.0.s8 %v4897
      %v4899 = vlaneseq
      %v4900 = vshrl.u32 %v4899, 7
      %v4901 = vsub.s32 %v4898, %v4900
      %v4902 = vrot.slane %v4451, %v4901
      %v4904 = vunpack.c.l.s4 1983009808
      %v4905 = vunpack.c.0.s8 %v4904
      %v4906 = vlaneseq
      %v4907 = vshrl.u32 %v4906, 7
      %v4908 = vsub.s32 %v4905, %v4907
      %v4909 = vrot.slane %v4895, %v4908
      %v4910 = vcombine.high %v4902, %v4902
      %v4911 = vcombine.high %v4452, %v4452
      %v4913 = vunpack.c.l.s4 1983009808
      %v4914 = vunpack.c.0.s8 %v4913
      %v4915 = vlaneseq
      %v4916 = vshrl.u32 %v4915, 7
      %v4917 = vsub.s32 %v4914, %v4916
      %v4918 = vrot.slane %v4452, %v4917
      %v4920 = vunpack.c.l.s4 1983009808
      %v4921 = vunpack.c.0.s8 %v4920
      %v4922 = vlaneseq
      %v4923 = vshrl.u32 %v4922, 7
      %v4924 = vsub.s32 %v4921, %v4923
      %v4925 = vrot.slane %v4911, %v4924
      %v4926 = vcombine.high %v4918, %v4918
      %v4927 = vcombine.high %v4925, %v4925
      %v4928 = vcombine.high %v4453, %v4453
      %v4930 = vunpack.c.l.s4 1983009808
      %v4931 = vunpack.c.0.s8 %v4930
      %v4932 = vlaneseq
      %v4933 = vshrl.u32 %v4932, 7
      %v4934 = vsub.s32 %v4931, %v4933
      %v4935 = vrot.slane %v4453, %v4934
      %v4937 = vunpack.c.l.s4 1983009808
      %v4938 = vunpack.c.0.s8 %v4937
      %v4939 = vlaneseq
      %v4940 = vshrl.u32 %v4939, 7
      %v4941 = vsub.s32 %v4938, %v4940
      %v4942 = vrot.slane %v4928, %v4941
      %v4943 = vcombine.high %v4935, %v4935
      %v4944 = vcombine.low %v343, %v351
      %v4945 = vcombine.low %v350, %v352
      %v4947 = vunpack.c.l.s4 1983009808
      %v4948 = vunpack.c.0.s8 %v4947
      %v4949 = vlaneseq
      %v4950 = vshrl.u32 %v4949, 7
      %v4951 = vsub.s32 %v4948, %v4950
      %v4952 = vrot.slane %v4944, %v4951
      %v4954 = vunpack.c.l.s4 1983009808
      %v4955 = vunpack.c.0.s8 %v4954
      %v4956 = vlaneseq
      %v4957 = vshrl.u32 %v4956, 7
      %v4958 = vsub.s32 %v4955, %v4957
      %v4959 = vrot.slane %v4945, %v4958
      %v4960 = vcombine.low %v4952, %v4959
      %v4961 = vcombine.low %v360, %v368
      %v4962 = vcombine.low %v367, %v376
      %v4964 = vunpack.c.l.s4 1983009808
      %v4965 = vunpack.c.0.s8 %v4964
      %v4966 = vlaneseq
      %v4967 = vshrl.u32 %v4966, 7
      %v4968 = vsub.s32 %v4965, %v4967
      %v4969 = vrot.slane %v4961, %v4968
      %v4971 = vunpack.c.l.s4 1983009808
      %v4972 = vunpack.c.0.s8 %v4971
      %v4973 = vlaneseq
      %v4974 = vshrl.u32 %v4973, 7
      %v4975 = vsub.s32 %v4972, %v4974
      %v4976 = vrot.slane %v4962, %v4975
      %v4977 = vcombine.low %v4969, %v4976
      %v4978 = vcombine.low %v384, %v383
      %v4979 = vcombine.low %v385, %v393
      %v4981 = vunpack.c.l.s4 1983009808
      %v4982 = vunpack.c.0.s8 %v4981
      %v4983 = vlaneseq
      %v4984 = vshrl.u32 %v4983, 7
      %v4985 = vsub.s32 %v4982, %v4984
      %v4986 = vrot.slane %v4978, %v4985
      %v4988 = vunpack.c.l.s4 1983009808
      %v4989 = vunpack.c.0.s8 %v4988
      %v4990 = vlaneseq
      %v4991 = vshrl.u32 %v4990, 7
      %v4992 = vsub.s32 %v4989, %v4991
      %v4993 = vrot.slane %v4979, %v4992
      %v4994 = vcombine.low %v4986, %v4993
      %v4995 = vcombine.low %v401, %v400
      %v4996 = vcombine.low %v409, %v417
      %v4998 = vunpack.c.l.s4 1983009808
      %v4999 = vunpack.c.0.s8 %v4998
      %v5000 = vlaneseq
      %v5001 = vshrl.u32 %v5000, 7
      %v5002 = vsub.s32 %v4999, %v5001
      %v5003 = vrot.slane %v4995, %v5002
      %v5005 = vunpack.c.l.s4 1983009808
      %v5006 = vunpack.c.0.s8 %v5005
      %v5007 = vlaneseq
      %v5008 = vshrl.u32 %v5007, 7
      %v5009 = vsub.s32 %v5006, %v5008
      %v5010 = vrot.slane %v4996, %v5009
      %v5011 = vcombine.low %v5003, %v5010
      %v5012 = vcombine.low %v416, %v418
      %v5013 = vcombine.low %v426, %v434
      %v5015 = vunpack.c.l.s4 1983009808
      %v5016 = vunpack.c.0.s8 %v5015
      %v5017 = vlaneseq
      %v5018 = vshrl.u32 %v5017, 7
      %v5019 = vsub.s32 %v5016, %v5018
      %v5020 = vrot.slane %v5012, %v5019
      %v5022 = vunpack.c.l.s4 1983009808
      %v5023 = vunpack.c.0.s8 %v5022
      %v5024 = vlaneseq
      %v5025 = vshrl.u32 %v5024, 7
      %v5026 = vsub.s32 %v5023, %v5025
      %v5027 = vrot.slane %v5013, %v5026
      %v5028 = vcombine.low %v5020, %v5027
      %v5029 = vcombine.low %v433, %v442
      %v5030 = vcombine.low %v450, %v449
      %v5032 = vunpack.c.l.s4 1983009808
      %v5033 = vunpack.c.0.s8 %v5032
      %v5034 = vlaneseq
      %v5035 = vshrl.u32 %v5034, 7
      %v5036 = vsub.s32 %v5033, %v5035
      %v5037 = vrot.slane %v5029, %v5036
      %v5039 = vunpack.c.l.s4 1983009808
      %v5040 = vunpack.c.0.s8 %v5039
      %v5041 = vlaneseq
      %v5042 = vshrl.u32 %v5041, 7
      %v5043 = vsub.s32 %v5040, %v5042
      %v5044 = vrot.slane %v5030, %v5043
      %v5045 = vcombine.low %v5037, %v5044
      %v5046 = vcombine.low %v451, %v459
      %v5047 = vcombine.low %v467, %v466
      %v5049 = vunpack.c.l.s4 1983009808
      %v5050 = vunpack.c.0.s8 %v5049
      %v5051 = vlaneseq
      %v5052 = vshrl.u32 %v5051, 7
      %v5053 = vsub.s32 %v5050, %v5052
      %v5054 = vrot.slane %v5046, %v5053
      %v5056 = vunpack.c.l.s4 1983009808
      %v5057 = vunpack.c.0.s8 %v5056
      %v5058 = vlaneseq
      %v5059 = vshrl.u32 %v5058, 7
      %v5060 = vsub.s32 %v5057, %v5059
      %v5061 = vrot.slane %v5047, %v5060
      %v5062 = vcombine.low %v5054, %v5061
      %v5063 = vcombine.low %v475, %v483
      %v5064 = vcombine.low %v482, %v484
      %v5066 = vunpack.c.l.s4 1983009808
      %v5067 = vunpack.c.0.s8 %v5066
      %v5068 = vlaneseq
      %v5069 = vshrl.u32 %v5068, 7
      %v5070 = vsub.s32 %v5067, %v5069
      %v5071 = vrot.slane %v5063, %v5070
      %v5073 = vunpack.c.l.s4 1983009808
      %v5074 = vunpack.c.0.s8 %v5073
      %v5075 = vlaneseq
      %v5076 = vshrl.u32 %v5075, 7
      %v5077 = vsub.s32 %v5074, %v5076
      %v5078 = vrot.slane %v5064, %v5077
      %v5079 = vcombine.low %v5071, %v5078
      %v5080 = vcombine.low %v492, %v500
      %v5081 = vcombine.low %v499, %v508
      %v5083 = vunpack.c.l.s4 1983009808
      %v5084 = vunpack.c.0.s8 %v5083
      %v5085 = vlaneseq
      %v5086 = vshrl.u32 %v5085, 7
      %v5087 = vsub.s32 %v5084, %v5086
      %v5088 = vrot.slane %v5080, %v5087
      %v5090 = vunpack.c.l.s4 1983009808
      %v5091 = vunpack.c.0.s8 %v5090
      %v5092 = vlaneseq
      %v5093 = vshrl.u32 %v5092, 7
      %v5094 = vsub.s32 %v5091, %v5093
      %v5095 = vrot.slane %v5081, %v5094
      %v5096 = vcombine.low %v5088, %v5095
      %v5097 = vcombine.low %v516, %v515
      %v5098 = vcombine.low %v517, %v525
      %v5100 = vunpack.c.l.s4 1983009808
      %v5101 = vunpack.c.0.s8 %v5100
      %v5102 = vlaneseq
      %v5103 = vshrl.u32 %v5102, 7
      %v5104 = vsub.s32 %v5101, %v5103
      %v5105 = vrot.slane %v5097, %v5104
      %v5107 = vunpack.c.l.s4 1983009808
      %v5108 = vunpack.c.0.s8 %v5107
      %v5109 = vlaneseq
      %v5110 = vshrl.u32 %v5109, 7
      %v5111 = vsub.s32 %v5108, %v5110
      %v5112 = vrot.slane %v5098, %v5111
      %v5113 = vcombine.low %v5105, %v5112
      %v5114 = vcombine.low %v533, %v532
      %v5115 = vcombine.low %v541, %v549
      %v5117 = vunpack.c.l.s4 1983009808
      %v5118 = vunpack.c.0.s8 %v5117
      %v5119 = vlaneseq
      %v5120 = vshrl.u32 %v5119, 7
      %v5121 = vsub.s32 %v5118, %v5120
      %v5122 = vrot.slane %v5114, %v5121
      %v5124 = vunpack.c.l.s4 1983009808
      %v5125 = vunpack.c.0.s8 %v5124
      %v5126 = vlaneseq
      %v5127 = vshrl.u32 %v5126, 7
      %v5128 = vsub.s32 %v5125, %v5127
      %v5129 = vrot.slane %v5115, %v5128
      %v5130 = vcombine.low %v5122, %v5129
      %v5131 = vcombine.low %v548, %v550
      %v5132 = vcombine.low %v558, %v566
      %v5134 = vunpack.c.l.s4 1983009808
      %v5135 = vunpack.c.0.s8 %v5134
      %v5136 = vlaneseq
      %v5137 = vshrl.u32 %v5136, 7
      %v5138 = vsub.s32 %v5135, %v5137
      %v5139 = vrot.slane %v5131, %v5138
      %v5141 = vunpack.c.l.s4 1983009808
      %v5142 = vunpack.c.0.s8 %v5141
      %v5143 = vlaneseq
      %v5144 = vshrl.u32 %v5143, 7
      %v5145 = vsub.s32 %v5142, %v5144
      %v5146 = vrot.slane %v5132, %v5145
      %v5147 = vcombine.low %v5139, %v5146
      %v5148 = vcombine.low %v565, %v574
      %v5149 = vcombine.low %v582, %v581
      %v5151 = vunpack.c.l.s4 1983009808
      %v5152 = vunpack.c.0.s8 %v5151
      %v5153 = vlaneseq
      %v5154 = vshrl.u32 %v5153, 7
      %v5155 = vsub.s32 %v5152, %v5154
      %v5156 = vrot.slane %v5148, %v5155
      %v5158 = vunpack.c.l.s4 1983009808
      %v5159 = vunpack.c.0.s8 %v5158
      %v5160 = vlaneseq
      %v5161 = vshrl.u32 %v5160, 7
      %v5162 = vsub.s32 %v5159, %v5161
      %v5163 = vrot.slane %v5149, %v5162
      %v5164 = vcombine.low %v5156, %v5163
      %v5165 = vcombine.low %v583, %v591
      %v5166 = vcombine.low %v599, %v598
      %v5168 = vunpack.c.l.s4 1983009808
      %v5169 = vunpack.c.0.s8 %v5168
      %v5170 = vlaneseq
      %v5171 = vshrl.u32 %v5170, 7
      %v5172 = vsub.s32 %v5169, %v5171
      %v5173 = vrot.slane %v5165, %v5172
      %v5175 = vunpack.c.l.s4 1983009808
      %v5176 = vunpack.c.0.s8 %v5175
      %v5177 = vlaneseq
      %v5178 = vshrl.u32 %v5177, 7
      %v5179 = vsub.s32 %v5176, %v5178
      %v5180 = vrot.slane %v5166, %v5179
      %v5181 = vcombine.low %v5173, %v5180
      %v5182 = vcombine.low %v607, %v615
      %v5183 = vcombine.low %v614, %v616
      %v5185 = vunpack.c.l.s4 1983009808
      %v5186 = vunpack.c.0.s8 %v5185
      %v5187 = vlaneseq
      %v5188 = vshrl.u32 %v5187, 7
      %v5189 = vsub.s32 %v5186, %v5188
      %v5190 = vrot.slane %v5182, %v5189
      %v5192 = vunpack.c.l.s4 1983009808
      %v5193 = vunpack.c.0.s8 %v5192
      %v5194 = vlaneseq
      %v5195 = vshrl.u32 %v5194, 7
      %v5196 = vsub.s32 %v5193, %v5195
      %v5197 = vrot.slane %v5183, %v5196
      %v5198 = vcombine.low %v5190, %v5197
      %v5199 = vcombine.low %v624, %v632
      %v5200 = vcombine.low %v631, %v640
      %v5202 = vunpack.c.l.s4 1983009808
      %v5203 = vunpack.c.0.s8 %v5202
      %v5204 = vlaneseq
      %v5205 = vshrl.u32 %v5204, 7
      %v5206 = vsub.s32 %v5203, %v5205
      %v5207 = vrot.slane %v5199, %v5206
      %v5209 = vunpack.c.l.s4 1983009808
      %v5210 = vunpack.c.0.s8 %v5209
      %v5211 = vlaneseq
      %v5212 = vshrl.u32 %v5211, 7
      %v5213 = vsub.s32 %v5210, %v5212
      %v5214 = vrot.slane %v5200, %v5213
      %v5215 = vcombine.low %v5207, %v5214
      %v5216 = vcombine.low %v648, %v647
      %v5217 = vcombine.low %v649, %v657
      %v5219 = vunpack.c.l.s4 1983009808
      %v5220 = vunpack.c.0.s8 %v5219
      %v5221 = vlaneseq
      %v5222 = vshrl.u32 %v5221, 7
      %v5223 = vsub.s32 %v5220, %v5222
      %v5224 = vrot.slane %v5216, %v5223
      %v5226 = vunpack.c.l.s4 1983009808
      %v5227 = vunpack.c.0.s8 %v5226
      %v5228 = vlaneseq
      %v5229 = vshrl.u32 %v5228, 7
      %v5230 = vsub.s32 %v5227, %v5229
      %v5231 = vrot.slane %v5217, %v5230
      %v5232 = vcombine.low %v5224, %v5231
      %v5233 = vcombine.low %v665, %v664
      %v5234 = vcombine.low %v673, %v681
      %v5236 = vunpack.c.l.s4 1983009808
      %v5237 = vunpack.c.0.s8 %v5236
      %v5238 = vlaneseq
      %v5239 = vshrl.u32 %v5238, 7
      %v5240 = vsub.s32 %v5237, %v5239
      %v5241 = vrot.slane %v5233, %v5240
      %v5243 = vunpack.c.l.s4 1983009808
      %v5244 = vunpack.c.0.s8 %v5243
      %v5245 = vlaneseq
      %v5246 = vshrl.u32 %v5245, 7
      %v5247 = vsub.s32 %v5244, %v5246
      %v5248 = vrot.slane %v5234, %v5247
      %v5249 = vcombine.low %v5241, %v5248
      %v5250 = vcombine.low %v680, %v682
      %v5251 = vcombine.low %v690, %v698
      %v5253 = vunpack.c.l.s4 1983009808
      %v5254 = vunpack.c.0.s8 %v5253
      %v5255 = vlaneseq
      %v5256 = vshrl.u32 %v5255, 7
      %v5257 = vsub.s32 %v5254, %v5256
      %v5258 = vrot.slane %v5250, %v5257
      %v5260 = vunpack.c.l.s4 1983009808
      %v5261 = vunpack.c.0.s8 %v5260
      %v5262 = vlaneseq
      %v5263 = vshrl.u32 %v5262, 7
      %v5264 = vsub.s32 %v5261, %v5263
      %v5265 = vrot.slane %v5251, %v5264
      %v5266 = vcombine.low %v5258, %v5265
      %v5267 = vcombine.low %v697, %v706
      %v5268 = vcombine.low %v714, %v713
      %v5270 = vunpack.c.l.s4 1983009808
      %v5271 = vunpack.c.0.s8 %v5270
      %v5272 = vlaneseq
      %v5273 = vshrl.u32 %v5272, 7
      %v5274 = vsub.s32 %v5271, %v5273
      %v5275 = vrot.slane %v5267, %v5274
      %v5277 = vunpack.c.l.s4 1983009808
      %v5278 = vunpack.c.0.s8 %v5277
      %v5279 = vlaneseq
      %v5280 = vshrl.u32 %v5279, 7
      %v5281 = vsub.s32 %v5278, %v5280
      %v5282 = vrot.slane %v5268, %v5281
      %v5283 = vcombine.low %v5275, %v5282
      %v5284 = vcombine.low %v715, %v723
      %v5285 = vcombine.low %v731, %v730
      %v5287 = vunpack.c.l.s4 1983009808
      %v5288 = vunpack.c.0.s8 %v5287
      %v5289 = vlaneseq
      %v5290 = vshrl.u32 %v5289, 7
      %v5291 = vsub.s32 %v5288, %v5290
      %v5292 = vrot.slane %v5284, %v5291
      %v5294 = vunpack.c.l.s4 1983009808
      %v5295 = vunpack.c.0.s8 %v5294
      %v5296 = vlaneseq
      %v5297 = vshrl.u32 %v5296, 7
      %v5298 = vsub.s32 %v5295, %v5297
      %v5299 = vrot.slane %v5285, %v5298
      %v5300 = vcombine.low %v5292, %v5299
      %v5301 = vcombine.low %v739, %v747
      %v5302 = vcombine.low %v746, %v748
      %v5304 = vunpack.c.l.s4 1983009808
      %v5305 = vunpack.c.0.s8 %v5304
      %v5306 = vlaneseq
      %v5307 = vshrl.u32 %v5306, 7
      %v5308 = vsub.s32 %v5305, %v5307
      %v5309 = vrot.slane %v5301, %v5308
      %v5311 = vunpack.c.l.s4 1983009808
      %v5312 = vunpack.c.0.s8 %v5311
      %v5313 = vlaneseq
      %v5314 = vshrl.u32 %v5313, 7
      %v5315 = vsub.s32 %v5312, %v5314
      %v5316 = vrot.slane %v5302, %v5315
      %v5317 = vcombine.low %v5309, %v5316
      %v5318 = vcombine.low %v756, %v764
      %v5319 = vcombine.low %v763, %v772
      %v5321 = vunpack.c.l.s4 1983009808
      %v5322 = vunpack.c.0.s8 %v5321
      %v5323 = vlaneseq
      %v5324 = vshrl.u32 %v5323, 7
      %v5325 = vsub.s32 %v5322, %v5324
      %v5326 = vrot.slane %v5318, %v5325
      %v5328 = vunpack.c.l.s4 1983009808
      %v5329 = vunpack.c.0.s8 %v5328
      %v5330 = vlaneseq
      %v5331 = vshrl.u32 %v5330, 7
      %v5332 = vsub.s32 %v5329, %v5331
      %v5333 = vrot.slane %v5319, %v5332
      %v5334 = vcombine.low %v5326, %v5333
      %v5335 = vcombine.low %v780, %v779
      %v5336 = vcombine.low %v781, %v789
      %v5338 = vunpack.c.l.s4 1983009808
      %v5339 = vunpack.c.0.s8 %v5338
      %v5340 = vlaneseq
      %v5341 = vshrl.u32 %v5340, 7
      %v5342 = vsub.s32 %v5339, %v5341
      %v5343 = vrot.slane %v5335, %v5342
      %v5345 = vunpack.c.l.s4 1983009808
      %v5346 = vunpack.c.0.s8 %v5345
      %v5347 = vlaneseq
      %v5348 = vshrl.u32 %v5347, 7
      %v5349 = vsub.s32 %v5346, %v5348
      %v5350 = vrot.slane %v5336, %v5349
      %v5351 = vcombine.low %v5343, %v5350
      %v5352 = vcombine.low %v797, %v796
      %v5354 = vunpack.c.l.s4 1983009808
      %v5355 = vunpack.c.0.s8 %v5354
      %v5356 = vlaneseq
      %v5357 = vshrl.u32 %v5356, 7
      %v5358 = vsub.s32 %v5355, %v5357
      %v5359 = vrot.slane %v5352, %v5358
      %v5385 = vcombine.low %v861, %v869
      %v5386 = vcombine.low %v868, %v870
      %v5388 = vunpack.c.l.s4 1983009808
      %v5389 = vunpack.c.0.s8 %v5388
      %v5390 = vlaneseq
      %v5391 = vshrl.u32 %v5390, 7
      %v5392 = vsub.s32 %v5389, %v5391
      %v5393 = vrot.slane %v5385, %v5392
      %v5395 = vunpack.c.l.s4 1983009808
      %v5396 = vunpack.c.0.s8 %v5395
      %v5397 = vlaneseq
      %v5398 = vshrl.u32 %v5397, 7
      %v5399 = vsub.s32 %v5396, %v5398
      %v5400 = vrot.slane %v5386, %v5399
      %v5401 = vcombine.low %v5393, %v5400
      %v5402 = vcombine.low %v878, %v886
      %v5403 = vcombine.low %v885, %v894
      %v5405 = vunpack.c.l.s4 1983009808
      %v5406 = vunpack.c.0.s8 %v5405
      %v5407 = vlaneseq
      %v5408 = vshrl.u32 %v5407, 7
      %v5409 = vsub.s32 %v5406, %v5408
      %v5410 = vrot.slane %v5402, %v5409
      %v5412 = vunpack.c.l.s4 1983009808
      %v5413 = vunpack.c.0.s8 %v5412
      %v5414 = vlaneseq
      %v5415 = vshrl.u32 %v5414, 7
      %v5416 = vsub.s32 %v5413, %v5415
      %v5417 = vrot.slane %v5403, %v5416
      %v5418 = vcombine.low %v5410, %v5417
      %v5419 = vcombine.low %v902, %v901
      %v5420 = vcombine.low %v903, %v911
      %v5422 = vunpack.c.l.s4 1983009808
      %v5423 = vunpack.c.0.s8 %v5422
      %v5424 = vlaneseq
      %v5425 = vshrl.u32 %v5424, 7
      %v5426 = vsub.s32 %v5423, %v5425
      %v5427 = vrot.slane %v5419, %v5426
      %v5429 = vunpack.c.l.s4 1983009808
      %v5430 = vunpack.c.0.s8 %v5429
      %v5431 = vlaneseq
      %v5432 = vshrl.u32 %v5431, 7
      %v5433 = vsub.s32 %v5430, %v5432
      %v5434 = vrot.slane %v5420, %v5433
      %v5435 = vcombine.low %v5427, %v5434
      %v5436 = vcombine.low %v919, %v918
      %v5437 = vcombine.low %v927, %v935
      %v5439 = vunpack.c.l.s4 1983009808
      %v5440 = vunpack.c.0.s8 %v5439
      %v5441 = vlaneseq
      %v5442 = vshrl.u32 %v5441, 7
      %v5443 = vsub.s32 %v5440, %v5442
      %v5444 = vrot.slane %v5436, %v5443
      %v5446 = vunpack.c.l.s4 1983009808
      %v5447 = vunpack.c.0.s8 %v5446
      %v5448 = vlaneseq
      %v5449 = vshrl.u32 %v5448, 7
      %v5450 = vsub.s32 %v5447, %v5449
      %v5451 = vrot.slane %v5437, %v5450
      %v5452 = vcombine.low %v5444, %v5451
      %v5453 = vcombine.low %v934, %v936
      %v5454 = vcombine.low %v944, %v952
      %v5456 = vunpack.c.l.s4 1983009808
      %v5457 = vunpack.c.0.s8 %v5456
      %v5458 = vlaneseq
      %v5459 = vshrl.u32 %v5458, 7
      %v5460 = vsub.s32 %v5457, %v5459
      %v5461 = vrot.slane %v5453, %v5460
      %v5463 = vunpack.c.l.s4 1983009808
      %v5464 = vunpack.c.0.s8 %v5463
      %v5465 = vlaneseq
      %v5466 = vshrl.u32 %v5465, 7
      %v5467 = vsub.s32 %v5464, %v5466
      %v5468 = vrot.slane %v5454, %v5467
      %v5469 = vcombine.low %v5461, %v5468
      %v5470 = vcombine.low %v951, %v960
      %v5471 = vcombine.low %v968, %v967
      %v5473 = vunpack.c.l.s4 1983009808
      %v5474 = vunpack.c.0.s8 %v5473
      %v5475 = vlaneseq
      %v5476 = vshrl.u32 %v5475, 7
      %v5477 = vsub.s32 %v5474, %v5476
      %v5478 = vrot.slane %v5470, %v5477
      %v5480 = vunpack.c.l.s4 1983009808
      %v5481 = vunpack.c.0.s8 %v5480
      %v5482 = vlaneseq
      %v5483 = vshrl.u32 %v5482, 7
      %v5484 = vsub.s32 %v5481, %v5483
      %v5485 = vrot.slane %v5471, %v5484
      %v5486 = vcombine.low %v5478, %v5485
      %v5487 = vcombine.low %v969, %v977
      %v5488 = vcombine.low %v985, %v984
      %v5490 = vunpack.c.l.s4 1983009808
      %v5491 = vunpack.c.0.s8 %v5490
      %v5492 = vlaneseq
      %v5493 = vshrl.u32 %v5492, 7
      %v5494 = vsub.s32 %v5491, %v5493
      %v5495 = vrot.slane %v5487, %v5494
      %v5497 = vunpack.c.l.s4 1983009808
      %v5498 = vunpack.c.0.s8 %v5497
      %v5499 = vlaneseq
      %v5500 = vshrl.u32 %v5499, 7
      %v5501 = vsub.s32 %v5498, %v5500
      %v5502 = vrot.slane %v5488, %v5501
      %v5503 = vcombine.low %v5495, %v5502
      %v5504 = vcombine.low %v993, %v1001
      %v5505 = vcombine.low %v1000, %v1002
      %v5507 = vunpack.c.l.s4 1983009808
      %v5508 = vunpack.c.0.s8 %v5507
      %v5509 = vlaneseq
      %v5510 = vshrl.u32 %v5509, 7
      %v5511 = vsub.s32 %v5508, %v5510
      %v5512 = vrot.slane %v5504, %v5511
      %v5514 = vunpack.c.l.s4 1983009808
      %v5515 = vunpack.c.0.s8 %v5514
      %v5516 = vlaneseq
      %v5517 = vshrl.u32 %v5516, 7
      %v5518 = vsub.s32 %v5515, %v5517
      %v5519 = vrot.slane %v5505, %v5518
      %v5520 = vcombine.low %v5512, %v5519
      %v5521 = vcombine.low %v1010, %v1018
      %v5522 = vcombine.low %v1017, %v1026
      %v5524 = vunpack.c.l.s4 1983009808
      %v5525 = vunpack.c.0.s8 %v5524
      %v5526 = vlaneseq
      %v5527 = vshrl.u32 %v5526, 7
      %v5528 = vsub.s32 %v5525, %v5527
      %v5529 = vrot.slane %v5521, %v5528
      %v5531 = vunpack.c.l.s4 1983009808
      %v5532 = vunpack.c.0.s8 %v5531
      %v5533 = vlaneseq
      %v5534 = vshrl.u32 %v5533, 7
      %v5535 = vsub.s32 %v5532, %v5534
      %v5536 = vrot.slane %v5522, %v5535
      %v5537 = vcombine.low %v5529, %v5536
      %v5538 = vcombine.low %v1034, %v1033
      %v5539 = vcombine.low %v1035, %v1043
      %v5541 = vunpack.c.l.s4 1983009808
      %v5542 = vunpack.c.0.s8 %v5541
      %v5543 = vlaneseq
      %v5544 = vshrl.u32 %v5543, 7
      %v5545 = vsub.s32 %v5542, %v5544
      %v5546 = vrot.slane %v5538, %v5545
      %v5548 = vunpack.c.l.s4 1983009808
      %v5549 = vunpack.c.0.s8 %v5548
      %v5550 = vlaneseq
      %v5551 = vshrl.u32 %v5550, 7
      %v5552 = vsub.s32 %v5549, %v5551
      %v5553 = vrot.slane %v5539, %v5552
      %v5554 = vcombine.low %v5546, %v5553
      %v5555 = vcombine.low %v1051, %v1050
      %v5556 = vcombine.low %v1059, %v1067
      %v5558 = vunpack.c.l.s4 1983009808
      %v5559 = vunpack.c.0.s8 %v5558
      %v5560 = vlaneseq
      %v5561 = vshrl.u32 %v5560, 7
      %v5562 = vsub.s32 %v5559, %v5561
      %v5563 = vrot.slane %v5555, %v5562
      %v5565 = vunpack.c.l.s4 1983009808
      %v5566 = vunpack.c.0.s8 %v5565
      %v5567 = vlaneseq
      %v5568 = vshrl.u32 %v5567, 7
      %v5569 = vsub.s32 %v5566, %v5568
      %v5570 = vrot.slane %v5556, %v5569
      %v5571 = vcombine.low %v5563, %v5570
      %v5572 = vcombine.low %v1066, %v1068
      %v5573 = vcombine.low %v1076, %v1084
      %v5575 = vunpack.c.l.s4 1983009808
      %v5576 = vunpack.c.0.s8 %v5575
      %v5577 = vlaneseq
      %v5578 = vshrl.u32 %v5577, 7
      %v5579 = vsub.s32 %v5576, %v5578
      %v5580 = vrot.slane %v5572, %v5579
      %v5582 = vunpack.c.l.s4 1983009808
      %v5583 = vunpack.c.0.s8 %v5582
      %v5584 = vlaneseq
      %v5585 = vshrl.u32 %v5584, 7
      %v5586 = vsub.s32 %v5583, %v5585
      %v5587 = vrot.slane %v5573, %v5586
      %v5588 = vcombine.low %v5580, %v5587
      %v5589 = vcombine.low %v1083, %v1092
      %v5590 = vcombine.low %v1100, %v1099
      %v5592 = vunpack.c.l.s4 1983009808
      %v5593 = vunpack.c.0.s8 %v5592
      %v5594 = vlaneseq
      %v5595 = vshrl.u32 %v5594, 7
      %v5596 = vsub.s32 %v5593, %v5595
      %v5597 = vrot.slane %v5589, %v5596
      %v5599 = vunpack.c.l.s4 1983009808
      %v5600 = vunpack.c.0.s8 %v5599
      %v5601 = vlaneseq
      %v5602 = vshrl.u32 %v5601, 7
      %v5603 = vsub.s32 %v5600, %v5602
      %v5604 = vrot.slane %v5590, %v5603
      %v5605 = vcombine.low %v5597, %v5604
      %v5606 = vcombine.low %v1101, %v1109
      %v5607 = vcombine.low %v1117, %v1116
      %v5609 = vunpack.c.l.s4 1983009808
      %v5610 = vunpack.c.0.s8 %v5609
      %v5611 = vlaneseq
      %v5612 = vshrl.u32 %v5611, 7
      %v5613 = vsub.s32 %v5610, %v5612
      %v5614 = vrot.slane %v5606, %v5613
      %v5616 = vunpack.c.l.s4 1983009808
      %v5617 = vunpack.c.0.s8 %v5616
      %v5618 = vlaneseq
      %v5619 = vshrl.u32 %v5618, 7
      %v5620 = vsub.s32 %v5617, %v5619
      %v5621 = vrot.slane %v5607, %v5620
      %v5622 = vcombine.low %v5614, %v5621
      %v5623 = vcombine.low %v1125, %v1133
      %v5624 = vcombine.low %v1132, %v1134
      %v5626 = vunpack.c.l.s4 1983009808
      %v5627 = vunpack.c.0.s8 %v5626
      %v5628 = vlaneseq
      %v5629 = vshrl.u32 %v5628, 7
      %v5630 = vsub.s32 %v5627, %v5629
      %v5631 = vrot.slane %v5623, %v5630
      %v5633 = vunpack.c.l.s4 1983009808
      %v5634 = vunpack.c.0.s8 %v5633
      %v5635 = vlaneseq
      %v5636 = vshrl.u32 %v5635, 7
      %v5637 = vsub.s32 %v5634, %v5636
      %v5638 = vrot.slane %v5624, %v5637
      %v5639 = vcombine.low %v5631, %v5638
      %v5640 = vcombine.low %v1142, %v1150
      %v5641 = vcombine.low %v1149, %v1158
      %v5643 = vunpack.c.l.s4 1983009808
      %v5644 = vunpack.c.0.s8 %v5643
      %v5645 = vlaneseq
      %v5646 = vshrl.u32 %v5645, 7
      %v5647 = vsub.s32 %v5644, %v5646
      %v5648 = vrot.slane %v5640, %v5647
      %v5650 = vunpack.c.l.s4 1983009808
      %v5651 = vunpack.c.0.s8 %v5650
      %v5652 = vlaneseq
      %v5653 = vshrl.u32 %v5652, 7
      %v5654 = vsub.s32 %v5651, %v5653
      %v5655 = vrot.slane %v5641, %v5654
      %v5656 = vcombine.low %v5648, %v5655
      %v5657 = vcombine.low %v1166, %v1165
      %v5658 = vcombine.low %v1167, %v1175
      %v5660 = vunpack.c.l.s4 1983009808
      %v5661 = vunpack.c.0.s8 %v5660
      %v5662 = vlaneseq
      %v5663 = vshrl.u32 %v5662, 7
      %v5664 = vsub.s32 %v5661, %v5663
      %v5665 = vrot.slane %v5657, %v5664
      %v5667 = vunpack.c.l.s4 1983009808
      %v5668 = vunpack.c.0.s8 %v5667
      %v5669 = vlaneseq
      %v5670 = vshrl.u32 %v5669, 7
      %v5671 = vsub.s32 %v5668, %v5670
      %v5672 = vrot.slane %v5658, %v5671
      %v5673 = vcombine.low %v5665, %v5672
      %v5674 = vcombine.low %v1183, %v1182
      %v5675 = vcombine.low %v1191, %v1199
      %v5677 = vunpack.c.l.s4 1983009808
      %v5678 = vunpack.c.0.s8 %v5677
      %v5679 = vlaneseq
      %v5680 = vshrl.u32 %v5679, 7
      %v5681 = vsub.s32 %v5678, %v5680
      %v5682 = vrot.slane %v5674, %v5681
      %v5684 = vunpack.c.l.s4 1983009808
      %v5685 = vunpack.c.0.s8 %v5684
      %v5686 = vlaneseq
      %v5687 = vshrl.u32 %v5686, 7
      %v5688 = vsub.s32 %v5685, %v5687
      %v5689 = vrot.slane %v5675, %v5688
      %v5690 = vcombine.low %v5682, %v5689
      %v5691 = vcombine.low %v1198, %v1200
      %v5692 = vcombine.low %v1208, %v1216
      %v5694 = vunpack.c.l.s4 1983009808
      %v5695 = vunpack.c.0.s8 %v5694
      %v5696 = vlaneseq
      %v5697 = vshrl.u32 %v5696, 7
      %v5698 = vsub.s32 %v5695, %v5697
      %v5699 = vrot.slane %v5691, %v5698
      %v5701 = vunpack.c.l.s4 1983009808
      %v5702 = vunpack.c.0.s8 %v5701
      %v5703 = vlaneseq
      %v5704 = vshrl.u32 %v5703, 7
      %v5705 = vsub.s32 %v5702, %v5704
      %v5706 = vrot.slane %v5692, %v5705
      %v5707 = vcombine.low %v5699, %v5706
      %v5708 = vcombine.low %v1215, %v1224
      %v5709 = vcombine.low %v1232, %v1231
      %v5711 = vunpack.c.l.s4 1983009808
      %v5712 = vunpack.c.0.s8 %v5711
      %v5713 = vlaneseq
      %v5714 = vshrl.u32 %v5713, 7
      %v5715 = vsub.s32 %v5712, %v5714
      %v5716 = vrot.slane %v5708, %v5715
      %v5718 = vunpack.c.l.s4 1983009808
      %v5719 = vunpack.c.0.s8 %v5718
      %v5720 = vlaneseq
      %v5721 = vshrl.u32 %v5720, 7
      %v5722 = vsub.s32 %v5719, %v5721
      %v5723 = vrot.slane %v5709, %v5722
      %v5724 = vcombine.low %v5716, %v5723
      %v5725 = vcombine.low %v1233, %v1241
      %v5726 = vcombine.low %v1249, %v1248
      %v5728 = vunpack.c.l.s4 1983009808
      %v5729 = vunpack.c.0.s8 %v5728
      %v5730 = vlaneseq
      %v5731 = vshrl.u32 %v5730, 7
      %v5732 = vsub.s32 %v5729, %v5731
      %v5733 = vrot.slane %v5725, %v5732
      %v5735 = vunpack.c.l.s4 1983009808
      %v5736 = vunpack.c.0.s8 %v5735
      %v5737 = vlaneseq
      %v5738 = vshrl.u32 %v5737, 7
      %v5739 = vsub.s32 %v5736, %v5738
      %v5740 = vrot.slane %v5726, %v5739
      %v5741 = vcombine.low %v5733, %v5740
      %v5742 = vcombine.low %v1257, %v1265
      %v5743 = vcombine.low %v1264, %v1266
      %v5745 = vunpack.c.l.s4 1983009808
      %v5746 = vunpack.c.0.s8 %v5745
      %v5747 = vlaneseq
      %v5748 = vshrl.u32 %v5747, 7
      %v5749 = vsub.s32 %v5746, %v5748
      %v5750 = vrot.slane %v5742, %v5749
      %v5752 = vunpack.c.l.s4 1983009808
      %v5753 = vunpack.c.0.s8 %v5752
      %v5754 = vlaneseq
      %v5755 = vshrl.u32 %v5754, 7
      %v5756 = vsub.s32 %v5753, %v5755
      %v5757 = vrot.slane %v5743, %v5756
      %v5758 = vcombine.low %v5750, %v5757
      %v5759 = vcombine.low %v1274, %v1282
      %v5760 = vcombine.low %v1281, %v1290
      %v5762 = vunpack.c.l.s4 1983009808
      %v5763 = vunpack.c.0.s8 %v5762
      %v5764 = vlaneseq
      %v5765 = vshrl.u32 %v5764, 7
      %v5766 = vsub.s32 %v5763, %v5765
      %v5767 = vrot.slane %v5759, %v5766
      %v5769 = vunpack.c.l.s4 1983009808
      %v5770 = vunpack.c.0.s8 %v5769
      %v5771 = vlaneseq
      %v5772 = vshrl.u32 %v5771, 7
      %v5773 = vsub.s32 %v5770, %v5772
      %v5774 = vrot.slane %v5760, %v5773
      %v5775 = vcombine.low %v5767, %v5774
      %v5776 = vcombine.low %v1298, %v1297
      %v5777 = vcombine.low %v1299, %v1307
      %v5779 = vunpack.c.l.s4 1983009808
      %v5780 = vunpack.c.0.s8 %v5779
      %v5781 = vlaneseq
      %v5782 = vshrl.u32 %v5781, 7
      %v5783 = vsub.s32 %v5780, %v5782
      %v5784 = vrot.slane %v5776, %v5783
      %v5786 = vunpack.c.l.s4 1983009808
      %v5787 = vunpack.c.0.s8 %v5786
      %v5788 = vlaneseq
      %v5789 = vshrl.u32 %v5788, 7
      %v5790 = vsub.s32 %v5787, %v5789
      %v5791 = vrot.slane %v5777, %v5790
      %v5792 = vcombine.low %v5784, %v5791
      %v5793 = vcombine.low %v1315, %v1314
      %v5795 = vunpack.c.l.s4 1983009808
      %v5796 = vunpack.c.0.s8 %v5795
      %v5797 = vlaneseq
      %v5798 = vshrl.u32 %v5797, 7
      %v5799 = vsub.s32 %v5796, %v5798
      %v5800 = vrot.slane %v5793, %v5799
      %5801 = vrot.lane.b32.xlu0 %v5401, 4
      %v5802 = vpop.permute.xlu0 %5801
      %5803 = vrot.lane.b32.xlu0 %v5418, 4
      %v5804 = vpop.permute.xlu0 %5803
      %5805 = vrot.lane.b32.xlu0 %v5435, 4
      %v5806 = vpop.permute.xlu0 %5805
      %5807 = vrot.lane.b32.xlu0 %v5452, 4
      %v5808 = vpop.permute.xlu0 %5807
      %5809 = vrot.lane.b32.xlu0 %v5469, 4
      %v5810 = vpop.permute.xlu0 %5809
      %5811 = vrot.lane.b32.xlu0 %v5486, 4
      %v5812 = vpop.permute.xlu0 %5811
      %5813 = vrot.lane.b32.xlu0 %v5503, 4
      %v5814 = vpop.permute.xlu0 %5813
      %5815 = vrot.lane.b32.xlu0 %v5520, 4
      %v5816 = vpop.permute.xlu0 %5815
      %5817 = vrot.lane.b32.xlu0 %v5537, 4
      %v5818 = vpop.permute.xlu0 %5817
      %5819 = vrot.lane.b32.xlu0 %v5554, 4
      %v5820 = vpop.permute.xlu0 %5819
      %5821 = vrot.lane.b32.xlu0 %v5571, 4
      %v5822 = vpop.permute.xlu0 %5821
      %5823 = vrot.lane.b32.xlu0 %v5588, 4
      %v5824 = vpop.permute.xlu0 %5823
      %5825 = vrot.lane.b32.xlu0 %v5605, 4
      %v5826 = vpop.permute.xlu0 %5825
      %5827 = vrot.lane.b32.xlu0 %v5622, 4
      %v5828 = vpop.permute.xlu0 %5827
      %5829 = vrot.lane.b32.xlu0 %v5639, 4
      %v5830 = vpop.permute.xlu0 %5829
      %5831 = vrot.lane.b32.xlu0 %v5656, 4
      %v5832 = vpop.permute.xlu0 %5831
      %5833 = vrot.lane.b32.xlu0 %v5673, 4
      %v5834 = vpop.permute.xlu0 %5833
      %5835 = vrot.lane.b32.xlu0 %v5690, 4
      %v5836 = vpop.permute.xlu0 %5835
      %5837 = vrot.lane.b32.xlu0 %v5707, 4
      %v5838 = vpop.permute.xlu0 %5837
      %5839 = vrot.lane.b32.xlu0 %v5724, 4
      %v5840 = vpop.permute.xlu0 %5839
      %5841 = vrot.lane.b32.xlu0 %v5741, 4
      %v5842 = vpop.permute.xlu0 %5841
      %5843 = vrot.lane.b32.xlu0 %v5758, 4
      %v5844 = vpop.permute.xlu0 %5843
      %5845 = vrot.lane.b32.xlu0 %v5775, 4
      %v5846 = vpop.permute.xlu0 %5845
      %5847 = vrot.lane.b32.xlu0 %v5792, 4
      %v5848 = vpop.permute.xlu0 %5847
      %5849 = vrot.lane.b32.xlu0 %v5800, 4
      %v5850 = vpop.permute.xlu0 %5849
      %v5876 = vcombine.low %v1379, %v1387
      %v5877 = vcombine.low %v1386, %v1388
      %v5879 = vunpack.c.l.s4 1983009808
      %v5880 = vunpack.c.0.s8 %v5879
      %v5881 = vlaneseq
      %v5882 = vshrl.u32 %v5881, 7
      %v5883 = vsub.s32 %v5880, %v5882
      %v5884 = vrot.slane %v5876, %v5883
      %v5886 = vunpack.c.l.s4 1983009808
      %v5887 = vunpack.c.0.s8 %v5886
      %v5888 = vlaneseq
      %v5889 = vshrl.u32 %v5888, 7
      %v5890 = vsub.s32 %v5887, %v5889
      %v5891 = vrot.slane %v5877, %v5890
      %v5892 = vcombine.low %v5884, %v5891
      %v5893 = vcombine.low %v1396, %v1404
      %v5894 = vcombine.low %v1403, %v1412
      %v5896 = vunpack.c.l.s4 1983009808
      %v5897 = vunpack.c.0.s8 %v5896
      %v5898 = vlaneseq
      %v5899 = vshrl.u32 %v5898, 7
      %v5900 = vsub.s32 %v5897, %v5899
      %v5901 = vrot.slane %v5893, %v5900
      %v5903 = vunpack.c.l.s4 1983009808
      %v5904 = vunpack.c.0.s8 %v5903
      %v5905 = vlaneseq
      %v5906 = vshrl.u32 %v5905, 7
      %v5907 = vsub.s32 %v5904, %v5906
      %v5908 = vrot.slane %v5894, %v5907
      %v5909 = vcombine.low %v5901, %v5908
      %v5910 = vcombine.low %v1420, %v1419
      %v5911 = vcombine.low %v1421, %v1429
      %v5913 = vunpack.c.l.s4 1983009808
      %v5914 = vunpack.c.0.s8 %v5913
      %v5915 = vlaneseq
      %v5916 = vshrl.u32 %v5915, 7
      %v5917 = vsub.s32 %v5914, %v5916
      %v5918 = vrot.slane %v5910, %v5917
      %v5920 = vunpack.c.l.s4 1983009808
      %v5921 = vunpack.c.0.s8 %v5920
      %v5922 = vlaneseq
      %v5923 = vshrl.u32 %v5922, 7
      %v5924 = vsub.s32 %v5921, %v5923
      %v5925 = vrot.slane %v5911, %v5924
      %v5926 = vcombine.low %v5918, %v5925
      %v5927 = vcombine.low %v1437, %v1436
      %v5928 = vcombine.low %v1445, %v1453
      %v5930 = vunpack.c.l.s4 1983009808
      %v5931 = vunpack.c.0.s8 %v5930
      %v5932 = vlaneseq
      %v5933 = vshrl.u32 %v5932, 7
      %v5934 = vsub.s32 %v5931, %v5933
      %v5935 = vrot.slane %v5927, %v5934
      %v5937 = vunpack.c.l.s4 1983009808
      %v5938 = vunpack.c.0.s8 %v5937
      %v5939 = vlaneseq
      %v5940 = vshrl.u32 %v5939, 7
      %v5941 = vsub.s32 %v5938, %v5940
      %v5942 = vrot.slane %v5928, %v5941
      %v5943 = vcombine.low %v5935, %v5942
      %v5944 = vcombine.low %v1452, %v1454
      %v5945 = vcombine.low %v1462, %v1470
      %v5947 = vunpack.c.l.s4 1983009808
      %v5948 = vunpack.c.0.s8 %v5947
      %v5949 = vlaneseq
      %v5950 = vshrl.u32 %v5949, 7
      %v5951 = vsub.s32 %v5948, %v5950
      %v5952 = vrot.slane %v5944, %v5951
      %v5954 = vunpack.c.l.s4 1983009808
      %v5955 = vunpack.c.0.s8 %v5954
      %v5956 = vlaneseq
      %v5957 = vshrl.u32 %v5956, 7
      %v5958 = vsub.s32 %v5955, %v5957
      %v5959 = vrot.slane %v5945, %v5958
      %v5960 = vcombine.low %v5952, %v5959
      %v5961 = vcombine.low %v1469, %v1478
      %v5962 = vcombine.low %v1486, %v1485
      %v5964 = vunpack.c.l.s4 1983009808
      %v5965 = vunpack.c.0.s8 %v5964
      %v5966 = vlaneseq
      %v5967 = vshrl.u32 %v5966, 7
      %v5968 = vsub.s32 %v5965, %v5967
      %v5969 = vrot.slane %v5961, %v5968
      %v5971 = vunpack.c.l.s4 1983009808
      %v5972 = vunpack.c.0.s8 %v5971
      %v5973 = vlaneseq
      %v5974 = vshrl.u32 %v5973, 7
      %v5975 = vsub.s32 %v5972, %v5974
      %v5976 = vrot.slane %v5962, %v5975
      %v5977 = vcombine.low %v5969, %v5976
      %v5978 = vcombine.low %v1487, %v1495
      %v5979 = vcombine.low %v1503, %v1502
      %v5981 = vunpack.c.l.s4 1983009808
      %v5982 = vunpack.c.0.s8 %v5981
      %v5983 = vlaneseq
      %v5984 = vshrl.u32 %v5983, 7
      %v5985 = vsub.s32 %v5982, %v5984
      %v5986 = vrot.slane %v5978, %v5985
      %v5988 = vunpack.c.l.s4 1983009808
      %v5989 = vunpack.c.0.s8 %v5988
      %v5990 = vlaneseq
      %v5991 = vshrl.u32 %v5990, 7
      %v5992 = vsub.s32 %v5989, %v5991
      %v5993 = vrot.slane %v5979, %v5992
      %v5994 = vcombine.low %v5986, %v5993
      %v5995 = vcombine.low %v1511, %v1519
      %v5996 = vcombine.low %v1518, %v1520
      %v5998 = vunpack.c.l.s4 1983009808
      %v5999 = vunpack.c.0.s8 %v5998
      %v6000 = vlaneseq
      %v6001 = vshrl.u32 %v6000, 7
      %v6002 = vsub.s32 %v5999, %v6001
      %v6003 = vrot.slane %v5995, %v6002
      %v6005 = vunpack.c.l.s4 1983009808
      %v6006 = vunpack.c.0.s8 %v6005
      %v6007 = vlaneseq
      %v6008 = vshrl.u32 %v6007, 7
      %v6009 = vsub.s32 %v6006, %v6008
      %v6010 = vrot.slane %v5996, %v6009
      %v6011 = vcombine.low %v6003, %v6010
      %v6012 = vcombine.low %v1528, %v1536
      %v6013 = vcombine.low %v1535, %v1544
      %v6015 = vunpack.c.l.s4 1983009808
      %v6016 = vunpack.c.0.s8 %v6015
      %v6017 = vlaneseq
      %v6018 = vshrl.u32 %v6017, 7
      %v6019 = vsub.s32 %v6016, %v6018
      %v6020 = vrot.slane %v6012, %v6019
      %v6022 = vunpack.c.l.s4 1983009808
      %v6023 = vunpack.c.0.s8 %v6022
      %v6024 = vlaneseq
      %v6025 = vshrl.u32 %v6024, 7
      %v6026 = vsub.s32 %v6023, %v6025
      %v6027 = vrot.slane %v6013, %v6026
      %v6028 = vcombine.low %v6020, %v6027
      %v6029 = vcombine.low %v1552, %v1551
      %v6030 = vcombine.low %v1553, %v1561
      %v6032 = vunpack.c.l.s4 1983009808
      %v6033 = vunpack.c.0.s8 %v6032
      %v6034 = vlaneseq
      %v6035 = vshrl.u32 %v6034, 7
      %v6036 = vsub.s32 %v6033, %v6035
      %v6037 = vrot.slane %v6029, %v6036
      %v6039 = vunpack.c.l.s4 1983009808
      %v6040 = vunpack.c.0.s8 %v6039
      %v6041 = vlaneseq
      %v6042 = vshrl.u32 %v6041, 7
      %v6043 = vsub.s32 %v6040, %v6042
      %v6044 = vrot.slane %v6030, %v6043
      %v6045 = vcombine.low %v6037, %v6044
      %v6046 = vcombine.low %v1569, %v1568
      %v6047 = vcombine.low %v1577, %v1585
      %v6049 = vunpack.c.l.s4 1983009808
      %v6050 = vunpack.c.0.s8 %v6049
      %v6051 = vlaneseq
      %v6052 = vshrl.u32 %v6051, 7
      %v6053 = vsub.s32 %v6050, %v6052
      %v6054 = vrot.slane %v6046, %v6053
      %v6056 = vunpack.c.l.s4 1983009808
      %v6057 = vunpack.c.0.s8 %v6056
      %v6058 = vlaneseq
      %v6059 = vshrl.u32 %v6058, 7
      %v6060 = vsub.s32 %v6057, %v6059
      %v6061 = vrot.slane %v6047, %v6060
      %v6062 = vcombine.low %v6054, %v6061
      %v6063 = vcombine.low %v1584, %v1586
      %v6064 = vcombine.low %v1594, %v1602
      %v6066 = vunpack.c.l.s4 1983009808
      %v6067 = vunpack.c.0.s8 %v6066
      %v6068 = vlaneseq
      %v6069 = vshrl.u32 %v6068, 7
      %v6070 = vsub.s32 %v6067, %v6069
      %v6071 = vrot.slane %v6063, %v6070
      %v6073 = vunpack.c.l.s4 1983009808
      %v6074 = vunpack.c.0.s8 %v6073
      %v6075 = vlaneseq
      %v6076 = vshrl.u32 %v6075, 7
      %v6077 = vsub.s32 %v6074, %v6076
      %v6078 = vrot.slane %v6064, %v6077
      %v6079 = vcombine.low %v6071, %v6078
      %v6080 = vcombine.low %v1601, %v1610
      %v6081 = vcombine.low %v1618, %v1617
      %v6083 = vunpack.c.l.s4 1983009808
      %v6084 = vunpack.c.0.s8 %v6083
      %v6085 = vlaneseq
      %v6086 = vshrl.u32 %v6085, 7
      %v6087 = vsub.s32 %v6084, %v6086
      %v6088 = vrot.slane %v6080, %v6087
      %v6090 = vunpack.c.l.s4 1983009808
      %v6091 = vunpack.c.0.s8 %v6090
      %v6092 = vlaneseq
      %v6093 = vshrl.u32 %v6092, 7
      %v6094 = vsub.s32 %v6091, %v6093
      %v6095 = vrot.slane %v6081, %v6094
      %v6096 = vcombine.low %v6088, %v6095
      %v6097 = vcombine.low %v1619, %v1627
      %v6098 = vcombine.low %v1635, %v1634
      %v6100 = vunpack.c.l.s4 1983009808
      %v6101 = vunpack.c.0.s8 %v6100
      %v6102 = vlaneseq
      %v6103 = vshrl.u32 %v6102, 7
      %v6104 = vsub.s32 %v6101, %v6103
      %v6105 = vrot.slane %v6097, %v6104
      %v6107 = vunpack.c.l.s4 1983009808
      %v6108 = vunpack.c.0.s8 %v6107
      %v6109 = vlaneseq
      %v6110 = vshrl.u32 %v6109, 7
      %v6111 = vsub.s32 %v6108, %v6110
      %v6112 = vrot.slane %v6098, %v6111
      %v6113 = vcombine.low %v6105, %v6112
      %v6114 = vcombine.low %v1643, %v1651
      %v6115 = vcombine.low %v1650, %v1652
      %v6117 = vunpack.c.l.s4 1983009808
      %v6118 = vunpack.c.0.s8 %v6117
      %v6119 = vlaneseq
      %v6120 = vshrl.u32 %v6119, 7
      %v6121 = vsub.s32 %v6118, %v6120
      %v6122 = vrot.slane %v6114, %v6121
      %v6124 = vunpack.c.l.s4 1983009808
      %v6125 = vunpack.c.0.s8 %v6124
      %v6126 = vlaneseq
      %v6127 = vshrl.u32 %v6126, 7
      %v6128 = vsub.s32 %v6125, %v6127
      %v6129 = vrot.slane %v6115, %v6128
      %v6130 = vcombine.low %v6122, %v6129
      %v6131 = vcombine.low %v1660, %v1668
      %v6132 = vcombine.low %v1667, %v1676
      %v6134 = vunpack.c.l.s4 1983009808
      %v6135 = vunpack.c.0.s8 %v6134
      %v6136 = vlaneseq
      %v6137 = vshrl.u32 %v6136, 7
      %v6138 = vsub.s32 %v6135, %v6137
      %v6139 = vrot.slane %v6131, %v6138
      %v6141 = vunpack.c.l.s4 1983009808
      %v6142 = vunpack.c.0.s8 %v6141
      %v6143 = vlaneseq
      %v6144 = vshrl.u32 %v6143, 7
      %v6145 = vsub.s32 %v6142, %v6144
      %v6146 = vrot.slane %v6132, %v6145
      %v6147 = vcombine.low %v6139, %v6146
      %v6148 = vcombine.low %v1684, %v1683
      %v6149 = vcombine.low %v1685, %v1693
      %v6151 = vunpack.c.l.s4 1983009808
      %v6152 = vunpack.c.0.s8 %v6151
      %v6153 = vlaneseq
      %v6154 = vshrl.u32 %v6153, 7
      %v6155 = vsub.s32 %v6152, %v6154
      %v6156 = vrot.slane %v6148, %v6155
      %v6158 = vunpack.c.l.s4 1983009808
      %v6159 = vunpack.c.0.s8 %v6158
      %v6160 = vlaneseq
      %v6161 = vshrl.u32 %v6160, 7
      %v6162 = vsub.s32 %v6159, %v6161
      %v6163 = vrot.slane %v6149, %v6162
      %v6164 = vcombine.low %v6156, %v6163
      %v6165 = vcombine.low %v1701, %v1700
      %v6166 = vcombine.low %v1709, %v1717
      %v6168 = vunpack.c.l.s4 1983009808
      %v6169 = vunpack.c.0.s8 %v6168
      %v6170 = vlaneseq
      %v6171 = vshrl.u32 %v6170, 7
      %v6172 = vsub.s32 %v6169, %v6171
      %v6173 = vrot.slane %v6165, %v6172
      %v6175 = vunpack.c.l.s4 1983009808
      %v6176 = vunpack.c.0.s8 %v6175
      %v6177 = vlaneseq
      %v6178 = vshrl.u32 %v6177, 7
      %v6179 = vsub.s32 %v6176, %v6178
      %v6180 = vrot.slane %v6166, %v6179
      %v6181 = vcombine.low %v6173, %v6180
      %v6182 = vcombine.low %v1716, %v1718
      %v6183 = vcombine.low %v1726, %v1734
      %v6185 = vunpack.c.l.s4 1983009808
      %v6186 = vunpack.c.0.s8 %v6185
      %v6187 = vlaneseq
      %v6188 = vshrl.u32 %v6187, 7
      %v6189 = vsub.s32 %v6186, %v6188
      %v6190 = vrot.slane %v6182, %v6189
      %v6192 = vunpack.c.l.s4 1983009808
      %v6193 = vunpack.c.0.s8 %v6192
      %v6194 = vlaneseq
      %v6195 = vshrl.u32 %v6194, 7
      %v6196 = vsub.s32 %v6193, %v6195
      %v6197 = vrot.slane %v6183, %v6196
      %v6198 = vcombine.low %v6190, %v6197
      %v6199 = vcombine.low %v1733, %v1742
      %v6200 = vcombine.low %v1750, %v1749
      %v6202 = vunpack.c.l.s4 1983009808
      %v6203 = vunpack.c.0.s8 %v6202
      %v6204 = vlaneseq
      %v6205 = vshrl.u32 %v6204, 7
      %v6206 = vsub.s32 %v6203, %v6205
      %v6207 = vrot.slane %v6199, %v6206
      %v6209 = vunpack.c.l.s4 1983009808
      %v6210 = vunpack.c.0.s8 %v6209
      %v6211 = vlaneseq
      %v6212 = vshrl.u32 %v6211, 7
      %v6213 = vsub.s32 %v6210, %v6212
      %v6214 = vrot.slane %v6200, %v6213
      %v6215 = vcombine.low %v6207, %v6214
      %v6216 = vcombine.low %v1751, %v1759
      %v6217 = vcombine.low %v1767, %v1766
      %v6219 = vunpack.c.l.s4 1983009808
      %v6220 = vunpack.c.0.s8 %v6219
      %v6221 = vlaneseq
      %v6222 = vshrl.u32 %v6221, 7
      %v6223 = vsub.s32 %v6220, %v6222
      %v6224 = vrot.slane %v6216, %v6223
      %v6226 = vunpack.c.l.s4 1983009808
      %v6227 = vunpack.c.0.s8 %v6226
      %v6228 = vlaneseq
      %v6229 = vshrl.u32 %v6228, 7
      %v6230 = vsub.s32 %v6227, %v6229
      %v6231 = vrot.slane %v6217, %v6230
      %v6232 = vcombine.low %v6224, %v6231
      %v6233 = vcombine.low %v1775, %v1783
      %v6234 = vcombine.low %v1782, %v1784
      %v6236 = vunpack.c.l.s4 1983009808
      %v6237 = vunpack.c.0.s8 %v6236
      %v6238 = vlaneseq
      %v6239 = vshrl.u32 %v6238, 7
      %v6240 = vsub.s32 %v6237, %v6239
      %v6241 = vrot.slane %v6233, %v6240
      %v6243 = vunpack.c.l.s4 1983009808
      %v6244 = vunpack.c.0.s8 %v6243
      %v6245 = vlaneseq
      %v6246 = vshrl.u32 %v6245, 7
      %v6247 = vsub.s32 %v6244, %v6246
      %v6248 = vrot.slane %v6234, %v6247
      %v6249 = vcombine.low %v6241, %v6248
      %v6250 = vcombine.low %v1792, %v1800
      %v6251 = vcombine.low %v1799, %v1808
      %v6253 = vunpack.c.l.s4 1983009808
      %v6254 = vunpack.c.0.s8 %v6253
      %v6255 = vlaneseq
      %v6256 = vshrl.u32 %v6255, 7
      %v6257 = vsub.s32 %v6254, %v6256
      %v6258 = vrot.slane %v6250, %v6257
      %v6260 = vunpack.c.l.s4 1983009808
      %v6261 = vunpack.c.0.s8 %v6260
      %v6262 = vlaneseq
      %v6263 = vshrl.u32 %v6262, 7
      %v6264 = vsub.s32 %v6261, %v6263
      %v6265 = vrot.slane %v6251, %v6264
      %v6266 = vcombine.low %v6258, %v6265
      %v6267 = vcombine.low %v1816, %v1815
      %v6268 = vcombine.low %v1817, %v1825
      %v6270 = vunpack.c.l.s4 1983009808
      %v6271 = vunpack.c.0.s8 %v6270
      %v6272 = vlaneseq
      %v6273 = vshrl.u32 %v6272, 7
      %v6274 = vsub.s32 %v6271, %v6273
      %v6275 = vrot.slane %v6267, %v6274
      %v6277 = vunpack.c.l.s4 1983009808
      %v6278 = vunpack.c.0.s8 %v6277
      %v6279 = vlaneseq
      %v6280 = vshrl.u32 %v6279, 7
      %v6281 = vsub.s32 %v6278, %v6280
      %v6282 = vrot.slane %v6268, %v6281
      %v6283 = vcombine.low %v6275, %v6282
      %v6284 = vcombine.low %v1833, %v1832
      %v6286 = vunpack.c.l.s4 1983009808
      %v6287 = vunpack.c.0.s8 %v6286
      %v6288 = vlaneseq
      %v6289 = vshrl.u32 %v6288, 7
      %v6290 = vsub.s32 %v6287, %v6289
      %v6291 = vrot.slane %v6284, %v6290
      %6292 = vrot.lane.b32.xlu0 %v5892, 8
      %v6293 = vpop.permute.xlu0 %6292
      %6294 = vrot.lane.b32.xlu0 %v5909, 8
      %v6295 = vpop.permute.xlu0 %6294
      %6296 = vrot.lane.b32.xlu0 %v5926, 8
      %v6297 = vpop.permute.xlu0 %6296
      %6298 = vrot.lane.b32.xlu0 %v5943, 8
      %v6299 = vpop.permute.xlu0 %6298
      %6300 = vrot.lane.b32.xlu0 %v5960, 8
      %v6301 = vpop.permute.xlu0 %6300
      %6302 = vrot.lane.b32.xlu0 %v5977, 8
      %v6303 = vpop.permute.xlu0 %6302
      %6304 = vrot.lane.b32.xlu0 %v5994, 8
      %v6305 = vpop.permute.xlu0 %6304
      %6306 = vrot.lane.b32.xlu0 %v6011, 8
      %v6307 = vpop.permute.xlu0 %6306
      %6308 = vrot.lane.b32.xlu0 %v6028, 8
      %v6309 = vpop.permute.xlu0 %6308
      %6310 = vrot.lane.b32.xlu0 %v6045, 8
      %v6311 = vpop.permute.xlu0 %6310
      %6312 = vrot.lane.b32.xlu0 %v6062, 8
      %v6313 = vpop.permute.xlu0 %6312
      %6314 = vrot.lane.b32.xlu0 %v6079, 8
      %v6315 = vpop.permute.xlu0 %6314
      %6316 = vrot.lane.b32.xlu0 %v6096, 8
      %v6317 = vpop.permute.xlu0 %6316
      %6318 = vrot.lane.b32.xlu0 %v6113, 8
      %v6319 = vpop.permute.xlu0 %6318
      %6320 = vrot.lane.b32.xlu0 %v6130, 8
      %v6321 = vpop.permute.xlu0 %6320
      %6322 = vrot.lane.b32.xlu0 %v6147, 8
      %v6323 = vpop.permute.xlu0 %6322
      %6324 = vrot.lane.b32.xlu0 %v6164, 8
      %v6325 = vpop.permute.xlu0 %6324
      %6326 = vrot.lane.b32.xlu0 %v6181, 8
      %v6327 = vpop.permute.xlu0 %6326
      %6328 = vrot.lane.b32.xlu0 %v6198, 8
      %v6329 = vpop.permute.xlu0 %6328
      %6330 = vrot.lane.b32.xlu0 %v6215, 8
      %v6331 = vpop.permute.xlu0 %6330
      %6332 = vrot.lane.b32.xlu0 %v6232, 8
      %v6333 = vpop.permute.xlu0 %6332
      %6334 = vrot.lane.b32.xlu0 %v6249, 8
      %v6335 = vpop.permute.xlu0 %6334
      %6336 = vrot.lane.b32.xlu0 %v6266, 8
      %v6337 = vpop.permute.xlu0 %6336
      %6338 = vrot.lane.b32.xlu0 %v6283, 8
      %v6339 = vpop.permute.xlu0 %6338
      %6340 = vrot.lane.b32.xlu0 %v6291, 8
      %v6341 = vpop.permute.xlu0 %6340
      %v6367 = vcombine.low %v1898, %v1906
      %v6368 = vcombine.low %v1905, %v1907
      %v6370 = vunpack.c.l.s4 1983009808
      %v6371 = vunpack.c.0.s8 %v6370
      %v6372 = vlaneseq
      %v6373 = vshrl.u32 %v6372, 7
      %v6374 = vsub.s32 %v6371, %v6373
      %v6375 = vrot.slane %v6367, %v6374
      %v6377 = vunpack.c.l.s4 1983009808
      %v6378 = vunpack.c.0.s8 %v6377
      %v6379 = vlaneseq
      %v6380 = vshrl.u32 %v6379, 7
      %v6381 = vsub.s32 %v6378, %v6380
      %v6382 = vrot.slane %v6368, %v6381
      %v6383 = vcombine.low %v6375, %v6382
      %v6384 = vcombine.low %v1915, %v1923
      %v6385 = vcombine.low %v1922, %v1931
      %v6387 = vunpack.c.l.s4 1983009808
      %v6388 = vunpack.c.0.s8 %v6387
      %v6389 = vlaneseq
      %v6390 = vshrl.u32 %v6389, 7
      %v6391 = vsub.s32 %v6388, %v6390
      %v6392 = vrot.slane %v6384, %v6391
      %v6394 = vunpack.c.l.s4 1983009808
      %v6395 = vunpack.c.0.s8 %v6394
      %v6396 = vlaneseq
      %v6397 = vshrl.u32 %v6396, 7
      %v6398 = vsub.s32 %v6395, %v6397
      %v6399 = vrot.slane %v6385, %v6398
      %v6400 = vcombine.low %v6392, %v6399
      %v6401 = vcombine.low %v1939, %v1938
      %v6402 = vcombine.low %v1940, %v1948
      %v6404 = vunpack.c.l.s4 1983009808
      %v6405 = vunpack.c.0.s8 %v6404
      %v6406 = vlaneseq
      %v6407 = vshrl.u32 %v6406, 7
      %v6408 = vsub.s32 %v6405, %v6407
      %v6409 = vrot.slane %v6401, %v6408
      %v6411 = vunpack.c.l.s4 1983009808
      %v6412 = vunpack.c.0.s8 %v6411
      %v6413 = vlaneseq
      %v6414 = vshrl.u32 %v6413, 7
      %v6415 = vsub.s32 %v6412, %v6414
      %v6416 = vrot.slane %v6402, %v6415
      %v6417 = vcombine.low %v6409, %v6416
      %v6418 = vcombine.low %v1956, %v1955
      %v6419 = vcombine.low %v1964, %v1972
      %v6421 = vunpack.c.l.s4 1983009808
      %v6422 = vunpack.c.0.s8 %v6421
      %v6423 = vlaneseq
      %v6424 = vshrl.u32 %v6423, 7
      %v6425 = vsub.s32 %v6422, %v6424
      %v6426 = vrot.slane %v6418, %v6425
      %v6428 = vunpack.c.l.s4 1983009808
      %v6429 = vunpack.c.0.s8 %v6428
      %v6430 = vlaneseq
      %v6431 = vshrl.u32 %v6430, 7
      %v6432 = vsub.s32 %v6429, %v6431
      %v6433 = vrot.slane %v6419, %v6432
      %v6434 = vcombine.low %v6426, %v6433
      %v6435 = vcombine.low %v1971, %v1973
      %v6436 = vcombine.low %v1981, %v1989
      %v6438 = vunpack.c.l.s4 1983009808
      %v6439 = vunpack.c.0.s8 %v6438
      %v6440 = vlaneseq
      %v6441 = vshrl.u32 %v6440, 7
      %v6442 = vsub.s32 %v6439, %v6441
      %v6443 = vrot.slane %v6435, %v6442
      %v6445 = vunpack.c.l.s4 1983009808
      %v6446 = vunpack.c.0.s8 %v6445
      %v6447 = vlaneseq
      %v6448 = vshrl.u32 %v6447, 7
      %v6449 = vsub.s32 %v6446, %v6448
      %v6450 = vrot.slane %v6436, %v6449
      %v6451 = vcombine.low %v6443, %v6450
      %v6452 = vcombine.low %v1988, %v1997
      %v6453 = vcombine.low %v2005, %v2004
      %v6455 = vunpack.c.l.s4 1983009808
      %v6456 = vunpack.c.0.s8 %v6455
      %v6457 = vlaneseq
      %v6458 = vshrl.u32 %v6457, 7
      %v6459 = vsub.s32 %v6456, %v6458
      %v6460 = vrot.slane %v6452, %v6459
      %v6462 = vunpack.c.l.s4 1983009808
      %v6463 = vunpack.c.0.s8 %v6462
      %v6464 = vlaneseq
      %v6465 = vshrl.u32 %v6464, 7
      %v6466 = vsub.s32 %v6463, %v6465
      %v6467 = vrot.slane %v6453, %v6466
      %v6468 = vcombine.low %v6460, %v6467
      %v6469 = vcombine.low %v2006, %v2014
      %v6470 = vcombine.low %v2022, %v2021
      %v6472 = vunpack.c.l.s4 1983009808
      %v6473 = vunpack.c.0.s8 %v6472
      %v6474 = vlaneseq
      %v6475 = vshrl.u32 %v6474, 7
      %v6476 = vsub.s32 %v6473, %v6475
      %v6477 = vrot.slane %v6469, %v6476
      %v6479 = vunpack.c.l.s4 1983009808
      %v6480 = vunpack.c.0.s8 %v6479
      %v6481 = vlaneseq
      %v6482 = vshrl.u32 %v6481, 7
      %v6483 = vsub.s32 %v6480, %v6482
      %v6484 = vrot.slane %v6470, %v6483
      %v6485 = vcombine.low %v6477, %v6484
      %v6486 = vcombine.low %v2030, %v2038
      %v6487 = vcombine.low %v2037, %v2039
      %v6489 = vunpack.c.l.s4 1983009808
      %v6490 = vunpack.c.0.s8 %v6489
      %v6491 = vlaneseq
      %v6492 = vshrl.u32 %v6491, 7
      %v6493 = vsub.s32 %v6490, %v6492
      %v6494 = vrot.slane %v6486, %v6493
      %v6496 = vunpack.c.l.s4 1983009808
      %v6497 = vunpack.c.0.s8 %v6496
      %v6498 = vlaneseq
      %v6499 = vshrl.u32 %v6498, 7
      %v6500 = vsub.s32 %v6497, %v6499
      %v6501 = vrot.slane %v6487, %v6500
      %v6502 = vcombine.low %v6494, %v6501
      %v6503 = vcombine.low %v2047, %v2055
      %v6504 = vcombine.low %v2054, %v2063
      %v6506 = vunpack.c.l.s4 1983009808
      %v6507 = vunpack.c.0.s8 %v6506
      %v6508 = vlaneseq
      %v6509 = vshrl.u32 %v6508, 7
      %v6510 = vsub.s32 %v6507, %v6509
      %v6511 = vrot.slane %v6503, %v6510
      %v6513 = vunpack.c.l.s4 1983009808
      %v6514 = vunpack.c.0.s8 %v6513
      %v6515 = vlaneseq
      %v6516 = vshrl.u32 %v6515, 7
      %v6517 = vsub.s32 %v6514, %v6516
      %v6518 = vrot.slane %v6504, %v6517
      %v6519 = vcombine.low %v6511, %v6518
      %v6520 = vcombine.low %v2071, %v2070
      %v6521 = vcombine.low %v2072, %v2080
      %v6523 = vunpack.c.l.s4 1983009808
      %v6524 = vunpack.c.0.s8 %v6523
      %v6525 = vlaneseq
      %v6526 = vshrl.u32 %v6525, 7
      %v6527 = vsub.s32 %v6524, %v6526
      %v6528 = vrot.slane %v6520, %v6527
      %v6530 = vunpack.c.l.s4 1983009808
      %v6531 = vunpack.c.0.s8 %v6530
      %v6532 = vlaneseq
      %v6533 = vshrl.u32 %v6532, 7
      %v6534 = vsub.s32 %v6531, %v6533
      %v6535 = vrot.slane %v6521, %v6534
      %v6536 = vcombine.low %v6528, %v6535
      %v6537 = vcombine.low %v2088, %v2087
      %v6538 = vcombine.low %v2096, %v2104
      %v6540 = vunpack.c.l.s4 1983009808
      %v6541 = vunpack.c.0.s8 %v6540
      %v6542 = vlaneseq
      %v6543 = vshrl.u32 %v6542, 7
      %v6544 = vsub.s32 %v6541, %v6543
      %v6545 = vrot.slane %v6537, %v6544
      %v6547 = vunpack.c.l.s4 1983009808
      %v6548 = vunpack.c.0.s8 %v6547
      %v6549 = vlaneseq
      %v6550 = vshrl.u32 %v6549, 7
      %v6551 = vsub.s32 %v6548, %v6550
      %v6552 = vrot.slane %v6538, %v6551
      %v6553 = vcombine.low %v6545, %v6552
      %v6554 = vcombine.low %v2103, %v2105
      %v6555 = vcombine.low %v2113, %v2121
      %v6557 = vunpack.c.l.s4 1983009808
      %v6558 = vunpack.c.0.s8 %v6557
      %v6559 = vlaneseq
      %v6560 = vshrl.u32 %v6559, 7
      %v6561 = vsub.s32 %v6558, %v6560
      %v6562 = vrot.slane %v6554, %v6561
      %v6564 = vunpack.c.l.s4 1983009808
      %v6565 = vunpack.c.0.s8 %v6564
      %v6566 = vlaneseq
      %v6567 = vshrl.u32 %v6566, 7
      %v6568 = vsub.s32 %v6565, %v6567
      %v6569 = vrot.slane %v6555, %v6568
      %v6570 = vcombine.low %v6562, %v6569
      %v6571 = vcombine.low %v2120, %v2129
      %v6572 = vcombine.low %v2137, %v2136
      %v6574 = vunpack.c.l.s4 1983009808
      %v6575 = vunpack.c.0.s8 %v6574
      %v6576 = vlaneseq
      %v6577 = vshrl.u32 %v6576, 7
      %v6578 = vsub.s32 %v6575, %v6577
      %v6579 = vrot.slane %v6571, %v6578
      %v6581 = vunpack.c.l.s4 1983009808
      %v6582 = vunpack.c.0.s8 %v6581
      %v6583 = vlaneseq
      %v6584 = vshrl.u32 %v6583, 7
      %v6585 = vsub.s32 %v6582, %v6584
      %v6586 = vrot.slane %v6572, %v6585
      %v6587 = vcombine.low %v6579, %v6586
      %v6588 = vcombine.low %v2138, %v2146
      %v6589 = vcombine.low %v2154, %v2153
      %v6591 = vunpack.c.l.s4 1983009808
      %v6592 = vunpack.c.0.s8 %v6591
      %v6593 = vlaneseq
      %v6594 = vshrl.u32 %v6593, 7
      %v6595 = vsub.s32 %v6592, %v6594
      %v6596 = vrot.slane %v6588, %v6595
      %v6598 = vunpack.c.l.s4 1983009808
      %v6599 = vunpack.c.0.s8 %v6598
      %v6600 = vlaneseq
      %v6601 = vshrl.u32 %v6600, 7
      %v6602 = vsub.s32 %v6599, %v6601
      %v6603 = vrot.slane %v6589, %v6602
      %v6604 = vcombine.low %v6596, %v6603
      %v6605 = vcombine.low %v2162, %v2170
      %v6606 = vcombine.low %v2169, %v2171
      %v6608 = vunpack.c.l.s4 1983009808
      %v6609 = vunpack.c.0.s8 %v6608
      %v6610 = vlaneseq
      %v6611 = vshrl.u32 %v6610, 7
      %v6612 = vsub.s32 %v6609, %v6611
      %v6613 = vrot.slane %v6605, %v6612
      %v6615 = vunpack.c.l.s4 1983009808
      %v6616 = vunpack.c.0.s8 %v6615
      %v6617 = vlaneseq
      %v6618 = vshrl.u32 %v6617, 7
      %v6619 = vsub.s32 %v6616, %v6618
      %v6620 = vrot.slane %v6606, %v6619
      %v6621 = vcombine.low %v6613, %v6620
      %v6622 = vcombine.low %v2179, %v2187
      %v6623 = vcombine.low %v2186, %v2195
      %v6625 = vunpack.c.l.s4 1983009808
      %v6626 = vunpack.c.0.s8 %v6625
      %v6627 = vlaneseq
      %v6628 = vshrl.u32 %v6627, 7
      %v6629 = vsub.s32 %v6626, %v6628
      %v6630 = vrot.slane %v6622, %v6629
      %v6632 = vunpack.c.l.s4 1983009808
      %v6633 = vunpack.c.0.s8 %v6632
      %v6634 = vlaneseq
      %v6635 = vshrl.u32 %v6634, 7
      %v6636 = vsub.s32 %v6633, %v6635
      %v6637 = vrot.slane %v6623, %v6636
      %v6638 = vcombine.low %v6630, %v6637
      %v6639 = vcombine.low %v2203, %v2202
      %v6640 = vcombine.low %v2204, %v2212
      %v6642 = vunpack.c.l.s4 1983009808
      %v6643 = vunpack.c.0.s8 %v6642
      %v6644 = vlaneseq
      %v6645 = vshrl.u32 %v6644, 7
      %v6646 = vsub.s32 %v6643, %v6645
      %v6647 = vrot.slane %v6639, %v6646
      %v6649 = vunpack.c.l.s4 1983009808
      %v6650 = vunpack.c.0.s8 %v6649
      %v6651 = vlaneseq
      %v6652 = vshrl.u32 %v6651, 7
      %v6653 = vsub.s32 %v6650, %v6652
      %v6654 = vrot.slane %v6640, %v6653
      %v6655 = vcombine.low %v6647, %v6654
      %v6656 = vcombine.low %v2220, %v2219
      %v6657 = vcombine.low %v2228, %v2236
      %v6659 = vunpack.c.l.s4 1983009808
      %v6660 = vunpack.c.0.s8 %v6659
      %v6661 = vlaneseq
      %v6662 = vshrl.u32 %v6661, 7
      %v6663 = vsub.s32 %v6660, %v6662
      %v6664 = vrot.slane %v6656, %v6663
      %v6666 = vunpack.c.l.s4 1983009808
      %v6667 = vunpack.c.0.s8 %v6666
      %v6668 = vlaneseq
      %v6669 = vshrl.u32 %v6668, 7
      %v6670 = vsub.s32 %v6667, %v6669
      %v6671 = vrot.slane %v6657, %v6670
      %v6672 = vcombine.low %v6664, %v6671
      %v6673 = vcombine.low %v2235, %v2237
      %v6674 = vcombine.low %v2245, %v2253
      %v6676 = vunpack.c.l.s4 1983009808
      %v6677 = vunpack.c.0.s8 %v6676
      %v6678 = vlaneseq
      %v6679 = vshrl.u32 %v6678, 7
      %v6680 = vsub.s32 %v6677, %v6679
      %v6681 = vrot.slane %v6673, %v6680
      %v6683 = vunpack.c.l.s4 1983009808
      %v6684 = vunpack.c.0.s8 %v6683
      %v6685 = vlaneseq
      %v6686 = vshrl.u32 %v6685, 7
      %v6687 = vsub.s32 %v6684, %v6686
      %v6688 = vrot.slane %v6674, %v6687
      %v6689 = vcombine.low %v6681, %v6688
      %v6690 = vcombine.low %v2252, %v2261
      %v6691 = vcombine.low %v2269, %v2268
      %v6693 = vunpack.c.l.s4 1983009808
      %v6694 = vunpack.c.0.s8 %v6693
      %v6695 = vlaneseq
      %v6696 = vshrl.u32 %v6695, 7
      %v6697 = vsub.s32 %v6694, %v6696
      %v6698 = vrot.slane %v6690, %v6697
      %v6700 = vunpack.c.l.s4 1983009808
      %v6701 = vunpack.c.0.s8 %v6700
      %v6702 = vlaneseq
      %v6703 = vshrl.u32 %v6702, 7
      %v6704 = vsub.s32 %v6701, %v6703
      %v6705 = vrot.slane %v6691, %v6704
      %v6706 = vcombine.low %v6698, %v6705
      %v6707 = vcombine.low %v2270, %v2278
      %v6708 = vcombine.low %v2286, %v2285
      %v6710 = vunpack.c.l.s4 1983009808
      %v6711 = vunpack.c.0.s8 %v6710
      %v6712 = vlaneseq
      %v6713 = vshrl.u32 %v6712, 7
      %v6714 = vsub.s32 %v6711, %v6713
      %v6715 = vrot.slane %v6707, %v6714
      %v6717 = vunpack.c.l.s4 1983009808
      %v6718 = vunpack.c.0.s8 %v6717
      %v6719 = vlaneseq
      %v6720 = vshrl.u32 %v6719, 7
      %v6721 = vsub.s32 %v6718, %v6720
      %v6722 = vrot.slane %v6708, %v6721
      %v6723 = vcombine.low %v6715, %v6722
      %v6724 = vcombine.low %v2294, %v2302
      %v6725 = vcombine.low %v2301, %v2303
      %v6727 = vunpack.c.l.s4 1983009808
      %v6728 = vunpack.c.0.s8 %v6727
      %v6729 = vlaneseq
      %v6730 = vshrl.u32 %v6729, 7
      %v6731 = vsub.s32 %v6728, %v6730
      %v6732 = vrot.slane %v6724, %v6731
      %v6734 = vunpack.c.l.s4 1983009808
      %v6735 = vunpack.c.0.s8 %v6734
      %v6736 = vlaneseq
      %v6737 = vshrl.u32 %v6736, 7
      %v6738 = vsub.s32 %v6735, %v6737
      %v6739 = vrot.slane %v6725, %v6738
      %v6740 = vcombine.low %v6732, %v6739
      %v6741 = vcombine.low %v2311, %v2319
      %v6742 = vcombine.low %v2318, %v2327
      %v6744 = vunpack.c.l.s4 1983009808
      %v6745 = vunpack.c.0.s8 %v6744
      %v6746 = vlaneseq
      %v6747 = vshrl.u32 %v6746, 7
      %v6748 = vsub.s32 %v6745, %v6747
      %v6749 = vrot.slane %v6741, %v6748
      %v6751 = vunpack.c.l.s4 1983009808
      %v6752 = vunpack.c.0.s8 %v6751
      %v6753 = vlaneseq
      %v6754 = vshrl.u32 %v6753, 7
      %v6755 = vsub.s32 %v6752, %v6754
      %v6756 = vrot.slane %v6742, %v6755
      %v6757 = vcombine.low %v6749, %v6756
      %v6758 = vcombine.low %v2335, %v2334
      %v6759 = vcombine.low %v2336, %v2344
      %v6761 = vunpack.c.l.s4 1983009808
      %v6762 = vunpack.c.0.s8 %v6761
      %v6763 = vlaneseq
      %v6764 = vshrl.u32 %v6763, 7
      %v6765 = vsub.s32 %v6762, %v6764
      %v6766 = vrot.slane %v6758, %v6765
      %v6768 = vunpack.c.l.s4 1983009808
      %v6769 = vunpack.c.0.s8 %v6768
      %v6770 = vlaneseq
      %v6771 = vshrl.u32 %v6770, 7
      %v6772 = vsub.s32 %v6769, %v6771
      %v6773 = vrot.slane %v6759, %v6772
      %v6774 = vcombine.low %v6766, %v6773
      %v6775 = vcombine.low %v2352, %v2351
      %v6777 = vunpack.c.l.s4 1983009808
      %v6778 = vunpack.c.0.s8 %v6777
      %v6779 = vlaneseq
      %v6780 = vshrl.u32 %v6779, 7
      %v6781 = vsub.s32 %v6778, %v6780
      %v6782 = vrot.slane %v6775, %v6781
      %6783 = vrot.lane.b32.xlu0 %v6383, 12
      %v6784 = vpop.permute.xlu0 %6783
      %6785 = vrot.lane.b32.xlu0 %v6400, 12
      %v6786 = vpop.permute.xlu0 %6785
      %6787 = vrot.lane.b32.xlu0 %v6417, 12
      %v6788 = vpop.permute.xlu0 %6787
      %6789 = vrot.lane.b32.xlu0 %v6434, 12
      %v6790 = vpop.permute.xlu0 %6789
      %6791 = vrot.lane.b32.xlu0 %v6451, 12
      %v6792 = vpop.permute.xlu0 %6791
      %6793 = vrot.lane.b32.xlu0 %v6468, 12
      %v6794 = vpop.permute.xlu0 %6793
      %6795 = vrot.lane.b32.xlu0 %v6485, 12
      %v6796 = vpop.permute.xlu0 %6795
      %6797 = vrot.lane.b32.xlu0 %v6502, 12
      %v6798 = vpop.permute.xlu0 %6797
      %6799 = vrot.lane.b32.xlu0 %v6519, 12
      %v6800 = vpop.permute.xlu0 %6799
      %6801 = vrot.lane.b32.xlu0 %v6536, 12
      %v6802 = vpop.permute.xlu0 %6801
      %6803 = vrot.lane.b32.xlu0 %v6553, 12
      %v6804 = vpop.permute.xlu0 %6803
      %6805 = vrot.lane.b32.xlu0 %v6570, 12
      %v6806 = vpop.permute.xlu0 %6805
      %6807 = vrot.lane.b32.xlu0 %v6587, 12
      %v6808 = vpop.permute.xlu0 %6807
      %6809 = vrot.lane.b32.xlu0 %v6604, 12
      %v6810 = vpop.permute.xlu0 %6809
      %6811 = vrot.lane.b32.xlu0 %v6621, 12
      %v6812 = vpop.permute.xlu0 %6811
      %6813 = vrot.lane.b32.xlu0 %v6638, 12
      %v6814 = vpop.permute.xlu0 %6813
      %6815 = vrot.lane.b32.xlu0 %v6655, 12
      %v6816 = vpop.permute.xlu0 %6815
      %6817 = vrot.lane.b32.xlu0 %v6672, 12
      %v6818 = vpop.permute.xlu0 %6817
      %6819 = vrot.lane.b32.xlu0 %v6689, 12
      %v6820 = vpop.permute.xlu0 %6819
      %6821 = vrot.lane.b32.xlu0 %v6706, 12
      %v6822 = vpop.permute.xlu0 %6821
      %6823 = vrot.lane.b32.xlu0 %v6723, 12
      %v6824 = vpop.permute.xlu0 %6823
      %6825 = vrot.lane.b32.xlu0 %v6740, 12
      %v6826 = vpop.permute.xlu0 %6825
      %6827 = vrot.lane.b32.xlu0 %v6757, 12
      %v6828 = vpop.permute.xlu0 %6827
      %6829 = vrot.lane.b32.xlu0 %v6774, 12
      %v6830 = vpop.permute.xlu0 %6829
      %6831 = vrot.lane.b32.xlu0 %v6782, 12
      %v6832 = vpop.permute.xlu0 %6831
      %v6858 = vcombine.low %v2416, %v2424
      %v6859 = vcombine.low %v2423, %v2425
      %v6861 = vunpack.c.l.s4 1983009808
      %v6862 = vunpack.c.0.s8 %v6861
      %v6863 = vlaneseq
      %v6864 = vshrl.u32 %v6863, 7
      %v6865 = vsub.s32 %v6862, %v6864
      %v6866 = vrot.slane %v6858, %v6865
      %v6868 = vunpack.c.l.s4 1983009808
      %v6869 = vunpack.c.0.s8 %v6868
      %v6870 = vlaneseq
      %v6871 = vshrl.u32 %v6870, 7
      %v6872 = vsub.s32 %v6869, %v6871
      %v6873 = vrot.slane %v6859, %v6872
      %v6874 = vcombine.low %v6866, %v6873
      %v6875 = vcombine.low %v2433, %v2441
      %v6876 = vcombine.low %v2440, %v2449
      %v6878 = vunpack.c.l.s4 1983009808
      %v6879 = vunpack.c.0.s8 %v6878
      %v6880 = vlaneseq
      %v6881 = vshrl.u32 %v6880, 7
      %v6882 = vsub.s32 %v6879, %v6881
      %v6883 = vrot.slane %v6875, %v6882
      %v6885 = vunpack.c.l.s4 1983009808
      %v6886 = vunpack.c.0.s8 %v6885
      %v6887 = vlaneseq
      %v6888 = vshrl.u32 %v6887, 7
      %v6889 = vsub.s32 %v6886, %v6888
      %v6890 = vrot.slane %v6876, %v6889
      %v6891 = vcombine.low %v6883, %v6890
      %v6892 = vcombine.low %v2457, %v2456
      %v6893 = vcombine.low %v2458, %v2466
      %v6895 = vunpack.c.l.s4 1983009808
      %v6896 = vunpack.c.0.s8 %v6895
      %v6897 = vlaneseq
      %v6898 = vshrl.u32 %v6897, 7
      %v6899 = vsub.s32 %v6896, %v6898
      %v6900 = vrot.slane %v6892, %v6899
      %v6902 = vunpack.c.l.s4 1983009808
      %v6903 = vunpack.c.0.s8 %v6902
      %v6904 = vlaneseq
      %v6905 = vshrl.u32 %v6904, 7
      %v6906 = vsub.s32 %v6903, %v6905
      %v6907 = vrot.slane %v6893, %v6906
      %v6908 = vcombine.low %v6900, %v6907
      %v6909 = vcombine.low %v2474, %v2473
      %v6910 = vcombine.low %v2482, %v2490
      %v6912 = vunpack.c.l.s4 1983009808
      %v6913 = vunpack.c.0.s8 %v6912
      %v6914 = vlaneseq
      %v6915 = vshrl.u32 %v6914, 7
      %v6916 = vsub.s32 %v6913, %v6915
      %v6917 = vrot.slane %v6909, %v6916
      %v6919 = vunpack.c.l.s4 1983009808
      %v6920 = vunpack.c.0.s8 %v6919
      %v6921 = vlaneseq
      %v6922 = vshrl.u32 %v6921, 7
      %v6923 = vsub.s32 %v6920, %v6922
      %v6924 = vrot.slane %v6910, %v6923
      %v6925 = vcombine.low %v6917, %v6924
      %v6926 = vcombine.low %v2489, %v2491
      %v6927 = vcombine.low %v2499, %v2507
      %v6929 = vunpack.c.l.s4 1983009808
      %v6930 = vunpack.c.0.s8 %v6929
      %v6931 = vlaneseq
      %v6932 = vshrl.u32 %v6931, 7
      %v6933 = vsub.s32 %v6930, %v6932
      %v6934 = vrot.slane %v6926, %v6933
      %v6936 = vunpack.c.l.s4 1983009808
      %v6937 = vunpack.c.0.s8 %v6936
      %v6938 = vlaneseq
      %v6939 = vshrl.u32 %v6938, 7
      %v6940 = vsub.s32 %v6937, %v6939
      %v6941 = vrot.slane %v6927, %v6940
      %v6942 = vcombine.low %v6934, %v6941
      %v6943 = vcombine.low %v2506, %v2515
      %v6944 = vcombine.low %v2523, %v2522
      %v6946 = vunpack.c.l.s4 1983009808
      %v6947 = vunpack.c.0.s8 %v6946
      %v6948 = vlaneseq
      %v6949 = vshrl.u32 %v6948, 7
      %v6950 = vsub.s32 %v6947, %v6949
      %v6951 = vrot.slane %v6943, %v6950
      %v6953 = vunpack.c.l.s4 1983009808
      %v6954 = vunpack.c.0.s8 %v6953
      %v6955 = vlaneseq
      %v6956 = vshrl.u32 %v6955, 7
      %v6957 = vsub.s32 %v6954, %v6956
      %v6958 = vrot.slane %v6944, %v6957
      %v6959 = vcombine.low %v6951, %v6958
      %v6960 = vcombine.low %v2524, %v2532
      %v6961 = vcombine.low %v2540, %v2539
      %v6963 = vunpack.c.l.s4 1983009808
      %v6964 = vunpack.c.0.s8 %v6963
      %v6965 = vlaneseq
      %v6966 = vshrl.u32 %v6965, 7
      %v6967 = vsub.s32 %v6964, %v6966
      %v6968 = vrot.slane %v6960, %v6967
      %v6970 = vunpack.c.l.s4 1983009808
      %v6971 = vunpack.c.0.s8 %v6970
      %v6972 = vlaneseq
      %v6973 = vshrl.u32 %v6972, 7
      %v6974 = vsub.s32 %v6971, %v6973
      %v6975 = vrot.slane %v6961, %v6974
      %v6976 = vcombine.low %v6968, %v6975
      %v6977 = vcombine.low %v2548, %v2556
      %v6978 = vcombine.low %v2555, %v2557
      %v6980 = vunpack.c.l.s4 1983009808
      %v6981 = vunpack.c.0.s8 %v6980
      %v6982 = vlaneseq
      %v6983 = vshrl.u32 %v6982, 7
      %v6984 = vsub.s32 %v6981, %v6983
      %v6985 = vrot.slane %v6977, %v6984
      %v6987 = vunpack.c.l.s4 1983009808
      %v6988 = vunpack.c.0.s8 %v6987
      %v6989 = vlaneseq
      %v6990 = vshrl.u32 %v6989, 7
      %v6991 = vsub.s32 %v6988, %v6990
      %v6992 = vrot.slane %v6978, %v6991
      %v6993 = vcombine.low %v6985, %v6992
      %v6994 = vcombine.low %v2565, %v2573
      %v6995 = vcombine.low %v2572, %v2581
      %v6997 = vunpack.c.l.s4 1983009808
      %v6998 = vunpack.c.0.s8 %v6997
      %v6999 = vlaneseq
      %v7000 = vshrl.u32 %v6999, 7
      %v7001 = vsub.s32 %v6998, %v7000
      %v7002 = vrot.slane %v6994, %v7001
      %v7004 = vunpack.c.l.s4 1983009808
      %v7005 = vunpack.c.0.s8 %v7004
      %v7006 = vlaneseq
      %v7007 = vshrl.u32 %v7006, 7
      %v7008 = vsub.s32 %v7005, %v7007
      %v7009 = vrot.slane %v6995, %v7008
      %v7010 = vcombine.low %v7002, %v7009
      %v7011 = vcombine.low %v2589, %v2588
      %v7012 = vcombine.low %v2590, %v2598
      %v7014 = vunpack.c.l.s4 1983009808
      %v7015 = vunpack.c.0.s8 %v7014
      %v7016 = vlaneseq
      %v7017 = vshrl.u32 %v7016, 7
      %v7018 = vsub.s32 %v7015, %v7017
      %v7019 = vrot.slane %v7011, %v7018
      %v7021 = vunpack.c.l.s4 1983009808
      %v7022 = vunpack.c.0.s8 %v7021
      %v7023 = vlaneseq
      %v7024 = vshrl.u32 %v7023, 7
      %v7025 = vsub.s32 %v7022, %v7024
      %v7026 = vrot.slane %v7012, %v7025
      %v7027 = vcombine.low %v7019, %v7026
      %v7028 = vcombine.low %v2606, %v2605
      %v7029 = vcombine.low %v2614, %v2622
      %v7031 = vunpack.c.l.s4 1983009808
      %v7032 = vunpack.c.0.s8 %v7031
      %v7033 = vlaneseq
      %v7034 = vshrl.u32 %v7033, 7
      %v7035 = vsub.s32 %v7032, %v7034
      %v7036 = vrot.slane %v7028, %v7035
      %v7038 = vunpack.c.l.s4 1983009808
      %v7039 = vunpack.c.0.s8 %v7038
      %v7040 = vlaneseq
      %v7041 = vshrl.u32 %v7040, 7
      %v7042 = vsub.s32 %v7039, %v7041
      %v7043 = vrot.slane %v7029, %v7042
      %v7044 = vcombine.low %v7036, %v7043
      %v7045 = vcombine.low %v2621, %v2623
      %v7046 = vcombine.low %v2631, %v2639
      %v7048 = vunpack.c.l.s4 1983009808
      %v7049 = vunpack.c.0.s8 %v7048
      %v7050 = vlaneseq
      %v7051 = vshrl.u32 %v7050, 7
      %v7052 = vsub.s32 %v7049, %v7051
      %v7053 = vrot.slane %v7045, %v7052
      %v7055 = vunpack.c.l.s4 1983009808
      %v7056 = vunpack.c.0.s8 %v7055
      %v7057 = vlaneseq
      %v7058 = vshrl.u32 %v7057, 7
      %v7059 = vsub.s32 %v7056, %v7058
      %v7060 = vrot.slane %v7046, %v7059
      %v7061 = vcombine.low %v7053, %v7060
      %v7062 = vcombine.low %v2638, %v2647
      %v7063 = vcombine.low %v2655, %v2654
      %v7065 = vunpack.c.l.s4 1983009808
      %v7066 = vunpack.c.0.s8 %v7065
      %v7067 = vlaneseq
      %v7068 = vshrl.u32 %v7067, 7
      %v7069 = vsub.s32 %v7066, %v7068
      %v7070 = vrot.slane %v7062, %v7069
      %v7072 = vunpack.c.l.s4 1983009808
      %v7073 = vunpack.c.0.s8 %v7072
      %v7074 = vlaneseq
      %v7075 = vshrl.u32 %v7074, 7
      %v7076 = vsub.s32 %v7073, %v7075
      %v7077 = vrot.slane %v7063, %v7076
      %v7078 = vcombine.low %v7070, %v7077
      %v7079 = vcombine.low %v2656, %v2664
      %v7080 = vcombine.low %v2672, %v2671
      %v7082 = vunpack.c.l.s4 1983009808
      %v7083 = vunpack.c.0.s8 %v7082
      %v7084 = vlaneseq
      %v7085 = vshrl.u32 %v7084, 7
      %v7086 = vsub.s32 %v7083, %v7085
      %v7087 = vrot.slane %v7079, %v7086
      %v7089 = vunpack.c.l.s4 1983009808
      %v7090 = vunpack.c.0.s8 %v7089
      %v7091 = vlaneseq
      %v7092 = vshrl.u32 %v7091, 7
      %v7093 = vsub.s32 %v7090, %v7092
      %v7094 = vrot.slane %v7080, %v7093
      %v7095 = vcombine.low %v7087, %v7094
      %v7096 = vcombine.low %v2680, %v2688
      %v7097 = vcombine.low %v2687, %v2689
      %v7099 = vunpack.c.l.s4 1983009808
      %v7100 = vunpack.c.0.s8 %v7099
      %v7101 = vlaneseq
      %v7102 = vshrl.u32 %v7101, 7
      %v7103 = vsub.s32 %v7100, %v7102
      %v7104 = vrot.slane %v7096, %v7103
      %v7106 = vunpack.c.l.s4 1983009808
      %v7107 = vunpack.c.0.s8 %v7106
      %v7108 = vlaneseq
      %v7109 = vshrl.u32 %v7108, 7
      %v7110 = vsub.s32 %v7107, %v7109
      %v7111 = vrot.slane %v7097, %v7110
      %v7112 = vcombine.low %v7104, %v7111
      %v7113 = vcombine.low %v2697, %v2705
      %v7114 = vcombine.low %v2704, %v2713
      %v7116 = vunpack.c.l.s4 1983009808
      %v7117 = vunpack.c.0.s8 %v7116
      %v7118 = vlaneseq
      %v7119 = vshrl.u32 %v7118, 7
      %v7120 = vsub.s32 %v7117, %v7119
      %v7121 = vrot.slane %v7113, %v7120
      %v7123 = vunpack.c.l.s4 1983009808
      %v7124 = vunpack.c.0.s8 %v7123
      %v7125 = vlaneseq
      %v7126 = vshrl.u32 %v7125, 7
      %v7127 = vsub.s32 %v7124, %v7126
      %v7128 = vrot.slane %v7114, %v7127
      %v7129 = vcombine.low %v7121, %v7128
      %v7130 = vcombine.low %v2721, %v2720
      %v7131 = vcombine.low %v2722, %v2730
      %v7133 = vunpack.c.l.s4 1983009808
      %v7134 = vunpack.c.0.s8 %v7133
      %v7135 = vlaneseq
      %v7136 = vshrl.u32 %v7135, 7
      %v7137 = vsub.s32 %v7134, %v7136
      %v7138 = vrot.slane %v7130, %v7137
      %v7140 = vunpack.c.l.s4 1983009808
      %v7141 = vunpack.c.0.s8 %v7140
      %v7142 = vlaneseq
      %v7143 = vshrl.u32 %v7142, 7
      %v7144 = vsub.s32 %v7141, %v7143
      %v7145 = vrot.slane %v7131, %v7144
      %v7146 = vcombine.low %v7138, %v7145
      %v7147 = vcombine.low %v2738, %v2737
      %v7148 = vcombine.low %v2746, %v2754
      %v7150 = vunpack.c.l.s4 1983009808
      %v7151 = vunpack.c.0.s8 %v7150
      %v7152 = vlaneseq
      %v7153 = vshrl.u32 %v7152, 7
      %v7154 = vsub.s32 %v7151, %v7153
      %v7155 = vrot.slane %v7147, %v7154
      %v7157 = vunpack.c.l.s4 1983009808
      %v7158 = vunpack.c.0.s8 %v7157
      %v7159 = vlaneseq
      %v7160 = vshrl.u32 %v7159, 7
      %v7161 = vsub.s32 %v7158, %v7160
      %v7162 = vrot.slane %v7148, %v7161
      %v7163 = vcombine.low %v7155, %v7162
      %v7164 = vcombine.low %v2753, %v2755
      %v7165 = vcombine.low %v2763, %v2771
      %v7167 = vunpack.c.l.s4 1983009808
      %v7168 = vunpack.c.0.s8 %v7167
      %v7169 = vlaneseq
      %v7170 = vshrl.u32 %v7169, 7
      %v7171 = vsub.s32 %v7168, %v7170
      %v7172 = vrot.slane %v7164, %v7171
      %v7174 = vunpack.c.l.s4 1983009808
      %v7175 = vunpack.c.0.s8 %v7174
      %v7176 = vlaneseq
      %v7177 = vshrl.u32 %v7176, 7
      %v7178 = vsub.s32 %v7175, %v7177
      %v7179 = vrot.slane %v7165, %v7178
      %v7180 = vcombine.low %v7172, %v7179
      %v7181 = vcombine.low %v2770, %v2779
      %v7182 = vcombine.low %v2787, %v2786
      %v7184 = vunpack.c.l.s4 1983009808
      %v7185 = vunpack.c.0.s8 %v7184
      %v7186 = vlaneseq
      %v7187 = vshrl.u32 %v7186, 7
      %v7188 = vsub.s32 %v7185, %v7187
      %v7189 = vrot.slane %v7181, %v7188
      %v7191 = vunpack.c.l.s4 1983009808
      %v7192 = vunpack.c.0.s8 %v7191
      %v7193 = vlaneseq
      %v7194 = vshrl.u32 %v7193, 7
      %v7195 = vsub.s32 %v7192, %v7194
      %v7196 = vrot.slane %v7182, %v7195
      %v7197 = vcombine.low %v7189, %v7196
      %v7198 = vcombine.low %v2788, %v2796
      %v7199 = vcombine.low %v2804, %v2803
      %v7201 = vunpack.c.l.s4 1983009808
      %v7202 = vunpack.c.0.s8 %v7201
      %v7203 = vlaneseq
      %v7204 = vshrl.u32 %v7203, 7
      %v7205 = vsub.s32 %v7202, %v7204
      %v7206 = vrot.slane %v7198, %v7205
      %v7208 = vunpack.c.l.s4 1983009808
      %v7209 = vunpack.c.0.s8 %v7208
      %v7210 = vlaneseq
      %v7211 = vshrl.u32 %v7210, 7
      %v7212 = vsub.s32 %v7209, %v7211
      %v7213 = vrot.slane %v7199, %v7212
      %v7214 = vcombine.low %v7206, %v7213
      %v7215 = vcombine.low %v2812, %v2820
      %v7216 = vcombine.low %v2819, %v2821
      %v7218 = vunpack.c.l.s4 1983009808
      %v7219 = vunpack.c.0.s8 %v7218
      %v7220 = vlaneseq
      %v7221 = vshrl.u32 %v7220, 7
      %v7222 = vsub.s32 %v7219, %v7221
      %v7223 = vrot.slane %v7215, %v7222
      %v7225 = vunpack.c.l.s4 1983009808
      %v7226 = vunpack.c.0.s8 %v7225
      %v7227 = vlaneseq
      %v7228 = vshrl.u32 %v7227, 7
      %v7229 = vsub.s32 %v7226, %v7228
      %v7230 = vrot.slane %v7216, %v7229
      %v7231 = vcombine.low %v7223, %v7230
      %v7232 = vcombine.low %v2829, %v2837
      %v7233 = vcombine.low %v2836, %v2845
      %v7235 = vunpack.c.l.s4 1983009808
      %v7236 = vunpack.c.0.s8 %v7235
      %v7237 = vlaneseq
      %v7238 = vshrl.u32 %v7237, 7
      %v7239 = vsub.s32 %v7236, %v7238
      %v7240 = vrot.slane %v7232, %v7239
      %v7242 = vunpack.c.l.s4 1983009808
      %v7243 = vunpack.c.0.s8 %v7242
      %v7244 = vlaneseq
      %v7245 = vshrl.u32 %v7244, 7
      %v7246 = vsub.s32 %v7243, %v7245
      %v7247 = vrot.slane %v7233, %v7246
      %v7248 = vcombine.low %v7240, %v7247
      %v7249 = vcombine.low %v2853, %v2852
      %v7250 = vcombine.low %v2854, %v2862
      %v7252 = vunpack.c.l.s4 1983009808
      %v7253 = vunpack.c.0.s8 %v7252
      %v7254 = vlaneseq
      %v7255 = vshrl.u32 %v7254, 7
      %v7256 = vsub.s32 %v7253, %v7255
      %v7257 = vrot.slane %v7249, %v7256
      %v7259 = vunpack.c.l.s4 1983009808
      %v7260 = vunpack.c.0.s8 %v7259
      %v7261 = vlaneseq
      %v7262 = vshrl.u32 %v7261, 7
      %v7263 = vsub.s32 %v7260, %v7262
      %v7264 = vrot.slane %v7250, %v7263
      %v7265 = vcombine.low %v7257, %v7264
      %v7266 = vcombine.low %v2870, %v2869
      %v7268 = vunpack.c.l.s4 1983009808
      %v7269 = vunpack.c.0.s8 %v7268
      %v7270 = vlaneseq
      %v7271 = vshrl.u32 %v7270, 7
      %v7272 = vsub.s32 %v7269, %v7271
      %v7273 = vrot.slane %v7266, %v7272
      %7274 = vrot.lane.b32.xlu0 %v6874, 16
      %v7275 = vpop.permute.xlu0 %7274
      %7276 = vrot.lane.b32.xlu0 %v6891, 16
      %v7277 = vpop.permute.xlu0 %7276
      %7278 = vrot.lane.b32.xlu0 %v6908, 16
      %v7279 = vpop.permute.xlu0 %7278
      %7280 = vrot.lane.b32.xlu0 %v6925, 16
      %v7281 = vpop.permute.xlu0 %7280
      %7282 = vrot.lane.b32.xlu0 %v6942, 16
      %v7283 = vpop.permute.xlu0 %7282
      %7284 = vrot.lane.b32.xlu0 %v6959, 16
      %v7285 = vpop.permute.xlu0 %7284
      %7286 = vrot.lane.b32.xlu0 %v6976, 16
      %v7287 = vpop.permute.xlu0 %7286
      %7288 = vrot.lane.b32.xlu0 %v6993, 16
      %v7289 = vpop.permute.xlu0 %7288
      %7290 = vrot.lane.b32.xlu0 %v7010, 16
      %v7291 = vpop.permute.xlu0 %7290
      %7292 = vrot.lane.b32.xlu0 %v7027, 16
      %v7293 = vpop.permute.xlu0 %7292
      %7294 = vrot.lane.b32.xlu0 %v7044, 16
      %v7295 = vpop.permute.xlu0 %7294
      %7296 = vrot.lane.b32.xlu0 %v7061, 16
      %v7297 = vpop.permute.xlu0 %7296
      %7298 = vrot.lane.b32.xlu0 %v7078, 16
      %v7299 = vpop.permute.xlu0 %7298
      %7300 = vrot.lane.b32.xlu0 %v7095, 16
      %v7301 = vpop.permute.xlu0 %7300
      %7302 = vrot.lane.b32.xlu0 %v7112, 16
      %v7303 = vpop.permute.xlu0 %7302
      %7304 = vrot.lane.b32.xlu0 %v7129, 16
      %v7305 = vpop.permute.xlu0 %7304
      %7306 = vrot.lane.b32.xlu0 %v7146, 16
      %v7307 = vpop.permute.xlu0 %7306
      %7308 = vrot.lane.b32.xlu0 %v7163, 16
      %v7309 = vpop.permute.xlu0 %7308
      %7310 = vrot.lane.b32.xlu0 %v7180, 16
      %v7311 = vpop.permute.xlu0 %7310
      %7312 = vrot.lane.b32.xlu0 %v7197, 16
      %v7313 = vpop.permute.xlu0 %7312
      %7314 = vrot.lane.b32.xlu0 %v7214, 16
      %v7315 = vpop.permute.xlu0 %7314
      %7316 = vrot.lane.b32.xlu0 %v7231, 16
      %v7317 = vpop.permute.xlu0 %7316
      %7318 = vrot.lane.b32.xlu0 %v7248, 16
      %v7319 = vpop.permute.xlu0 %7318
      %7320 = vrot.lane.b32.xlu0 %v7265, 16
      %v7321 = vpop.permute.xlu0 %7320
      %7322 = vrot.lane.b32.xlu0 %v7273, 16
      %v7323 = vpop.permute.xlu0 %7322
      %v7349 = vcombine.low %v2934, %v2942
      %v7350 = vcombine.low %v2941, %v2943
      %v7352 = vunpack.c.l.s4 1983009808
      %v7353 = vunpack.c.0.s8 %v7352
      %v7354 = vlaneseq
      %v7355 = vshrl.u32 %v7354, 7
      %v7356 = vsub.s32 %v7353, %v7355
      %v7357 = vrot.slane %v7349, %v7356
      %v7359 = vunpack.c.l.s4 1983009808
      %v7360 = vunpack.c.0.s8 %v7359
      %v7361 = vlaneseq
      %v7362 = vshrl.u32 %v7361, 7
      %v7363 = vsub.s32 %v7360, %v7362
      %v7364 = vrot.slane %v7350, %v7363
      %v7365 = vcombine.low %v7357, %v7364
      %v7366 = vcombine.low %v2951, %v2959
      %v7367 = vcombine.low %v2958, %v2967
      %v7369 = vunpack.c.l.s4 1983009808
      %v7370 = vunpack.c.0.s8 %v7369
      %v7371 = vlaneseq
      %v7372 = vshrl.u32 %v7371, 7
      %v7373 = vsub.s32 %v7370, %v7372
      %v7374 = vrot.slane %v7366, %v7373
      %v7376 = vunpack.c.l.s4 1983009808
      %v7377 = vunpack.c.0.s8 %v7376
      %v7378 = vlaneseq
      %v7379 = vshrl.u32 %v7378, 7
      %v7380 = vsub.s32 %v7377, %v7379
      %v7381 = vrot.slane %v7367, %v7380
      %v7382 = vcombine.low %v7374, %v7381
      %v7383 = vcombine.low %v2975, %v2974
      %v7384 = vcombine.low %v2976, %v2984
      %v7386 = vunpack.c.l.s4 1983009808
      %v7387 = vunpack.c.0.s8 %v7386
      %v7388 = vlaneseq
      %v7389 = vshrl.u32 %v7388, 7
      %v7390 = vsub.s32 %v7387, %v7389
      %v7391 = vrot.slane %v7383, %v7390
      %v7393 = vunpack.c.l.s4 1983009808
      %v7394 = vunpack.c.0.s8 %v7393
      %v7395 = vlaneseq
      %v7396 = vshrl.u32 %v7395, 7
      %v7397 = vsub.s32 %v7394, %v7396
      %v7398 = vrot.slane %v7384, %v7397
      %v7399 = vcombine.low %v7391, %v7398
      %v7400 = vcombine.low %v2992, %v2991
      %v7401 = vcombine.low %v3000, %v3008
      %v7403 = vunpack.c.l.s4 1983009808
      %v7404 = vunpack.c.0.s8 %v7403
      %v7405 = vlaneseq
      %v7406 = vshrl.u32 %v7405, 7
      %v7407 = vsub.s32 %v7404, %v7406
      %v7408 = vrot.slane %v7400, %v7407
      %v7410 = vunpack.c.l.s4 1983009808
      %v7411 = vunpack.c.0.s8 %v7410
      %v7412 = vlaneseq
      %v7413 = vshrl.u32 %v7412, 7
      %v7414 = vsub.s32 %v7411, %v7413
      %v7415 = vrot.slane %v7401, %v7414
      %v7416 = vcombine.low %v7408, %v7415
      %v7417 = vcombine.low %v3007, %v3009
      %v7418 = vcombine.low %v3017, %v3025
      %v7420 = vunpack.c.l.s4 1983009808
      %v7421 = vunpack.c.0.s8 %v7420
      %v7422 = vlaneseq
      %v7423 = vshrl.u32 %v7422, 7
      %v7424 = vsub.s32 %v7421, %v7423
      %v7425 = vrot.slane %v7417, %v7424
      %v7427 = vunpack.c.l.s4 1983009808
      %v7428 = vunpack.c.0.s8 %v7427
      %v7429 = vlaneseq
      %v7430 = vshrl.u32 %v7429, 7
      %v7431 = vsub.s32 %v7428, %v7430
      %v7432 = vrot.slane %v7418, %v7431
      %v7433 = vcombine.low %v7425, %v7432
      %v7434 = vcombine.low %v3024, %v3033
      %v7435 = vcombine.low %v3041, %v3040
      %v7437 = vunpack.c.l.s4 1983009808
      %v7438 = vunpack.c.0.s8 %v7437
      %v7439 = vlaneseq
      %v7440 = vshrl.u32 %v7439, 7
      %v7441 = vsub.s32 %v7438, %v7440
      %v7442 = vrot.slane %v7434, %v7441
      %v7444 = vunpack.c.l.s4 1983009808
      %v7445 = vunpack.c.0.s8 %v7444
      %v7446 = vlaneseq
      %v7447 = vshrl.u32 %v7446, 7
      %v7448 = vsub.s32 %v7445, %v7447
      %v7449 = vrot.slane %v7435, %v7448
      %v7450 = vcombine.low %v7442, %v7449
      %v7451 = vcombine.low %v3042, %v3050
      %v7452 = vcombine.low %v3058, %v3057
      %v7454 = vunpack.c.l.s4 1983009808
      %v7455 = vunpack.c.0.s8 %v7454
      %v7456 = vlaneseq
      %v7457 = vshrl.u32 %v7456, 7
      %v7458 = vsub.s32 %v7455, %v7457
      %v7459 = vrot.slane %v7451, %v7458
      %v7461 = vunpack.c.l.s4 1983009808
      %v7462 = vunpack.c.0.s8 %v7461
      %v7463 = vlaneseq
      %v7464 = vshrl.u32 %v7463, 7
      %v7465 = vsub.s32 %v7462, %v7464
      %v7466 = vrot.slane %v7452, %v7465
      %v7467 = vcombine.low %v7459, %v7466
      %v7468 = vcombine.low %v3066, %v3074
      %v7469 = vcombine.low %v3073, %v3075
      %v7471 = vunpack.c.l.s4 1983009808
      %v7472 = vunpack.c.0.s8 %v7471
      %v7473 = vlaneseq
      %v7474 = vshrl.u32 %v7473, 7
      %v7475 = vsub.s32 %v7472, %v7474
      %v7476 = vrot.slane %v7468, %v7475
      %v7478 = vunpack.c.l.s4 1983009808
      %v7479 = vunpack.c.0.s8 %v7478
      %v7480 = vlaneseq
      %v7481 = vshrl.u32 %v7480, 7
      %v7482 = vsub.s32 %v7479, %v7481
      %v7483 = vrot.slane %v7469, %v7482
      %v7484 = vcombine.low %v7476, %v7483
      %v7485 = vcombine.low %v3083, %v3091
      %v7486 = vcombine.low %v3090, %v3099
      %v7488 = vunpack.c.l.s4 1983009808
      %v7489 = vunpack.c.0.s8 %v7488
      %v7490 = vlaneseq
      %v7491 = vshrl.u32 %v7490, 7
      %v7492 = vsub.s32 %v7489, %v7491
      %v7493 = vrot.slane %v7485, %v7492
      %v7495 = vunpack.c.l.s4 1983009808
      %v7496 = vunpack.c.0.s8 %v7495
      %v7497 = vlaneseq
      %v7498 = vshrl.u32 %v7497, 7
      %v7499 = vsub.s32 %v7496, %v7498
      %v7500 = vrot.slane %v7486, %v7499
      %v7501 = vcombine.low %v7493, %v7500
      %v7502 = vcombine.low %v3107, %v3106
      %v7503 = vcombine.low %v3108, %v3116
      %v7505 = vunpack.c.l.s4 1983009808
      %v7506 = vunpack.c.0.s8 %v7505
      %v7507 = vlaneseq
      %v7508 = vshrl.u32 %v7507, 7
      %v7509 = vsub.s32 %v7506, %v7508
      %v7510 = vrot.slane %v7502, %v7509
      %v7512 = vunpack.c.l.s4 1983009808
      %v7513 = vunpack.c.0.s8 %v7512
      %v7514 = vlaneseq
      %v7515 = vshrl.u32 %v7514, 7
      %v7516 = vsub.s32 %v7513, %v7515
      %v7517 = vrot.slane %v7503, %v7516
      %v7518 = vcombine.low %v7510, %v7517
      %v7519 = vcombine.low %v3124, %v3123
      %v7520 = vcombine.low %v3132, %v3140
      %v7522 = vunpack.c.l.s4 1983009808
      %v7523 = vunpack.c.0.s8 %v7522
      %v7524 = vlaneseq
      %v7525 = vshrl.u32 %v7524, 7
      %v7526 = vsub.s32 %v7523, %v7525
      %v7527 = vrot.slane %v7519, %v7526
      %v7529 = vunpack.c.l.s4 1983009808
      %v7530 = vunpack.c.0.s8 %v7529
      %v7531 = vlaneseq
      %v7532 = vshrl.u32 %v7531, 7
      %v7533 = vsub.s32 %v7530, %v7532
      %v7534 = vrot.slane %v7520, %v7533
      %v7535 = vcombine.low %v7527, %v7534
      %v7536 = vcombine.low %v3139, %v3141
      %v7537 = vcombine.low %v3149, %v3157
      %v7539 = vunpack.c.l.s4 1983009808
      %v7540 = vunpack.c.0.s8 %v7539
      %v7541 = vlaneseq
      %v7542 = vshrl.u32 %v7541, 7
      %v7543 = vsub.s32 %v7540, %v7542
      %v7544 = vrot.slane %v7536, %v7543
      %v7546 = vunpack.c.l.s4 1983009808
      %v7547 = vunpack.c.0.s8 %v7546
      %v7548 = vlaneseq
      %v7549 = vshrl.u32 %v7548, 7
      %v7550 = vsub.s32 %v7547, %v7549
      %v7551 = vrot.slane %v7537, %v7550
      %v7552 = vcombine.low %v7544, %v7551
      %v7553 = vcombine.low %v3156, %v3165
      %v7554 = vcombine.low %v3173, %v3172
      %v7556 = vunpack.c.l.s4 1983009808
      %v7557 = vunpack.c.0.s8 %v7556
      %v7558 = vlaneseq
      %v7559 = vshrl.u32 %v7558, 7
      %v7560 = vsub.s32 %v7557, %v7559
      %v7561 = vrot.slane %v7553, %v7560
      %v7563 = vunpack.c.l.s4 1983009808
      %v7564 = vunpack.c.0.s8 %v7563
      %v7565 = vlaneseq
      %v7566 = vshrl.u32 %v7565, 7
      %v7567 = vsub.s32 %v7564, %v7566
      %v7568 = vrot.slane %v7554, %v7567
      %v7569 = vcombine.low %v7561, %v7568
      %v7570 = vcombine.low %v3174, %v3182
      %v7571 = vcombine.low %v3190, %v3189
      %v7573 = vunpack.c.l.s4 1983009808
      %v7574 = vunpack.c.0.s8 %v7573
      %v7575 = vlaneseq
      %v7576 = vshrl.u32 %v7575, 7
      %v7577 = vsub.s32 %v7574, %v7576
      %v7578 = vrot.slane %v7570, %v7577
      %v7580 = vunpack.c.l.s4 1983009808
      %v7581 = vunpack.c.0.s8 %v7580
      %v7582 = vlaneseq
      %v7583 = vshrl.u32 %v7582, 7
      %v7584 = vsub.s32 %v7581, %v7583
      %v7585 = vrot.slane %v7571, %v7584
      %v7586 = vcombine.low %v7578, %v7585
      %v7587 = vcombine.low %v3198, %v3206
      %v7588 = vcombine.low %v3205, %v3207
      %v7590 = vunpack.c.l.s4 1983009808
      %v7591 = vunpack.c.0.s8 %v7590
      %v7592 = vlaneseq
      %v7593 = vshrl.u32 %v7592, 7
      %v7594 = vsub.s32 %v7591, %v7593
      %v7595 = vrot.slane %v7587, %v7594
      %v7597 = vunpack.c.l.s4 1983009808
      %v7598 = vunpack.c.0.s8 %v7597
      %v7599 = vlaneseq
      %v7600 = vshrl.u32 %v7599, 7
      %v7601 = vsub.s32 %v7598, %v7600
      %v7602 = vrot.slane %v7588, %v7601
      %v7603 = vcombine.low %v7595, %v7602
      %v7604 = vcombine.low %v3215, %v3223
      %v7605 = vcombine.low %v3222, %v3231
      %v7607 = vunpack.c.l.s4 1983009808
      %v7608 = vunpack.c.0.s8 %v7607
      %v7609 = vlaneseq
      %v7610 = vshrl.u32 %v7609, 7
      %v7611 = vsub.s32 %v7608, %v7610
      %v7612 = vrot.slane %v7604, %v7611
      %v7614 = vunpack.c.l.s4 1983009808
      %v7615 = vunpack.c.0.s8 %v7614
      %v7616 = vlaneseq
      %v7617 = vshrl.u32 %v7616, 7
      %v7618 = vsub.s32 %v7615, %v7617
      %v7619 = vrot.slane %v7605, %v7618
      %v7620 = vcombine.low %v7612, %v7619
      %v7621 = vcombine.low %v3239, %v3238
      %v7622 = vcombine.low %v3240, %v3248
      %v7624 = vunpack.c.l.s4 1983009808
      %v7625 = vunpack.c.0.s8 %v7624
      %v7626 = vlaneseq
      %v7627 = vshrl.u32 %v7626, 7
      %v7628 = vsub.s32 %v7625, %v7627
      %v7629 = vrot.slane %v7621, %v7628
      %v7631 = vunpack.c.l.s4 1983009808
      %v7632 = vunpack.c.0.s8 %v7631
      %v7633 = vlaneseq
      %v7634 = vshrl.u32 %v7633, 7
      %v7635 = vsub.s32 %v7632, %v7634
      %v7636 = vrot.slane %v7622, %v7635
      %v7637 = vcombine.low %v7629, %v7636
      %v7638 = vcombine.low %v3256, %v3255
      %v7639 = vcombine.low %v3264, %v3272
      %v7641 = vunpack.c.l.s4 1983009808
      %v7642 = vunpack.c.0.s8 %v7641
      %v7643 = vlaneseq
      %v7644 = vshrl.u32 %v7643, 7
      %v7645 = vsub.s32 %v7642, %v7644
      %v7646 = vrot.slane %v7638, %v7645
      %v7648 = vunpack.c.l.s4 1983009808
      %v7649 = vunpack.c.0.s8 %v7648
      %v7650 = vlaneseq
      %v7651 = vshrl.u32 %v7650, 7
      %v7652 = vsub.s32 %v7649, %v7651
      %v7653 = vrot.slane %v7639, %v7652
      %v7654 = vcombine.low %v7646, %v7653
      %v7655 = vcombine.low %v3271, %v3273
      %v7656 = vcombine.low %v3281, %v3289
      %v7658 = vunpack.c.l.s4 1983009808
      %v7659 = vunpack.c.0.s8 %v7658
      %v7660 = vlaneseq
      %v7661 = vshrl.u32 %v7660, 7
      %v7662 = vsub.s32 %v7659, %v7661
      %v7663 = vrot.slane %v7655, %v7662
      %v7665 = vunpack.c.l.s4 1983009808
      %v7666 = vunpack.c.0.s8 %v7665
      %v7667 = vlaneseq
      %v7668 = vshrl.u32 %v7667, 7
      %v7669 = vsub.s32 %v7666, %v7668
      %v7670 = vrot.slane %v7656, %v7669
      %v7671 = vcombine.low %v7663, %v7670
      %v7672 = vcombine.low %v3288, %v3297
      %v7673 = vcombine.low %v3305, %v3304
      %v7675 = vunpack.c.l.s4 1983009808
      %v7676 = vunpack.c.0.s8 %v7675
      %v7677 = vlaneseq
      %v7678 = vshrl.u32 %v7677, 7
      %v7679 = vsub.s32 %v7676, %v7678
      %v7680 = vrot.slane %v7672, %v7679
      %v7682 = vunpack.c.l.s4 1983009808
      %v7683 = vunpack.c.0.s8 %v7682
      %v7684 = vlaneseq
      %v7685 = vshrl.u32 %v7684, 7
      %v7686 = vsub.s32 %v7683, %v7685
      %v7687 = vrot.slane %v7673, %v7686
      %v7688 = vcombine.low %v7680, %v7687
      %v7689 = vcombine.low %v3306, %v3314
      %v7690 = vcombine.low %v3322, %v3321
      %v7692 = vunpack.c.l.s4 1983009808
      %v7693 = vunpack.c.0.s8 %v7692
      %v7694 = vlaneseq
      %v7695 = vshrl.u32 %v7694, 7
      %v7696 = vsub.s32 %v7693, %v7695
      %v7697 = vrot.slane %v7689, %v7696
      %v7699 = vunpack.c.l.s4 1983009808
      %v7700 = vunpack.c.0.s8 %v7699
      %v7701 = vlaneseq
      %v7702 = vshrl.u32 %v7701, 7
      %v7703 = vsub.s32 %v7700, %v7702
      %v7704 = vrot.slane %v7690, %v7703
      %v7705 = vcombine.low %v7697, %v7704
      %v7706 = vcombine.low %v3330, %v3338
      %v7707 = vcombine.low %v3337, %v3339
      %v7709 = vunpack.c.l.s4 1983009808
      %v7710 = vunpack.c.0.s8 %v7709
      %v7711 = vlaneseq
      %v7712 = vshrl.u32 %v7711, 7
      %v7713 = vsub.s32 %v7710, %v7712
      %v7714 = vrot.slane %v7706, %v7713
      %v7716 = vunpack.c.l.s4 1983009808
      %v7717 = vunpack.c.0.s8 %v7716
      %v7718 = vlaneseq
      %v7719 = vshrl.u32 %v7718, 7
      %v7720 = vsub.s32 %v7717, %v7719
      %v7721 = vrot.slane %v7707, %v7720
      %v7722 = vcombine.low %v7714, %v7721
      %v7723 = vcombine.low %v3347, %v3355
      %v7724 = vcombine.low %v3354, %v3363
      %v7726 = vunpack.c.l.s4 1983009808
      %v7727 = vunpack.c.0.s8 %v7726
      %v7728 = vlaneseq
      %v7729 = vshrl.u32 %v7728, 7
      %v7730 = vsub.s32 %v7727, %v7729
      %v7731 = vrot.slane %v7723, %v7730
      %v7733 = vunpack.c.l.s4 1983009808
      %v7734 = vunpack.c.0.s8 %v7733
      %v7735 = vlaneseq
      %v7736 = vshrl.u32 %v7735, 7
      %v7737 = vsub.s32 %v7734, %v7736
      %v7738 = vrot.slane %v7724, %v7737
      %v7739 = vcombine.low %v7731, %v7738
      %v7740 = vcombine.low %v3371, %v3370
      %v7741 = vcombine.low %v3372, %v3380
      %v7743 = vunpack.c.l.s4 1983009808
      %v7744 = vunpack.c.0.s8 %v7743
      %v7745 = vlaneseq
      %v7746 = vshrl.u32 %v7745, 7
      %v7747 = vsub.s32 %v7744, %v7746
      %v7748 = vrot.slane %v7740, %v7747
      %v7750 = vunpack.c.l.s4 1983009808
      %v7751 = vunpack.c.0.s8 %v7750
      %v7752 = vlaneseq
      %v7753 = vshrl.u32 %v7752, 7
      %v7754 = vsub.s32 %v7751, %v7753
      %v7755 = vrot.slane %v7741, %v7754
      %v7756 = vcombine.low %v7748, %v7755
      %v7757 = vcombine.low %v3388, %v3387
      %v7759 = vunpack.c.l.s4 1983009808
      %v7760 = vunpack.c.0.s8 %v7759
      %v7761 = vlaneseq
      %v7762 = vshrl.u32 %v7761, 7
      %v7763 = vsub.s32 %v7760, %v7762
      %v7764 = vrot.slane %v7757, %v7763
      %7765 = vrot.lane.b32.xlu0 %v7365, 20
      %v7766 = vpop.permute.xlu0 %7765
      %7767 = vrot.lane.b32.xlu0 %v7382, 20
      %v7768 = vpop.permute.xlu0 %7767
      %7769 = vrot.lane.b32.xlu0 %v7399, 20
      %v7770 = vpop.permute.xlu0 %7769
      %7771 = vrot.lane.b32.xlu0 %v7416, 20
      %v7772 = vpop.permute.xlu0 %7771
      %7773 = vrot.lane.b32.xlu0 %v7433, 20
      %v7774 = vpop.permute.xlu0 %7773
      %7775 = vrot.lane.b32.xlu0 %v7450, 20
      %v7776 = vpop.permute.xlu0 %7775
      %7777 = vrot.lane.b32.xlu0 %v7467, 20
      %v7778 = vpop.permute.xlu0 %7777
      %7779 = vrot.lane.b32.xlu0 %v7484, 20
      %v7780 = vpop.permute.xlu0 %7779
      %7781 = vrot.lane.b32.xlu0 %v7501, 20
      %v7782 = vpop.permute.xlu0 %7781
      %7783 = vrot.lane.b32.xlu0 %v7518, 20
      %v7784 = vpop.permute.xlu0 %7783
      %7785 = vrot.lane.b32.xlu0 %v7535, 20
      %v7786 = vpop.permute.xlu0 %7785
      %7787 = vrot.lane.b32.xlu0 %v7552, 20
      %v7788 = vpop.permute.xlu0 %7787
      %7789 = vrot.lane.b32.xlu0 %v7569, 20
      %v7790 = vpop.permute.xlu0 %7789
      %7791 = vrot.lane.b32.xlu0 %v7586, 20
      %v7792 = vpop.permute.xlu0 %7791
      %7793 = vrot.lane.b32.xlu0 %v7603, 20
      %v7794 = vpop.permute.xlu0 %7793
      %7795 = vrot.lane.b32.xlu0 %v7620, 20
      %v7796 = vpop.permute.xlu0 %7795
      %7797 = vrot.lane.b32.xlu0 %v7637, 20
      %v7798 = vpop.permute.xlu0 %7797
      %7799 = vrot.lane.b32.xlu0 %v7654, 20
      %v7800 = vpop.permute.xlu0 %7799
      %7801 = vrot.lane.b32.xlu0 %v7671, 20
      %v7802 = vpop.permute.xlu0 %7801
      %7803 = vrot.lane.b32.xlu0 %v7688, 20
      %v7804 = vpop.permute.xlu0 %7803
      %7805 = vrot.lane.b32.xlu0 %v7705, 20
      %v7806 = vpop.permute.xlu0 %7805
      %7807 = vrot.lane.b32.xlu0 %v7722, 20
      %v7808 = vpop.permute.xlu0 %7807
      %7809 = vrot.lane.b32.xlu0 %v7739, 20
      %v7810 = vpop.permute.xlu0 %7809
      %7811 = vrot.lane.b32.xlu0 %v7756, 20
      %v7812 = vpop.permute.xlu0 %7811
      %7813 = vrot.lane.b32.xlu0 %v7764, 20
      %v7814 = vpop.permute.xlu0 %7813
      %v7840 = vcombine.low %v3453, %v3461
      %v7841 = vcombine.low %v3460, %v3462
      %v7843 = vunpack.c.l.s4 1983009808
      %v7844 = vunpack.c.0.s8 %v7843
      %v7845 = vlaneseq
      %v7846 = vshrl.u32 %v7845, 7
      %v7847 = vsub.s32 %v7844, %v7846
      %v7848 = vrot.slane %v7840, %v7847
      %v7850 = vunpack.c.l.s4 1983009808
      %v7851 = vunpack.c.0.s8 %v7850
      %v7852 = vlaneseq
      %v7853 = vshrl.u32 %v7852, 7
      %v7854 = vsub.s32 %v7851, %v7853
      %v7855 = vrot.slane %v7841, %v7854
      %v7856 = vcombine.low %v7848, %v7855
      %v7857 = vcombine.low %v3470, %v3478
      %v7858 = vcombine.low %v3477, %v3486
      %v7860 = vunpack.c.l.s4 1983009808
      %v7861 = vunpack.c.0.s8 %v7860
      %v7862 = vlaneseq
      %v7863 = vshrl.u32 %v7862, 7
      %v7864 = vsub.s32 %v7861, %v7863
      %v7865 = vrot.slane %v7857, %v7864
      %v7867 = vunpack.c.l.s4 1983009808
      %v7868 = vunpack.c.0.s8 %v7867
      %v7869 = vlaneseq
      %v7870 = vshrl.u32 %v7869, 7
      %v7871 = vsub.s32 %v7868, %v7870
      %v7872 = vrot.slane %v7858, %v7871
      %v7873 = vcombine.low %v7865, %v7872
      %v7874 = vcombine.low %v3494, %v3493
      %v7875 = vcombine.low %v3495, %v3503
      %v7877 = vunpack.c.l.s4 1983009808
      %v7878 = vunpack.c.0.s8 %v7877
      %v7879 = vlaneseq
      %v7880 = vshrl.u32 %v7879, 7
      %v7881 = vsub.s32 %v7878, %v7880
      %v7882 = vrot.slane %v7874, %v7881
      %v7884 = vunpack.c.l.s4 1983009808
      %v7885 = vunpack.c.0.s8 %v7884
      %v7886 = vlaneseq
      %v7887 = vshrl.u32 %v7886, 7
      %v7888 = vsub.s32 %v7885, %v7887
      %v7889 = vrot.slane %v7875, %v7888
      %v7890 = vcombine.low %v7882, %v7889
      %v7891 = vcombine.low %v3511, %v3510
      %v7892 = vcombine.low %v3519, %v3527
      %v7894 = vunpack.c.l.s4 1983009808
      %v7895 = vunpack.c.0.s8 %v7894
      %v7896 = vlaneseq
      %v7897 = vshrl.u32 %v7896, 7
      %v7898 = vsub.s32 %v7895, %v7897
      %v7899 = vrot.slane %v7891, %v7898
      %v7901 = vunpack.c.l.s4 1983009808
      %v7902 = vunpack.c.0.s8 %v7901
      %v7903 = vlaneseq
      %v7904 = vshrl.u32 %v7903, 7
      %v7905 = vsub.s32 %v7902, %v7904
      %v7906 = vrot.slane %v7892, %v7905
      %v7907 = vcombine.low %v7899, %v7906
      %v7908 = vcombine.low %v3526, %v3528
      %v7909 = vcombine.low %v3536, %v3544
      %v7911 = vunpack.c.l.s4 1983009808
      %v7912 = vunpack.c.0.s8 %v7911
      %v7913 = vlaneseq
      %v7914 = vshrl.u32 %v7913, 7
      %v7915 = vsub.s32 %v7912, %v7914
      %v7916 = vrot.slane %v7908, %v7915
      %v7918 = vunpack.c.l.s4 1983009808
      %v7919 = vunpack.c.0.s8 %v7918
      %v7920 = vlaneseq
      %v7921 = vshrl.u32 %v7920, 7
      %v7922 = vsub.s32 %v7919, %v7921
      %v7923 = vrot.slane %v7909, %v7922
      %v7924 = vcombine.low %v7916, %v7923
      %v7925 = vcombine.low %v3543, %v3552
      %v7926 = vcombine.low %v3560, %v3559
      %v7928 = vunpack.c.l.s4 1983009808
      %v7929 = vunpack.c.0.s8 %v7928
      %v7930 = vlaneseq
      %v7931 = vshrl.u32 %v7930, 7
      %v7932 = vsub.s32 %v7929, %v7931
      %v7933 = vrot.slane %v7925, %v7932
      %v7935 = vunpack.c.l.s4 1983009808
      %v7936 = vunpack.c.0.s8 %v7935
      %v7937 = vlaneseq
      %v7938 = vshrl.u32 %v7937, 7
      %v7939 = vsub.s32 %v7936, %v7938
      %v7940 = vrot.slane %v7926, %v7939
      %v7941 = vcombine.low %v7933, %v7940
      %v7942 = vcombine.low %v3561, %v3569
      %v7943 = vcombine.low %v3577, %v3576
      %v7945 = vunpack.c.l.s4 1983009808
      %v7946 = vunpack.c.0.s8 %v7945
      %v7947 = vlaneseq
      %v7948 = vshrl.u32 %v7947, 7
      %v7949 = vsub.s32 %v7946, %v7948
      %v7950 = vrot.slane %v7942, %v7949
      %v7952 = vunpack.c.l.s4 1983009808
      %v7953 = vunpack.c.0.s8 %v7952
      %v7954 = vlaneseq
      %v7955 = vshrl.u32 %v7954, 7
      %v7956 = vsub.s32 %v7953, %v7955
      %v7957 = vrot.slane %v7943, %v7956
      %v7958 = vcombine.low %v7950, %v7957
      %v7959 = vcombine.low %v3585, %v3593
      %v7960 = vcombine.low %v3592, %v3594
      %v7962 = vunpack.c.l.s4 1983009808
      %v7963 = vunpack.c.0.s8 %v7962
      %v7964 = vlaneseq
      %v7965 = vshrl.u32 %v7964, 7
      %v7966 = vsub.s32 %v7963, %v7965
      %v7967 = vrot.slane %v7959, %v7966
      %v7969 = vunpack.c.l.s4 1983009808
      %v7970 = vunpack.c.0.s8 %v7969
      %v7971 = vlaneseq
      %v7972 = vshrl.u32 %v7971, 7
      %v7973 = vsub.s32 %v7970, %v7972
      %v7974 = vrot.slane %v7960, %v7973
      %v7975 = vcombine.low %v7967, %v7974
      %v7976 = vcombine.low %v3602, %v3610
      %v7977 = vcombine.low %v3609, %v3618
      %v7979 = vunpack.c.l.s4 1983009808
      %v7980 = vunpack.c.0.s8 %v7979
      %v7981 = vlaneseq
      %v7982 = vshrl.u32 %v7981, 7
      %v7983 = vsub.s32 %v7980, %v7982
      %v7984 = vrot.slane %v7976, %v7983
      %v7986 = vunpack.c.l.s4 1983009808
      %v7987 = vunpack.c.0.s8 %v7986
      %v7988 = vlaneseq
      %v7989 = vshrl.u32 %v7988, 7
      %v7990 = vsub.s32 %v7987, %v7989
      %v7991 = vrot.slane %v7977, %v7990
      %v7992 = vcombine.low %v7984, %v7991
      %v7993 = vcombine.low %v3626, %v3625
      %v7994 = vcombine.low %v3627, %v3635
      %v7996 = vunpack.c.l.s4 1983009808
      %v7997 = vunpack.c.0.s8 %v7996
      %v7998 = vlaneseq
      %v7999 = vshrl.u32 %v7998, 7
      %v8000 = vsub.s32 %v7997, %v7999
      %v8001 = vrot.slane %v7993, %v8000
      %v8003 = vunpack.c.l.s4 1983009808
      %v8004 = vunpack.c.0.s8 %v8003
      %v8005 = vlaneseq
      %v8006 = vshrl.u32 %v8005, 7
      %v8007 = vsub.s32 %v8004, %v8006
      %v8008 = vrot.slane %v7994, %v8007
      %v8009 = vcombine.low %v8001, %v8008
      %v8010 = vcombine.low %v3643, %v3642
      %v8011 = vcombine.low %v3651, %v3659
      %v8013 = vunpack.c.l.s4 1983009808
      %v8014 = vunpack.c.0.s8 %v8013
      %v8015 = vlaneseq
      %v8016 = vshrl.u32 %v8015, 7
      %v8017 = vsub.s32 %v8014, %v8016
      %v8018 = vrot.slane %v8010, %v8017
      %v8020 = vunpack.c.l.s4 1983009808
      %v8021 = vunpack.c.0.s8 %v8020
      %v8022 = vlaneseq
      %v8023 = vshrl.u32 %v8022, 7
      %v8024 = vsub.s32 %v8021, %v8023
      %v8025 = vrot.slane %v8011, %v8024
      %v8026 = vcombine.low %v8018, %v8025
      %v8027 = vcombine.low %v3658, %v3660
      %v8028 = vcombine.low %v3668, %v3676
      %v8030 = vunpack.c.l.s4 1983009808
      %v8031 = vunpack.c.0.s8 %v8030
      %v8032 = vlaneseq
      %v8033 = vshrl.u32 %v8032, 7
      %v8034 = vsub.s32 %v8031, %v8033
      %v8035 = vrot.slane %v8027, %v8034
      %v8037 = vunpack.c.l.s4 1983009808
      %v8038 = vunpack.c.0.s8 %v8037
      %v8039 = vlaneseq
      %v8040 = vshrl.u32 %v8039, 7
      %v8041 = vsub.s32 %v8038, %v8040
      %v8042 = vrot.slane %v8028, %v8041
      %v8043 = vcombine.low %v8035, %v8042
      %v8044 = vcombine.low %v3675, %v3684
      %v8045 = vcombine.low %v3692, %v3691
      %v8047 = vunpack.c.l.s4 1983009808
      %v8048 = vunpack.c.0.s8 %v8047
      %v8049 = vlaneseq
      %v8050 = vshrl.u32 %v8049, 7
      %v8051 = vsub.s32 %v8048, %v8050
      %v8052 = vrot.slane %v8044, %v8051
      %v8054 = vunpack.c.l.s4 1983009808
      %v8055 = vunpack.c.0.s8 %v8054
      %v8056 = vlaneseq
      %v8057 = vshrl.u32 %v8056, 7
      %v8058 = vsub.s32 %v8055, %v8057
      %v8059 = vrot.slane %v8045, %v8058
      %v8060 = vcombine.low %v8052, %v8059
      %v8061 = vcombine.low %v3693, %v3701
      %v8062 = vcombine.low %v3709, %v3708
      %v8064 = vunpack.c.l.s4 1983009808
      %v8065 = vunpack.c.0.s8 %v8064
      %v8066 = vlaneseq
      %v8067 = vshrl.u32 %v8066, 7
      %v8068 = vsub.s32 %v8065, %v8067
      %v8069 = vrot.slane %v8061, %v8068
      %v8071 = vunpack.c.l.s4 1983009808
      %v8072 = vunpack.c.0.s8 %v8071
      %v8073 = vlaneseq
      %v8074 = vshrl.u32 %v8073, 7
      %v8075 = vsub.s32 %v8072, %v8074
      %v8076 = vrot.slane %v8062, %v8075
      %v8077 = vcombine.low %v8069, %v8076
      %v8078 = vcombine.low %v3717, %v3725
      %v8079 = vcombine.low %v3724, %v3726
      %v8081 = vunpack.c.l.s4 1983009808
      %v8082 = vunpack.c.0.s8 %v8081
      %v8083 = vlaneseq
      %v8084 = vshrl.u32 %v8083, 7
      %v8085 = vsub.s32 %v8082, %v8084
      %v8086 = vrot.slane %v8078, %v8085
      %v8088 = vunpack.c.l.s4 1983009808
      %v8089 = vunpack.c.0.s8 %v8088
      %v8090 = vlaneseq
      %v8091 = vshrl.u32 %v8090, 7
      %v8092 = vsub.s32 %v8089, %v8091
      %v8093 = vrot.slane %v8079, %v8092
      %v8094 = vcombine.low %v8086, %v8093
      %v8095 = vcombine.low %v3734, %v3742
      %v8096 = vcombine.low %v3741, %v3750
      %v8098 = vunpack.c.l.s4 1983009808
      %v8099 = vunpack.c.0.s8 %v8098
      %v8100 = vlaneseq
      %v8101 = vshrl.u32 %v8100, 7
      %v8102 = vsub.s32 %v8099, %v8101
      %v8103 = vrot.slane %v8095, %v8102
      %v8105 = vunpack.c.l.s4 1983009808
      %v8106 = vunpack.c.0.s8 %v8105
      %v8107 = vlaneseq
      %v8108 = vshrl.u32 %v8107, 7
      %v8109 = vsub.s32 %v8106, %v8108
      %v8110 = vrot.slane %v8096, %v8109
      %v8111 = vcombine.low %v8103, %v8110
      %v8112 = vcombine.low %v3758, %v3757
      %v8113 = vcombine.low %v3759, %v3767
      %v8115 = vunpack.c.l.s4 1983009808
      %v8116 = vunpack.c.0.s8 %v8115
      %v8117 = vlaneseq
      %v8118 = vshrl.u32 %v8117, 7
      %v8119 = vsub.s32 %v8116, %v8118
      %v8120 = vrot.slane %v8112, %v8119
      %v8122 = vunpack.c.l.s4 1983009808
      %v8123 = vunpack.c.0.s8 %v8122
      %v8124 = vlaneseq
      %v8125 = vshrl.u32 %v8124, 7
      %v8126 = vsub.s32 %v8123, %v8125
      %v8127 = vrot.slane %v8113, %v8126
      %v8128 = vcombine.low %v8120, %v8127
      %v8129 = vcombine.low %v3775, %v3774
      %v8130 = vcombine.low %v3783, %v3791
      %v8132 = vunpack.c.l.s4 1983009808
      %v8133 = vunpack.c.0.s8 %v8132
      %v8134 = vlaneseq
      %v8135 = vshrl.u32 %v8134, 7
      %v8136 = vsub.s32 %v8133, %v8135
      %v8137 = vrot.slane %v8129, %v8136
      %v8139 = vunpack.c.l.s4 1983009808
      %v8140 = vunpack.c.0.s8 %v8139
      %v8141 = vlaneseq
      %v8142 = vshrl.u32 %v8141, 7
      %v8143 = vsub.s32 %v8140, %v8142
      %v8144 = vrot.slane %v8130, %v8143
      %v8145 = vcombine.low %v8137, %v8144
      %v8146 = vcombine.low %v3790, %v3792
      %v8147 = vcombine.low %v3800, %v3808
      %v8149 = vunpack.c.l.s4 1983009808
      %v8150 = vunpack.c.0.s8 %v8149
      %v8151 = vlaneseq
      %v8152 = vshrl.u32 %v8151, 7
      %v8153 = vsub.s32 %v8150, %v8152
      %v8154 = vrot.slane %v8146, %v8153
      %v8156 = vunpack.c.l.s4 1983009808
      %v8157 = vunpack.c.0.s8 %v8156
      %v8158 = vlaneseq
      %v8159 = vshrl.u32 %v8158, 7
      %v8160 = vsub.s32 %v8157, %v8159
      %v8161 = vrot.slane %v8147, %v8160
      %v8162 = vcombine.low %v8154, %v8161
      %v8163 = vcombine.low %v3807, %v3816
      %v8164 = vcombine.low %v3824, %v3823
      %v8166 = vunpack.c.l.s4 1983009808
      %v8167 = vunpack.c.0.s8 %v8166
      %v8168 = vlaneseq
      %v8169 = vshrl.u32 %v8168, 7
      %v8170 = vsub.s32 %v8167, %v8169
      %v8171 = vrot.slane %v8163, %v8170
      %v8173 = vunpack.c.l.s4 1983009808
      %v8174 = vunpack.c.0.s8 %v8173
      %v8175 = vlaneseq
      %v8176 = vshrl.u32 %v8175, 7
      %v8177 = vsub.s32 %v8174, %v8176
      %v8178 = vrot.slane %v8164, %v8177
      %v8179 = vcombine.low %v8171, %v8178
      %v8180 = vcombine.low %v3825, %v3833
      %v8181 = vcombine.low %v3841, %v3840
      %v8183 = vunpack.c.l.s4 1983009808
      %v8184 = vunpack.c.0.s8 %v8183
      %v8185 = vlaneseq
      %v8186 = vshrl.u32 %v8185, 7
      %v8187 = vsub.s32 %v8184, %v8186
      %v8188 = vrot.slane %v8180, %v8187
      %v8190 = vunpack.c.l.s4 1983009808
      %v8191 = vunpack.c.0.s8 %v8190
      %v8192 = vlaneseq
      %v8193 = vshrl.u32 %v8192, 7
      %v8194 = vsub.s32 %v8191, %v8193
      %v8195 = vrot.slane %v8181, %v8194
      %v8196 = vcombine.low %v8188, %v8195
      %v8197 = vcombine.low %v3849, %v3857
      %v8198 = vcombine.low %v3856, %v3858
      %v8200 = vunpack.c.l.s4 1983009808
      %v8201 = vunpack.c.0.s8 %v8200
      %v8202 = vlaneseq
      %v8203 = vshrl.u32 %v8202, 7
      %v8204 = vsub.s32 %v8201, %v8203
      %v8205 = vrot.slane %v8197, %v8204
      %v8207 = vunpack.c.l.s4 1983009808
      %v8208 = vunpack.c.0.s8 %v8207
      %v8209 = vlaneseq
      %v8210 = vshrl.u32 %v8209, 7
      %v8211 = vsub.s32 %v8208, %v8210
      %v8212 = vrot.slane %v8198, %v8211
      %v8213 = vcombine.low %v8205, %v8212
      %v8214 = vcombine.low %v3866, %v3874
      %v8215 = vcombine.low %v3873, %v3882
      %v8217 = vunpack.c.l.s4 1983009808
      %v8218 = vunpack.c.0.s8 %v8217
      %v8219 = vlaneseq
      %v8220 = vshrl.u32 %v8219, 7
      %v8221 = vsub.s32 %v8218, %v8220
      %v8222 = vrot.slane %v8214, %v8221
      %v8224 = vunpack.c.l.s4 1983009808
      %v8225 = vunpack.c.0.s8 %v8224
      %v8226 = vlaneseq
      %v8227 = vshrl.u32 %v8226, 7
      %v8228 = vsub.s32 %v8225, %v8227
      %v8229 = vrot.slane %v8215, %v8228
      %v8230 = vcombine.low %v8222, %v8229
      %v8231 = vcombine.low %v3890, %v3889
      %v8232 = vcombine.low %v3891, %v3899
      %v8234 = vunpack.c.l.s4 1983009808
      %v8235 = vunpack.c.0.s8 %v8234
      %v8236 = vlaneseq
      %v8237 = vshrl.u32 %v8236, 7
      %v8238 = vsub.s32 %v8235, %v8237
      %v8239 = vrot.slane %v8231, %v8238
      %v8241 = vunpack.c.l.s4 1983009808
      %v8242 = vunpack.c.0.s8 %v8241
      %v8243 = vlaneseq
      %v8244 = vshrl.u32 %v8243, 7
      %v8245 = vsub.s32 %v8242, %v8244
      %v8246 = vrot.slane %v8232, %v8245
      %v8247 = vcombine.low %v8239, %v8246
      %v8248 = vcombine.low %v3907, %v3906
      %v8250 = vunpack.c.l.s4 1983009808
      %v8251 = vunpack.c.0.s8 %v8250
      %v8252 = vlaneseq
      %v8253 = vshrl.u32 %v8252, 7
      %v8254 = vsub.s32 %v8251, %v8253
      %v8255 = vrot.slane %v8248, %v8254
      %8256 = vrot.lane.b32.xlu0 %v7856, 24
      %v8257 = vpop.permute.xlu0 %8256
      %8258 = vrot.lane.b32.xlu0 %v7873, 24
      %v8259 = vpop.permute.xlu0 %8258
      %8260 = vrot.lane.b32.xlu0 %v7890, 24
      %v8261 = vpop.permute.xlu0 %8260
      %8262 = vrot.lane.b32.xlu0 %v7907, 24
      %v8263 = vpop.permute.xlu0 %8262
      %8264 = vrot.lane.b32.xlu0 %v7924, 24
      %v8265 = vpop.permute.xlu0 %8264
      %8266 = vrot.lane.b32.xlu0 %v7941, 24
      %v8267 = vpop.permute.xlu0 %8266
      %8268 = vrot.lane.b32.xlu0 %v7958, 24
      %v8269 = vpop.permute.xlu0 %8268
      %8270 = vrot.lane.b32.xlu0 %v7975, 24
      %v8271 = vpop.permute.xlu0 %8270
      %8272 = vrot.lane.b32.xlu0 %v7992, 24
      %v8273 = vpop.permute.xlu0 %8272
      %8274 = vrot.lane.b32.xlu0 %v8009, 24
      %v8275 = vpop.permute.xlu0 %8274
      %8276 = vrot.lane.b32.xlu0 %v8026, 24
      %v8277 = vpop.permute.xlu0 %8276
      %8278 = vrot.lane.b32.xlu0 %v8043, 24
      %v8279 = vpop.permute.xlu0 %8278
      %8280 = vrot.lane.b32.xlu0 %v8060, 24
      %v8281 = vpop.permute.xlu0 %8280
      %8282 = vrot.lane.b32.xlu0 %v8077, 24
      %v8283 = vpop.permute.xlu0 %8282
      %8284 = vrot.lane.b32.xlu0 %v8094, 24
      %v8285 = vpop.permute.xlu0 %8284
      %8286 = vrot.lane.b32.xlu0 %v8111, 24
      %v8287 = vpop.permute.xlu0 %8286
      %8288 = vrot.lane.b32.xlu0 %v8128, 24
      %v8289 = vpop.permute.xlu0 %8288
      %8290 = vrot.lane.b32.xlu0 %v8145, 24
      %v8291 = vpop.permute.xlu0 %8290
      %8292 = vrot.lane.b32.xlu0 %v8162, 24
      %v8293 = vpop.permute.xlu0 %8292
      %8294 = vrot.lane.b32.xlu0 %v8179, 24
      %v8295 = vpop.permute.xlu0 %8294
      %8296 = vrot.lane.b32.xlu0 %v8196, 24
      %v8297 = vpop.permute.xlu0 %8296
      %8298 = vrot.lane.b32.xlu0 %v8213, 24
      %v8299 = vpop.permute.xlu0 %8298
      %8300 = vrot.lane.b32.xlu0 %v8230, 24
      %v8301 = vpop.permute.xlu0 %8300
      %8302 = vrot.lane.b32.xlu0 %v8247, 24
      %v8303 = vpop.permute.xlu0 %8302
      %8304 = vrot.lane.b32.xlu0 %v8255, 24
      %v8305 = vpop.permute.xlu0 %8304
      %v8331 = vcombine.low %v3971, %v3979
      %v8332 = vcombine.low %v3978, %v3980
      %v8334 = vunpack.c.l.s4 1983009808
      %v8335 = vunpack.c.0.s8 %v8334
      %v8336 = vlaneseq
      %v8337 = vshrl.u32 %v8336, 7
      %v8338 = vsub.s32 %v8335, %v8337
      %v8339 = vrot.slane %v8331, %v8338
      %v8341 = vunpack.c.l.s4 1983009808
      %v8342 = vunpack.c.0.s8 %v8341
      %v8343 = vlaneseq
      %v8344 = vshrl.u32 %v8343, 7
      %v8345 = vsub.s32 %v8342, %v8344
      %v8346 = vrot.slane %v8332, %v8345
      %v8347 = vcombine.low %v8339, %v8346
      %v8348 = vcombine.low %v3988, %v3996
      %v8349 = vcombine.low %v3995, %v4004
      %v8351 = vunpack.c.l.s4 1983009808
      %v8352 = vunpack.c.0.s8 %v8351
      %v8353 = vlaneseq
      %v8354 = vshrl.u32 %v8353, 7
      %v8355 = vsub.s32 %v8352, %v8354
      %v8356 = vrot.slane %v8348, %v8355
      %v8358 = vunpack.c.l.s4 1983009808
      %v8359 = vunpack.c.0.s8 %v8358
      %v8360 = vlaneseq
      %v8361 = vshrl.u32 %v8360, 7
      %v8362 = vsub.s32 %v8359, %v8361
      %v8363 = vrot.slane %v8349, %v8362
      %v8364 = vcombine.low %v8356, %v8363
      %v8365 = vcombine.low %v4012, %v4011
      %v8366 = vcombine.low %v4013, %v4021
      %v8368 = vunpack.c.l.s4 1983009808
      %v8369 = vunpack.c.0.s8 %v8368
      %v8370 = vlaneseq
      %v8371 = vshrl.u32 %v8370, 7
      %v8372 = vsub.s32 %v8369, %v8371
      %v8373 = vrot.slane %v8365, %v8372
      %v8375 = vunpack.c.l.s4 1983009808
      %v8376 = vunpack.c.0.s8 %v8375
      %v8377 = vlaneseq
      %v8378 = vshrl.u32 %v8377, 7
      %v8379 = vsub.s32 %v8376, %v8378
      %v8380 = vrot.slane %v8366, %v8379
      %v8381 = vcombine.low %v8373, %v8380
      %v8382 = vcombine.low %v4029, %v4028
      %v8383 = vcombine.low %v4037, %v4045
      %v8385 = vunpack.c.l.s4 1983009808
      %v8386 = vunpack.c.0.s8 %v8385
      %v8387 = vlaneseq
      %v8388 = vshrl.u32 %v8387, 7
      %v8389 = vsub.s32 %v8386, %v8388
      %v8390 = vrot.slane %v8382, %v8389
      %v8392 = vunpack.c.l.s4 1983009808
      %v8393 = vunpack.c.0.s8 %v8392
      %v8394 = vlaneseq
      %v8395 = vshrl.u32 %v8394, 7
      %v8396 = vsub.s32 %v8393, %v8395
      %v8397 = vrot.slane %v8383, %v8396
      %v8398 = vcombine.low %v8390, %v8397
      %v8399 = vcombine.low %v4044, %v4046
      %v8400 = vcombine.low %v4054, %v4062
      %v8402 = vunpack.c.l.s4 1983009808
      %v8403 = vunpack.c.0.s8 %v8402
      %v8404 = vlaneseq
      %v8405 = vshrl.u32 %v8404, 7
      %v8406 = vsub.s32 %v8403, %v8405
      %v8407 = vrot.slane %v8399, %v8406
      %v8409 = vunpack.c.l.s4 1983009808
      %v8410 = vunpack.c.0.s8 %v8409
      %v8411 = vlaneseq
      %v8412 = vshrl.u32 %v8411, 7
      %v8413 = vsub.s32 %v8410, %v8412
      %v8414 = vrot.slane %v8400, %v8413
      %v8415 = vcombine.low %v8407, %v8414
      %v8416 = vcombine.low %v4061, %v4070
      %v8417 = vcombine.low %v4078, %v4077
      %v8419 = vunpack.c.l.s4 1983009808
      %v8420 = vunpack.c.0.s8 %v8419
      %v8421 = vlaneseq
      %v8422 = vshrl.u32 %v8421, 7
      %v8423 = vsub.s32 %v8420, %v8422
      %v8424 = vrot.slane %v8416, %v8423
      %v8426 = vunpack.c.l.s4 1983009808
      %v8427 = vunpack.c.0.s8 %v8426
      %v8428 = vlaneseq
      %v8429 = vshrl.u32 %v8428, 7
      %v8430 = vsub.s32 %v8427, %v8429
      %v8431 = vrot.slane %v8417, %v8430
      %v8432 = vcombine.low %v8424, %v8431
      %v8433 = vcombine.low %v4079, %v4087
      %v8434 = vcombine.low %v4095, %v4094
      %v8436 = vunpack.c.l.s4 1983009808
      %v8437 = vunpack.c.0.s8 %v8436
      %v8438 = vlaneseq
      %v8439 = vshrl.u32 %v8438, 7
      %v8440 = vsub.s32 %v8437, %v8439
      %v8441 = vrot.slane %v8433, %v8440
      %v8443 = vunpack.c.l.s4 1983009808
      %v8444 = vunpack.c.0.s8 %v8443
      %v8445 = vlaneseq
      %v8446 = vshrl.u32 %v8445, 7
      %v8447 = vsub.s32 %v8444, %v8446
      %v8448 = vrot.slane %v8434, %v8447
      %v8449 = vcombine.low %v8441, %v8448
      %v8450 = vcombine.low %v4103, %v4111
      %v8451 = vcombine.low %v4110, %v4112
      %v8453 = vunpack.c.l.s4 1983009808
      %v8454 = vunpack.c.0.s8 %v8453
      %v8455 = vlaneseq
      %v8456 = vshrl.u32 %v8455, 7
      %v8457 = vsub.s32 %v8454, %v8456
      %v8458 = vrot.slane %v8450, %v8457
      %v8460 = vunpack.c.l.s4 1983009808
      %v8461 = vunpack.c.0.s8 %v8460
      %v8462 = vlaneseq
      %v8463 = vshrl.u32 %v8462, 7
      %v8464 = vsub.s32 %v8461, %v8463
      %v8465 = vrot.slane %v8451, %v8464
      %v8466 = vcombine.low %v8458, %v8465
      %v8467 = vcombine.low %v4120, %v4128
      %v8468 = vcombine.low %v4127, %v4136
      %v8470 = vunpack.c.l.s4 1983009808
      %v8471 = vunpack.c.0.s8 %v8470
      %v8472 = vlaneseq
      %v8473 = vshrl.u32 %v8472, 7
      %v8474 = vsub.s32 %v8471, %v8473
      %v8475 = vrot.slane %v8467, %v8474
      %v8477 = vunpack.c.l.s4 1983009808
      %v8478 = vunpack.c.0.s8 %v8477
      %v8479 = vlaneseq
      %v8480 = vshrl.u32 %v8479, 7
      %v8481 = vsub.s32 %v8478, %v8480
      %v8482 = vrot.slane %v8468, %v8481
      %v8483 = vcombine.low %v8475, %v8482
      %v8484 = vcombine.low %v4144, %v4143
      %v8485 = vcombine.low %v4145, %v4153
      %v8487 = vunpack.c.l.s4 1983009808
      %v8488 = vunpack.c.0.s8 %v8487
      %v8489 = vlaneseq
      %v8490 = vshrl.u32 %v8489, 7
      %v8491 = vsub.s32 %v8488, %v8490
      %v8492 = vrot.slane %v8484, %v8491
      %v8494 = vunpack.c.l.s4 1983009808
      %v8495 = vunpack.c.0.s8 %v8494
      %v8496 = vlaneseq
      %v8497 = vshrl.u32 %v8496, 7
      %v8498 = vsub.s32 %v8495, %v8497
      %v8499 = vrot.slane %v8485, %v8498
      %v8500 = vcombine.low %v8492, %v8499
      %v8501 = vcombine.low %v4161, %v4160
      %v8502 = vcombine.low %v4169, %v4177
      %v8504 = vunpack.c.l.s4 1983009808
      %v8505 = vunpack.c.0.s8 %v8504
      %v8506 = vlaneseq
      %v8507 = vshrl.u32 %v8506, 7
      %v8508 = vsub.s32 %v8505, %v8507
      %v8509 = vrot.slane %v8501, %v8508
      %v8511 = vunpack.c.l.s4 1983009808
      %v8512 = vunpack.c.0.s8 %v8511
      %v8513 = vlaneseq
      %v8514 = vshrl.u32 %v8513, 7
      %v8515 = vsub.s32 %v8512, %v8514
      %v8516 = vrot.slane %v8502, %v8515
      %v8517 = vcombine.low %v8509, %v8516
      %v8518 = vcombine.low %v4176, %v4178
      %v8519 = vcombine.low %v4186, %v4194
      %v8521 = vunpack.c.l.s4 1983009808
      %v8522 = vunpack.c.0.s8 %v8521
      %v8523 = vlaneseq
      %v8524 = vshrl.u32 %v8523, 7
      %v8525 = vsub.s32 %v8522, %v8524
      %v8526 = vrot.slane %v8518, %v8525
      %v8528 = vunpack.c.l.s4 1983009808
      %v8529 = vunpack.c.0.s8 %v8528
      %v8530 = vlaneseq
      %v8531 = vshrl.u32 %v8530, 7
      %v8532 = vsub.s32 %v8529, %v8531
      %v8533 = vrot.slane %v8519, %v8532
      %v8534 = vcombine.low %v8526, %v8533
      %v8535 = vcombine.low %v4193, %v4202
      %v8536 = vcombine.low %v4210, %v4209
      %v8538 = vunpack.c.l.s4 1983009808
      %v8539 = vunpack.c.0.s8 %v8538
      %v8540 = vlaneseq
      %v8541 = vshrl.u32 %v8540, 7
      %v8542 = vsub.s32 %v8539, %v8541
      %v8543 = vrot.slane %v8535, %v8542
      %v8545 = vunpack.c.l.s4 1983009808
      %v8546 = vunpack.c.0.s8 %v8545
      %v8547 = vlaneseq
      %v8548 = vshrl.u32 %v8547, 7
      %v8549 = vsub.s32 %v8546, %v8548
      %v8550 = vrot.slane %v8536, %v8549
      %v8551 = vcombine.low %v8543, %v8550
      %v8552 = vcombine.low %v4211, %v4219
      %v8553 = vcombine.low %v4227, %v4226
      %v8555 = vunpack.c.l.s4 1983009808
      %v8556 = vunpack.c.0.s8 %v8555
      %v8557 = vlaneseq
      %v8558 = vshrl.u32 %v8557, 7
      %v8559 = vsub.s32 %v8556, %v8558
      %v8560 = vrot.slane %v8552, %v8559
      %v8562 = vunpack.c.l.s4 1983009808
      %v8563 = vunpack.c.0.s8 %v8562
      %v8564 = vlaneseq
      %v8565 = vshrl.u32 %v8564, 7
      %v8566 = vsub.s32 %v8563, %v8565
      %v8567 = vrot.slane %v8553, %v8566
      %v8568 = vcombine.low %v8560, %v8567
      %v8569 = vcombine.low %v4235, %v4243
      %v8570 = vcombine.low %v4242, %v4244
      %v8572 = vunpack.c.l.s4 1983009808
      %v8573 = vunpack.c.0.s8 %v8572
      %v8574 = vlaneseq
      %v8575 = vshrl.u32 %v8574, 7
      %v8576 = vsub.s32 %v8573, %v8575
      %v8577 = vrot.slane %v8569, %v8576
      %v8579 = vunpack.c.l.s4 1983009808
      %v8580 = vunpack.c.0.s8 %v8579
      %v8581 = vlaneseq
      %v8582 = vshrl.u32 %v8581, 7
      %v8583 = vsub.s32 %v8580, %v8582
      %v8584 = vrot.slane %v8570, %v8583
      %v8585 = vcombine.low %v8577, %v8584
      %v8586 = vcombine.low %v4252, %v4260
      %v8587 = vcombine.low %v4259, %v4268
      %v8589 = vunpack.c.l.s4 1983009808
      %v8590 = vunpack.c.0.s8 %v8589
      %v8591 = vlaneseq
      %v8592 = vshrl.u32 %v8591, 7
      %v8593 = vsub.s32 %v8590, %v8592
      %v8594 = vrot.slane %v8586, %v8593
      %v8596 = vunpack.c.l.s4 1983009808
      %v8597 = vunpack.c.0.s8 %v8596
      %v8598 = vlaneseq
      %v8599 = vshrl.u32 %v8598, 7
      %v8600 = vsub.s32 %v8597, %v8599
      %v8601 = vrot.slane %v8587, %v8600
      %v8602 = vcombine.low %v8594, %v8601
      %v8603 = vcombine.low %v4276, %v4275
      %v8604 = vcombine.low %v4277, %v4285
      %v8606 = vunpack.c.l.s4 1983009808
      %v8607 = vunpack.c.0.s8 %v8606
      %v8608 = vlaneseq
      %v8609 = vshrl.u32 %v8608, 7
      %v8610 = vsub.s32 %v8607, %v8609
      %v8611 = vrot.slane %v8603, %v8610
      %v8613 = vunpack.c.l.s4 1983009808
      %v8614 = vunpack.c.0.s8 %v8613
      %v8615 = vlaneseq
      %v8616 = vshrl.u32 %v8615, 7
      %v8617 = vsub.s32 %v8614, %v8616
      %v8618 = vrot.slane %v8604, %v8617
      %v8619 = vcombine.low %v8611, %v8618
      %v8620 = vcombine.low %v4293, %v4292
      %v8621 = vcombine.low %v4301, %v4309
      %v8623 = vunpack.c.l.s4 1983009808
      %v8624 = vunpack.c.0.s8 %v8623
      %v8625 = vlaneseq
      %v8626 = vshrl.u32 %v8625, 7
      %v8627 = vsub.s32 %v8624, %v8626
      %v8628 = vrot.slane %v8620, %v8627
      %v8630 = vunpack.c.l.s4 1983009808
      %v8631 = vunpack.c.0.s8 %v8630
      %v8632 = vlaneseq
      %v8633 = vshrl.u32 %v8632, 7
      %v8634 = vsub.s32 %v8631, %v8633
      %v8635 = vrot.slane %v8621, %v8634
      %v8636 = vcombine.low %v8628, %v8635
      %v8637 = vcombine.low %v4308, %v4310
      %v8638 = vcombine.low %v4318, %v4326
      %v8640 = vunpack.c.l.s4 1983009808
      %v8641 = vunpack.c.0.s8 %v8640
      %v8642 = vlaneseq
      %v8643 = vshrl.u32 %v8642, 7
      %v8644 = vsub.s32 %v8641, %v8643
      %v8645 = vrot.slane %v8637, %v8644
      %v8647 = vunpack.c.l.s4 1983009808
      %v8648 = vunpack.c.0.s8 %v8647
      %v8649 = vlaneseq
      %v8650 = vshrl.u32 %v8649, 7
      %v8651 = vsub.s32 %v8648, %v8650
      %v8652 = vrot.slane %v8638, %v8651
      %v8653 = vcombine.low %v8645, %v8652
      %v8654 = vcombine.low %v4325, %v4334
      %v8655 = vcombine.low %v4342, %v4341
      %v8657 = vunpack.c.l.s4 1983009808
      %v8658 = vunpack.c.0.s8 %v8657
      %v8659 = vlaneseq
      %v8660 = vshrl.u32 %v8659, 7
      %v8661 = vsub.s32 %v8658, %v8660
      %v8662 = vrot.slane %v8654, %v8661
      %v8664 = vunpack.c.l.s4 1983009808
      %v8665 = vunpack.c.0.s8 %v8664
      %v8666 = vlaneseq
      %v8667 = vshrl.u32 %v8666, 7
      %v8668 = vsub.s32 %v8665, %v8667
      %v8669 = vrot.slane %v8655, %v8668
      %v8670 = vcombine.low %v8662, %v8669
      %v8671 = vcombine.low %v4343, %v4351
      %v8672 = vcombine.low %v4359, %v4358
      %v8674 = vunpack.c.l.s4 1983009808
      %v8675 = vunpack.c.0.s8 %v8674
      %v8676 = vlaneseq
      %v8677 = vshrl.u32 %v8676, 7
      %v8678 = vsub.s32 %v8675, %v8677
      %v8679 = vrot.slane %v8671, %v8678
      %v8681 = vunpack.c.l.s4 1983009808
      %v8682 = vunpack.c.0.s8 %v8681
      %v8683 = vlaneseq
      %v8684 = vshrl.u32 %v8683, 7
      %v8685 = vsub.s32 %v8682, %v8684
      %v8686 = vrot.slane %v8672, %v8685
      %v8687 = vcombine.low %v8679, %v8686
      %v8688 = vcombine.low %v4367, %v4375
      %v8689 = vcombine.low %v4374, %v4376
      %v8691 = vunpack.c.l.s4 1983009808
      %v8692 = vunpack.c.0.s8 %v8691
      %v8693 = vlaneseq
      %v8694 = vshrl.u32 %v8693, 7
      %v8695 = vsub.s32 %v8692, %v8694
      %v8696 = vrot.slane %v8688, %v8695
      %v8698 = vunpack.c.l.s4 1983009808
      %v8699 = vunpack.c.0.s8 %v8698
      %v8700 = vlaneseq
      %v8701 = vshrl.u32 %v8700, 7
      %v8702 = vsub.s32 %v8699, %v8701
      %v8703 = vrot.slane %v8689, %v8702
      %v8704 = vcombine.low %v8696, %v8703
      %v8705 = vcombine.low %v4384, %v4392
      %v8706 = vcombine.low %v4391, %v4400
      %v8708 = vunpack.c.l.s4 1983009808
      %v8709 = vunpack.c.0.s8 %v8708
      %v8710 = vlaneseq
      %v8711 = vshrl.u32 %v8710, 7
      %v8712 = vsub.s32 %v8709, %v8711
      %v8713 = vrot.slane %v8705, %v8712
      %v8715 = vunpack.c.l.s4 1983009808
      %v8716 = vunpack.c.0.s8 %v8715
      %v8717 = vlaneseq
      %v8718 = vshrl.u32 %v8717, 7
      %v8719 = vsub.s32 %v8716, %v8718
      %v8720 = vrot.slane %v8706, %v8719
      %v8721 = vcombine.low %v8713, %v8720
      %v8722 = vcombine.low %v4408, %v4407
      %v8723 = vcombine.low %v4409, %v4417
      %v8725 = vunpack.c.l.s4 1983009808
      %v8726 = vunpack.c.0.s8 %v8725
      %v8727 = vlaneseq
      %v8728 = vshrl.u32 %v8727, 7
      %v8729 = vsub.s32 %v8726, %v8728
      %v8730 = vrot.slane %v8722, %v8729
      %v8732 = vunpack.c.l.s4 1983009808
      %v8733 = vunpack.c.0.s8 %v8732
      %v8734 = vlaneseq
      %v8735 = vshrl.u32 %v8734, 7
      %v8736 = vsub.s32 %v8733, %v8735
      %v8737 = vrot.slane %v8723, %v8736
      %v8738 = vcombine.low %v8730, %v8737
      %v8739 = vcombine.low %v4425, %v4424
      %v8741 = vunpack.c.l.s4 1983009808
      %v8742 = vunpack.c.0.s8 %v8741
      %v8743 = vlaneseq
      %v8744 = vshrl.u32 %v8743, 7
      %v8745 = vsub.s32 %v8742, %v8744
      %v8746 = vrot.slane %v8739, %v8745
      %8747 = vrot.lane.b32.xlu0 %v8347, 28
      %v8748 = vpop.permute.xlu0 %8747
      %8749 = vrot.lane.b32.xlu0 %v8364, 28
      %v8750 = vpop.permute.xlu0 %8749
      %8751 = vrot.lane.b32.xlu0 %v8381, 28
      %v8752 = vpop.permute.xlu0 %8751
      %8753 = vrot.lane.b32.xlu0 %v8398, 28
      %v8754 = vpop.permute.xlu0 %8753
      %8755 = vrot.lane.b32.xlu0 %v8415, 28
      %v8756 = vpop.permute.xlu0 %8755
      %8757 = vrot.lane.b32.xlu0 %v8432, 28
      %v8758 = vpop.permute.xlu0 %8757
      %8759 = vrot.lane.b32.xlu0 %v8449, 28
      %v8760 = vpop.permute.xlu0 %8759
      %8761 = vrot.lane.b32.xlu0 %v8466, 28
      %v8762 = vpop.permute.xlu0 %8761
      %8763 = vrot.lane.b32.xlu0 %v8483, 28
      %v8764 = vpop.permute.xlu0 %8763
      %8765 = vrot.lane.b32.xlu0 %v8500, 28
      %v8766 = vpop.permute.xlu0 %8765
      %8767 = vrot.lane.b32.xlu0 %v8517, 28
      %v8768 = vpop.permute.xlu0 %8767
      %8769 = vrot.lane.b32.xlu0 %v8534, 28
      %v8770 = vpop.permute.xlu0 %8769
      %8771 = vrot.lane.b32.xlu0 %v8551, 28
      %v8772 = vpop.permute.xlu0 %8771
      %8773 = vrot.lane.b32.xlu0 %v8568, 28
      %v8774 = vpop.permute.xlu0 %8773
      %8775 = vrot.lane.b32.xlu0 %v8585, 28
      %v8776 = vpop.permute.xlu0 %8775
      %8777 = vrot.lane.b32.xlu0 %v8602, 28
      %v8778 = vpop.permute.xlu0 %8777
      %8779 = vrot.lane.b32.xlu0 %v8619, 28
      %v8780 = vpop.permute.xlu0 %8779
      %8781 = vrot.lane.b32.xlu0 %v8636, 28
      %v8782 = vpop.permute.xlu0 %8781
      %8783 = vrot.lane.b32.xlu0 %v8653, 28
      %v8784 = vpop.permute.xlu0 %8783
      %8785 = vrot.lane.b32.xlu0 %v8670, 28
      %v8786 = vpop.permute.xlu0 %8785
      %8787 = vrot.lane.b32.xlu0 %v8687, 28
      %v8788 = vpop.permute.xlu0 %8787
      %8789 = vrot.lane.b32.xlu0 %v8704, 28
      %v8790 = vpop.permute.xlu0 %8789
      %8791 = vrot.lane.b32.xlu0 %v8721, 28
      %v8792 = vpop.permute.xlu0 %8791
      %8793 = vrot.lane.b32.xlu0 %v8738, 28
      %v8794 = vpop.permute.xlu0 %8793
      %8795 = vrot.lane.b32.xlu0 %v8746, 28
      %v8796 = vpop.permute.xlu0 %8795
      %v8822 = vcombine.low %v4489, %v4497
      %v8823 = vcombine.low %v4496, %v4498
      %v8825 = vunpack.c.l.s4 1983009808
      %v8826 = vunpack.c.0.s8 %v8825
      %v8827 = vlaneseq
      %v8828 = vshrl.u32 %v8827, 7
      %v8829 = vsub.s32 %v8826, %v8828
      %v8830 = vrot.slane %v8822, %v8829
      %v8832 = vunpack.c.l.s4 1983009808
      %v8833 = vunpack.c.0.s8 %v8832
      %v8834 = vlaneseq
      %v8835 = vshrl.u32 %v8834, 7
      %v8836 = vsub.s32 %v8833, %v8835
      %v8837 = vrot.slane %v8823, %v8836
      %v8838 = vcombine.low %v8830, %v8837
      %v8839 = vcombine.low %v4506, %v4514
      %v8840 = vcombine.low %v4513, %v4522
      %v8842 = vunpack.c.l.s4 1983009808
      %v8843 = vunpack.c.0.s8 %v8842
      %v8844 = vlaneseq
      %v8845 = vshrl.u32 %v8844, 7
      %v8846 = vsub.s32 %v8843, %v8845
      %v8847 = vrot.slane %v8839, %v8846
      %v8849 = vunpack.c.l.s4 1983009808
      %v8850 = vunpack.c.0.s8 %v8849
      %v8851 = vlaneseq
      %v8852 = vshrl.u32 %v8851, 7
      %v8853 = vsub.s32 %v8850, %v8852
      %v8854 = vrot.slane %v8840, %v8853
      %v8855 = vcombine.low %v8847, %v8854
      %v8856 = vcombine.low %v4530, %v4529
      %v8857 = vcombine.low %v4531, %v4539
      %v8859 = vunpack.c.l.s4 1983009808
      %v8860 = vunpack.c.0.s8 %v8859
      %v8861 = vlaneseq
      %v8862 = vshrl.u32 %v8861, 7
      %v8863 = vsub.s32 %v8860, %v8862
      %v8864 = vrot.slane %v8856, %v8863
      %v8866 = vunpack.c.l.s4 1983009808
      %v8867 = vunpack.c.0.s8 %v8866
      %v8868 = vlaneseq
      %v8869 = vshrl.u32 %v8868, 7
      %v8870 = vsub.s32 %v8867, %v8869
      %v8871 = vrot.slane %v8857, %v8870
      %v8872 = vcombine.low %v8864, %v8871
      %v8873 = vcombine.low %v4547, %v4546
      %v8874 = vcombine.low %v4555, %v4563
      %v8876 = vunpack.c.l.s4 1983009808
      %v8877 = vunpack.c.0.s8 %v8876
      %v8878 = vlaneseq
      %v8879 = vshrl.u32 %v8878, 7
      %v8880 = vsub.s32 %v8877, %v8879
      %v8881 = vrot.slane %v8873, %v8880
      %v8883 = vunpack.c.l.s4 1983009808
      %v8884 = vunpack.c.0.s8 %v8883
      %v8885 = vlaneseq
      %v8886 = vshrl.u32 %v8885, 7
      %v8887 = vsub.s32 %v8884, %v8886
      %v8888 = vrot.slane %v8874, %v8887
      %v8889 = vcombine.low %v8881, %v8888
      %v8890 = vcombine.low %v4562, %v4564
      %v8891 = vcombine.low %v4572, %v4580
      %v8893 = vunpack.c.l.s4 1983009808
      %v8894 = vunpack.c.0.s8 %v8893
      %v8895 = vlaneseq
      %v8896 = vshrl.u32 %v8895, 7
      %v8897 = vsub.s32 %v8894, %v8896
      %v8898 = vrot.slane %v8890, %v8897
      %v8900 = vunpack.c.l.s4 1983009808
      %v8901 = vunpack.c.0.s8 %v8900
      %v8902 = vlaneseq
      %v8903 = vshrl.u32 %v8902, 7
      %v8904 = vsub.s32 %v8901, %v8903
      %v8905 = vrot.slane %v8891, %v8904
      %v8906 = vcombine.low %v8898, %v8905
      %v8907 = vcombine.low %v4579, %v4588
      %v8908 = vcombine.low %v4596, %v4595
      %v8910 = vunpack.c.l.s4 1983009808
      %v8911 = vunpack.c.0.s8 %v8910
      %v8912 = vlaneseq
      %v8913 = vshrl.u32 %v8912, 7
      %v8914 = vsub.s32 %v8911, %v8913
      %v8915 = vrot.slane %v8907, %v8914
      %v8917 = vunpack.c.l.s4 1983009808
      %v8918 = vunpack.c.0.s8 %v8917
      %v8919 = vlaneseq
      %v8920 = vshrl.u32 %v8919, 7
      %v8921 = vsub.s32 %v8918, %v8920
      %v8922 = vrot.slane %v8908, %v8921
      %v8923 = vcombine.low %v8915, %v8922
      %v8924 = vcombine.low %v4597, %v4605
      %v8925 = vcombine.low %v4613, %v4612
      %v8927 = vunpack.c.l.s4 1983009808
      %v8928 = vunpack.c.0.s8 %v8927
      %v8929 = vlaneseq
      %v8930 = vshrl.u32 %v8929, 7
      %v8931 = vsub.s32 %v8928, %v8930
      %v8932 = vrot.slane %v8924, %v8931
      %v8934 = vunpack.c.l.s4 1983009808
      %v8935 = vunpack.c.0.s8 %v8934
      %v8936 = vlaneseq
      %v8937 = vshrl.u32 %v8936, 7
      %v8938 = vsub.s32 %v8935, %v8937
      %v8939 = vrot.slane %v8925, %v8938
      %v8940 = vcombine.low %v8932, %v8939
      %v8941 = vcombine.low %v4621, %v4629
      %v8942 = vcombine.low %v4628, %v4630
      %v8944 = vunpack.c.l.s4 1983009808
      %v8945 = vunpack.c.0.s8 %v8944
      %v8946 = vlaneseq
      %v8947 = vshrl.u32 %v8946, 7
      %v8948 = vsub.s32 %v8945, %v8947
      %v8949 = vrot.slane %v8941, %v8948
      %v8951 = vunpack.c.l.s4 1983009808
      %v8952 = vunpack.c.0.s8 %v8951
      %v8953 = vlaneseq
      %v8954 = vshrl.u32 %v8953, 7
      %v8955 = vsub.s32 %v8952, %v8954
      %v8956 = vrot.slane %v8942, %v8955
      %v8957 = vcombine.low %v8949, %v8956
      %v8958 = vcombine.low %v4638, %v4646
      %v8959 = vcombine.low %v4645, %v4654
      %v8961 = vunpack.c.l.s4 1983009808
      %v8962 = vunpack.c.0.s8 %v8961
      %v8963 = vlaneseq
      %v8964 = vshrl.u32 %v8963, 7
      %v8965 = vsub.s32 %v8962, %v8964
      %v8966 = vrot.slane %v8958, %v8965
      %v8968 = vunpack.c.l.s4 1983009808
      %v8969 = vunpack.c.0.s8 %v8968
      %v8970 = vlaneseq
      %v8971 = vshrl.u32 %v8970, 7
      %v8972 = vsub.s32 %v8969, %v8971
      %v8973 = vrot.slane %v8959, %v8972
      %v8974 = vcombine.low %v8966, %v8973
      %v8975 = vcombine.low %v4662, %v4661
      %v8976 = vcombine.low %v4663, %v4671
      %v8978 = vunpack.c.l.s4 1983009808
      %v8979 = vunpack.c.0.s8 %v8978
      %v8980 = vlaneseq
      %v8981 = vshrl.u32 %v8980, 7
      %v8982 = vsub.s32 %v8979, %v8981
      %v8983 = vrot.slane %v8975, %v8982
      %v8985 = vunpack.c.l.s4 1983009808
      %v8986 = vunpack.c.0.s8 %v8985
      %v8987 = vlaneseq
      %v8988 = vshrl.u32 %v8987, 7
      %v8989 = vsub.s32 %v8986, %v8988
      %v8990 = vrot.slane %v8976, %v8989
      %v8991 = vcombine.low %v8983, %v8990
      %v8992 = vcombine.low %v4679, %v4678
      %v8993 = vcombine.low %v4687, %v4695
      %v8995 = vunpack.c.l.s4 1983009808
      %v8996 = vunpack.c.0.s8 %v8995
      %v8997 = vlaneseq
      %v8998 = vshrl.u32 %v8997, 7
      %v8999 = vsub.s32 %v8996, %v8998
      %v9000 = vrot.slane %v8992, %v8999
      %v9002 = vunpack.c.l.s4 1983009808
      %v9003 = vunpack.c.0.s8 %v9002
      %v9004 = vlaneseq
      %v9005 = vshrl.u32 %v9004, 7
      %v9006 = vsub.s32 %v9003, %v9005
      %v9007 = vrot.slane %v8993, %v9006
      %v9008 = vcombine.low %v9000, %v9007
      %v9009 = vcombine.low %v4694, %v4696
      %v9010 = vcombine.low %v4704, %v4712
      %v9012 = vunpack.c.l.s4 1983009808
      %v9013 = vunpack.c.0.s8 %v9012
      %v9014 = vlaneseq
      %v9015 = vshrl.u32 %v9014, 7
      %v9016 = vsub.s32 %v9013, %v9015
      %v9017 = vrot.slane %v9009, %v9016
      %v9019 = vunpack.c.l.s4 1983009808
      %v9020 = vunpack.c.0.s8 %v9019
      %v9021 = vlaneseq
      %v9022 = vshrl.u32 %v9021, 7
      %v9023 = vsub.s32 %v9020, %v9022
      %v9024 = vrot.slane %v9010, %v9023
      %v9025 = vcombine.low %v9017, %v9024
      %v9026 = vcombine.low %v4711, %v4720
      %v9027 = vcombine.low %v4728, %v4727
      %v9029 = vunpack.c.l.s4 1983009808
      %v9030 = vunpack.c.0.s8 %v9029
      %v9031 = vlaneseq
      %v9032 = vshrl.u32 %v9031, 7
      %v9033 = vsub.s32 %v9030, %v9032
      %v9034 = vrot.slane %v9026, %v9033
      %v9036 = vunpack.c.l.s4 1983009808
      %v9037 = vunpack.c.0.s8 %v9036
      %v9038 = vlaneseq
      %v9039 = vshrl.u32 %v9038, 7
      %v9040 = vsub.s32 %v9037, %v9039
      %v9041 = vrot.slane %v9027, %v9040
      %v9042 = vcombine.low %v9034, %v9041
      %v9043 = vcombine.low %v4729, %v4737
      %v9044 = vcombine.low %v4745, %v4744
      %v9046 = vunpack.c.l.s4 1983009808
      %v9047 = vunpack.c.0.s8 %v9046
      %v9048 = vlaneseq
      %v9049 = vshrl.u32 %v9048, 7
      %v9050 = vsub.s32 %v9047, %v9049
      %v9051 = vrot.slane %v9043, %v9050
      %v9053 = vunpack.c.l.s4 1983009808
      %v9054 = vunpack.c.0.s8 %v9053
      %v9055 = vlaneseq
      %v9056 = vshrl.u32 %v9055, 7
      %v9057 = vsub.s32 %v9054, %v9056
      %v9058 = vrot.slane %v9044, %v9057
      %v9059 = vcombine.low %v9051, %v9058
      %v9060 = vcombine.low %v4753, %v4761
      %v9061 = vcombine.low %v4760, %v4762
      %v9063 = vunpack.c.l.s4 1983009808
      %v9064 = vunpack.c.0.s8 %v9063
      %v9065 = vlaneseq
      %v9066 = vshrl.u32 %v9065, 7
      %v9067 = vsub.s32 %v9064, %v9066
      %v9068 = vrot.slane %v9060, %v9067
      %v9070 = vunpack.c.l.s4 1983009808
      %v9071 = vunpack.c.0.s8 %v9070
      %v9072 = vlaneseq
      %v9073 = vshrl.u32 %v9072, 7
      %v9074 = vsub.s32 %v9071, %v9073
      %v9075 = vrot.slane %v9061, %v9074
      %v9076 = vcombine.low %v9068, %v9075
      %v9077 = vcombine.low %v4770, %v4778
      %v9078 = vcombine.low %v4777, %v4786
      %v9080 = vunpack.c.l.s4 1983009808
      %v9081 = vunpack.c.0.s8 %v9080
      %v9082 = vlaneseq
      %v9083 = vshrl.u32 %v9082, 7
      %v9084 = vsub.s32 %v9081, %v9083
      %v9085 = vrot.slane %v9077, %v9084
      %v9087 = vunpack.c.l.s4 1983009808
      %v9088 = vunpack.c.0.s8 %v9087
      %v9089 = vlaneseq
      %v9090 = vshrl.u32 %v9089, 7
      %v9091 = vsub.s32 %v9088, %v9090
      %v9092 = vrot.slane %v9078, %v9091
      %v9093 = vcombine.low %v9085, %v9092
      %v9094 = vcombine.low %v4794, %v4793
      %v9095 = vcombine.low %v4795, %v4803
      %v9097 = vunpack.c.l.s4 1983009808
      %v9098 = vunpack.c.0.s8 %v9097
      %v9099 = vlaneseq
      %v9100 = vshrl.u32 %v9099, 7
      %v9101 = vsub.s32 %v9098, %v9100
      %v9102 = vrot.slane %v9094, %v9101
      %v9104 = vunpack.c.l.s4 1983009808
      %v9105 = vunpack.c.0.s8 %v9104
      %v9106 = vlaneseq
      %v9107 = vshrl.u32 %v9106, 7
      %v9108 = vsub.s32 %v9105, %v9107
      %v9109 = vrot.slane %v9095, %v9108
      %v9110 = vcombine.low %v9102, %v9109
      %v9111 = vcombine.low %v4811, %v4810
      %v9112 = vcombine.low %v4819, %v4827
      %v9114 = vunpack.c.l.s4 1983009808
      %v9115 = vunpack.c.0.s8 %v9114
      %v9116 = vlaneseq
      %v9117 = vshrl.u32 %v9116, 7
      %v9118 = vsub.s32 %v9115, %v9117
      %v9119 = vrot.slane %v9111, %v9118
      %v9121 = vunpack.c.l.s4 1983009808
      %v9122 = vunpack.c.0.s8 %v9121
      %v9123 = vlaneseq
      %v9124 = vshrl.u32 %v9123, 7
      %v9125 = vsub.s32 %v9122, %v9124
      %v9126 = vrot.slane %v9112, %v9125
      %v9127 = vcombine.low %v9119, %v9126
      %v9128 = vcombine.low %v4826, %v4828
      %v9129 = vcombine.low %v4836, %v4844
      %v9131 = vunpack.c.l.s4 1983009808
      %v9132 = vunpack.c.0.s8 %v9131
      %v9133 = vlaneseq
      %v9134 = vshrl.u32 %v9133, 7
      %v9135 = vsub.s32 %v9132, %v9134
      %v9136 = vrot.slane %v9128, %v9135
      %v9138 = vunpack.c.l.s4 1983009808
      %v9139 = vunpack.c.0.s8 %v9138
      %v9140 = vlaneseq
      %v9141 = vshrl.u32 %v9140, 7
      %v9142 = vsub.s32 %v9139, %v9141
      %v9143 = vrot.slane %v9129, %v9142
      %v9144 = vcombine.low %v9136, %v9143
      %v9145 = vcombine.low %v4843, %v4852
      %v9146 = vcombine.low %v4860, %v4859
      %v9148 = vunpack.c.l.s4 1983009808
      %v9149 = vunpack.c.0.s8 %v9148
      %v9150 = vlaneseq
      %v9151 = vshrl.u32 %v9150, 7
      %v9152 = vsub.s32 %v9149, %v9151
      %v9153 = vrot.slane %v9145, %v9152
      %v9155 = vunpack.c.l.s4 1983009808
      %v9156 = vunpack.c.0.s8 %v9155
      %v9157 = vlaneseq
      %v9158 = vshrl.u32 %v9157, 7
      %v9159 = vsub.s32 %v9156, %v9158
      %v9160 = vrot.slane %v9146, %v9159
      %v9161 = vcombine.low %v9153, %v9160
      %v9162 = vcombine.low %v4861, %v4869
      %v9163 = vcombine.low %v4877, %v4876
      %v9165 = vunpack.c.l.s4 1983009808
      %v9166 = vunpack.c.0.s8 %v9165
      %v9167 = vlaneseq
      %v9168 = vshrl.u32 %v9167, 7
      %v9169 = vsub.s32 %v9166, %v9168
      %v9170 = vrot.slane %v9162, %v9169
      %v9172 = vunpack.c.l.s4 1983009808
      %v9173 = vunpack.c.0.s8 %v9172
      %v9174 = vlaneseq
      %v9175 = vshrl.u32 %v9174, 7
      %v9176 = vsub.s32 %v9173, %v9175
      %v9177 = vrot.slane %v9163, %v9176
      %v9178 = vcombine.low %v9170, %v9177
      %v9179 = vcombine.low %v4885, %v4893
      %v9180 = vcombine.low %v4892, %v4894
      %v9182 = vunpack.c.l.s4 1983009808
      %v9183 = vunpack.c.0.s8 %v9182
      %v9184 = vlaneseq
      %v9185 = vshrl.u32 %v9184, 7
      %v9186 = vsub.s32 %v9183, %v9185
      %v9187 = vrot.slane %v9179, %v9186
      %v9189 = vunpack.c.l.s4 1983009808
      %v9190 = vunpack.c.0.s8 %v9189
      %v9191 = vlaneseq
      %v9192 = vshrl.u32 %v9191, 7
      %v9193 = vsub.s32 %v9190, %v9192
      %v9194 = vrot.slane %v9180, %v9193
      %v9195 = vcombine.low %v9187, %v9194
      %v9196 = vcombine.low %v4902, %v4910
      %v9197 = vcombine.low %v4909, %v4918
      %v9199 = vunpack.c.l.s4 1983009808
      %v9200 = vunpack.c.0.s8 %v9199
      %v9201 = vlaneseq
      %v9202 = vshrl.u32 %v9201, 7
      %v9203 = vsub.s32 %v9200, %v9202
      %v9204 = vrot.slane %v9196, %v9203
      %v9206 = vunpack.c.l.s4 1983009808
      %v9207 = vunpack.c.0.s8 %v9206
      %v9208 = vlaneseq
      %v9209 = vshrl.u32 %v9208, 7
      %v9210 = vsub.s32 %v9207, %v9209
      %v9211 = vrot.slane %v9197, %v9210
      %v9212 = vcombine.low %v9204, %v9211
      %v9213 = vcombine.low %v4926, %v4925
      %v9214 = vcombine.low %v4927, %v4935
      %v9216 = vunpack.c.l.s4 1983009808
      %v9217 = vunpack.c.0.s8 %v9216
      %v9218 = vlaneseq
      %v9219 = vshrl.u32 %v9218, 7
      %v9220 = vsub.s32 %v9217, %v9219
      %v9221 = vrot.slane %v9213, %v9220
      %v9223 = vunpack.c.l.s4 1983009808
      %v9224 = vunpack.c.0.s8 %v9223
      %v9225 = vlaneseq
      %v9226 = vshrl.u32 %v9225, 7
      %v9227 = vsub.s32 %v9224, %v9226
      %v9228 = vrot.slane %v9214, %v9227
      %v9229 = vcombine.low %v9221, %v9228
      %v9230 = vcombine.low %v4943, %v4942
      %v9232 = vunpack.c.l.s4 1983009808
      %v9233 = vunpack.c.0.s8 %v9232
      %v9234 = vlaneseq
      %v9235 = vshrl.u32 %v9234, 7
      %v9236 = vsub.s32 %v9233, %v9235
      %v9237 = vrot.slane %v9230, %v9236
      %9238 = vrot.lane.b32.xlu0 %v8838, 32
      %v9239 = vpop.permute.xlu0 %9238
      %9240 = vrot.lane.b32.xlu0 %v8855, 32
      %v9241 = vpop.permute.xlu0 %9240
      %9242 = vrot.lane.b32.xlu0 %v8872, 32
      %v9243 = vpop.permute.xlu0 %9242
      %9244 = vrot.lane.b32.xlu0 %v8889, 32
      %v9245 = vpop.permute.xlu0 %9244
      %9246 = vrot.lane.b32.xlu0 %v8906, 32
      %v9247 = vpop.permute.xlu0 %9246
      %9248 = vrot.lane.b32.xlu0 %v8923, 32
      %v9249 = vpop.permute.xlu0 %9248
      %9250 = vrot.lane.b32.xlu0 %v8940, 32
      %v9251 = vpop.permute.xlu0 %9250
      %9252 = vrot.lane.b32.xlu0 %v8957, 32
      %v9253 = vpop.permute.xlu0 %9252
      %9254 = vrot.lane.b32.xlu0 %v8974, 32
      %v9255 = vpop.permute.xlu0 %9254
      %9256 = vrot.lane.b32.xlu0 %v8991, 32
      %v9257 = vpop.permute.xlu0 %9256
      %9258 = vrot.lane.b32.xlu0 %v9008, 32
      %v9259 = vpop.permute.xlu0 %9258
      %9260 = vrot.lane.b32.xlu0 %v9025, 32
      %v9261 = vpop.permute.xlu0 %9260
      %9262 = vrot.lane.b32.xlu0 %v9042, 32
      %v9263 = vpop.permute.xlu0 %9262
      %9264 = vrot.lane.b32.xlu0 %v9059, 32
      %v9265 = vpop.permute.xlu0 %9264
      %9266 = vrot.lane.b32.xlu0 %v9076, 32
      %v9267 = vpop.permute.xlu0 %9266
      %9268 = vrot.lane.b32.xlu0 %v9093, 32
      %v9269 = vpop.permute.xlu0 %9268
      %9270 = vrot.lane.b32.xlu0 %v9110, 32
      %v9271 = vpop.permute.xlu0 %9270
      %9272 = vrot.lane.b32.xlu0 %v9127, 32
      %v9273 = vpop.permute.xlu0 %9272
      %9274 = vrot.lane.b32.xlu0 %v9144, 32
      %v9275 = vpop.permute.xlu0 %9274
      %9276 = vrot.lane.b32.xlu0 %v9161, 32
      %v9277 = vpop.permute.xlu0 %9276
      %9278 = vrot.lane.b32.xlu0 %v9178, 32
      %v9279 = vpop.permute.xlu0 %9278
      %9280 = vrot.lane.b32.xlu0 %v9195, 32
      %v9281 = vpop.permute.xlu0 %9280
      %9282 = vrot.lane.b32.xlu0 %v9212, 32
      %v9283 = vpop.permute.xlu0 %9282
      %9284 = vrot.lane.b32.xlu0 %v9229, 32
      %v9285 = vpop.permute.xlu0 %9284
      %9286 = vrot.lane.b32.xlu0 %v9237, 32
      %v9287 = vpop.permute.xlu0 %9286
      %vm9313 = vcmask 31744
      %v9314 = vsel %vm9313, %v4960, %v5802
      %v9315 = vsel %vm9313, %v4977, %v5804
      %v9316 = vsel %vm9313, %v4994, %v5806
      %v9317 = vsel %vm9313, %v5011, %v5808
      %v9318 = vsel %vm9313, %v5028, %v5810
      %v9319 = vsel %vm9313, %v5045, %v5812
      %v9320 = vsel %vm9313, %v5062, %v5814
      %v9321 = vsel %vm9313, %v5079, %v5816
      %v9322 = vsel %vm9313, %v5096, %v5818
      %v9323 = vsel %vm9313, %v5113, %v5820
      %v9324 = vsel %vm9313, %v5130, %v5822
      %v9325 = vsel %vm9313, %v5147, %v5824
      %v9326 = vsel %vm9313, %v5164, %v5826
      %v9327 = vsel %vm9313, %v5181, %v5828
      %v9328 = vsel %vm9313, %v5198, %v5830
      %v9329 = vsel %vm9313, %v5215, %v5832
      %v9330 = vsel %vm9313, %v5232, %v5834
      %v9331 = vsel %vm9313, %v5249, %v5836
      %v9332 = vsel %vm9313, %v5266, %v5838
      %v9333 = vsel %vm9313, %v5283, %v5840
      %v9334 = vsel %vm9313, %v5300, %v5842
      %v9335 = vsel %vm9313, %v5317, %v5844
      %v9336 = vsel %vm9313, %v5334, %v5846
      %v9337 = vsel %vm9313, %v5351, %v5848
      %v9338 = vsel %vm9313, %v5359, %v5850
      %vm9339 = vcmask 64512
      %v9340 = vsel %vm9339, %v9314, %v6293
      %v9341 = vsel %vm9339, %v9315, %v6295
      %v9342 = vsel %vm9339, %v9316, %v6297
      %v9343 = vsel %vm9339, %v9317, %v6299
      %v9344 = vsel %vm9339, %v9318, %v6301
      %v9345 = vsel %vm9339, %v9319, %v6303
      %v9346 = vsel %vm9339, %v9320, %v6305
      %v9347 = vsel %vm9339, %v9321, %v6307
      %v9348 = vsel %vm9339, %v9322, %v6309
      %v9349 = vsel %vm9339, %v9323, %v6311
      %v9350 = vsel %vm9339, %v9324, %v6313
      %v9351 = vsel %vm9339, %v9325, %v6315
      %v9352 = vsel %vm9339, %v9326, %v6317
      %v9353 = vsel %vm9339, %v9327, %v6319
      %v9354 = vsel %vm9339, %v9328, %v6321
      %v9355 = vsel %vm9339, %v9329, %v6323
      %v9356 = vsel %vm9339, %v9330, %v6325
      %v9357 = vsel %vm9339, %v9331, %v6327
      %v9358 = vsel %vm9339, %v9332, %v6329
      %v9359 = vsel %vm9339, %v9333, %v6331
      %v9360 = vsel %vm9339, %v9334, %v6333
      %v9361 = vsel %vm9339, %v9335, %v6335
      %v9362 = vsel %vm9339, %v9336, %v6337
      %v9363 = vsel %vm9339, %v9337, %v6339
      %v9364 = vsel %vm9339, %v9338, %v6341
      %vm9365 = vcmask 97280
      %v9366 = vsel %vm9365, %v9340, %v6784
      %v9367 = vsel %vm9365, %v9341, %v6786
      %v9368 = vsel %vm9365, %v9342, %v6788
      %v9369 = vsel %vm9365, %v9343, %v6790
      %v9370 = vsel %vm9365, %v9344, %v6792
      %v9371 = vsel %vm9365, %v9345, %v6794
      %v9372 = vsel %vm9365, %v9346, %v6796
      %v9373 = vsel %vm9365, %v9347, %v6798
      %v9374 = vsel %vm9365, %v9348, %v6800
      %v9375 = vsel %vm9365, %v9349, %v6802
      %v9376 = vsel %vm9365, %v9350, %v6804
      %v9377 = vsel %vm9365, %v9351, %v6806
      %v9378 = vsel %vm9365, %v9352, %v6808
      %v9379 = vsel %vm9365, %v9353, %v6810
      %v9380 = vsel %vm9365, %v9354, %v6812
      %v9381 = vsel %vm9365, %v9355, %v6814
      %v9382 = vsel %vm9365, %v9356, %v6816
      %v9383 = vsel %vm9365, %v9357, %v6818
      %v9384 = vsel %vm9365, %v9358, %v6820
      %v9385 = vsel %vm9365, %v9359, %v6822
      %v9386 = vsel %vm9365, %v9360, %v6824
      %v9387 = vsel %vm9365, %v9361, %v6826
      %v9388 = vsel %vm9365, %v9362, %v6828
      %v9389 = vsel %vm9365, %v9363, %v6830
      %v9390 = vsel %vm9365, %v9364, %v6832
      %vm9391 = vcmask 130048
      %v9392 = vsel %vm9391, %v9366, %v7275
      %v9393 = vsel %vm9391, %v9367, %v7277
      %v9394 = vsel %vm9391, %v9368, %v7279
      %v9395 = vsel %vm9391, %v9369, %v7281
      %v9396 = vsel %vm9391, %v9370, %v7283
      %v9397 = vsel %vm9391, %v9371, %v7285
      %v9398 = vsel %vm9391, %v9372, %v7287
      %v9399 = vsel %vm9391, %v9373, %v7289
      %v9400 = vsel %vm9391, %v9374, %v7291
      %v9401 = vsel %vm9391, %v9375, %v7293
      %v9402 = vsel %vm9391, %v9376, %v7295
      %v9403 = vsel %vm9391, %v9377, %v7297
      %v9404 = vsel %vm9391, %v9378, %v7299
      %v9405 = vsel %vm9391, %v9379, %v7301
      %v9406 = vsel %vm9391, %v9380, %v7303
      %v9407 = vsel %vm9391, %v9381, %v7305
      %v9408 = vsel %vm9391, %v9382, %v7307
      %v9409 = vsel %vm9391, %v9383, %v7309
      %v9410 = vsel %vm9391, %v9384, %v7311
      %v9411 = vsel %vm9391, %v9385, %v7313
      %v9412 = vsel %vm9391, %v9386, %v7315
      %v9413 = vsel %vm9391, %v9387, %v7317
      %v9414 = vsel %vm9391, %v9388, %v7319
      %v9415 = vsel %vm9391, %v9389, %v7321
      %v9416 = vsel %vm9391, %v9390, %v7323
      %vm9417 = vcmask 162816
      %v9418 = vsel %vm9417, %v9392, %v7766
      %v9419 = vsel %vm9417, %v9393, %v7768
      %v9420 = vsel %vm9417, %v9394, %v7770
      %v9421 = vsel %vm9417, %v9395, %v7772
      %v9422 = vsel %vm9417, %v9396, %v7774
      %v9423 = vsel %vm9417, %v9397, %v7776
      %v9424 = vsel %vm9417, %v9398, %v7778
      %v9425 = vsel %vm9417, %v9399, %v7780
      %v9426 = vsel %vm9417, %v9400, %v7782
      %v9427 = vsel %vm9417, %v9401, %v7784
      %v9428 = vsel %vm9417, %v9402, %v7786
      %v9429 = vsel %vm9417, %v9403, %v7788
      %v9430 = vsel %vm9417, %v9404, %v7790
      %v9431 = vsel %vm9417, %v9405, %v7792
      %v9432 = vsel %vm9417, %v9406, %v7794
      %v9433 = vsel %vm9417, %v9407, %v7796
      %v9434 = vsel %vm9417, %v9408, %v7798
      %v9435 = vsel %vm9417, %v9409, %v7800
      %v9436 = vsel %vm9417, %v9410, %v7802
      %v9437 = vsel %vm9417, %v9411, %v7804
      %v9438 = vsel %vm9417, %v9412, %v7806
      %v9439 = vsel %vm9417, %v9413, %v7808
      %v9440 = vsel %vm9417, %v9414, %v7810
      %v9441 = vsel %vm9417, %v9415, %v7812
      %v9442 = vsel %vm9417, %v9416, %v7814
      %vm9443 = vcmask 195584
      %v9444 = vsel %vm9443, %v9418, %v8257
      %v9445 = vsel %vm9443, %v9419, %v8259
      %v9446 = vsel %vm9443, %v9420, %v8261
      %v9447 = vsel %vm9443, %v9421, %v8263
      %v9448 = vsel %vm9443, %v9422, %v8265
      %v9449 = vsel %vm9443, %v9423, %v8267
      %v9450 = vsel %vm9443, %v9424, %v8269
      %v9451 = vsel %vm9443, %v9425, %v8271
      %v9452 = vsel %vm9443, %v9426, %v8273
      %v9453 = vsel %vm9443, %v9427, %v8275
      %v9454 = vsel %vm9443, %v9428, %v8277
      %v9455 = vsel %vm9443, %v9429, %v8279
      %v9456 = vsel %vm9443, %v9430, %v8281
      %v9457 = vsel %vm9443, %v9431, %v8283
      %v9458 = vsel %vm9443, %v9432, %v8285
      %v9459 = vsel %vm9443, %v9433, %v8287
      %v9460 = vsel %vm9443, %v9434, %v8289
      %v9461 = vsel %vm9443, %v9435, %v8291
      %v9462 = vsel %vm9443, %v9436, %v8293
      %v9463 = vsel %vm9443, %v9437, %v8295
      %v9464 = vsel %vm9443, %v9438, %v8297
      %v9465 = vsel %vm9443, %v9439, %v8299
      %v9466 = vsel %vm9443, %v9440, %v8301
      %v9467 = vsel %vm9443, %v9441, %v8303
      %v9468 = vsel %vm9443, %v9442, %v8305
      %vm9469 = vcmask 228352
      %v9470 = vsel %vm9469, %v9444, %v8748
      %v9471 = vsel %vm9469, %v9445, %v8750
      %v9472 = vsel %vm9469, %v9446, %v8752
      %v9473 = vsel %vm9469, %v9447, %v8754
      %v9474 = vsel %vm9469, %v9448, %v8756
      %v9475 = vsel %vm9469, %v9449, %v8758
      %v9476 = vsel %vm9469, %v9450, %v8760
      %v9477 = vsel %vm9469, %v9451, %v8762
      %v9478 = vsel %vm9469, %v9452, %v8764
      %v9479 = vsel %vm9469, %v9453, %v8766
      %v9480 = vsel %vm9469, %v9454, %v8768
      %v9481 = vsel %vm9469, %v9455, %v8770
      %v9482 = vsel %vm9469, %v9456, %v8772
      %v9483 = vsel %vm9469, %v9457, %v8774
      %v9484 = vsel %vm9469, %v9458, %v8776
      %v9485 = vsel %vm9469, %v9459, %v8778
      %v9486 = vsel %vm9469, %v9460, %v8780
      %v9487 = vsel %vm9469, %v9461, %v8782
      %v9488 = vsel %vm9469, %v9462, %v8784
      %v9489 = vsel %vm9469, %v9463, %v8786
      %v9490 = vsel %vm9469, %v9464, %v8788
      %v9491 = vsel %vm9469, %v9465, %v8790
      %v9492 = vsel %vm9469, %v9466, %v8792
      %v9493 = vsel %vm9469, %v9467, %v8794
      %v9494 = vsel %vm9469, %v9468, %v8796
      %vm9495 = vcmask 261120
      %v9496 = vsel %vm9495, %v9470, %v9239
      %v9497 = vsel %vm9495, %v9471, %v9241
      %v9498 = vsel %vm9495, %v9472, %v9243
      %v9499 = vsel %vm9495, %v9473, %v9245
      %v9500 = vsel %vm9495, %v9474, %v9247
      %v9501 = vsel %vm9495, %v9475, %v9249
      %v9502 = vsel %vm9495, %v9476, %v9251
      %v9503 = vsel %vm9495, %v9477, %v9253
      %v9504 = vsel %vm9495, %v9478, %v9255
      %v9505 = vsel %vm9495, %v9479, %v9257
      %v9506 = vsel %vm9495, %v9480, %v9259
      %v9507 = vsel %vm9495, %v9481, %v9261
      %v9508 = vsel %vm9495, %v9482, %v9263
      %v9509 = vsel %vm9495, %v9483, %v9265
      %v9510 = vsel %vm9495, %v9484, %v9267
      %v9511 = vsel %vm9495, %v9485, %v9269
      %v9512 = vsel %vm9495, %v9486, %v9271
      %v9513 = vsel %vm9495, %v9487, %v9273
      %v9514 = vsel %vm9495, %v9488, %v9275
      %v9515 = vsel %vm9495, %v9489, %v9277
      %v9516 = vsel %vm9495, %v9490, %v9279
      %v9517 = vsel %vm9495, %v9491, %v9281
      %v9518 = vsel %vm9495, %v9492, %v9283
      %v9519 = vsel %vm9495, %v9493, %v9285
      %v9520 = vsel %vm9495, %v9494, %v9287
      %v9521 = vpack.c.bf16 %v9497, %v9496
      %v9522 = vpack.c.bf16 %v9499, %v9498
      %v9523 = vpack.c.bf16 %v9501, %v9500
      %v9524 = vpack.c.bf16 %v9503, %v9502
      %v9525 = vpack.c.bf16 %v9505, %v9504
      %v9526 = vpack.c.bf16 %v9507, %v9506
      %v9527 = vpack.c.bf16 %v9509, %v9508
      %v9528 = vpack.c.bf16 %v9511, %v9510
      %v9529 = vpack.c.bf16 %v9513, %v9512
      %v9530 = vpack.c.bf16 %v9515, %v9514
      %v9531 = vpack.c.bf16 %v9517, %v9516
      %v9532 = vpack.c.bf16 %v9519, %v9518
      %v9533 = vpack.c.bf16 %v9520, %v9520
      %v9534 = vld [vmem:[%s1] sm:$0xf]
      %v9535 = vld [vmem:[%s1 + $0x4] sm:$0xf]
      %v9536 = vld [vmem:[%s1 + $0x8] sm:$0xf]
      %v9537 = vld [vmem:[%s1 + $0xc] sm:$0xf]
      %v9538 = vld [vmem:[%s1 + $0x10] sm:$0x3]
      %v9544 = vunpack.c.l.b16 %v9534
      %v9545 = vunpack.c.l.b16 %v9535
      %v9546 = vunpack.c.l.b16 %v9536
      %v9547 = vunpack.c.l.b16 %v9537
      %v9548 = vunpack.c.l.b16 %v9538
      %v9549 = vpack.c.b16 %v9545, %v9544
      %v9550 = vpack.c.b16 %v9547, %v9546
      %v9551 = vpack.c.b16 %v9548, %v9548
      %vm9554 = vcmask 293888
      %v9556 = vsel %vm9554, %v9521, 0
      %v9559 = vsel %vm9554, %v9522, 0
      %v9562 = vsel %vm9554, %v9523, 0
      %v9565 = vsel %vm9554, %v9524, 0
      %v9568 = vsel %vm9554, %v9525, 0
      %v9571 = vsel %vm9554, %v9526, 0
      %v9574 = vsel %vm9554, %v9527, 0
      %v9577 = vsel %vm9554, %v9528, 0
      %v9580 = vsel %vm9554, %v9529, 0
      %v9583 = vsel %vm9554, %v9530, 0
      %v9586 = vsel %vm9554, %v9531, 0
      %v9589 = vsel %vm9554, %v9532, 0
      %v9592 = vsel %vm9554, %v9533, 0
      %vm9594 = vcmask 1041408
      %v9596 = vsel %vm9594, %v9551, 0
      %9598 = vmatprep.subr.bf16.mxu0 0
      %9599 = vmatpush1.bf16.msra.mxu0 %v9549
      %9600 = vmatprep.subr.bf16.mxu0 0
      %9601 = vmatpush1.bf16.msra.mxu0 %v9550
      %9602 = vmatprep.subr.bf16.mxu0 0
      %9603 = vmatpush1.bf16.msra.mxu0 %v9596
      %9604 = vmatprep.subr.bf16.mxu0 0
      %9605 = vmatpush1.bf16.msra.mxu0 0
      %9606 = vmatprep.subr.bf16.mxu0 0
      %9607 = vmatpush1.bf16.msra.mxu0 0
      %9608 = vmatprep.subr.bf16.mxu0 0
      %9609 = vmatpush1.bf16.msra.mxu0 0
      %9610 = vmatprep.subr.bf16.mxu0 0
      %9611 = vmatpush1.bf16.msra.mxu0 0
      %9612 = vmatprep.subr.bf16.mxu0 0
      %9613 = vmatpush1.bf16.msra.mxu0 0
      %9614 = vmatprep.subr.bf16.mxu0 0
      %9615 = vmatpush1.bf16.msra.mxu0 0
      %9616 = vmatprep.subr.bf16.mxu0 0
      %9617 = vmatpush1.bf16.msra.mxu0 0
      %9618 = vmatprep.subr.bf16.mxu0 0
      %9619 = vmatpush1.bf16.msra.mxu0 0
      %9620 = vmatprep.subr.bf16.mxu0 0
      %9621 = vmatpush1.bf16.msra.mxu0 0
      %9622 = vmatprep.subr.bf16.mxu0 0
      %9623 = vmatpush1.bf16.msra.mxu0 0
      %9624 = vmatprep.subr.bf16.mxu0 0
      %9625 = vmatpush1.bf16.msra.mxu0 0
      %9626 = vmatprep.subr.bf16.mxu0 0
      %9627 = vmatpush1.bf16.msra.mxu0 0
      %9628 = vmatprep.subr.bf16.mxu0 0
      %9629 = vmatpush1.bf16.msra.mxu0 0
      %9630 = vmatprep.mubr.bf16.mxu0 0
      %9631 = vmatmul.mubr.bf16.gmra.mrb[0].mxu0 %v9556
      %v9632 = vpop.f32.mrb[0].mxu0
      %v9633 = vadd.f32 0.0, %v9632
      %v9634 = vpop.f32.mrb[0].mxu0
      %v9635 = vpop.f32.mrb[0].mxu0
      %v9636 = vadd.f32 0.0, %v9635
      %v9637 = vpop.f32.mrb[0].mxu0
      %9638 = vmatprep.mubr.bf16.mxu0 0
      %9639 = vmatmul.mubr.bf16.gmra.mrb[0].mxu0 %v9559
      %v9640 = vpop.f32.mrb[0].mxu0
      %v9641 = vadd.f32 0.0, %v9640
      %v9642 = vpop.f32.mrb[0].mxu0
      %v9643 = vpop.f32.mrb[0].mxu0
      %v9644 = vadd.f32 0.0, %v9643
      %v9645 = vpop.f32.mrb[0].mxu0
      %9646 = vmatprep.mubr.bf16.mxu0 0
      %9647 = vmatmul.mubr.bf16.gmra.mrb[0].mxu0 %v9562
      %v9648 = vpop.f32.mrb[0].mxu0
      %v9649 = vadd.f32 0.0, %v9648
      %v9650 = vpop.f32.mrb[0].mxu0
      %v9651 = vpop.f32.mrb[0].mxu0
      %v9652 = vadd.f32 0.0, %v9651
      %v9653 = vpop.f32.mrb[0].mxu0
      %9654 = vmatprep.mubr.bf16.mxu0 0
      %9655 = vmatmul.mubr.bf16.gmra.mrb[0].mxu0 %v9565
      %v9656 = vpop.f32.mrb[0].mxu0
      %v9657 = vadd.f32 0.0, %v9656
      %v9658 = vpop.f32.mrb[0].mxu0
      %v9659 = vpop.f32.mrb[0].mxu0
      %v9660 = vadd.f32 0.0, %v9659
      %v9661 = vpop.f32.mrb[0].mxu0
      %9662 = vmatprep.mubr.bf16.mxu0 0
      %9663 = vmatmul.mubr.bf16.gmra.mrb[0].mxu0 %v9568
      %v9664 = vpop.f32.mrb[0].mxu0
      %v9665 = vadd.f32 0.0, %v9664
      %v9666 = vpop.f32.mrb[0].mxu0
      %v9667 = vpop.f32.mrb[0].mxu0
      %v9668 = vadd.f32 0.0, %v9667
      %v9669 = vpop.f32.mrb[0].mxu0
      %9670 = vmatprep.mubr.bf16.mxu0 0
      %9671 = vmatmul.mubr.bf16.gmra.mrb[0].mxu0 %v9571
      %v9672 = vpop.f32.mrb[0].mxu0
      %v9673 = vadd.f32 0.0, %v9672
      %v9674 = vpop.f32.mrb[0].mxu0
      %v9675 = vpop.f32.mrb[0].mxu0
      %v9676 = vadd.f32 0.0, %v9675
      %v9677 = vpop.f32.mrb[0].mxu0
      %9678 = vmatprep.mubr.bf16.mxu0 0
      %9679 = vmatmul.mubr.bf16.gmra.mrb[0].mxu0 %v9574
      %v9680 = vpop.f32.mrb[0].mxu0
      %v9681 = vadd.f32 0.0, %v9680
      %v9682 = vpop.f32.mrb[0].mxu0
      %v9683 = vpop.f32.mrb[0].mxu0
      %v9684 = vadd.f32 0.0, %v9683
      %v9685 = vpop.f32.mrb[0].mxu0
      %9686 = vmatprep.mubr.bf16.mxu0 0
      %9687 = vmatmul.mubr.bf16.gmra.mrb[0].mxu0 %v9577
      %v9688 = vpop.f32.mrb[0].mxu0
      %v9689 = vadd.f32 0.0, %v9688
      %v9690 = vpop.f32.mrb[0].mxu0
      %v9691 = vpop.f32.mrb[0].mxu0
      %v9692 = vadd.f32 0.0, %v9691
      %v9693 = vpop.f32.mrb[0].mxu0
      %9694 = vmatprep.mubr.bf16.mxu0 0
      %9695 = vmatmul.mubr.bf16.gmra.mrb[0].mxu0 %v9580
      %v9696 = vpop.f32.mrb[0].mxu0
      %v9697 = vadd.f32 0.0, %v9696
      %v9698 = vpop.f32.mrb[0].mxu0
      %v9699 = vpop.f32.mrb[0].mxu0
      %v9700 = vadd.f32 0.0, %v9699
      %v9701 = vpop.f32.mrb[0].mxu0
      %9702 = vmatprep.mubr.bf16.mxu0 0
      %9703 = vmatmul.mubr.bf16.gmra.mrb[0].mxu0 %v9583
      %v9704 = vpop.f32.mrb[0].mxu0
      %v9705 = vadd.f32 0.0, %v9704
      %v9706 = vpop.f32.mrb[0].mxu0
      %v9707 = vpop.f32.mrb[0].mxu0
      %v9708 = vadd.f32 0.0, %v9707
      %v9709 = vpop.f32.mrb[0].mxu0
      %9710 = vmatprep.mubr.bf16.mxu0 0
      %9711 = vmatmul.mubr.bf16.gmra.mrb[0].mxu0 %v9586
      %v9712 = vpop.f32.mrb[0].mxu0
      %v9713 = vadd.f32 0.0, %v9712
      %v9714 = vpop.f32.mrb[0].mxu0
      %v9715 = vpop.f32.mrb[0].mxu0
      %v9716 = vadd.f32 0.0, %v9715
      %v9717 = vpop.f32.mrb[0].mxu0
      %9718 = vmatprep.mubr.bf16.mxu0 0
      %9719 = vmatmul.mubr.bf16.gmra.mrb[0].mxu0 %v9589
      %v9720 = vpop.f32.mrb[0].mxu0
      %v9721 = vadd.f32 0.0, %v9720
      %v9722 = vpop.f32.mrb[0].mxu0
      %v9723 = vpop.f32.mrb[0].mxu0
      %v9724 = vadd.f32 0.0, %v9723
      %v9725 = vpop.f32.mrb[0].mxu0
      %9726 = vmatprep.mubr.bf16.mxu0 0
      %9727 = vmatmul.mubr.bf16.gmra.mrb[0].mxu0 %v9592
      %v9728 = vpop.f32.mrb[0].mxu0
      %v9729 = vadd.f32 0.0, %v9728
      %v9730 = vpop.f32.mrb[0].mxu0
      %v9731 = vpop.f32.mrb[0].mxu0
      %v9732 = vpop.f32.mrb[0].mxu0
      %9733 = vdwg.mxu0
      %v9734 = vld [vmem:[%s2] sm:$0x1]
      %v9736 = vlaneseq
      %v9737 = vshrl.u32 %v9736, 7
      %v9738 = vsub.s32 0, %v9737
      %v9739 = vrot.slane %v9734, %v9738
      %v9741 = vmul.f32 %v9633, %v9739
      %v9742 = vmul.f32 %v9636, %v9739
      %v9743 = vmul.f32 %v9641, %v9739
      %v9744 = vmul.f32 %v9644, %v9739
      %v9745 = vmul.f32 %v9649, %v9739
      %v9746 = vmul.f32 %v9652, %v9739
      %v9747 = vmul.f32 %v9657, %v9739
      %v9748 = vmul.f32 %v9660, %v9739
      %v9749 = vmul.f32 %v9665, %v9739
      %v9750 = vmul.f32 %v9668, %v9739
      %v9751 = vmul.f32 %v9673, %v9739
      %v9752 = vmul.f32 %v9676, %v9739
      %v9753 = vmul.f32 %v9681, %v9739
      %v9754 = vmul.f32 %v9684, %v9739
      %v9755 = vmul.f32 %v9689, %v9739
      %v9756 = vmul.f32 %v9692, %v9739
      %v9757 = vmul.f32 %v9697, %v9739
      %v9758 = vmul.f32 %v9700, %v9739
      %v9759 = vmul.f32 %v9705, %v9739
      %v9760 = vmul.f32 %v9708, %v9739
      %v9761 = vmul.f32 %v9713, %v9739
      %v9762 = vmul.f32 %v9716, %v9739
      %v9763 = vmul.f32 %v9721, %v9739
      %v9764 = vmul.f32 %v9724, %v9739
      %v9765 = vmul.f32 %v9729, %v9739
      %v9766 = vld [vmem:[%s3] sm:$0x1]
      %v9768 = vlaneseq
      %v9769 = vshrl.u32 %v9768, 7
      %v9770 = vsub.s32 0, %v9769
      %v9771 = vrot.slane %v9766, %v9770
      %v9773 = vadd.f32 %v9741, %v9771
      %v9774 = vadd.f32 %v9742, %v9771
      %v9775 = vadd.f32 %v9743, %v9771
      %v9776 = vadd.f32 %v9744, %v9771
      %v9777 = vadd.f32 %v9745, %v9771
      %v9778 = vadd.f32 %v9746, %v9771
      %v9779 = vadd.f32 %v9747, %v9771
      %v9780 = vadd.f32 %v9748, %v9771
      %v9781 = vadd.f32 %v9749, %v9771
      %v9782 = vadd.f32 %v9750, %v9771
      %v9783 = vadd.f32 %v9751, %v9771
      %v9784 = vadd.f32 %v9752, %v9771
      %v9785 = vadd.f32 %v9753, %v9771
      %v9786 = vadd.f32 %v9754, %v9771
      %v9787 = vadd.f32 %v9755, %v9771
      %v9788 = vadd.f32 %v9756, %v9771
      %v9789 = vadd.f32 %v9757, %v9771
      %v9790 = vadd.f32 %v9758, %v9771
      %v9791 = vadd.f32 %v9759, %v9771
      %v9792 = vadd.f32 %v9760, %v9771
      %v9793 = vadd.f32 %v9761, %v9771
      %v9794 = vadd.f32 %v9762, %v9771
      %v9795 = vadd.f32 %v9763, %v9771
      %v9796 = vadd.f32 %v9764, %v9771
      %v9797 = vadd.f32 %v9765, %v9771
      %v9798 = vmax.f32 %v9773, 0.0
      %v9799 = vmax.f32 %v9774, 0.0
      %v9800 = vmax.f32 %v9775, 0.0
      %v9801 = vmax.f32 %v9776, 0.0
      %v9802 = vmax.f32 %v9777, 0.0
      %v9803 = vmax.f32 %v9778, 0.0
      %v9804 = vmax.f32 %v9779, 0.0
      %v9805 = vmax.f32 %v9780, 0.0
      %v9806 = vmax.f32 %v9781, 0.0
      %v9807 = vmax.f32 %v9782, 0.0
      %v9808 = vmax.f32 %v9783, 0.0
      %v9809 = vmax.f32 %v9784, 0.0
      %v9810 = vmax.f32 %v9785, 0.0
      %v9811 = vmax.f32 %v9786, 0.0
      %v9812 = vmax.f32 %v9787, 0.0
      %v9813 = vmax.f32 %v9788, 0.0
      %v9814 = vmax.f32 %v9789, 0.0
      %v9815 = vmax.f32 %v9790, 0.0
      %v9816 = vmax.f32 %v9791, 0.0
      %v9817 = vmax.f32 %v9792, 0.0
      %v9818 = vmax.f32 %v9793, 0.0
      %v9819 = vmax.f32 %v9794, 0.0
      %v9820 = vmax.f32 %v9795, 0.0
      %v9821 = vmax.f32 %v9796, 0.0
      %v9822 = vmax.f32 %v9797, 0.0
      %v9848 = vcombine.high %v9798, %v9798
      %v9850 = vunpack.c.l.s4 1983009808
      %v9851 = vunpack.c.0.s8 %v9850
      %v9852 = vlaneseq
      %v9853 = vshrl.u32 %v9852, 7
      %v9854 = vsub.s32 %v9851, %v9853
      %v9855 = vrot.slane %v9798, %v9854
      %v9857 = vunpack.c.l.s4 1983009808
      %v9858 = vunpack.c.0.s8 %v9857
      %v9859 = vlaneseq
      %v9860 = vshrl.u32 %v9859, 7
      %v9861 = vsub.s32 %v9858, %v9860
      %v9862 = vrot.slane %v9848, %v9861
      %v9863 = vcombine.high %v9855, %v9855
      %v9864 = vcombine.high %v9862, %v9862
      %v9865 = vcombine.high %v9799, %v9799
      %v9867 = vunpack.c.l.s4 1983009808
      %v9868 = vunpack.c.0.s8 %v9867
      %v9869 = vlaneseq
      %v9870 = vshrl.u32 %v9869, 7
      %v9871 = vsub.s32 %v9868, %v9870
      %v9872 = vrot.slane %v9799, %v9871
      %v9874 = vunpack.c.l.s4 1983009808
      %v9875 = vunpack.c.0.s8 %v9874
      %v9876 = vlaneseq
      %v9877 = vshrl.u32 %v9876, 7
      %v9878 = vsub.s32 %v9875, %v9877
      %v9879 = vrot.slane %v9865, %v9878
      %v9880 = vcombine.high %v9872, %v9872
      %v9881 = vcombine.high %v9879, %v9879
      %v9882 = vcombine.high %v9800, %v9800
      %v9884 = vunpack.c.l.s4 1983009808
      %v9885 = vunpack.c.0.s8 %v9884
      %v9886 = vlaneseq
      %v9887 = vshrl.u32 %v9886, 7
      %v9888 = vsub.s32 %v9885, %v9887
      %v9889 = vrot.slane %v9800, %v9888
      %v9891 = vunpack.c.l.s4 1983009808
      %v9892 = vunpack.c.0.s8 %v9891
      %v9893 = vlaneseq
      %v9894 = vshrl.u32 %v9893, 7
      %v9895 = vsub.s32 %v9892, %v9894
      %v9896 = vrot.slane %v9882, %v9895
      %v9897 = vcombine.high %v9889, %v9889
      %v9898 = vcombine.high %v9896, %v9896
      %v9899 = vcombine.high %v9801, %v9801
      %v9901 = vunpack.c.l.s4 1983009808
      %v9902 = vunpack.c.0.s8 %v9901
      %v9903 = vlaneseq
      %v9904 = vshrl.u32 %v9903, 7
      %v9905 = vsub.s32 %v9902, %v9904
      %v9906 = vrot.slane %v9801, %v9905
      %v9908 = vunpack.c.l.s4 1983009808
      %v9909 = vunpack.c.0.s8 %v9908
      %v9910 = vlaneseq
      %v9911 = vshrl.u32 %v9910, 7
      %v9912 = vsub.s32 %v9909, %v9911
      %v9913 = vrot.slane %v9899, %v9912
      %v9914 = vcombine.high %v9906, %v9906
      %v9915 = vcombine.high %v9913, %v9913
      %v9916 = vcombine.high %v9802, %v9802
      %v9918 = vunpack.c.l.s4 1983009808
      %v9919 = vunpack.c.0.s8 %v9918
      %v9920 = vlaneseq
      %v9921 = vshrl.u32 %v9920, 7
      %v9922 = vsub.s32 %v9919, %v9921
      %v9923 = vrot.slane %v9802, %v9922
      %v9925 = vunpack.c.l.s4 1983009808
      %v9926 = vunpack.c.0.s8 %v9925
      %v9927 = vlaneseq
      %v9928 = vshrl.u32 %v9927, 7
      %v9929 = vsub.s32 %v9926, %v9928
      %v9930 = vrot.slane %v9916, %v9929
      %v9931 = vcombine.high %v9923, %v9923
      %v9932 = vcombine.high %v9930, %v9930
      %v9933 = vcombine.high %v9803, %v9803
      %v9935 = vunpack.c.l.s4 1983009808
      %v9936 = vunpack.c.0.s8 %v9935
      %v9937 = vlaneseq
      %v9938 = vshrl.u32 %v9937, 7
      %v9939 = vsub.s32 %v9936, %v9938
      %v9940 = vrot.slane %v9803, %v9939
      %v9942 = vunpack.c.l.s4 1983009808
      %v9943 = vunpack.c.0.s8 %v9942
      %v9944 = vlaneseq
      %v9945 = vshrl.u32 %v9944, 7
      %v9946 = vsub.s32 %v9943, %v9945
      %v9947 = vrot.slane %v9933, %v9946
      %v9948 = vcombine.high %v9940, %v9940
      %v9949 = vcombine.high %v9947, %v9947
      %v9950 = vcombine.high %v9804, %v9804
      %v9952 = vunpack.c.l.s4 1983009808
      %v9953 = vunpack.c.0.s8 %v9952
      %v9954 = vlaneseq
      %v9955 = vshrl.u32 %v9954, 7
      %v9956 = vsub.s32 %v9953, %v9955
      %v9957 = vrot.slane %v9804, %v9956
      %v9959 = vunpack.c.l.s4 1983009808
      %v9960 = vunpack.c.0.s8 %v9959
      %v9961 = vlaneseq
      %v9962 = vshrl.u32 %v9961, 7
      %v9963 = vsub.s32 %v9960, %v9962
      %v9964 = vrot.slane %v9950, %v9963
      %v9965 = vcombine.high %v9957, %v9957
      %v9966 = vcombine.high %v9964, %v9964
      %v9967 = vcombine.high %v9805, %v9805
      %v9969 = vunpack.c.l.s4 1983009808
      %v9970 = vunpack.c.0.s8 %v9969
      %v9971 = vlaneseq
      %v9972 = vshrl.u32 %v9971, 7
      %v9973 = vsub.s32 %v9970, %v9972
      %v9974 = vrot.slane %v9805, %v9973
      %v9976 = vunpack.c.l.s4 1983009808
      %v9977 = vunpack.c.0.s8 %v9976
      %v9978 = vlaneseq
      %v9979 = vshrl.u32 %v9978, 7
      %v9980 = vsub.s32 %v9977, %v9979
      %v9981 = vrot.slane %v9967, %v9980
      %v9982 = vcombine.high %v9974, %v9974
      %v9983 = vcombine.high %v9981, %v9981
      %v9984 = vcombine.high %v9806, %v9806
      %v9986 = vunpack.c.l.s4 1983009808
      %v9987 = vunpack.c.0.s8 %v9986
      %v9988 = vlaneseq
      %v9989 = vshrl.u32 %v9988, 7
      %v9990 = vsub.s32 %v9987, %v9989
      %v9991 = vrot.slane %v9806, %v9990
      %v9993 = vunpack.c.l.s4 1983009808
      %v9994 = vunpack.c.0.s8 %v9993
      %v9995 = vlaneseq
      %v9996 = vshrl.u32 %v9995, 7
      %v9997 = vsub.s32 %v9994, %v9996
      %v9998 = vrot.slane %v9984, %v9997
      %v9999 = vcombine.high %v9991, %v9991
      %v10000 = vcombine.high %v9998, %v9998
      %v10001 = vcombine.high %v9807, %v9807
      %v10003 = vunpack.c.l.s4 1983009808
      %v10004 = vunpack.c.0.s8 %v10003
      %v10005 = vlaneseq
      %v10006 = vshrl.u32 %v10005, 7
      %v10007 = vsub.s32 %v10004, %v10006
      %v10008 = vrot.slane %v9807, %v10007
      %v10010 = vunpack.c.l.s4 1983009808
      %v10011 = vunpack.c.0.s8 %v10010
      %v10012 = vlaneseq
      %v10013 = vshrl.u32 %v10012, 7
      %v10014 = vsub.s32 %v10011, %v10013
      %v10015 = vrot.slane %v10001, %v10014
      %v10016 = vcombine.high %v10008, %v10008
      %v10017 = vcombine.high %v10015, %v10015
      %v10018 = vcombine.high %v9808, %v9808
      %v10020 = vunpack.c.l.s4 1983009808
      %v10021 = vunpack.c.0.s8 %v10020
      %v10022 = vlaneseq
      %v10023 = vshrl.u32 %v10022, 7
      %v10024 = vsub.s32 %v10021, %v10023
      %v10025 = vrot.slane %v9808, %v10024
      %v10027 = vunpack.c.l.s4 1983009808
      %v10028 = vunpack.c.0.s8 %v10027
      %v10029 = vlaneseq
      %v10030 = vshrl.u32 %v10029, 7
      %v10031 = vsub.s32 %v10028, %v10030
      %v10032 = vrot.slane %v10018, %v10031
      %v10033 = vcombine.high %v10025, %v10025
      %v10034 = vcombine.high %v10032, %v10032
      %v10035 = vcombine.high %v9809, %v9809
      %v10037 = vunpack.c.l.s4 1983009808
      %v10038 = vunpack.c.0.s8 %v10037
      %v10039 = vlaneseq
      %v10040 = vshrl.u32 %v10039, 7
      %v10041 = vsub.s32 %v10038, %v10040
      %v10042 = vrot.slane %v9809, %v10041
      %v10044 = vunpack.c.l.s4 1983009808
      %v10045 = vunpack.c.0.s8 %v10044
      %v10046 = vlaneseq
      %v10047 = vshrl.u32 %v10046, 7
      %v10048 = vsub.s32 %v10045, %v10047
      %v10049 = vrot.slane %v10035, %v10048
      %v10050 = vcombine.high %v10042, %v10042
      %v10051 = vcombine.high %v10049, %v10049
      %v10052 = vcombine.high %v9810, %v9810
      %v10054 = vunpack.c.l.s4 1983009808
      %v10055 = vunpack.c.0.s8 %v10054
      %v10056 = vlaneseq
      %v10057 = vshrl.u32 %v10056, 7
      %v10058 = vsub.s32 %v10055, %v10057
      %v10059 = vrot.slane %v9810, %v10058
      %v10061 = vunpack.c.l.s4 1983009808
      %v10062 = vunpack.c.0.s8 %v10061
      %v10063 = vlaneseq
      %v10064 = vshrl.u32 %v10063, 7
      %v10065 = vsub.s32 %v10062, %v10064
      %v10066 = vrot.slane %v10052, %v10065
      %v10067 = vcombine.high %v10059, %v10059
      %v10068 = vcombine.high %v10066, %v10066
      %v10069 = vcombine.high %v9811, %v9811
      %v10071 = vunpack.c.l.s4 1983009808
      %v10072 = vunpack.c.0.s8 %v10071
      %v10073 = vlaneseq
      %v10074 = vshrl.u32 %v10073, 7
      %v10075 = vsub.s32 %v10072, %v10074
      %v10076 = vrot.slane %v9811, %v10075
      %v10078 = vunpack.c.l.s4 1983009808
      %v10079 = vunpack.c.0.s8 %v10078
      %v10080 = vlaneseq
      %v10081 = vshrl.u32 %v10080, 7
      %v10082 = vsub.s32 %v10079, %v10081
      %v10083 = vrot.slane %v10069, %v10082
      %v10084 = vcombine.high %v10076, %v10076
      %v10085 = vcombine.high %v10083, %v10083
      %v10086 = vcombine.high %v9812, %v9812
      %v10088 = vunpack.c.l.s4 1983009808
      %v10089 = vunpack.c.0.s8 %v10088
      %v10090 = vlaneseq
      %v10091 = vshrl.u32 %v10090, 7
      %v10092 = vsub.s32 %v10089, %v10091
      %v10093 = vrot.slane %v9812, %v10092
      %v10095 = vunpack.c.l.s4 1983009808
      %v10096 = vunpack.c.0.s8 %v10095
      %v10097 = vlaneseq
      %v10098 = vshrl.u32 %v10097, 7
      %v10099 = vsub.s32 %v10096, %v10098
      %v10100 = vrot.slane %v10086, %v10099
      %v10101 = vcombine.high %v10093, %v10093
      %v10102 = vcombine.high %v10100, %v10100
      %v10103 = vcombine.high %v9813, %v9813
      %v10105 = vunpack.c.l.s4 1983009808
      %v10106 = vunpack.c.0.s8 %v10105
      %v10107 = vlaneseq
      %v10108 = vshrl.u32 %v10107, 7
      %v10109 = vsub.s32 %v10106, %v10108
      %v10110 = vrot.slane %v9813, %v10109
      %v10112 = vunpack.c.l.s4 1983009808
      %v10113 = vunpack.c.0.s8 %v10112
      %v10114 = vlaneseq
      %v10115 = vshrl.u32 %v10114, 7
      %v10116 = vsub.s32 %v10113, %v10115
      %v10117 = vrot.slane %v10103, %v10116
      %v10118 = vcombine.high %v10110, %v10110
      %v10119 = vcombine.high %v10117, %v10117
      %v10120 = vcombine.high %v9814, %v9814
      %v10122 = vunpack.c.l.s4 1983009808
      %v10123 = vunpack.c.0.s8 %v10122
      %v10124 = vlaneseq
      %v10125 = vshrl.u32 %v10124, 7
      %v10126 = vsub.s32 %v10123, %v10125
      %v10127 = vrot.slane %v9814, %v10126
      %v10129 = vunpack.c.l.s4 1983009808
      %v10130 = vunpack.c.0.s8 %v10129
      %v10131 = vlaneseq
      %v10132 = vshrl.u32 %v10131, 7
      %v10133 = vsub.s32 %v10130, %v10132
      %v10134 = vrot.slane %v10120, %v10133
      %v10135 = vcombine.high %v10127, %v10127
      %v10136 = vcombine.high %v10134, %v10134
      %v10137 = vcombine.high %v9815, %v9815
      %v10139 = vunpack.c.l.s4 1983009808
      %v10140 = vunpack.c.0.s8 %v10139
      %v10141 = vlaneseq
      %v10142 = vshrl.u32 %v10141, 7
      %v10143 = vsub.s32 %v10140, %v10142
      %v10144 = vrot.slane %v9815, %v10143
      %v10146 = vunpack.c.l.s4 1983009808
      %v10147 = vunpack.c.0.s8 %v10146
      %v10148 = vlaneseq
      %v10149 = vshrl.u32 %v10148, 7
      %v10150 = vsub.s32 %v10147, %v10149
      %v10151 = vrot.slane %v10137, %v10150
      %v10152 = vcombine.high %v10144, %v10144
      %v10153 = vcombine.high %v10151, %v10151
      %v10154 = vcombine.high %v9816, %v9816
      %v10156 = vunpack.c.l.s4 1983009808
      %v10157 = vunpack.c.0.s8 %v10156
      %v10158 = vlaneseq
      %v10159 = vshrl.u32 %v10158, 7
      %v10160 = vsub.s32 %v10157, %v10159
      %v10161 = vrot.slane %v9816, %v10160
      %v10163 = vunpack.c.l.s4 1983009808
      %v10164 = vunpack.c.0.s8 %v10163
      %v10165 = vlaneseq
      %v10166 = vshrl.u32 %v10165, 7
      %v10167 = vsub.s32 %v10164, %v10166
      %v10168 = vrot.slane %v10154, %v10167
      %v10169 = vcombine.high %v10161, %v10161
      %v10170 = vcombine.high %v10168, %v10168
      %v10171 = vcombine.high %v9817, %v9817
      %v10173 = vunpack.c.l.s4 1983009808
      %v10174 = vunpack.c.0.s8 %v10173
      %v10175 = vlaneseq
      %v10176 = vshrl.u32 %v10175, 7
      %v10177 = vsub.s32 %v10174, %v10176
      %v10178 = vrot.slane %v9817, %v10177
      %v10180 = vunpack.c.l.s4 1983009808
      %v10181 = vunpack.c.0.s8 %v10180
      %v10182 = vlaneseq
      %v10183 = vshrl.u32 %v10182, 7
      %v10184 = vsub.s32 %v10181, %v10183
      %v10185 = vrot.slane %v10171, %v10184
      %v10186 = vcombine.high %v10178, %v10178
      %v10187 = vcombine.high %v10185, %v10185
      %v10188 = vcombine.high %v9818, %v9818
      %v10190 = vunpack.c.l.s4 1983009808
      %v10191 = vunpack.c.0.s8 %v10190
      %v10192 = vlaneseq
      %v10193 = vshrl.u32 %v10192, 7
      %v10194 = vsub.s32 %v10191, %v10193
      %v10195 = vrot.slane %v9818, %v10194
      %v10197 = vunpack.c.l.s4 1983009808
      %v10198 = vunpack.c.0.s8 %v10197
      %v10199 = vlaneseq
      %v10200 = vshrl.u32 %v10199, 7
      %v10201 = vsub.s32 %v10198, %v10200
      %v10202 = vrot.slane %v10188, %v10201
      %v10203 = vcombine.high %v10195, %v10195
      %v10204 = vcombine.high %v10202, %v10202
      %v10205 = vcombine.high %v9819, %v9819
      %v10207 = vunpack.c.l.s4 1983009808
      %v10208 = vunpack.c.0.s8 %v10207
      %v10209 = vlaneseq
      %v10210 = vshrl.u32 %v10209, 7
      %v10211 = vsub.s32 %v10208, %v10210
      %v10212 = vrot.slane %v9819, %v10211
      %v10214 = vunpack.c.l.s4 1983009808
      %v10215 = vunpack.c.0.s8 %v10214
      %v10216 = vlaneseq
      %v10217 = vshrl.u32 %v10216, 7
      %v10218 = vsub.s32 %v10215, %v10217
      %v10219 = vrot.slane %v10205, %v10218
      %v10220 = vcombine.high %v10212, %v10212
      %v10221 = vcombine.high %v10219, %v10219
      %v10222 = vcombine.high %v9820, %v9820
      %v10224 = vunpack.c.l.s4 1983009808
      %v10225 = vunpack.c.0.s8 %v10224
      %v10226 = vlaneseq
      %v10227 = vshrl.u32 %v10226, 7
      %v10228 = vsub.s32 %v10225, %v10227
      %v10229 = vrot.slane %v9820, %v10228
      %v10231 = vunpack.c.l.s4 1983009808
      %v10232 = vunpack.c.0.s8 %v10231
      %v10233 = vlaneseq
      %v10234 = vshrl.u32 %v10233, 7
      %v10235 = vsub.s32 %v10232, %v10234
      %v10236 = vrot.slane %v10222, %v10235
      %v10237 = vcombine.high %v10229, %v10229
      %v10238 = vcombine.high %v10236, %v10236
      %v10239 = vcombine.high %v9821, %v9821
      %v10241 = vunpack.c.l.s4 1983009808
      %v10242 = vunpack.c.0.s8 %v10241
      %v10243 = vlaneseq
      %v10244 = vshrl.u32 %v10243, 7
      %v10245 = vsub.s32 %v10242, %v10244
      %v10246 = vrot.slane %v9821, %v10245
      %v10248 = vunpack.c.l.s4 1983009808
      %v10249 = vunpack.c.0.s8 %v10248
      %v10250 = vlaneseq
      %v10251 = vshrl.u32 %v10250, 7
      %v10252 = vsub.s32 %v10249, %v10251
      %v10253 = vrot.slane %v10239, %v10252
      %v10254 = vcombine.high %v10246, %v10246
      %v10255 = vcombine.high %v10253, %v10253
      %v10257 = vunpack.c.l.s4 1983009808
      %v10258 = vunpack.c.0.s8 %v10257
      %v10259 = vlaneseq
      %v10260 = vshrl.u32 %v10259, 7
      %v10261 = vsub.s32 %v10258, %v10260
      %v10262 = vrot.slane %v9822, %v10261
      %v10263 = vcombine.high %v10262, %v10262
      %vm10264 = vcmask 1040384
      %vm10265 = vcmask 1042434
      %vm10266 = vmor %vm10264, %vm10265
      %vm10267 = vcmask 1044484
      %vm10268 = vmor %vm10266, %vm10267
      %vm10269 = vcmask 1046534
      %vm10270 = vmor %vm10268, %vm10269
      %v10271 = vrot.slane %v9855, 7
      %v10272 = vrot.slane %v10271, 2
      %v10273 = vrot.slane %v9863, 7
      %v10274 = vsel %vm10270, %v10272, %v10273
      %v10275 = vrot.slane %v10273, 2
      %v10276 = vrot.slane %v9862, 7
      %v10277 = vsel %vm10270, %v10275, %v10276
      %v10278 = vrot.slane %v10276, 2
      %v10279 = vrot.slane %v9864, 7
      %v10280 = vsel %vm10270, %v10278, %v10279
      %v10281 = vrot.slane %v10279, 2
      %v10282 = vrot.slane %v9872, 7
      %v10283 = vsel %vm10270, %v10281, %v10282
      %v10284 = vrot.slane %v10282, 2
      %v10285 = vrot.slane %v9880, 7
      %v10286 = vsel %vm10270, %v10284, %v10285
      %v10287 = vrot.slane %v10285, 2
      %v10288 = vrot.slane %v9879, 7
      %v10289 = vsel %vm10270, %v10287, %v10288
      %v10290 = vrot.slane %v9881, 7
      %v10291 = vrot.slane %v10290, 2
      %v10292 = vrot.slane %v9889, 7
      %v10293 = vsel %vm10270, %v10291, %v10292
      %v10294 = vrot.slane %v10292, 2
      %v10295 = vrot.slane %v9897, 7
      %v10296 = vsel %vm10270, %v10294, %v10295
      %v10297 = vrot.slane %v10295, 2
      %v10298 = vrot.slane %v9896, 7
      %v10299 = vsel %vm10270, %v10297, %v10298
      %v10300 = vrot.slane %v10298, 2
      %v10301 = vrot.slane %v9898, 7
      %v10302 = vsel %vm10270, %v10300, %v10301
      %v10303 = vrot.slane %v10301, 2
      %v10304 = vrot.slane %v9906, 7
      %v10305 = vsel %vm10270, %v10303, %v10304
      %v10306 = vrot.slane %v10304, 2
      %v10307 = vrot.slane %v9914, 7
      %v10308 = vsel %vm10270, %v10306, %v10307
      %v10309 = vrot.slane %v9913, 7
      %v10310 = vrot.slane %v10309, 2
      %v10311 = vrot.slane %v9915, 7
      %v10312 = vsel %vm10270, %v10310, %v10311
      %v10313 = vrot.slane %v10311, 2
      %v10314 = vrot.slane %v9923, 7
      %v10315 = vsel %vm10270, %v10313, %v10314
      %v10316 = vrot.slane %v10314, 2
      %v10317 = vrot.slane %v9931, 7
      %v10318 = vsel %vm10270, %v10316, %v10317
      %v10319 = vrot.slane %v10317, 2
      %v10320 = vrot.slane %v9930, 7
      %v10321 = vsel %vm10270, %v10319, %v10320
      %v10322 = vrot.slane %v10320, 2
      %v10323 = vrot.slane %v9932, 7
      %v10324 = vsel %vm10270, %v10322, %v10323
      %v10325 = vrot.slane %v10323, 2
      %v10326 = vrot.slane %v9940, 7
      %v10327 = vsel %vm10270, %v10325, %v10326
      %v10328 = vrot.slane %v9948, 7
      %v10329 = vrot.slane %v10328, 2
      %v10330 = vrot.slane %v9947, 7
      %v10331 = vsel %vm10270, %v10329, %v10330
      %v10332 = vrot.slane %v10330, 2
      %v10333 = vrot.slane %v9949, 7
      %v10334 = vsel %vm10270, %v10332, %v10333
      %v10335 = vrot.slane %v10333, 2
      %v10336 = vrot.slane %v9957, 7
      %v10337 = vsel %vm10270, %v10335, %v10336
      %v10338 = vrot.slane %v10336, 2
      %v10339 = vrot.slane %v9965, 7
      %v10340 = vsel %vm10270, %v10338, %v10339
      %v10341 = vrot.slane %v10339, 2
      %v10342 = vrot.slane %v9964, 7
      %v10343 = vsel %vm10270, %v10341, %v10342
      %v10344 = vrot.slane %v10342, 2
      %v10345 = vrot.slane %v9966, 7
      %v10346 = vsel %vm10270, %v10344, %v10345
      %v10347 = vrot.slane %v9974, 7
      %v10348 = vrot.slane %v10347, 2
      %v10349 = vrot.slane %v9982, 7
      %v10350 = vsel %vm10270, %v10348, %v10349
      %v10351 = vrot.slane %v10349, 2
      %v10352 = vrot.slane %v9981, 7
      %v10353 = vsel %vm10270, %v10351, %v10352
      %v10354 = vrot.slane %v10352, 2
      %v10355 = vrot.slane %v9983, 7
      %v10356 = vsel %vm10270, %v10354, %v10355
      %v10357 = vrot.slane %v10355, 2
      %v10358 = vrot.slane %v9991, 7
      %v10359 = vsel %vm10270, %v10357, %v10358
      %v10360 = vrot.slane %v10358, 2
      %v10361 = vrot.slane %v9999, 7
      %v10362 = vsel %vm10270, %v10360, %v10361
      %v10363 = vrot.slane %v10361, 2
      %v10364 = vrot.slane %v9998, 7
      %v10365 = vsel %vm10270, %v10363, %v10364
      %v10366 = vrot.slane %v10000, 7
      %v10367 = vrot.slane %v10366, 2
      %v10368 = vrot.slane %v10008, 7
      %v10369 = vsel %vm10270, %v10367, %v10368
      %v10370 = vrot.slane %v10368, 2
      %v10371 = vrot.slane %v10016, 7
      %v10372 = vsel %vm10270, %v10370, %v10371
      %v10373 = vrot.slane %v10371, 2
      %v10374 = vrot.slane %v10015, 7
      %v10375 = vsel %vm10270, %v10373, %v10374
      %v10376 = vrot.slane %v10374, 2
      %v10377 = vrot.slane %v10017, 7
      %v10378 = vsel %vm10270, %v10376, %v10377
      %v10379 = vrot.slane %v10377, 2
      %v10380 = vrot.slane %v10025, 7
      %v10381 = vsel %vm10270, %v10379, %v10380
      %v10382 = vrot.slane %v10380, 2
      %v10383 = vrot.slane %v10033, 7
      %v10384 = vsel %vm10270, %v10382, %v10383
      %v10385 = vrot.slane %v10032, 7
      %v10386 = vrot.slane %v10385, 2
      %v10387 = vrot.slane %v10034, 7
      %v10388 = vsel %vm10270, %v10386, %v10387
      %v10389 = vrot.slane %v10387, 2
      %v10390 = vrot.slane %v10042, 7
      %v10391 = vsel %vm10270, %v10389, %v10390
      %v10392 = vrot.slane %v10390, 2
      %v10393 = vrot.slane %v10050, 7
      %v10394 = vsel %vm10270, %v10392, %v10393
      %v10395 = vrot.slane %v10393, 2
      %v10396 = vrot.slane %v10049, 7
      %v10397 = vsel %vm10270, %v10395, %v10396
      %v10398 = vrot.slane %v10396, 2
      %v10399 = vrot.slane %v10051, 7
      %v10400 = vsel %vm10270, %v10398, %v10399
      %v10401 = vrot.slane %v10399, 2
      %v10402 = vrot.slane %v10059, 7
      %v10403 = vsel %vm10270, %v10401, %v10402
      %v10404 = vrot.slane %v10067, 7
      %v10405 = vrot.slane %v10404, 2
      %v10406 = vrot.slane %v10066, 7
      %v10407 = vsel %vm10270, %v10405, %v10406
      %v10408 = vrot.slane %v10406, 2
      %v10409 = vrot.slane %v10068, 7
      %v10410 = vsel %vm10270, %v10408, %v10409
      %v10411 = vrot.slane %v10409, 2
      %v10412 = vrot.slane %v10076, 7
      %v10413 = vsel %vm10270, %v10411, %v10412
      %v10414 = vrot.slane %v10412, 2
      %v10415 = vrot.slane %v10084, 7
      %v10416 = vsel %vm10270, %v10414, %v10415
      %v10417 = vrot.slane %v10415, 2
      %v10418 = vrot.slane %v10083, 7
      %v10419 = vsel %vm10270, %v10417, %v10418
      %v10420 = vrot.slane %v10418, 2
      %v10421 = vrot.slane %v10085, 7
      %v10422 = vsel %vm10270, %v10420, %v10421
      %v10423 = vrot.slane %v10093, 7
      %v10424 = vrot.slane %v10423, 2
      %v10425 = vrot.slane %v10101, 7
      %v10426 = vsel %vm10270, %v10424, %v10425
      %v10427 = vrot.slane %v10425, 2
      %v10428 = vrot.slane %v10100, 7
      %v10429 = vsel %vm10270, %v10427, %v10428
      %v10430 = vrot.slane %v10428, 2
      %v10431 = vrot.slane %v10102, 7
      %v10432 = vsel %vm10270, %v10430, %v10431
      %v10433 = vrot.slane %v10431, 2
      %v10434 = vrot.slane %v10110, 7
      %v10435 = vsel %vm10270, %v10433, %v10434
      %v10436 = vrot.slane %v10434, 2
      %v10437 = vrot.slane %v10118, 7
      %v10438 = vsel %vm10270, %v10436, %v10437
      %v10439 = vrot.slane %v10437, 2
      %v10440 = vrot.slane %v10117, 7
      %v10441 = vsel %vm10270, %v10439, %v10440
      %v10442 = vrot.slane %v10119, 7
      %v10443 = vrot.slane %v10442, 2
      %v10444 = vrot.slane %v10127, 7
      %v10445 = vsel %vm10270, %v10443, %v10444
      %v10446 = vrot.slane %v10444, 2
      %v10447 = vrot.slane %v10135, 7
      %v10448 = vsel %vm10270, %v10446, %v10447
      %v10449 = vrot.slane %v10447, 2
      %v10450 = vrot.slane %v10134, 7
      %v10451 = vsel %vm10270, %v10449, %v10450
      %v10452 = vrot.slane %v10450, 2
      %v10453 = vrot.slane %v10136, 7
      %v10454 = vsel %vm10270, %v10452, %v10453
      %v10455 = vrot.slane %v10453, 2
      %v10456 = vrot.slane %v10144, 7
      %v10457 = vsel %vm10270, %v10455, %v10456
      %v10458 = vrot.slane %v10456, 2
      %v10459 = vrot.slane %v10152, 7
      %v10460 = vsel %vm10270, %v10458, %v10459
      %v10461 = vrot.slane %v10151, 7
      %v10462 = vrot.slane %v10461, 2
      %v10463 = vrot.slane %v10153, 7
      %v10464 = vsel %vm10270, %v10462, %v10463
      %v10465 = vrot.slane %v10463, 2
      %v10466 = vrot.slane %v10161, 7
      %v10467 = vsel %vm10270, %v10465, %v10466
      %v10468 = vrot.slane %v10466, 2
      %v10469 = vrot.slane %v10169, 7
      %v10470 = vsel %vm10270, %v10468, %v10469
      %v10471 = vrot.slane %v10469, 2
      %v10472 = vrot.slane %v10168, 7
      %v10473 = vsel %vm10270, %v10471, %v10472
      %v10474 = vrot.slane %v10472, 2
      %v10475 = vrot.slane %v10170, 7
      %v10476 = vsel %vm10270, %v10474, %v10475
      %v10477 = vrot.slane %v10475, 2
      %v10478 = vrot.slane %v10178, 7
      %v10479 = vsel %vm10270, %v10477, %v10478
      %v10480 = vrot.slane %v10186, 7
      %v10481 = vrot.slane %v10480, 2
      %v10482 = vrot.slane %v10185, 7
      %v10483 = vsel %vm10270, %v10481, %v10482
      %v10484 = vrot.slane %v10482, 2
      %v10485 = vrot.slane %v10187, 7
      %v10486 = vsel %vm10270, %v10484, %v10485
      %v10487 = vrot.slane %v10485, 2
      %v10488 = vrot.slane %v10195, 7
      %v10489 = vsel %vm10270, %v10487, %v10488
      %v10490 = vrot.slane %v10488, 2
      %v10491 = vrot.slane %v10203, 7
      %v10492 = vsel %vm10270, %v10490, %v10491
      %v10493 = vrot.slane %v10491, 2
      %v10494 = vrot.slane %v10202, 7
      %v10495 = vsel %vm10270, %v10493, %v10494
      %v10496 = vrot.slane %v10494, 2
      %v10497 = vrot.slane %v10204, 7
      %v10498 = vsel %vm10270, %v10496, %v10497
      %v10499 = vrot.slane %v10212, 7
      %v10500 = vrot.slane %v10499, 2
      %v10501 = vrot.slane %v10220, 7
      %v10502 = vsel %vm10270, %v10500, %v10501
      %v10503 = vrot.slane %v10501, 2
      %v10504 = vrot.slane %v10219, 7
      %v10505 = vsel %vm10270, %v10503, %v10504
      %v10506 = vrot.slane %v10504, 2
      %v10507 = vrot.slane %v10221, 7
      %v10508 = vsel %vm10270, %v10506, %v10507
      %v10509 = vrot.slane %v10507, 2
      %v10510 = vrot.slane %v10229, 7
      %v10511 = vsel %vm10270, %v10509, %v10510
      %v10512 = vrot.slane %v10510, 2
      %v10513 = vrot.slane %v10237, 7
      %v10514 = vsel %vm10270, %v10512, %v10513
      %v10515 = vrot.slane %v10513, 2
      %v10516 = vrot.slane %v10236, 7
      %v10517 = vsel %vm10270, %v10515, %v10516
      %v10518 = vrot.slane %v10238, 7
      %v10519 = vrot.slane %v10518, 2
      %v10520 = vrot.slane %v10246, 7
      %v10521 = vsel %vm10270, %v10519, %v10520
      %v10522 = vrot.slane %v10520, 2
      %v10523 = vrot.slane %v10254, 7
      %v10524 = vsel %vm10270, %v10522, %v10523
      %v10525 = vrot.slane %v10523, 2
      %v10526 = vrot.slane %v10253, 7
      %v10527 = vsel %vm10270, %v10525, %v10526
      %v10528 = vrot.slane %v10526, 2
      %v10529 = vrot.slane %v10255, 7
      %v10530 = vsel %vm10270, %v10528, %v10529
      %v10531 = vrot.slane %v10529, 2
      %v10532 = vrot.slane %v10262, 7
      %v10533 = vsel %vm10270, %v10531, %v10532
      %v10534 = vrot.slane %v10532, 2
      %v10535 = vrot.slane %v10263, 7
      %v10536 = vsel %vm10270, %v10534, %v10535
      %v10537 = vcombine.low %v9855, %v9863
      %v10538 = vcombine.low %v9862, %v9864
      %v10540 = vunpack.c.l.s4 1983009808
      %v10541 = vunpack.c.0.s8 %v10540
      %v10542 = vlaneseq
      %v10543 = vshrl.u32 %v10542, 7
      %v10544 = vsub.s32 %v10541, %v10543
      %v10545 = vrot.slane %v10537, %v10544
      %v10547 = vunpack.c.l.s4 1983009808
      %v10548 = vunpack.c.0.s8 %v10547
      %v10549 = vlaneseq
      %v10550 = vshrl.u32 %v10549, 7
      %v10551 = vsub.s32 %v10548, %v10550
      %v10552 = vrot.slane %v10538, %v10551
      %v10553 = vcombine.low %v10545, %v10552
      %v10554 = vcombine.low %v9872, %v9880
      %v10555 = vcombine.low %v9881, %v9889
      %v10557 = vunpack.c.l.s4 1983009808
      %v10558 = vunpack.c.0.s8 %v10557
      %v10559 = vlaneseq
      %v10560 = vshrl.u32 %v10559, 7
      %v10561 = vsub.s32 %v10558, %v10560
      %v10562 = vrot.slane %v10554, %v10561
      %v10564 = vunpack.c.l.s4 1983009808
      %v10565 = vunpack.c.0.s8 %v10564
      %v10566 = vlaneseq
      %v10567 = vshrl.u32 %v10566, 7
      %v10568 = vsub.s32 %v10565, %v10567
      %v10569 = vrot.slane %v10555, %v10568
      %v10570 = vcombine.low %v10562, %v10569
      %v10571 = vcombine.low %v9897, %v9896
      %v10572 = vcombine.low %v9898, %v9906
      %v10574 = vunpack.c.l.s4 1983009808
      %v10575 = vunpack.c.0.s8 %v10574
      %v10576 = vlaneseq
      %v10577 = vshrl.u32 %v10576, 7
      %v10578 = vsub.s32 %v10575, %v10577
      %v10579 = vrot.slane %v10571, %v10578
      %v10581 = vunpack.c.l.s4 1983009808
      %v10582 = vunpack.c.0.s8 %v10581
      %v10583 = vlaneseq
      %v10584 = vshrl.u32 %v10583, 7
      %v10585 = vsub.s32 %v10582, %v10584
      %v10586 = vrot.slane %v10572, %v10585
      %v10587 = vcombine.low %v10579, %v10586
      %v10588 = vcombine.low %v9913, %v9915
      %v10589 = vcombine.low %v9923, %v9931
      %v10591 = vunpack.c.l.s4 1983009808
      %v10592 = vunpack.c.0.s8 %v10591
      %v10593 = vlaneseq
      %v10594 = vshrl.u32 %v10593, 7
      %v10595 = vsub.s32 %v10592, %v10594
      %v10596 = vrot.slane %v10588, %v10595
      %v10598 = vunpack.c.l.s4 1983009808
      %v10599 = vunpack.c.0.s8 %v10598
      %v10600 = vlaneseq
      %v10601 = vshrl.u32 %v10600, 7
      %v10602 = vsub.s32 %v10599, %v10601
      %v10603 = vrot.slane %v10589, %v10602
      %v10604 = vcombine.low %v10596, %v10603
      %v10605 = vcombine.low %v9930, %v9932
      %v10606 = vcombine.low %v9948, %v9947
      %v10608 = vunpack.c.l.s4 1983009808
      %v10609 = vunpack.c.0.s8 %v10608
      %v10610 = vlaneseq
      %v10611 = vshrl.u32 %v10610, 7
      %v10612 = vsub.s32 %v10609, %v10611
      %v10613 = vrot.slane %v10605, %v10612
      %v10615 = vunpack.c.l.s4 1983009808
      %v10616 = vunpack.c.0.s8 %v10615
      %v10617 = vlaneseq
      %v10618 = vshrl.u32 %v10617, 7
      %v10619 = vsub.s32 %v10616, %v10618
      %v10620 = vrot.slane %v10606, %v10619
      %v10621 = vcombine.low %v10613, %v10620
      %v10622 = vcombine.low %v9949, %v9957
      %v10623 = vcombine.low %v9965, %v9964
      %v10625 = vunpack.c.l.s4 1983009808
      %v10626 = vunpack.c.0.s8 %v10625
      %v10627 = vlaneseq
      %v10628 = vshrl.u32 %v10627, 7
      %v10629 = vsub.s32 %v10626, %v10628
      %v10630 = vrot.slane %v10622, %v10629
      %v10632 = vunpack.c.l.s4 1983009808
      %v10633 = vunpack.c.0.s8 %v10632
      %v10634 = vlaneseq
      %v10635 = vshrl.u32 %v10634, 7
      %v10636 = vsub.s32 %v10633, %v10635
      %v10637 = vrot.slane %v10623, %v10636
      %v10638 = vcombine.low %v10630, %v10637
      %v10639 = vcombine.low %v9974, %v9982
      %v10640 = vcombine.low %v9981, %v9983
      %v10642 = vunpack.c.l.s4 1983009808
      %v10643 = vunpack.c.0.s8 %v10642
      %v10644 = vlaneseq
      %v10645 = vshrl.u32 %v10644, 7
      %v10646 = vsub.s32 %v10643, %v10645
      %v10647 = vrot.slane %v10639, %v10646
      %v10649 = vunpack.c.l.s4 1983009808
      %v10650 = vunpack.c.0.s8 %v10649
      %v10651 = vlaneseq
      %v10652 = vshrl.u32 %v10651, 7
      %v10653 = vsub.s32 %v10650, %v10652
      %v10654 = vrot.slane %v10640, %v10653
      %v10655 = vcombine.low %v10647, %v10654
      %v10656 = vcombine.low %v9991, %v9999
      %v10657 = vcombine.low %v10000, %v10008
      %v10659 = vunpack.c.l.s4 1983009808
      %v10660 = vunpack.c.0.s8 %v10659
      %v10661 = vlaneseq
      %v10662 = vshrl.u32 %v10661, 7
      %v10663 = vsub.s32 %v10660, %v10662
      %v10664 = vrot.slane %v10656, %v10663
      %v10666 = vunpack.c.l.s4 1983009808
      %v10667 = vunpack.c.0.s8 %v10666
      %v10668 = vlaneseq
      %v10669 = vshrl.u32 %v10668, 7
      %v10670 = vsub.s32 %v10667, %v10669
      %v10671 = vrot.slane %v10657, %v10670
      %v10672 = vcombine.low %v10664, %v10671
      %v10673 = vcombine.low %v10016, %v10015
      %v10674 = vcombine.low %v10017, %v10025
      %v10676 = vunpack.c.l.s4 1983009808
      %v10677 = vunpack.c.0.s8 %v10676
      %v10678 = vlaneseq
      %v10679 = vshrl.u32 %v10678, 7
      %v10680 = vsub.s32 %v10677, %v10679
      %v10681 = vrot.slane %v10673, %v10680
      %v10683 = vunpack.c.l.s4 1983009808
      %v10684 = vunpack.c.0.s8 %v10683
      %v10685 = vlaneseq
      %v10686 = vshrl.u32 %v10685, 7
      %v10687 = vsub.s32 %v10684, %v10686
      %v10688 = vrot.slane %v10674, %v10687
      %v10689 = vcombine.low %v10681, %v10688
      %v10690 = vcombine.low %v10032, %v10034
      %v10691 = vcombine.low %v10042, %v10050
      %v10693 = vunpack.c.l.s4 1983009808
      %v10694 = vunpack.c.0.s8 %v10693
      %v10695 = vlaneseq
      %v10696 = vshrl.u32 %v10695, 7
      %v10697 = vsub.s32 %v10694, %v10696
      %v10698 = vrot.slane %v10690, %v10697
      %v10700 = vunpack.c.l.s4 1983009808
      %v10701 = vunpack.c.0.s8 %v10700
      %v10702 = vlaneseq
      %v10703 = vshrl.u32 %v10702, 7
      %v10704 = vsub.s32 %v10701, %v10703
      %v10705 = vrot.slane %v10691, %v10704
      %v10706 = vcombine.low %v10698, %v10705
      %v10707 = vcombine.low %v10049, %v10051
      %v10708 = vcombine.low %v10067, %v10066
      %v10710 = vunpack.c.l.s4 1983009808
      %v10711 = vunpack.c.0.s8 %v10710
      %v10712 = vlaneseq
      %v10713 = vshrl.u32 %v10712, 7
      %v10714 = vsub.s32 %v10711, %v10713
      %v10715 = vrot.slane %v10707, %v10714
      %v10717 = vunpack.c.l.s4 1983009808
      %v10718 = vunpack.c.0.s8 %v10717
      %v10719 = vlaneseq
      %v10720 = vshrl.u32 %v10719, 7
      %v10721 = vsub.s32 %v10718, %v10720
      %v10722 = vrot.slane %v10708, %v10721
      %v10723 = vcombine.low %v10715, %v10722
      %v10724 = vcombine.low %v10068, %v10076
      %v10725 = vcombine.low %v10084, %v10083
      %v10727 = vunpack.c.l.s4 1983009808
      %v10728 = vunpack.c.0.s8 %v10727
      %v10729 = vlaneseq
      %v10730 = vshrl.u32 %v10729, 7
      %v10731 = vsub.s32 %v10728, %v10730
      %v10732 = vrot.slane %v10724, %v10731
      %v10734 = vunpack.c.l.s4 1983009808
      %v10735 = vunpack.c.0.s8 %v10734
      %v10736 = vlaneseq
      %v10737 = vshrl.u32 %v10736, 7
      %v10738 = vsub.s32 %v10735, %v10737
      %v10739 = vrot.slane %v10725, %v10738
      %v10740 = vcombine.low %v10732, %v10739
      %v10741 = vcombine.low %v10093, %v10101
      %v10742 = vcombine.low %v10100, %v10102
      %v10744 = vunpack.c.l.s4 1983009808
      %v10745 = vunpack.c.0.s8 %v10744
      %v10746 = vlaneseq
      %v10747 = vshrl.u32 %v10746, 7
      %v10748 = vsub.s32 %v10745, %v10747
      %v10749 = vrot.slane %v10741, %v10748
      %v10751 = vunpack.c.l.s4 1983009808
      %v10752 = vunpack.c.0.s8 %v10751
      %v10753 = vlaneseq
      %v10754 = vshrl.u32 %v10753, 7
      %v10755 = vsub.s32 %v10752, %v10754
      %v10756 = vrot.slane %v10742, %v10755
      %v10757 = vcombine.low %v10749, %v10756
      %v10758 = vcombine.low %v10110, %v10118
      %v10759 = vcombine.low %v10119, %v10127
      %v10761 = vunpack.c.l.s4 1983009808
      %v10762 = vunpack.c.0.s8 %v10761
      %v10763 = vlaneseq
      %v10764 = vshrl.u32 %v10763, 7
      %v10765 = vsub.s32 %v10762, %v10764
      %v10766 = vrot.slane %v10758, %v10765
      %v10768 = vunpack.c.l.s4 1983009808
      %v10769 = vunpack.c.0.s8 %v10768
      %v10770 = vlaneseq
      %v10771 = vshrl.u32 %v10770, 7
      %v10772 = vsub.s32 %v10769, %v10771
      %v10773 = vrot.slane %v10759, %v10772
      %v10774 = vcombine.low %v10766, %v10773
      %v10775 = vcombine.low %v10135, %v10134
      %v10776 = vcombine.low %v10136, %v10144
      %v10778 = vunpack.c.l.s4 1983009808
      %v10779 = vunpack.c.0.s8 %v10778
      %v10780 = vlaneseq
      %v10781 = vshrl.u32 %v10780, 7
      %v10782 = vsub.s32 %v10779, %v10781
      %v10783 = vrot.slane %v10775, %v10782
      %v10785 = vunpack.c.l.s4 1983009808
      %v10786 = vunpack.c.0.s8 %v10785
      %v10787 = vlaneseq
      %v10788 = vshrl.u32 %v10787, 7
      %v10789 = vsub.s32 %v10786, %v10788
      %v10790 = vrot.slane %v10776, %v10789
      %v10791 = vcombine.low %v10783, %v10790
      %v10792 = vcombine.low %v10151, %v10153
      %v10793 = vcombine.low %v10161, %v10169
      %v10795 = vunpack.c.l.s4 1983009808
      %v10796 = vunpack.c.0.s8 %v10795
      %v10797 = vlaneseq
      %v10798 = vshrl.u32 %v10797, 7
      %v10799 = vsub.s32 %v10796, %v10798
      %v10800 = vrot.slane %v10792, %v10799
      %v10802 = vunpack.c.l.s4 1983009808
      %v10803 = vunpack.c.0.s8 %v10802
      %v10804 = vlaneseq
      %v10805 = vshrl.u32 %v10804, 7
      %v10806 = vsub.s32 %v10803, %v10805
      %v10807 = vrot.slane %v10793, %v10806
      %v10808 = vcombine.low %v10800, %v10807
      %v10809 = vcombine.low %v10168, %v10170
      %v10810 = vcombine.low %v10186, %v10185
      %v10812 = vunpack.c.l.s4 1983009808
      %v10813 = vunpack.c.0.s8 %v10812
      %v10814 = vlaneseq
      %v10815 = vshrl.u32 %v10814, 7
      %v10816 = vsub.s32 %v10813, %v10815
      %v10817 = vrot.slane %v10809, %v10816
      %v10819 = vunpack.c.l.s4 1983009808
      %v10820 = vunpack.c.0.s8 %v10819
      %v10821 = vlaneseq
      %v10822 = vshrl.u32 %v10821, 7
      %v10823 = vsub.s32 %v10820, %v10822
      %v10824 = vrot.slane %v10810, %v10823
      %v10825 = vcombine.low %v10817, %v10824
      %v10826 = vcombine.low %v10187, %v10195
      %v10827 = vcombine.low %v10203, %v10202
      %v10829 = vunpack.c.l.s4 1983009808
      %v10830 = vunpack.c.0.s8 %v10829
      %v10831 = vlaneseq
      %v10832 = vshrl.u32 %v10831, 7
      %v10833 = vsub.s32 %v10830, %v10832
      %v10834 = vrot.slane %v10826, %v10833
      %v10836 = vunpack.c.l.s4 1983009808
      %v10837 = vunpack.c.0.s8 %v10836
      %v10838 = vlaneseq
      %v10839 = vshrl.u32 %v10838, 7
      %v10840 = vsub.s32 %v10837, %v10839
      %v10841 = vrot.slane %v10827, %v10840
      %v10842 = vcombine.low %v10834, %v10841
      %v10861 = vcombine.low %v10274, %v10277
      %v10862 = vcombine.low %v10280, %v10283
      %v10864 = vunpack.c.l.s4 1983009808
      %v10865 = vunpack.c.0.s8 %v10864
      %v10866 = vlaneseq
      %v10867 = vshrl.u32 %v10866, 7
      %v10868 = vsub.s32 %v10865, %v10867
      %v10869 = vrot.slane %v10861, %v10868
      %v10871 = vunpack.c.l.s4 1983009808
      %v10872 = vunpack.c.0.s8 %v10871
      %v10873 = vlaneseq
      %v10874 = vshrl.u32 %v10873, 7
      %v10875 = vsub.s32 %v10872, %v10874
      %v10876 = vrot.slane %v10862, %v10875
      %v10877 = vcombine.low %v10869, %v10876
      %v10878 = vcombine.low %v10286, %v10289
      %v10879 = vcombine.low %v10293, %v10296
      %v10881 = vunpack.c.l.s4 1983009808
      %v10882 = vunpack.c.0.s8 %v10881
      %v10883 = vlaneseq
      %v10884 = vshrl.u32 %v10883, 7
      %v10885 = vsub.s32 %v10882, %v10884
      %v10886 = vrot.slane %v10878, %v10885
      %v10888 = vunpack.c.l.s4 1983009808
      %v10889 = vunpack.c.0.s8 %v10888
      %v10890 = vlaneseq
      %v10891 = vshrl.u32 %v10890, 7
      %v10892 = vsub.s32 %v10889, %v10891
      %v10893 = vrot.slane %v10879, %v10892
      %v10894 = vcombine.low %v10886, %v10893
      %v10895 = vcombine.low %v10299, %v10302
      %v10896 = vcombine.low %v10305, %v10308
      %v10898 = vunpack.c.l.s4 1983009808
      %v10899 = vunpack.c.0.s8 %v10898
      %v10900 = vlaneseq
      %v10901 = vshrl.u32 %v10900, 7
      %v10902 = vsub.s32 %v10899, %v10901
      %v10903 = vrot.slane %v10895, %v10902
      %v10905 = vunpack.c.l.s4 1983009808
      %v10906 = vunpack.c.0.s8 %v10905
      %v10907 = vlaneseq
      %v10908 = vshrl.u32 %v10907, 7
      %v10909 = vsub.s32 %v10906, %v10908
      %v10910 = vrot.slane %v10896, %v10909
      %v10911 = vcombine.low %v10903, %v10910
      %v10912 = vcombine.low %v10312, %v10315
      %v10913 = vcombine.low %v10318, %v10321
      %v10915 = vunpack.c.l.s4 1983009808
      %v10916 = vunpack.c.0.s8 %v10915
      %v10917 = vlaneseq
      %v10918 = vshrl.u32 %v10917, 7
      %v10919 = vsub.s32 %v10916, %v10918
      %v10920 = vrot.slane %v10912, %v10919
      %v10922 = vunpack.c.l.s4 1983009808
      %v10923 = vunpack.c.0.s8 %v10922
      %v10924 = vlaneseq
      %v10925 = vshrl.u32 %v10924, 7
      %v10926 = vsub.s32 %v10923, %v10925
      %v10927 = vrot.slane %v10913, %v10926
      %v10928 = vcombine.low %v10920, %v10927
      %v10929 = vcombine.low %v10324, %v10327
      %v10930 = vcombine.low %v10331, %v10334
      %v10932 = vunpack.c.l.s4 1983009808
      %v10933 = vunpack.c.0.s8 %v10932
      %v10934 = vlaneseq
      %v10935 = vshrl.u32 %v10934, 7
      %v10936 = vsub.s32 %v10933, %v10935
      %v10937 = vrot.slane %v10929, %v10936
      %v10939 = vunpack.c.l.s4 1983009808
      %v10940 = vunpack.c.0.s8 %v10939
      %v10941 = vlaneseq
      %v10942 = vshrl.u32 %v10941, 7
      %v10943 = vsub.s32 %v10940, %v10942
      %v10944 = vrot.slane %v10930, %v10943
      %v10945 = vcombine.low %v10937, %v10944
      %v10946 = vcombine.low %v10337, %v10340
      %v10947 = vcombine.low %v10343, %v10346
      %v10949 = vunpack.c.l.s4 1983009808
      %v10950 = vunpack.c.0.s8 %v10949
      %v10951 = vlaneseq
      %v10952 = vshrl.u32 %v10951, 7
      %v10953 = vsub.s32 %v10950, %v10952
      %v10954 = vrot.slane %v10946, %v10953
      %v10956 = vunpack.c.l.s4 1983009808
      %v10957 = vunpack.c.0.s8 %v10956
      %v10958 = vlaneseq
      %v10959 = vshrl.u32 %v10958, 7
      %v10960 = vsub.s32 %v10957, %v10959
      %v10961 = vrot.slane %v10947, %v10960
      %v10962 = vcombine.low %v10954, %v10961
      %v10963 = vcombine.low %v10350, %v10353
      %v10964 = vcombine.low %v10356, %v10359
      %v10966 = vunpack.c.l.s4 1983009808
      %v10967 = vunpack.c.0.s8 %v10966
      %v10968 = vlaneseq
      %v10969 = vshrl.u32 %v10968, 7
      %v10970 = vsub.s32 %v10967, %v10969
      %v10971 = vrot.slane %v10963, %v10970
      %v10973 = vunpack.c.l.s4 1983009808
      %v10974 = vunpack.c.0.s8 %v10973
      %v10975 = vlaneseq
      %v10976 = vshrl.u32 %v10975, 7
      %v10977 = vsub.s32 %v10974, %v10976
      %v10978 = vrot.slane %v10964, %v10977
      %v10979 = vcombine.low %v10971, %v10978
      %v10980 = vcombine.low %v10362, %v10365
      %v10981 = vcombine.low %v10369, %v10372
      %v10983 = vunpack.c.l.s4 1983009808
      %v10984 = vunpack.c.0.s8 %v10983
      %v10985 = vlaneseq
      %v10986 = vshrl.u32 %v10985, 7
      %v10987 = vsub.s32 %v10984, %v10986
      %v10988 = vrot.slane %v10980, %v10987
      %v10990 = vunpack.c.l.s4 1983009808
      %v10991 = vunpack.c.0.s8 %v10990
      %v10992 = vlaneseq
      %v10993 = vshrl.u32 %v10992, 7
      %v10994 = vsub.s32 %v10991, %v10993
      %v10995 = vrot.slane %v10981, %v10994
      %v10996 = vcombine.low %v10988, %v10995
      %v10997 = vcombine.low %v10375, %v10378
      %v10998 = vcombine.low %v10381, %v10384
      %v11000 = vunpack.c.l.s4 1983009808
      %v11001 = vunpack.c.0.s8 %v11000
      %v11002 = vlaneseq
      %v11003 = vshrl.u32 %v11002, 7
      %v11004 = vsub.s32 %v11001, %v11003
      %v11005 = vrot.slane %v10997, %v11004
      %v11007 = vunpack.c.l.s4 1983009808
      %v11008 = vunpack.c.0.s8 %v11007
      %v11009 = vlaneseq
      %v11010 = vshrl.u32 %v11009, 7
      %v11011 = vsub.s32 %v11008, %v11010
      %v11012 = vrot.slane %v10998, %v11011
      %v11013 = vcombine.low %v11005, %v11012
      %v11014 = vcombine.low %v10388, %v10391
      %v11015 = vcombine.low %v10394, %v10397
      %v11017 = vunpack.c.l.s4 1983009808
      %v11018 = vunpack.c.0.s8 %v11017
      %v11019 = vlaneseq
      %v11020 = vshrl.u32 %v11019, 7
      %v11021 = vsub.s32 %v11018, %v11020
      %v11022 = vrot.slane %v11014, %v11021
      %v11024 = vunpack.c.l.s4 1983009808
      %v11025 = vunpack.c.0.s8 %v11024
      %v11026 = vlaneseq
      %v11027 = vshrl.u32 %v11026, 7
      %v11028 = vsub.s32 %v11025, %v11027
      %v11029 = vrot.slane %v11015, %v11028
      %v11030 = vcombine.low %v11022, %v11029
      %v11031 = vcombine.low %v10400, %v10403
      %v11032 = vcombine.low %v10407, %v10410
      %v11034 = vunpack.c.l.s4 1983009808
      %v11035 = vunpack.c.0.s8 %v11034
      %v11036 = vlaneseq
      %v11037 = vshrl.u32 %v11036, 7
      %v11038 = vsub.s32 %v11035, %v11037
      %v11039 = vrot.slane %v11031, %v11038
      %v11041 = vunpack.c.l.s4 1983009808
      %v11042 = vunpack.c.0.s8 %v11041
      %v11043 = vlaneseq
      %v11044 = vshrl.u32 %v11043, 7
      %v11045 = vsub.s32 %v11042, %v11044
      %v11046 = vrot.slane %v11032, %v11045
      %v11047 = vcombine.low %v11039, %v11046
      %v11048 = vcombine.low %v10413, %v10416
      %v11049 = vcombine.low %v10419, %v10422
      %v11051 = vunpack.c.l.s4 1983009808
      %v11052 = vunpack.c.0.s8 %v11051
      %v11053 = vlaneseq
      %v11054 = vshrl.u32 %v11053, 7
      %v11055 = vsub.s32 %v11052, %v11054
      %v11056 = vrot.slane %v11048, %v11055
      %v11058 = vunpack.c.l.s4 1983009808
      %v11059 = vunpack.c.0.s8 %v11058
      %v11060 = vlaneseq
      %v11061 = vshrl.u32 %v11060, 7
      %v11062 = vsub.s32 %v11059, %v11061
      %v11063 = vrot.slane %v11049, %v11062
      %v11064 = vcombine.low %v11056, %v11063
      %v11065 = vcombine.low %v10426, %v10429
      %v11066 = vcombine.low %v10432, %v10435
      %v11068 = vunpack.c.l.s4 1983009808
      %v11069 = vunpack.c.0.s8 %v11068
      %v11070 = vlaneseq
      %v11071 = vshrl.u32 %v11070, 7
      %v11072 = vsub.s32 %v11069, %v11071
      %v11073 = vrot.slane %v11065, %v11072
      %v11075 = vunpack.c.l.s4 1983009808
      %v11076 = vunpack.c.0.s8 %v11075
      %v11077 = vlaneseq
      %v11078 = vshrl.u32 %v11077, 7
      %v11079 = vsub.s32 %v11076, %v11078
      %v11080 = vrot.slane %v11066, %v11079
      %v11081 = vcombine.low %v11073, %v11080
      %v11082 = vcombine.low %v10438, %v10441
      %v11083 = vcombine.low %v10445, %v10448
      %v11085 = vunpack.c.l.s4 1983009808
      %v11086 = vunpack.c.0.s8 %v11085
      %v11087 = vlaneseq
      %v11088 = vshrl.u32 %v11087, 7
      %v11089 = vsub.s32 %v11086, %v11088
      %v11090 = vrot.slane %v11082, %v11089
      %v11092 = vunpack.c.l.s4 1983009808
      %v11093 = vunpack.c.0.s8 %v11092
      %v11094 = vlaneseq
      %v11095 = vshrl.u32 %v11094, 7
      %v11096 = vsub.s32 %v11093, %v11095
      %v11097 = vrot.slane %v11083, %v11096
      %v11098 = vcombine.low %v11090, %v11097
      %v11099 = vcombine.low %v10451, %v10454
      %v11100 = vcombine.low %v10457, %v10460
      %v11102 = vunpack.c.l.s4 1983009808
      %v11103 = vunpack.c.0.s8 %v11102
      %v11104 = vlaneseq
      %v11105 = vshrl.u32 %v11104, 7
      %v11106 = vsub.s32 %v11103, %v11105
      %v11107 = vrot.slane %v11099, %v11106
      %v11109 = vunpack.c.l.s4 1983009808
      %v11110 = vunpack.c.0.s8 %v11109
      %v11111 = vlaneseq
      %v11112 = vshrl.u32 %v11111, 7
      %v11113 = vsub.s32 %v11110, %v11112
      %v11114 = vrot.slane %v11100, %v11113
      %v11115 = vcombine.low %v11107, %v11114
      %v11116 = vcombine.low %v10464, %v10467
      %v11117 = vcombine.low %v10470, %v10473
      %v11119 = vunpack.c.l.s4 1983009808
      %v11120 = vunpack.c.0.s8 %v11119
      %v11121 = vlaneseq
      %v11122 = vshrl.u32 %v11121, 7
      %v11123 = vsub.s32 %v11120, %v11122
      %v11124 = vrot.slane %v11116, %v11123
      %v11126 = vunpack.c.l.s4 1983009808
      %v11127 = vunpack.c.0.s8 %v11126
      %v11128 = vlaneseq
      %v11129 = vshrl.u32 %v11128, 7
      %v11130 = vsub.s32 %v11127, %v11129
      %v11131 = vrot.slane %v11117, %v11130
      %v11132 = vcombine.low %v11124, %v11131
      %v11133 = vcombine.low %v10476, %v10479
      %v11134 = vcombine.low %v10483, %v10486
      %v11136 = vunpack.c.l.s4 1983009808
      %v11137 = vunpack.c.0.s8 %v11136
      %v11138 = vlaneseq
      %v11139 = vshrl.u32 %v11138, 7
      %v11140 = vsub.s32 %v11137, %v11139
      %v11141 = vrot.slane %v11133, %v11140
      %v11143 = vunpack.c.l.s4 1983009808
      %v11144 = vunpack.c.0.s8 %v11143
      %v11145 = vlaneseq
      %v11146 = vshrl.u32 %v11145, 7
      %v11147 = vsub.s32 %v11144, %v11146
      %v11148 = vrot.slane %v11134, %v11147
      %v11149 = vcombine.low %v11141, %v11148
      %v11150 = vcombine.low %v10489, %v10492
      %v11151 = vcombine.low %v10495, %v10498
      %v11153 = vunpack.c.l.s4 1983009808
      %v11154 = vunpack.c.0.s8 %v11153
      %v11155 = vlaneseq
      %v11156 = vshrl.u32 %v11155, 7
      %v11157 = vsub.s32 %v11154, %v11156
      %v11158 = vrot.slane %v11150, %v11157
      %v11160 = vunpack.c.l.s4 1983009808
      %v11161 = vunpack.c.0.s8 %v11160
      %v11162 = vlaneseq
      %v11163 = vshrl.u32 %v11162, 7
      %v11164 = vsub.s32 %v11161, %v11163
      %v11165 = vrot.slane %v11151, %v11164
      %v11166 = vcombine.low %v11158, %v11165
      %11167 = vrot.lane.b32.xlu0 %v10877, 8
      %v11168 = vpop.permute.xlu0 %11167
      %11169 = vrot.lane.b32.xlu0 %v10894, 8
      %v11170 = vpop.permute.xlu0 %11169
      %11171 = vrot.lane.b32.xlu0 %v10911, 8
      %v11172 = vpop.permute.xlu0 %11171
      %11173 = vrot.lane.b32.xlu0 %v10928, 8
      %v11174 = vpop.permute.xlu0 %11173
      %11175 = vrot.lane.b32.xlu0 %v10945, 8
      %v11176 = vpop.permute.xlu0 %11175
      %11177 = vrot.lane.b32.xlu0 %v10962, 8
      %v11178 = vpop.permute.xlu0 %11177
      %11179 = vrot.lane.b32.xlu0 %v10979, 8
      %v11180 = vpop.permute.xlu0 %11179
      %11181 = vrot.lane.b32.xlu0 %v10996, 8
      %v11182 = vpop.permute.xlu0 %11181
      %11183 = vrot.lane.b32.xlu0 %v11013, 8
      %v11184 = vpop.permute.xlu0 %11183
      %11185 = vrot.lane.b32.xlu0 %v11030, 8
      %v11186 = vpop.permute.xlu0 %11185
      %11187 = vrot.lane.b32.xlu0 %v11047, 8
      %v11188 = vpop.permute.xlu0 %11187
      %11189 = vrot.lane.b32.xlu0 %v11064, 8
      %v11190 = vpop.permute.xlu0 %11189
      %11191 = vrot.lane.b32.xlu0 %v11081, 8
      %v11192 = vpop.permute.xlu0 %11191
      %11193 = vrot.lane.b32.xlu0 %v11098, 8
      %v11194 = vpop.permute.xlu0 %11193
      %11195 = vrot.lane.b32.xlu0 %v11115, 8
      %v11196 = vpop.permute.xlu0 %11195
      %11197 = vrot.lane.b32.xlu0 %v11132, 8
      %v11198 = vpop.permute.xlu0 %11197
      %11199 = vrot.lane.b32.xlu0 %v11149, 8
      %v11200 = vpop.permute.xlu0 %11199
      %11201 = vrot.lane.b32.xlu0 %v11166, 8
      %v11202 = vpop.permute.xlu0 %11201
      %v11221 = vcombine.low %v9863, %v9862
      %v11222 = vcombine.low %v9864, %v9872
      %v11224 = vunpack.c.l.s4 1983009808
      %v11225 = vunpack.c.0.s8 %v11224
      %v11226 = vlaneseq
      %v11227 = vshrl.u32 %v11226, 7
      %v11228 = vsub.s32 %v11225, %v11227
      %v11229 = vrot.slane %v11221, %v11228
      %v11231 = vunpack.c.l.s4 1983009808
      %v11232 = vunpack.c.0.s8 %v11231
      %v11233 = vlaneseq
      %v11234 = vshrl.u32 %v11233, 7
      %v11235 = vsub.s32 %v11232, %v11234
      %v11236 = vrot.slane %v11222, %v11235
      %v11237 = vcombine.low %v11229, %v11236
      %v11238 = vcombine.low %v9880, %v9879
      %v11239 = vcombine.low %v9889, %v9897
      %v11241 = vunpack.c.l.s4 1983009808
      %v11242 = vunpack.c.0.s8 %v11241
      %v11243 = vlaneseq
      %v11244 = vshrl.u32 %v11243, 7
      %v11245 = vsub.s32 %v11242, %v11244
      %v11246 = vrot.slane %v11238, %v11245
      %v11248 = vunpack.c.l.s4 1983009808
      %v11249 = vunpack.c.0.s8 %v11248
      %v11250 = vlaneseq
      %v11251 = vshrl.u32 %v11250, 7
      %v11252 = vsub.s32 %v11249, %v11251
      %v11253 = vrot.slane %v11239, %v11252
      %v11254 = vcombine.low %v11246, %v11253
      %v11255 = vcombine.low %v9896, %v9898
      %v11256 = vcombine.low %v9906, %v9914
      %v11258 = vunpack.c.l.s4 1983009808
      %v11259 = vunpack.c.0.s8 %v11258
      %v11260 = vlaneseq
      %v11261 = vshrl.u32 %v11260, 7
      %v11262 = vsub.s32 %v11259, %v11261
      %v11263 = vrot.slane %v11255, %v11262
      %v11265 = vunpack.c.l.s4 1983009808
      %v11266 = vunpack.c.0.s8 %v11265
      %v11267 = vlaneseq
      %v11268 = vshrl.u32 %v11267, 7
      %v11269 = vsub.s32 %v11266, %v11268
      %v11270 = vrot.slane %v11256, %v11269
      %v11271 = vcombine.low %v11263, %v11270
      %v11272 = vcombine.low %v9915, %v9923
      %v11273 = vcombine.low %v9931, %v9930
      %v11275 = vunpack.c.l.s4 1983009808
      %v11276 = vunpack.c.0.s8 %v11275
      %v11277 = vlaneseq
      %v11278 = vshrl.u32 %v11277, 7
      %v11279 = vsub.s32 %v11276, %v11278
      %v11280 = vrot.slane %v11272, %v11279
      %v11282 = vunpack.c.l.s4 1983009808
      %v11283 = vunpack.c.0.s8 %v11282
      %v11284 = vlaneseq
      %v11285 = vshrl.u32 %v11284, 7
      %v11286 = vsub.s32 %v11283, %v11285
      %v11287 = vrot.slane %v11273, %v11286
      %v11288 = vcombine.low %v11280, %v11287
      %v11289 = vcombine.low %v9932, %v9940
      %v11290 = vcombine.low %v9947, %v9949
      %v11292 = vunpack.c.l.s4 1983009808
      %v11293 = vunpack.c.0.s8 %v11292
      %v11294 = vlaneseq
      %v11295 = vshrl.u32 %v11294, 7
      %v11296 = vsub.s32 %v11293, %v11295
      %v11297 = vrot.slane %v11289, %v11296
      %v11299 = vunpack.c.l.s4 1983009808
      %v11300 = vunpack.c.0.s8 %v11299
      %v11301 = vlaneseq
      %v11302 = vshrl.u32 %v11301, 7
      %v11303 = vsub.s32 %v11300, %v11302
      %v11304 = vrot.slane %v11290, %v11303
      %v11305 = vcombine.low %v11297, %v11304
      %v11306 = vcombine.low %v9957, %v9965
      %v11307 = vcombine.low %v9964, %v9966
      %v11309 = vunpack.c.l.s4 1983009808
      %v11310 = vunpack.c.0.s8 %v11309
      %v11311 = vlaneseq
      %v11312 = vshrl.u32 %v11311, 7
      %v11313 = vsub.s32 %v11310, %v11312
      %v11314 = vrot.slane %v11306, %v11313
      %v11316 = vunpack.c.l.s4 1983009808
      %v11317 = vunpack.c.0.s8 %v11316
      %v11318 = vlaneseq
      %v11319 = vshrl.u32 %v11318, 7
      %v11320 = vsub.s32 %v11317, %v11319
      %v11321 = vrot.slane %v11307, %v11320
      %v11322 = vcombine.low %v11314, %v11321
      %v11323 = vcombine.low %v9982, %v9981
      %v11324 = vcombine.low %v9983, %v9991
      %v11326 = vunpack.c.l.s4 1983009808
      %v11327 = vunpack.c.0.s8 %v11326
      %v11328 = vlaneseq
      %v11329 = vshrl.u32 %v11328, 7
      %v11330 = vsub.s32 %v11327, %v11329
      %v11331 = vrot.slane %v11323, %v11330
      %v11333 = vunpack.c.l.s4 1983009808
      %v11334 = vunpack.c.0.s8 %v11333
      %v11335 = vlaneseq
      %v11336 = vshrl.u32 %v11335, 7
      %v11337 = vsub.s32 %v11334, %v11336
      %v11338 = vrot.slane %v11324, %v11337
      %v11339 = vcombine.low %v11331, %v11338
      %v11340 = vcombine.low %v9999, %v9998
      %v11341 = vcombine.low %v10008, %v10016
      %v11343 = vunpack.c.l.s4 1983009808
      %v11344 = vunpack.c.0.s8 %v11343
      %v11345 = vlaneseq
      %v11346 = vshrl.u32 %v11345, 7
      %v11347 = vsub.s32 %v11344, %v11346
      %v11348 = vrot.slane %v11340, %v11347
      %v11350 = vunpack.c.l.s4 1983009808
      %v11351 = vunpack.c.0.s8 %v11350
      %v11352 = vlaneseq
      %v11353 = vshrl.u32 %v11352, 7
      %v11354 = vsub.s32 %v11351, %v11353
      %v11355 = vrot.slane %v11341, %v11354
      %v11356 = vcombine.low %v11348, %v11355
      %v11357 = vcombine.low %v10015, %v10017
      %v11358 = vcombine.low %v10025, %v10033
      %v11360 = vunpack.c.l.s4 1983009808
      %v11361 = vunpack.c.0.s8 %v11360
      %v11362 = vlaneseq
      %v11363 = vshrl.u32 %v11362, 7
      %v11364 = vsub.s32 %v11361, %v11363
      %v11365 = vrot.slane %v11357, %v11364
      %v11367 = vunpack.c.l.s4 1983009808
      %v11368 = vunpack.c.0.s8 %v11367
      %v11369 = vlaneseq
      %v11370 = vshrl.u32 %v11369, 7
      %v11371 = vsub.s32 %v11368, %v11370
      %v11372 = vrot.slane %v11358, %v11371
      %v11373 = vcombine.low %v11365, %v11372
      %v11374 = vcombine.low %v10034, %v10042
      %v11375 = vcombine.low %v10050, %v10049
      %v11377 = vunpack.c.l.s4 1983009808
      %v11378 = vunpack.c.0.s8 %v11377
      %v11379 = vlaneseq
      %v11380 = vshrl.u32 %v11379, 7
      %v11381 = vsub.s32 %v11378, %v11380
      %v11382 = vrot.slane %v11374, %v11381
      %v11384 = vunpack.c.l.s4 1983009808
      %v11385 = vunpack.c.0.s8 %v11384
      %v11386 = vlaneseq
      %v11387 = vshrl.u32 %v11386, 7
      %v11388 = vsub.s32 %v11385, %v11387
      %v11389 = vrot.slane %v11375, %v11388
      %v11390 = vcombine.low %v11382, %v11389
      %v11391 = vcombine.low %v10051, %v10059
      %v11392 = vcombine.low %v10066, %v10068
      %v11394 = vunpack.c.l.s4 1983009808
      %v11395 = vunpack.c.0.s8 %v11394
      %v11396 = vlaneseq
      %v11397 = vshrl.u32 %v11396, 7
      %v11398 = vsub.s32 %v11395, %v11397
      %v11399 = vrot.slane %v11391, %v11398
      %v11401 = vunpack.c.l.s4 1983009808
      %v11402 = vunpack.c.0.s8 %v11401
      %v11403 = vlaneseq
      %v11404 = vshrl.u32 %v11403, 7
      %v11405 = vsub.s32 %v11402, %v11404
      %v11406 = vrot.slane %v11392, %v11405
      %v11407 = vcombine.low %v11399, %v11406
      %v11408 = vcombine.low %v10076, %v10084
      %v11409 = vcombine.low %v10083, %v10085
      %v11411 = vunpack.c.l.s4 1983009808
      %v11412 = vunpack.c.0.s8 %v11411
      %v11413 = vlaneseq
      %v11414 = vshrl.u32 %v11413, 7
      %v11415 = vsub.s32 %v11412, %v11414
      %v11416 = vrot.slane %v11408, %v11415
      %v11418 = vunpack.c.l.s4 1983009808
      %v11419 = vunpack.c.0.s8 %v11418
      %v11420 = vlaneseq
      %v11421 = vshrl.u32 %v11420, 7
      %v11422 = vsub.s32 %v11419, %v11421
      %v11423 = vrot.slane %v11409, %v11422
      %v11424 = vcombine.low %v11416, %v11423
      %v11425 = vcombine.low %v10101, %v10100
      %v11426 = vcombine.low %v10102, %v10110
      %v11428 = vunpack.c.l.s4 1983009808
      %v11429 = vunpack.c.0.s8 %v11428
      %v11430 = vlaneseq
      %v11431 = vshrl.u32 %v11430, 7
      %v11432 = vsub.s32 %v11429, %v11431
      %v11433 = vrot.slane %v11425, %v11432
      %v11435 = vunpack.c.l.s4 1983009808
      %v11436 = vunpack.c.0.s8 %v11435
      %v11437 = vlaneseq
      %v11438 = vshrl.u32 %v11437, 7
      %v11439 = vsub.s32 %v11436, %v11438
      %v11440 = vrot.slane %v11426, %v11439
      %v11441 = vcombine.low %v11433, %v11440
      %v11442 = vcombine.low %v10118, %v10117
      %v11443 = vcombine.low %v10127, %v10135
      %v11445 = vunpack.c.l.s4 1983009808
      %v11446 = vunpack.c.0.s8 %v11445
      %v11447 = vlaneseq
      %v11448 = vshrl.u32 %v11447, 7
      %v11449 = vsub.s32 %v11446, %v11448
      %v11450 = vrot.slane %v11442, %v11449
      %v11452 = vunpack.c.l.s4 1983009808
      %v11453 = vunpack.c.0.s8 %v11452
      %v11454 = vlaneseq
      %v11455 = vshrl.u32 %v11454, 7
      %v11456 = vsub.s32 %v11453, %v11455
      %v11457 = vrot.slane %v11443, %v11456
      %v11458 = vcombine.low %v11450, %v11457
      %v11459 = vcombine.low %v10134, %v10136
      %v11460 = vcombine.low %v10144, %v10152
      %v11462 = vunpack.c.l.s4 1983009808
      %v11463 = vunpack.c.0.s8 %v11462
      %v11464 = vlaneseq
      %v11465 = vshrl.u32 %v11464, 7
      %v11466 = vsub.s32 %v11463, %v11465
      %v11467 = vrot.slane %v11459, %v11466
      %v11469 = vunpack.c.l.s4 1983009808
      %v11470 = vunpack.c.0.s8 %v11469
      %v11471 = vlaneseq
      %v11472 = vshrl.u32 %v11471, 7
      %v11473 = vsub.s32 %v11470, %v11472
      %v11474 = vrot.slane %v11460, %v11473
      %v11475 = vcombine.low %v11467, %v11474
      %v11476 = vcombine.low %v10153, %v10161
      %v11477 = vcombine.low %v10169, %v10168
      %v11479 = vunpack.c.l.s4 1983009808
      %v11480 = vunpack.c.0.s8 %v11479
      %v11481 = vlaneseq
      %v11482 = vshrl.u32 %v11481, 7
      %v11483 = vsub.s32 %v11480, %v11482
      %v11484 = vrot.slane %v11476, %v11483
      %v11486 = vunpack.c.l.s4 1983009808
      %v11487 = vunpack.c.0.s8 %v11486
      %v11488 = vlaneseq
      %v11489 = vshrl.u32 %v11488, 7
      %v11490 = vsub.s32 %v11487, %v11489
      %v11491 = vrot.slane %v11477, %v11490
      %v11492 = vcombine.low %v11484, %v11491
      %v11493 = vcombine.low %v10170, %v10178
      %v11494 = vcombine.low %v10185, %v10187
      %v11496 = vunpack.c.l.s4 1983009808
      %v11497 = vunpack.c.0.s8 %v11496
      %v11498 = vlaneseq
      %v11499 = vshrl.u32 %v11498, 7
      %v11500 = vsub.s32 %v11497, %v11499
      %v11501 = vrot.slane %v11493, %v11500
      %v11503 = vunpack.c.l.s4 1983009808
      %v11504 = vunpack.c.0.s8 %v11503
      %v11505 = vlaneseq
      %v11506 = vshrl.u32 %v11505, 7
      %v11507 = vsub.s32 %v11504, %v11506
      %v11508 = vrot.slane %v11494, %v11507
      %v11509 = vcombine.low %v11501, %v11508
      %v11510 = vcombine.low %v10195, %v10203
      %v11511 = vcombine.low %v10202, %v10204
      %v11513 = vunpack.c.l.s4 1983009808
      %v11514 = vunpack.c.0.s8 %v11513
      %v11515 = vlaneseq
      %v11516 = vshrl.u32 %v11515, 7
      %v11517 = vsub.s32 %v11514, %v11516
      %v11518 = vrot.slane %v11510, %v11517
      %v11520 = vunpack.c.l.s4 1983009808
      %v11521 = vunpack.c.0.s8 %v11520
      %v11522 = vlaneseq
      %v11523 = vshrl.u32 %v11522, 7
      %v11524 = vsub.s32 %v11521, %v11523
      %v11525 = vrot.slane %v11511, %v11524
      %v11526 = vcombine.low %v11518, %v11525
      %11527 = vrot.lane.b32.xlu0 %v11237, 16
      %v11528 = vpop.permute.xlu0 %11527
      %11529 = vrot.lane.b32.xlu0 %v11254, 16
      %v11530 = vpop.permute.xlu0 %11529
      %11531 = vrot.lane.b32.xlu0 %v11271, 16
      %v11532 = vpop.permute.xlu0 %11531
      %11533 = vrot.lane.b32.xlu0 %v11288, 16
      %v11534 = vpop.permute.xlu0 %11533
      %11535 = vrot.lane.b32.xlu0 %v11305, 16
      %v11536 = vpop.permute.xlu0 %11535
      %11537 = vrot.lane.b32.xlu0 %v11322, 16
      %v11538 = vpop.permute.xlu0 %11537
      %11539 = vrot.lane.b32.xlu0 %v11339, 16
      %v11540 = vpop.permute.xlu0 %11539
      %11541 = vrot.lane.b32.xlu0 %v11356, 16
      %v11542 = vpop.permute.xlu0 %11541
      %11543 = vrot.lane.b32.xlu0 %v11373, 16
      %v11544 = vpop.permute.xlu0 %11543
      %11545 = vrot.lane.b32.xlu0 %v11390, 16
      %v11546 = vpop.permute.xlu0 %11545
      %11547 = vrot.lane.b32.xlu0 %v11407, 16
      %v11548 = vpop.permute.xlu0 %11547
      %11549 = vrot.lane.b32.xlu0 %v11424, 16
      %v11550 = vpop.permute.xlu0 %11549
      %11551 = vrot.lane.b32.xlu0 %v11441, 16
      %v11552 = vpop.permute.xlu0 %11551
      %11553 = vrot.lane.b32.xlu0 %v11458, 16
      %v11554 = vpop.permute.xlu0 %11553
      %11555 = vrot.lane.b32.xlu0 %v11475, 16
      %v11556 = vpop.permute.xlu0 %11555
      %11557 = vrot.lane.b32.xlu0 %v11492, 16
      %v11558 = vpop.permute.xlu0 %11557
      %11559 = vrot.lane.b32.xlu0 %v11509, 16
      %v11560 = vpop.permute.xlu0 %11559
      %11561 = vrot.lane.b32.xlu0 %v11526, 16
      %v11562 = vpop.permute.xlu0 %11561
      %v11581 = vcombine.low %v10569, %v10579
      %v11582 = vcombine.low %v10586, %v10596
      %v11583 = vcombine.low %v10603, %v10613
      %v11584 = vcombine.low %v10620, %v10630
      %v11585 = vcombine.low %v10637, %v10647
      %v11586 = vcombine.low %v10654, %v10664
      %v11587 = vcombine.low %v10671, %v10681
      %v11588 = vcombine.low %v10688, %v10698
      %v11589 = vcombine.low %v10705, %v10715
      %v11590 = vcombine.low %v10722, %v10732
      %v11591 = vcombine.low %v10739, %v10749
      %v11592 = vcombine.low %v10756, %v10766
      %v11593 = vcombine.low %v10773, %v10783
      %v11594 = vcombine.low %v10790, %v10800
      %v11595 = vcombine.low %v10807, %v10817
      %v11596 = vcombine.low %v10824, %v10834
      %v11597 = vcombine.low %v10212, %v10220
      %v11599 = vunpack.c.l.s4 1983009808
      %v11600 = vunpack.c.0.s8 %v11599
      %v11601 = vlaneseq
      %v11602 = vshrl.u32 %v11601, 7
      %v11603 = vsub.s32 %v11600, %v11602
      %v11604 = vrot.slane %v11597, %v11603
      %v11605 = vcombine.low %v10841, %v11604
      %v11606 = vcombine.low %v10219, %v10221
      %v11607 = vcombine.low %v10229, %v10237
      %v11609 = vunpack.c.l.s4 1983009808
      %v11610 = vunpack.c.0.s8 %v11609
      %v11611 = vlaneseq
      %v11612 = vshrl.u32 %v11611, 7
      %v11613 = vsub.s32 %v11610, %v11612
      %v11614 = vrot.slane %v11606, %v11613
      %v11616 = vunpack.c.l.s4 1983009808
      %v11617 = vunpack.c.0.s8 %v11616
      %v11618 = vlaneseq
      %v11619 = vshrl.u32 %v11618, 7
      %v11620 = vsub.s32 %v11617, %v11619
      %v11621 = vrot.slane %v11607, %v11620
      %v11622 = vcombine.low %v11614, %v11621
      %11623 = vrot.lane.b32.xlu0 %v11581, 24
      %v11624 = vpop.permute.xlu0 %11623
      %11625 = vrot.lane.b32.xlu0 %v11582, 24
      %v11626 = vpop.permute.xlu0 %11625
      %11627 = vrot.lane.b32.xlu0 %v11583, 24
      %v11628 = vpop.permute.xlu0 %11627
      %11629 = vrot.lane.b32.xlu0 %v11584, 24
      %v11630 = vpop.permute.xlu0 %11629
      %11631 = vrot.lane.b32.xlu0 %v11585, 24
      %v11632 = vpop.permute.xlu0 %11631
      %11633 = vrot.lane.b32.xlu0 %v11586, 24
      %v11634 = vpop.permute.xlu0 %11633
      %11635 = vrot.lane.b32.xlu0 %v11587, 24
      %v11636 = vpop.permute.xlu0 %11635
      %11637 = vrot.lane.b32.xlu0 %v11588, 24
      %v11638 = vpop.permute.xlu0 %11637
      %11639 = vrot.lane.b32.xlu0 %v11589, 24
      %v11640 = vpop.permute.xlu0 %11639
      %11641 = vrot.lane.b32.xlu0 %v11590, 24
      %v11642 = vpop.permute.xlu0 %11641
      %11643 = vrot.lane.b32.xlu0 %v11591, 24
      %v11644 = vpop.permute.xlu0 %11643
      %11645 = vrot.lane.b32.xlu0 %v11592, 24
      %v11646 = vpop.permute.xlu0 %11645
      %11647 = vrot.lane.b32.xlu0 %v11593, 24
      %v11648 = vpop.permute.xlu0 %11647
      %11649 = vrot.lane.b32.xlu0 %v11594, 24
      %v11650 = vpop.permute.xlu0 %11649
      %11651 = vrot.lane.b32.xlu0 %v11595, 24
      %v11652 = vpop.permute.xlu0 %11651
      %11653 = vrot.lane.b32.xlu0 %v11596, 24
      %v11654 = vpop.permute.xlu0 %11653
      %11655 = vrot.lane.b32.xlu0 %v11605, 24
      %v11656 = vpop.permute.xlu0 %11655
      %11657 = vrot.lane.b32.xlu0 %v11622, 24
      %v11658 = vpop.permute.xlu0 %11657
      %v11677 = vcombine.low %v10893, %v10903
      %v11678 = vcombine.low %v10910, %v10920
      %v11679 = vcombine.low %v10927, %v10937
      %v11680 = vcombine.low %v10944, %v10954
      %v11681 = vcombine.low %v10961, %v10971
      %v11682 = vcombine.low %v10978, %v10988
      %v11683 = vcombine.low %v10995, %v11005
      %v11684 = vcombine.low %v11012, %v11022
      %v11685 = vcombine.low %v11029, %v11039
      %v11686 = vcombine.low %v11046, %v11056
      %v11687 = vcombine.low %v11063, %v11073
      %v11688 = vcombine.low %v11080, %v11090
      %v11689 = vcombine.low %v11097, %v11107
      %v11690 = vcombine.low %v11114, %v11124
      %v11691 = vcombine.low %v11131, %v11141
      %v11692 = vcombine.low %v11148, %v11158
      %v11693 = vcombine.low %v10502, %v10505
      %v11695 = vunpack.c.l.s4 1983009808
      %v11696 = vunpack.c.0.s8 %v11695
      %v11697 = vlaneseq
      %v11698 = vshrl.u32 %v11697, 7
      %v11699 = vsub.s32 %v11696, %v11698
      %v11700 = vrot.slane %v11693, %v11699
      %v11701 = vcombine.low %v11165, %v11700
      %v11702 = vcombine.low %v10508, %v10511
      %v11703 = vcombine.low %v10514, %v10517
      %v11705 = vunpack.c.l.s4 1983009808
      %v11706 = vunpack.c.0.s8 %v11705
      %v11707 = vlaneseq
      %v11708 = vshrl.u32 %v11707, 7
      %v11709 = vsub.s32 %v11706, %v11708
      %v11710 = vrot.slane %v11702, %v11709
      %v11712 = vunpack.c.l.s4 1983009808
      %v11713 = vunpack.c.0.s8 %v11712
      %v11714 = vlaneseq
      %v11715 = vshrl.u32 %v11714, 7
      %v11716 = vsub.s32 %v11713, %v11715
      %v11717 = vrot.slane %v11703, %v11716
      %v11718 = vcombine.low %v11710, %v11717
      %11719 = vrot.lane.b32.xlu0 %v11677, 32
      %v11720 = vpop.permute.xlu0 %11719
      %11721 = vrot.lane.b32.xlu0 %v11678, 32
      %v11722 = vpop.permute.xlu0 %11721
      %11723 = vrot.lane.b32.xlu0 %v11679, 32
      %v11724 = vpop.permute.xlu0 %11723
      %11725 = vrot.lane.b32.xlu0 %v11680, 32
      %v11726 = vpop.permute.xlu0 %11725
      %11727 = vrot.lane.b32.xlu0 %v11681, 32
      %v11728 = vpop.permute.xlu0 %11727
      %11729 = vrot.lane.b32.xlu0 %v11682, 32
      %v11730 = vpop.permute.xlu0 %11729
      %11731 = vrot.lane.b32.xlu0 %v11683, 32
      %v11732 = vpop.permute.xlu0 %11731
      %11733 = vrot.lane.b32.xlu0 %v11684, 32
      %v11734 = vpop.permute.xlu0 %11733
      %11735 = vrot.lane.b32.xlu0 %v11685, 32
      %v11736 = vpop.permute.xlu0 %11735
      %11737 = vrot.lane.b32.xlu0 %v11686, 32
      %v11738 = vpop.permute.xlu0 %11737
      %11739 = vrot.lane.b32.xlu0 %v11687, 32
      %v11740 = vpop.permute.xlu0 %11739
      %11741 = vrot.lane.b32.xlu0 %v11688, 32
      %v11742 = vpop.permute.xlu0 %11741
      %11743 = vrot.lane.b32.xlu0 %v11689, 32
      %v11744 = vpop.permute.xlu0 %11743
      %11745 = vrot.lane.b32.xlu0 %v11690, 32
      %v11746 = vpop.permute.xlu0 %11745
      %11747 = vrot.lane.b32.xlu0 %v11691, 32
      %v11748 = vpop.permute.xlu0 %11747
      %11749 = vrot.lane.b32.xlu0 %v11692, 32
      %v11750 = vpop.permute.xlu0 %11749
      %11751 = vrot.lane.b32.xlu0 %v11701, 32
      %v11752 = vpop.permute.xlu0 %11751
      %11753 = vrot.lane.b32.xlu0 %v11718, 32
      %v11754 = vpop.permute.xlu0 %11753
      %v11773 = vcombine.low %v11253, %v11263
      %v11774 = vcombine.low %v11270, %v11280
      %v11775 = vcombine.low %v11287, %v11297
      %v11776 = vcombine.low %v11304, %v11314
      %v11777 = vcombine.low %v11321, %v11331
      %v11778 = vcombine.low %v11338, %v11348
      %v11779 = vcombine.low %v11355, %v11365
      %v11780 = vcombine.low %v11372, %v11382
      %v11781 = vcombine.low %v11389, %v11399
      %v11782 = vcombine.low %v11406, %v11416
      %v11783 = vcombine.low %v11423, %v11433
      %v11784 = vcombine.low %v11440, %v11450
      %v11785 = vcombine.low %v11457, %v11467
      %v11786 = vcombine.low %v11474, %v11484
      %v11787 = vcombine.low %v11491, %v11501
      %v11788 = vcombine.low %v11508, %v11518
      %v11789 = vcombine.low %v10220, %v10219
      %v11791 = vunpack.c.l.s4 1983009808
      %v11792 = vunpack.c.0.s8 %v11791
      %v11793 = vlaneseq
      %v11794 = vshrl.u32 %v11793, 7
      %v11795 = vsub.s32 %v11792, %v11794
      %v11796 = vrot.slane %v11789, %v11795
      %v11797 = vcombine.low %v11525, %v11796
      %v11798 = vcombine.low %v10221, %v10229
      %v11799 = vcombine.low %v10237, %v10236
      %v11801 = vunpack.c.l.s4 1983009808
      %v11802 = vunpack.c.0.s8 %v11801
      %v11803 = vlaneseq
      %v11804 = vshrl.u32 %v11803, 7
      %v11805 = vsub.s32 %v11802, %v11804
      %v11806 = vrot.slane %v11798, %v11805
      %v11808 = vunpack.c.l.s4 1983009808
      %v11809 = vunpack.c.0.s8 %v11808
      %v11810 = vlaneseq
      %v11811 = vshrl.u32 %v11810, 7
      %v11812 = vsub.s32 %v11809, %v11811
      %v11813 = vrot.slane %v11799, %v11812
      %v11814 = vcombine.low %v11806, %v11813
      %11815 = vrot.lane.b32.xlu0 %v11773, 40
      %v11816 = vpop.permute.xlu0 %11815
      %11817 = vrot.lane.b32.xlu0 %v11774, 40
      %v11818 = vpop.permute.xlu0 %11817
      %11819 = vrot.lane.b32.xlu0 %v11775, 40
      %v11820 = vpop.permute.xlu0 %11819
      %11821 = vrot.lane.b32.xlu0 %v11776, 40
      %v11822 = vpop.permute.xlu0 %11821
      %11823 = vrot.lane.b32.xlu0 %v11777, 40
      %v11824 = vpop.permute.xlu0 %11823
      %11825 = vrot.lane.b32.xlu0 %v11778, 40
      %v11826 = vpop.permute.xlu0 %11825
      %11827 = vrot.lane.b32.xlu0 %v11779, 40
      %v11828 = vpop.permute.xlu0 %11827
      %11829 = vrot.lane.b32.xlu0 %v11780, 40
      %v11830 = vpop.permute.xlu0 %11829
      %11831 = vrot.lane.b32.xlu0 %v11781, 40
      %v11832 = vpop.permute.xlu0 %11831
      %11833 = vrot.lane.b32.xlu0 %v11782, 40
      %v11834 = vpop.permute.xlu0 %11833
      %11835 = vrot.lane.b32.xlu0 %v11783, 40
      %v11836 = vpop.permute.xlu0 %11835
      %11837 = vrot.lane.b32.xlu0 %v11784, 40
      %v11838 = vpop.permute.xlu0 %11837
      %11839 = vrot.lane.b32.xlu0 %v11785, 40
      %v11840 = vpop.permute.xlu0 %11839
      %11841 = vrot.lane.b32.xlu0 %v11786, 40
      %v11842 = vpop.permute.xlu0 %11841
      %11843 = vrot.lane.b32.xlu0 %v11787, 40
      %v11844 = vpop.permute.xlu0 %11843
      %11845 = vrot.lane.b32.xlu0 %v11788, 40
      %v11846 = vpop.permute.xlu0 %11845
      %11847 = vrot.lane.b32.xlu0 %v11797, 40
      %v11848 = vpop.permute.xlu0 %11847
      %11849 = vrot.lane.b32.xlu0 %v11814, 40
      %v11850 = vpop.permute.xlu0 %11849
      %v11869 = vcombine.low %v11604, %v11614
      %v11870 = vcombine.low %v10238, %v10246
      %v11872 = vunpack.c.l.s4 1983009808
      %v11873 = vunpack.c.0.s8 %v11872
      %v11874 = vlaneseq
      %v11875 = vshrl.u32 %v11874, 7
      %v11876 = vsub.s32 %v11873, %v11875
      %v11877 = vrot.slane %v11870, %v11876
      %v11878 = vcombine.low %v11621, %v11877
      %v11879 = vcombine.low %v10254, %v10253
      %v11880 = vcombine.low %v10255, %v10262
      %v11882 = vunpack.c.l.s4 1983009808
      %v11883 = vunpack.c.0.s8 %v11882
      %v11884 = vlaneseq
      %v11885 = vshrl.u32 %v11884, 7
      %v11886 = vsub.s32 %v11883, %v11885
      %v11887 = vrot.slane %v11879, %v11886
      %v11889 = vunpack.c.l.s4 1983009808
      %v11890 = vunpack.c.0.s8 %v11889
      %v11891 = vlaneseq
      %v11892 = vshrl.u32 %v11891, 7
      %v11893 = vsub.s32 %v11890, %v11892
      %v11894 = vrot.slane %v11880, %v11893
      %v11895 = vcombine.low %v11887, %v11894
      %11896 = vrot.lane.b32.xlu0 %v10604, 48
      %v11897 = vpop.permute.xlu0 %11896
      %11898 = vrot.lane.b32.xlu0 %v10621, 48
      %v11899 = vpop.permute.xlu0 %11898
      %11900 = vrot.lane.b32.xlu0 %v10638, 48
      %v11901 = vpop.permute.xlu0 %11900
      %11902 = vrot.lane.b32.xlu0 %v10655, 48
      %v11903 = vpop.permute.xlu0 %11902
      %11904 = vrot.lane.b32.xlu0 %v10672, 48
      %v11905 = vpop.permute.xlu0 %11904
      %11906 = vrot.lane.b32.xlu0 %v10689, 48
      %v11907 = vpop.permute.xlu0 %11906
      %11908 = vrot.lane.b32.xlu0 %v10706, 48
      %v11909 = vpop.permute.xlu0 %11908
      %11910 = vrot.lane.b32.xlu0 %v10723, 48
      %v11911 = vpop.permute.xlu0 %11910
      %11912 = vrot.lane.b32.xlu0 %v10740, 48
      %v11913 = vpop.permute.xlu0 %11912
      %11914 = vrot.lane.b32.xlu0 %v10757, 48
      %v11915 = vpop.permute.xlu0 %11914
      %11916 = vrot.lane.b32.xlu0 %v10774, 48
      %v11917 = vpop.permute.xlu0 %11916
      %11918 = vrot.lane.b32.xlu0 %v10791, 48
      %v11919 = vpop.permute.xlu0 %11918
      %11920 = vrot.lane.b32.xlu0 %v10808, 48
      %v11921 = vpop.permute.xlu0 %11920
      %11922 = vrot.lane.b32.xlu0 %v10825, 48
      %v11923 = vpop.permute.xlu0 %11922
      %11924 = vrot.lane.b32.xlu0 %v10842, 48
      %v11925 = vpop.permute.xlu0 %11924
      %11926 = vrot.lane.b32.xlu0 %v11869, 48
      %v11927 = vpop.permute.xlu0 %11926
      %11928 = vrot.lane.b32.xlu0 %v11878, 48
      %v11929 = vpop.permute.xlu0 %11928
      %11930 = vrot.lane.b32.xlu0 %v11895, 48
      %v11931 = vpop.permute.xlu0 %11930
      %v11950 = vcombine.low %v11700, %v11710
      %v11951 = vcombine.low %v10521, %v10524
      %v11953 = vunpack.c.l.s4 1983009808
      %v11954 = vunpack.c.0.s8 %v11953
      %v11955 = vlaneseq
      %v11956 = vshrl.u32 %v11955, 7
      %v11957 = vsub.s32 %v11954, %v11956
      %v11958 = vrot.slane %v11951, %v11957
      %v11959 = vcombine.low %v11717, %v11958
      %v11960 = vcombine.low %v10527, %v10530
      %v11961 = vcombine.low %v10533, %v10536
      %v11963 = vunpack.c.l.s4 1983009808
      %v11964 = vunpack.c.0.s8 %v11963
      %v11965 = vlaneseq
      %v11966 = vshrl.u32 %v11965, 7
      %v11967 = vsub.s32 %v11964, %v11966
      %v11968 = vrot.slane %v11960, %v11967
      %v11970 = vunpack.c.l.s4 1983009808
      %v11971 = vunpack.c.0.s8 %v11970
      %v11972 = vlaneseq
      %v11973 = vshrl.u32 %v11972, 7
      %v11974 = vsub.s32 %v11971, %v11973
      %v11975 = vrot.slane %v11961, %v11974
      %v11976 = vcombine.low %v11968, %v11975
      %11977 = vrot.lane.b32.xlu0 %v10928, 56
      %v11978 = vpop.permute.xlu0 %11977
      %11979 = vrot.lane.b32.xlu0 %v10945, 56
      %v11980 = vpop.permute.xlu0 %11979
      %11981 = vrot.lane.b32.xlu0 %v10962, 56
      %v11982 = vpop.permute.xlu0 %11981
      %11983 = vrot.lane.b32.xlu0 %v10979, 56
      %v11984 = vpop.permute.xlu0 %11983
      %11985 = vrot.lane.b32.xlu0 %v10996, 56
      %v11986 = vpop.permute.xlu0 %11985
      %11987 = vrot.lane.b32.xlu0 %v11013, 56
      %v11988 = vpop.permute.xlu0 %11987
      %11989 = vrot.lane.b32.xlu0 %v11030, 56
      %v11990 = vpop.permute.xlu0 %11989
      %11991 = vrot.lane.b32.xlu0 %v11047, 56
      %v11992 = vpop.permute.xlu0 %11991
      %11993 = vrot.lane.b32.xlu0 %v11064, 56
      %v11994 = vpop.permute.xlu0 %11993
      %11995 = vrot.lane.b32.xlu0 %v11081, 56
      %v11996 = vpop.permute.xlu0 %11995
      %11997 = vrot.lane.b32.xlu0 %v11098, 56
      %v11998 = vpop.permute.xlu0 %11997
      %11999 = vrot.lane.b32.xlu0 %v11115, 56
      %v12000 = vpop.permute.xlu0 %11999
      %12001 = vrot.lane.b32.xlu0 %v11132, 56
      %v12002 = vpop.permute.xlu0 %12001
      %12003 = vrot.lane.b32.xlu0 %v11149, 56
      %v12004 = vpop.permute.xlu0 %12003
      %12005 = vrot.lane.b32.xlu0 %v11166, 56
      %v12006 = vpop.permute.xlu0 %12005
      %12007 = vrot.lane.b32.xlu0 %v11950, 56
      %v12008 = vpop.permute.xlu0 %12007
      %12009 = vrot.lane.b32.xlu0 %v11959, 56
      %v12010 = vpop.permute.xlu0 %12009
      %12011 = vrot.lane.b32.xlu0 %v11976, 56
      %v12012 = vpop.permute.xlu0 %12011
      %v12031 = vcombine.low %v11796, %v11806
      %v12032 = vcombine.low %v10246, %v10254
      %v12034 = vunpack.c.l.s4 1983009808
      %v12035 = vunpack.c.0.s8 %v12034
      %v12036 = vlaneseq
      %v12037 = vshrl.u32 %v12036, 7
      %v12038 = vsub.s32 %v12035, %v12037
      %v12039 = vrot.slane %v12032, %v12038
      %v12040 = vcombine.low %v11813, %v12039
      %v12041 = vcombine.low %v10253, %v10255
      %v12042 = vcombine.low %v10262, %v10263
      %v12044 = vunpack.c.l.s4 1983009808
      %v12045 = vunpack.c.0.s8 %v12044
      %v12046 = vlaneseq
      %v12047 = vshrl.u32 %v12046, 7
      %v12048 = vsub.s32 %v12045, %v12047
      %v12049 = vrot.slane %v12041, %v12048
      %v12051 = vunpack.c.l.s4 1983009808
      %v12052 = vunpack.c.0.s8 %v12051
      %v12053 = vlaneseq
      %v12054 = vshrl.u32 %v12053, 7
      %v12055 = vsub.s32 %v12052, %v12054
      %v12056 = vrot.slane %v12042, %v12055
      %v12057 = vcombine.low %v12049, %v12056
      %12058 = vrot.lane.b32.xlu0 %v11288, 64
      %v12059 = vpop.permute.xlu0 %12058
      %12060 = vrot.lane.b32.xlu0 %v11305, 64
      %v12061 = vpop.permute.xlu0 %12060
      %12062 = vrot.lane.b32.xlu0 %v11322, 64
      %v12063 = vpop.permute.xlu0 %12062
      %12064 = vrot.lane.b32.xlu0 %v11339, 64
      %v12065 = vpop.permute.xlu0 %12064
      %12066 = vrot.lane.b32.xlu0 %v11356, 64
      %v12067 = vpop.permute.xlu0 %12066
      %12068 = vrot.lane.b32.xlu0 %v11373, 64
      %v12069 = vpop.permute.xlu0 %12068
      %12070 = vrot.lane.b32.xlu0 %v11390, 64
      %v12071 = vpop.permute.xlu0 %12070
      %12072 = vrot.lane.b32.xlu0 %v11407, 64
      %v12073 = vpop.permute.xlu0 %12072
      %12074 = vrot.lane.b32.xlu0 %v11424, 64
      %v12075 = vpop.permute.xlu0 %12074
      %12076 = vrot.lane.b32.xlu0 %v11441, 64
      %v12077 = vpop.permute.xlu0 %12076
      %12078 = vrot.lane.b32.xlu0 %v11458, 64
      %v12079 = vpop.permute.xlu0 %12078
      %12080 = vrot.lane.b32.xlu0 %v11475, 64
      %v12081 = vpop.permute.xlu0 %12080
      %12082 = vrot.lane.b32.xlu0 %v11492, 64
      %v12083 = vpop.permute.xlu0 %12082
      %12084 = vrot.lane.b32.xlu0 %v11509, 64
      %v12085 = vpop.permute.xlu0 %12084
      %12086 = vrot.lane.b32.xlu0 %v11526, 64
      %v12087 = vpop.permute.xlu0 %12086
      %12088 = vrot.lane.b32.xlu0 %v12031, 64
      %v12089 = vpop.permute.xlu0 %12088
      %12090 = vrot.lane.b32.xlu0 %v12040, 64
      %v12091 = vpop.permute.xlu0 %12090
      %12092 = vrot.lane.b32.xlu0 %v12057, 64
      %v12093 = vpop.permute.xlu0 %12092
      %v12112 = vsel %vm9339, %v10553, %v11168
      %v12113 = vsel %vm9339, %v10570, %v11170
      %v12114 = vsel %vm9339, %v10587, %v11172
      %v12115 = vsel %vm9339, %v10604, %v11174
      %v12116 = vsel %vm9339, %v10621, %v11176
      %v12117 = vsel %vm9339, %v10638, %v11178
      %v12118 = vsel %vm9339, %v10655, %v11180
      %v12119 = vsel %vm9339, %v10672, %v11182
      %v12120 = vsel %vm9339, %v10689, %v11184
      %v12121 = vsel %vm9339, %v10706, %v11186
      %v12122 = vsel %vm9339, %v10723, %v11188
      %v12123 = vsel %vm9339, %v10740, %v11190
      %v12124 = vsel %vm9339, %v10757, %v11192
      %v12125 = vsel %vm9339, %v10774, %v11194
      %v12126 = vsel %vm9339, %v10791, %v11196
      %v12127 = vsel %vm9339, %v10808, %v11198
      %v12128 = vsel %vm9339, %v10825, %v11200
      %v12129 = vsel %vm9339, %v10842, %v11202
      %v12130 = vsel %vm9391, %v12112, %v11528
      %v12131 = vsel %vm9391, %v12113, %v11530
      %v12132 = vsel %vm9391, %v12114, %v11532
      %v12133 = vsel %vm9391, %v12115, %v11534
      %v12134 = vsel %vm9391, %v12116, %v11536
      %v12135 = vsel %vm9391, %v12117, %v11538
      %v12136 = vsel %vm9391, %v12118, %v11540
      %v12137 = vsel %vm9391, %v12119, %v11542
      %v12138 = vsel %vm9391, %v12120, %v11544
      %v12139 = vsel %vm9391, %v12121, %v11546
      %v12140 = vsel %vm9391, %v12122, %v11548
      %v12141 = vsel %vm9391, %v12123, %v11550
      %v12142 = vsel %vm9391, %v12124, %v11552
      %v12143 = vsel %vm9391, %v12125, %v11554
      %v12144 = vsel %vm9391, %v12126, %v11556
      %v12145 = vsel %vm9391, %v12127, %v11558
      %v12146 = vsel %vm9391, %v12128, %v11560
      %v12147 = vsel %vm9391, %v12129, %v11562
      %v12148 = vsel %vm9443, %v12130, %v11624
      %v12149 = vsel %vm9443, %v12131, %v11626
      %v12150 = vsel %vm9443, %v12132, %v11628
      %v12151 = vsel %vm9443, %v12133, %v11630
      %v12152 = vsel %vm9443, %v12134, %v11632
      %v12153 = vsel %vm9443, %v12135, %v11634
      %v12154 = vsel %vm9443, %v12136, %v11636
      %v12155 = vsel %vm9443, %v12137, %v11638
      %v12156 = vsel %vm9443, %v12138, %v11640
      %v12157 = vsel %vm9443, %v12139, %v11642
      %v12158 = vsel %vm9443, %v12140, %v11644
      %v12159 = vsel %vm9443, %v12141, %v11646
      %v12160 = vsel %vm9443, %v12142, %v11648
      %v12161 = vsel %vm9443, %v12143, %v11650
      %v12162 = vsel %vm9443, %v12144, %v11652
      %v12163 = vsel %vm9443, %v12145, %v11654
      %v12164 = vsel %vm9443, %v12146, %v11656
      %v12165 = vsel %vm9443, %v12147, %v11658
      %v12166 = vsel %vm9495, %v12148, %v11720
      %v12167 = vsel %vm9495, %v12149, %v11722
      %v12168 = vsel %vm9495, %v12150, %v11724
      %v12169 = vsel %vm9495, %v12151, %v11726
      %v12170 = vsel %vm9495, %v12152, %v11728
      %v12171 = vsel %vm9495, %v12153, %v11730
      %v12172 = vsel %vm9495, %v12154, %v11732
      %v12173 = vsel %vm9495, %v12155, %v11734
      %v12174 = vsel %vm9495, %v12156, %v11736
      %v12175 = vsel %vm9495, %v12157, %v11738
      %v12176 = vsel %vm9495, %v12158, %v11740
      %v12177 = vsel %vm9495, %v12159, %v11742
      %v12178 = vsel %vm9495, %v12160, %v11744
      %v12179 = vsel %vm9495, %v12161, %v11746
      %v12180 = vsel %vm9495, %v12162, %v11748
      %v12181 = vsel %vm9495, %v12163, %v11750
      %v12182 = vsel %vm9495, %v12164, %v11752
      %v12183 = vsel %vm9495, %v12165, %v11754
      %vm12184 = vcmask 326656
      %v12185 = vsel %vm12184, %v12166, %v11816
      %v12186 = vsel %vm12184, %v12167, %v11818
      %v12187 = vsel %vm12184, %v12168, %v11820
      %v12188 = vsel %vm12184, %v12169, %v11822
      %v12189 = vsel %vm12184, %v12170, %v11824
      %v12190 = vsel %vm12184, %v12171, %v11826
      %v12191 = vsel %vm12184, %v12172, %v11828
      %v12192 = vsel %vm12184, %v12173, %v11830
      %v12193 = vsel %vm12184, %v12174, %v11832
      %v12194 = vsel %vm12184, %v12175, %v11834
      %v12195 = vsel %vm12184, %v12176, %v11836
      %v12196 = vsel %vm12184, %v12177, %v11838
      %v12197 = vsel %vm12184, %v12178, %v11840
      %v12198 = vsel %vm12184, %v12179, %v11842
      %v12199 = vsel %vm12184, %v12180, %v11844
      %v12200 = vsel %vm12184, %v12181, %v11846
      %v12201 = vsel %vm12184, %v12182, %v11848
      %v12202 = vsel %vm12184, %v12183, %v11850
      %vm12203 = vcmask 392192
      %v12204 = vsel %vm12203, %v12185, %v11897
      %v12205 = vsel %vm12203, %v12186, %v11899
      %v12206 = vsel %vm12203, %v12187, %v11901
      %v12207 = vsel %vm12203, %v12188, %v11903
      %v12208 = vsel %vm12203, %v12189, %v11905
      %v12209 = vsel %vm12203, %v12190, %v11907
      %v12210 = vsel %vm12203, %v12191, %v11909
      %v12211 = vsel %vm12203, %v12192, %v11911
      %v12212 = vsel %vm12203, %v12193, %v11913
      %v12213 = vsel %vm12203, %v12194, %v11915
      %v12214 = vsel %vm12203, %v12195, %v11917
      %v12215 = vsel %vm12203, %v12196, %v11919
      %v12216 = vsel %vm12203, %v12197, %v11921
      %v12217 = vsel %vm12203, %v12198, %v11923
      %v12218 = vsel %vm12203, %v12199, %v11925
      %v12219 = vsel %vm12203, %v12200, %v11927
      %v12220 = vsel %vm12203, %v12201, %v11929
      %v12221 = vsel %vm12203, %v12202, %v11931
      %vm12222 = vcmask 457728
      %v12223 = vsel %vm12222, %v12204, %v11978
      %v12224 = vsel %vm12222, %v12205, %v11980
      %v12225 = vsel %vm12222, %v12206, %v11982
      %v12226 = vsel %vm12222, %v12207, %v11984
      %v12227 = vsel %vm12222, %v12208, %v11986
      %v12228 = vsel %vm12222, %v12209, %v11988
      %v12229 = vsel %vm12222, %v12210, %v11990
      %v12230 = vsel %vm12222, %v12211, %v11992
      %v12231 = vsel %vm12222, %v12212, %v11994
      %v12232 = vsel %vm12222, %v12213, %v11996
      %v12233 = vsel %vm12222, %v12214, %v11998
      %v12234 = vsel %vm12222, %v12215, %v12000
      %v12235 = vsel %vm12222, %v12216, %v12002
      %v12236 = vsel %vm12222, %v12217, %v12004
      %v12237 = vsel %vm12222, %v12218, %v12006
      %v12238 = vsel %vm12222, %v12219, %v12008
      %v12239 = vsel %vm12222, %v12220, %v12010
      %v12240 = vsel %vm12222, %v12221, %v12012
      %vm12241 = vcmask 523264
      %v12242 = vsel %vm12241, %v12223, %v12059
      %v12243 = vsel %vm12241, %v12224, %v12061
      %v12244 = vsel %vm12241, %v12225, %v12063
      %v12245 = vsel %vm12241, %v12226, %v12065
      %v12246 = vsel %vm12241, %v12227, %v12067
      %v12247 = vsel %vm12241, %v12228, %v12069
      %v12248 = vsel %vm12241, %v12229, %v12071
      %v12249 = vsel %vm12241, %v12230, %v12073
      %v12250 = vsel %vm12241, %v12231, %v12075
      %v12251 = vsel %vm12241, %v12232, %v12077
      %v12252 = vsel %vm12241, %v12233, %v12079
      %v12253 = vsel %vm12241, %v12234, %v12081
      %v12254 = vsel %vm12241, %v12235, %v12083
      %v12255 = vsel %vm12241, %v12236, %v12085
      %v12256 = vsel %vm12241, %v12237, %v12087
      %v12257 = vsel %vm12241, %v12238, %v12089
      %v12258 = vsel %vm12241, %v12239, %v12091
      %v12259 = vsel %vm12241, %v12240, %v12093
      %v12260 = vpack.c.bf16 %v12243, %v12242
      %v12261 = vpack.c.bf16 %v12245, %v12244
      %v12262 = vpack.c.bf16 %v12247, %v12246
      %v12263 = vpack.c.bf16 %v12249, %v12248
      %v12264 = vpack.c.bf16 %v12251, %v12250
      %v12265 = vpack.c.bf16 %v12253, %v12252
      %v12266 = vpack.c.bf16 %v12255, %v12254
      %v12267 = vpack.c.bf16 %v12257, %v12256
      %v12268 = vpack.c.bf16 %v12259, %v12258
      %v12269 = vld [vmem:[%s4] sm:$0xf]
      %v12270 = vld [vmem:[%s4 + $0x4] sm:$0xf]
      %v12271 = vld [vmem:[%s4 + $0x8] sm:$0xf]
      %v12272 = vld [vmem:[%s4 + $0xc] sm:$0xf]
      %v12273 = vld [vmem:[%s4 + $0x10] sm:$0xf]
      %v12274 = vld [vmem:[%s4 + $0x14] sm:$0xf]
      %v12275 = vld [vmem:[%s4 + $0x18] sm:$0xf]
      %v12276 = vld [vmem:[%s4 + $0x1c] sm:$0xf]
      %v12277 = vld [vmem:[%s4 + $0x20] sm:$0xf]
      %v12287 = vunpack.c.l.b16 %v12269
      %v12288 = vunpack.c.l.b16 %v12270
      %v12289 = vunpack.c.l.b16 %v12271
      %v12290 = vunpack.c.l.b16 %v12272
      %v12291 = vunpack.c.l.b16 %v12273
      %v12292 = vunpack.c.l.b16 %v12274
      %v12293 = vunpack.c.l.b16 %v12275
      %v12294 = vunpack.c.l.b16 %v12276
      %v12295 = vunpack.c.l.b16 %v12277
      %v12296 = vpack.c.b16 %v12288, %v12287
      %v12297 = vpack.c.b16 %v12290, %v12289
      %v12298 = vpack.c.b16 %v12292, %v12291
      %v12299 = vpack.c.b16 %v12294, %v12293
      %v12300 = vpack.c.b16 %v12295, %v12295
      %vm12305 = vcmask 588800
      %v12307 = vsel %vm12305, %v12260, 0
      %v12310 = vsel %vm12305, %v12261, 0
      %v12313 = vsel %vm12305, %v12262, 0
      %v12316 = vsel %vm12305, %v12263, 0
      %v12319 = vsel %vm12305, %v12264, 0
      %v12322 = vsel %vm12305, %v12265, 0
      %v12325 = vsel %vm12305, %v12266, 0
      %v12328 = vsel %vm12305, %v12267, 0
      %v12331 = vsel %vm12305, %v12268, 0
      %vm12333 = vcmask 1043456
      %v12335 = vsel %vm12333, %v12300, 0
      %12337 = vmatprep.subr.bf16.mxu0 0
      %12338 = vmatpush1.bf16.msra.mxu0 %v12296
      %12339 = vmatprep.subr.bf16.mxu0 0
      %12340 = vmatpush1.bf16.msra.mxu0 %v12297
      %12341 = vmatprep.subr.bf16.mxu0 0
      %12342 = vmatpush1.bf16.msra.mxu0 %v12298
      %12343 = vmatprep.subr.bf16.mxu0 0
      %12344 = vmatpush1.bf16.msra.mxu0 %v12299
      %12345 = vmatprep.subr.bf16.mxu0 0
      %12346 = vmatpush1.bf16.msra.mxu0 %v12335
      %12347 = vmatprep.subr.bf16.mxu0 0
      %12348 = vmatpush1.bf16.msra.mxu0 0
      %12349 = vmatprep.subr.bf16.mxu0 0
      %12350 = vmatpush1.bf16.msra.mxu0 0
      %12351 = vmatprep.subr.bf16.mxu0 0
      %12352 = vmatpush1.bf16.msra.mxu0 0
      %12353 = vmatprep.subr.bf16.mxu0 0
      %12354 = vmatpush1.bf16.msra.mxu0 0
      %12355 = vmatprep.subr.bf16.mxu0 0
      %12356 = vmatpush1.bf16.msra.mxu0 0
      %12357 = vmatprep.subr.bf16.mxu0 0
      %12358 = vmatpush1.bf16.msra.mxu0 0
      %12359 = vmatprep.subr.bf16.mxu0 0
      %12360 = vmatpush1.bf16.msra.mxu0 0
      %12361 = vmatprep.subr.bf16.mxu0 0
      %12362 = vmatpush1.bf16.msra.mxu0 0
      %12363 = vmatprep.subr.bf16.mxu0 0
      %12364 = vmatpush1.bf16.msra.mxu0 0
      %12365 = vmatprep.subr.bf16.mxu0 0
      %12366 = vmatpush1.bf16.msra.mxu0 0
      %12367 = vmatprep.subr.bf16.mxu0 0
      %12368 = vmatpush1.bf16.msra.mxu0 0
      %12369 = vmatprep.mubr.bf16.mxu0 0
      %12370 = vmatmul.mubr.bf16.gmra.mrb[0].mxu0 %v12307
      %v12371 = vpop.f32.mrb[0].mxu0
      %v12372 = vadd.f32 0.0, %v12371
      %v12373 = vpop.f32.mrb[0].mxu0
      %v12374 = vpop.f32.mrb[0].mxu0
      %v12375 = vadd.f32 0.0, %v12374
      %v12376 = vpop.f32.mrb[0].mxu0
      %12377 = vmatprep.mubr.bf16.mxu0 0
      %12378 = vmatmul.mubr.bf16.gmra.mrb[0].mxu0 %v12310
      %v12379 = vpop.f32.mrb[0].mxu0
      %v12380 = vadd.f32 0.0, %v12379
      %v12381 = vpop.f32.mrb[0].mxu0
      %v12382 = vpop.f32.mrb[0].mxu0
      %v12383 = vadd.f32 0.0, %v12382
      %v12384 = vpop.f32.mrb[0].mxu0
      %12385 = vmatprep.mubr.bf16.mxu0 0
      %12386 = vmatmul.mubr.bf16.gmra.mrb[0].mxu0 %v12313
      %v12387 = vpop.f32.mrb[0].mxu0
      %v12388 = vadd.f32 0.0, %v12387
      %v12389 = vpop.f32.mrb[0].mxu0
      %v12390 = vpop.f32.mrb[0].mxu0
      %v12391 = vadd.f32 0.0, %v12390
      %v12392 = vpop.f32.mrb[0].mxu0
      %12393 = vmatprep.mubr.bf16.mxu0 0
      %12394 = vmatmul.mubr.bf16.gmra.mrb[0].mxu0 %v12316
      %v12395 = vpop.f32.mrb[0].mxu0
      %v12396 = vadd.f32 0.0, %v12395
      %v12397 = vpop.f32.mrb[0].mxu0
      %v12398 = vpop.f32.mrb[0].mxu0
      %v12399 = vadd.f32 0.0, %v12398
      %v12400 = vpop.f32.mrb[0].mxu0
      %12401 = vmatprep.mubr.bf16.mxu0 0
      %12402 = vmatmul.mubr.bf16.gmra.mrb[0].mxu0 %v12319
      %v12403 = vpop.f32.mrb[0].mxu0
      %v12404 = vadd.f32 0.0, %v12403
      %v12405 = vpop.f32.mrb[0].mxu0
      %v12406 = vpop.f32.mrb[0].mxu0
      %v12407 = vadd.f32 0.0, %v12406
      %v12408 = vpop.f32.mrb[0].mxu0
      %12409 = vmatprep.mubr.bf16.mxu0 0
      %12410 = vmatmul.mubr.bf16.gmra.mrb[0].mxu0 %v12322
      %v12411 = vpop.f32.mrb[0].mxu0
      %v12412 = vadd.f32 0.0, %v12411
      %v12413 = vpop.f32.mrb[0].mxu0
      %v12414 = vpop.f32.mrb[0].mxu0
      %v12415 = vadd.f32 0.0, %v12414
      %v12416 = vpop.f32.mrb[0].mxu0
      %12417 = vmatprep.mubr.bf16.mxu0 0
      %12418 = vmatmul.mubr.bf16.gmra.mrb[0].mxu0 %v12325
      %v12419 = vpop.f32.mrb[0].mxu0
      %v12420 = vadd.f32 0.0, %v12419
      %v12421 = vpop.f32.mrb[0].mxu0
      %v12422 = vpop.f32.mrb[0].mxu0
      %v12423 = vadd.f32 0.0, %v12422
      %v12424 = vpop.f32.mrb[0].mxu0
      %12425 = vmatprep.mubr.bf16.mxu0 0
      %12426 = vmatmul.mubr.bf16.gmra.mrb[0].mxu0 %v12328
      %v12427 = vpop.f32.mrb[0].mxu0
      %v12428 = vadd.f32 0.0, %v12427
      %v12429 = vpop.f32.mrb[0].mxu0
      %v12430 = vpop.f32.mrb[0].mxu0
      %v12431 = vadd.f32 0.0, %v12430
      %v12432 = vpop.f32.mrb[0].mxu0
      %12433 = vmatprep.mubr.bf16.mxu0 0
      %12434 = vmatmul.mubr.bf16.gmra.mrb[0].mxu0 %v12331
      %v12435 = vpop.f32.mrb[0].mxu0
      %v12436 = vadd.f32 0.0, %v12435
      %v12437 = vpop.f32.mrb[0].mxu0
      %v12438 = vpop.f32.mrb[0].mxu0
      %v12439 = vadd.f32 0.0, %v12438
      %v12440 = vpop.f32.mrb[0].mxu0
      %12441 = vdwg.mxu0
      %v12442 = vld [vmem:[%s5] sm:$0x1]
      %v12444 = vlaneseq
      %v12445 = vshrl.u32 %v12444, 7
      %v12446 = vsub.s32 0, %v12445
      %v12447 = vrot.slane %v12442, %v12446
      %v12449 = vmul.f32 %v12372, %v12447
      %v12450 = vmul.f32 %v12375, %v12447
      %v12451 = vmul.f32 %v12380, %v12447
      %v12452 = vmul.f32 %v12383, %v12447
      %v12453 = vmul.f32 %v12388, %v12447
      %v12454 = vmul.f32 %v12391, %v12447
      %v12455 = vmul.f32 %v12396, %v12447
      %v12456 = vmul.f32 %v12399, %v12447
      %v12457 = vmul.f32 %v12404, %v12447
      %v12458 = vmul.f32 %v12407, %v12447
      %v12459 = vmul.f32 %v12412, %v12447
      %v12460 = vmul.f32 %v12415, %v12447
      %v12461 = vmul.f32 %v12420, %v12447
      %v12462 = vmul.f32 %v12423, %v12447
      %v12463 = vmul.f32 %v12428, %v12447
      %v12464 = vmul.f32 %v12431, %v12447
      %v12465 = vmul.f32 %v12436, %v12447
      %v12466 = vmul.f32 %v12439, %v12447
      %v12467 = vld [vmem:[%s6] sm:$0x1]
      %v12469 = vlaneseq
      %v12470 = vshrl.u32 %v12469, 7
      %v12471 = vsub.s32 0, %v12470
      %v12472 = vrot.slane %v12467, %v12471
      %v12474 = vadd.f32 %v12449, %v12472
      %v12475 = vadd.f32 %v12450, %v12472
      %v12476 = vadd.f32 %v12451, %v12472
      %v12477 = vadd.f32 %v12452, %v12472
      %v12478 = vadd.f32 %v12453, %v12472
      %v12479 = vadd.f32 %v12454, %v12472
      %v12480 = vadd.f32 %v12455, %v12472
      %v12481 = vadd.f32 %v12456, %v12472
      %v12482 = vadd.f32 %v12457, %v12472
      %v12483 = vadd.f32 %v12458, %v12472
      %v12484 = vadd.f32 %v12459, %v12472
      %v12485 = vadd.f32 %v12460, %v12472
      %v12486 = vadd.f32 %v12461, %v12472
      %v12487 = vadd.f32 %v12462, %v12472
      %v12488 = vadd.f32 %v12463, %v12472
      %v12489 = vadd.f32 %v12464, %v12472
      %v12490 = vadd.f32 %v12465, %v12472
      %v12491 = vadd.f32 %v12466, %v12472
      %v12492 = vmax.f32 %v12474, 0.0
      %v12493 = vmax.f32 %v12475, 0.0
      %v12494 = vmax.f32 %v12476, 0.0
      %v12495 = vmax.f32 %v12477, 0.0
      %v12496 = vmax.f32 %v12478, 0.0
      %v12497 = vmax.f32 %v12479, 0.0
      %v12498 = vmax.f32 %v12480, 0.0
      %v12499 = vmax.f32 %v12481, 0.0
      %v12500 = vmax.f32 %v12482, 0.0
      %v12501 = vmax.f32 %v12483, 0.0
      %v12502 = vmax.f32 %v12484, 0.0
      %v12503 = vmax.f32 %v12485, 0.0
      %v12504 = vmax.f32 %v12486, 0.0
      %v12505 = vmax.f32 %v12487, 0.0
      %v12506 = vmax.f32 %v12488, 0.0
      %v12507 = vmax.f32 %v12489, 0.0
      %v12508 = vmax.f32 %v12490, 0.0
      %v12509 = vmax.f32 %v12491, 0.0
      %12510 = vst [vmem:[%s278] sm:$0xff] %v12492
      %12511 = vst [vmem:[%s278 + $0x8] sm:$0xff] %v12493
      %12512 = vst [vmem:[%s278 + $0x10] sm:$0xff] %v12494
      %12513 = vst [vmem:[%s278 + $0x18] sm:$0xff] %v12495
      %12514 = vst [vmem:[%s278 + $0x20] sm:$0xff] %v12496
      %12515 = vst [vmem:[%s278 + $0x28] sm:$0xff] %v12497
      %12516 = vst [vmem:[%s278 + $0x30] sm:$0xff] %v12498
      %12517 = vst [vmem:[%s278 + $0x38] sm:$0xff] %v12499
      %12518 = vst [vmem:[%s278 + $0x40] sm:$0xff] %v12500
      %12519 = vst [vmem:[%s278 + $0x48] sm:$0xff] %v12501
      %12520 = vst [vmem:[%s278 + $0x50] sm:$0xff] %v12502
      %12521 = vst [vmem:[%s278 + $0x58] sm:$0xff] %v12503
      %12522 = vst [vmem:[%s278 + $0x60] sm:$0xff] %v12504
      %12523 = vst [vmem:[%s278 + $0x68] sm:$0xff] %v12505
      %12524 = vst [vmem:[%s278 + $0x70] sm:$0xff] %v12506
      %12525 = vst [vmem:[%s278 + $0x78] sm:$0xff] %v12507
      %12526 = vst [vmem:[%s278 + $0x80] sm:$0xff] %v12508
      %12527 = vst [vmem:[%s278 + $0x88] sm:$0xff] %v12509
      %p12528 = scmp.lt.s32.totalorder %s18, 1
      %s12529 = scalar_select %p12528, %s18, 1
      %s12530 = smul.addr %s12529, 18
      %s12531 = smul.addr %s12530, 8
      %s12532 = scalar_lea.vmem %s7, %s12531
      // Predicated region
      $region49: #{inconv_forward.1} parent=47 // pred_check
        %p12533 = pneg %p188
      $region50: #{inconv_forward.1} parent=47 // pred_check_branch
        %12535 = sbr.rel (%p12533) target = $region52
      $region51: #{inconv_forward.1} parent=47 // pred_region
        _
      $region52: #{inconv_forward.1} parent=47 // pred_fallthru
        _
    $region48: #{inconv_forward.1} parent=5 // pred_fallthru
      _
    %p12536 = scmp.le.s32.totalorder 2, %s13
    // Predicated region
    $region53: #{inconv_forward.1} parent=5 // pred_check
      %p12537 = pneg %p12536
    $region54: #{inconv_forward.1} parent=5 // pred_check_branch
      %12539 = sbr.rel (%p12537) target = $region56
    $region55: #{inconv_forward.1} parent=5 // pred_region
      %s12540 = ssub.s32 %s13, 2
      // Predicated region
      $region57: #{inconv_forward.1} parent=55 // pred_check
        %p12541 = pneg %p194
      $region58: #{inconv_forward.1} parent=55 // pred_check_branch
        %12543 = sbr.rel (%p12541) target = $region60
      $region59: #{inconv_forward.1} parent=55 // pred_region
        %p12544 = scmp.lt.s32.totalorder %s19, 1
        %s12545 = scalar_select %p12544, %s19, 1
        %s12546 = smul.addr %s12545, 18
        %s12547 = smul.addr %s12546, 8
        %s12548 = scalar_lea.vmem %s7, %s12547
      $region60: #{inconv_forward.1} parent=55 // pred_fallthru
        _
    $region56: #{inconv_forward.1} parent=5 // pred_fallthru
      _
  $region6: #{inconv_forward.1} parent=0 // loop_footer
    %s17 = sadd.s32 1, %s13
  $region7: #{inconv_forward.1} parent=0 // loop_footer_branch
    %12 = sbr.rel target = $region3
  $region8: #{inconv_forward.1} parent=0 // loop_exit
    _

</llo_original>
